<compile_context>
chip_gen: v7x
topology: tpu7x:2x2x1
jax: 0.10.0
libtpu: 0.0.40
codegen_flags: <defaults>
</compile_context>

<pallas_src>
import numpy as np
import jax
import jax.numpy as jnp
from jax.experimental import pallas as pl
from jax.experimental.pallas import tpu as pltpu


KSIZE = 4
PAD = 1
NTAPS = KSIZE * KSIZE
STRIDES = (2, 2, 2, 1, 1)      # conv0, conv1, conv2, conv3, last
EPS = 1e-5


# -----------------------------------------------------------------------------
# In-kernel building blocks
# -----------------------------------------------------------------------------
def _leaky(z):
    return jnp.where(z >= 0.0, z, 0.2 * z)


def _instance_norm(z):
    # InstanceNorm2d (affine=False, eps=1e-5): per-channel stats over spatial
    # (the lane axis). Biased variance; d is reused for var and normalization.
    mean = jnp.mean(z, axis=-1, keepdims=True)
    d = z - mean
    var = jnp.mean(d * d, axis=-1, keepdims=True)
    return d * jax.lax.rsqrt(var + EPS)


def _conv_block(a_all, w_ref, b_ref, g_ref, bt, cin):
    """4x4 / pad=1 conv applied to `bt` samples stacked on the sublane axis.

    a_all : (bt*cin, Pin) bf16 activations (sample-major rows)
    w_ref : (Cout, 16*cin) bf16 -- taps folded into the contraction axis,
            contraction index = t*cin + ci
    b_ref : (Cout, 1) f32
    g_ref : (16, Pin, Pout) bf16 0/1 gather matrices (shared by all samples)
    returns: list of bt (Cout, Pout) f32 pre-activation maps
    """
    # im2col gather: 16 MXU matmuls batched over all bt samples (M = bt*cin).
    # Every G column holds at most a single 1, so each output value is an
    # exact copy of a bf16 input value (f32 accumulate is lossless here).
    taps = [jnp.dot(a_all, g_ref[t], preferred_element_type=jnp.float32)
            for t in range(NTAPS)]
    w = w_ref[...]
    bias = b_ref[...]
    zs = []
    for b in range(bt):
        lo = b * cin
        # (16*cin, Pout) patch slab for this sample: sublane-aligned static
        # slices (cin is a multiple of 8), one concat, ONE bf16 cast.
        patches = jnp.concatenate(
            [taps[t][lo:lo + cin, :] for t in range(NTAPS)], axis=0)
        # Single weight matmul per sample (K = 16*cin = 128..1024): replaces
        # the previous 16 tiny matmuls + 16-deep f32 accumulation chain.
        zs.append(jnp.dot(w, patches.astype(jnp.bfloat16),
                          preferred_element_type=jnp.float32) + bias)
    return zs


def _make_kernel(bt, p1_in, cins):
    c1, c2, c3, c4 = cins

    def kernel(p0_ref, w0_ref, b0_ref,
               w1_ref, b1_ref, g1_ref,
               w2_ref, b2_ref, g2_ref,
               w3_ref, b3_ref, g3_ref,
               w4_ref, b4_ref, g4_ref,
               o_ref):
        # conv0: the bt samples are lane-concatenated -> one MXU matmul + LeakyReLU.
        z0 = jnp.dot(w0_ref[...], p0_ref[0], preferred_element_type=jnp.float32)
        a0 = _leaky(z0 + b0_ref[...])                       # (c1, bt*p1_in) f32

        # Re-stack the samples onto the sublane axis for the gather matmuls
        # (lane slices at multiples of 128, sublane concat of 8k-row pieces).
        a = jnp.concatenate(
            [a0[:, b * p1_in:(b + 1) * p1_in] for b in range(bt)],
            axis=0).astype(jnp.bfloat16)                     # (bt*c1, p1_in)

        def norm_layer(a_in, w_r, b_r, g_r, cin):
            zs = _conv_block(a_in, w_r, b_r, g_r, bt, cin)
            acts = [_leaky(_instance_norm(z)) for z in zs]
            return jnp.concatenate(acts, axis=0).astype(jnp.bfloat16)

        # conv1..conv3: conv + InstanceNorm + LeakyReLU (bf16 matmuls, f32 stats).
        a = norm_layer(a, w1_ref, b1_ref, g1_ref, c1)
        a = norm_layer(a, w2_ref, b2_ref, g2_ref, c2)
        a = norm_layer(a, w3_ref, b3_ref, g3_ref, c3)

        # last: conv + Sigmoid; one lane-dense (1, bt*Pf) store per step.
        zs = _conv_block(a, w4_ref, b4_ref, g4_ref, bt, c4)
        o_ref[0] = jnp.concatenate(
            [jax.nn.sigmoid(z) for z in zs], axis=1).astype(o_ref.dtype)

    return kernel


# -----------------------------------------------------------------------------
# Host-side plumbing (layer geometry, gather matrices, weight packing)
# -----------------------------------------------------------------------------
def _conv_out_hw(h, w, stride):
    return (h + 2 * PAD - KSIZE) // stride + 1, (w + 2 * PAD - KSIZE) // stride + 1


def _gather_matrices(h, w, stride):
    """0/1 matrices (16, h*w, ho*wo): patches[t] = A_flat @ G[t] for a 4x4/pad=1 conv."""
    ho, wo = _conv_out_hw(h, w, stride)
    g = np.zeros((NTAPS, h * w, ho * wo), np.float32)
    for ki in range(KSIZE):
        for kj in range(KSIZE):
            t = ki * KSIZE + kj
            for oi in range(ho):
                y = stride * oi + ki - PAD
                if y < 0 or y >= h:
                    continue
                for oj in range(wo):
                    x = stride * oj + kj - PAD
                    if x < 0 or x >= w:
                        continue
                    g[t, y * w + x, oi * wo + oj] = 1.0
    return g


def _im2col_kp(x, stride):
    """x: (B, C, H, W) -> patches (B, C*16, Ho*Wo), row index ci*16 + t
    (matches PyTorch weight.reshape(Cout, -1))."""
    b, c, h, w = x.shape
    ho, wo = _conv_out_hw(h, w, stride)
    xp = jnp.pad(x, ((0, 0), (0, 0), (PAD, PAD), (PAD, PAD)))
    cols = []
    for i in range(KSIZE):
        for j in range(KSIZE):
            cols.append(xp[:, :, i:i + stride * ho:stride, j:j + stride * wo:stride])
    return jnp.stack(cols, axis=2).reshape(b, c * NTAPS, ho * wo)


def _weight_fold(w):
    """(Cout, Cin, 4, 4) -> (Cout, 16*Cin) bf16, contraction index = t*Cin + ci."""
    co, ci = w.shape[0], w.shape[1]
    return jnp.transpose(w.reshape(co, ci, NTAPS), (0, 2, 1)) \
              .reshape(co, NTAPS * ci).astype(jnp.bfloat16)


def _const_spec(arr):
    """Whole-array block, same block for every grid step."""
    if arr.ndim == 2:
        return pl.BlockSpec(arr.shape, lambda s: (0, 0))
    return pl.BlockSpec(arr.shape, lambda s: (0, 0, 0))


def discriminator_forward(x, params):
    B, _, H, W = x.shape

    # Grid / per-step batch choice: keep >=2 parallel steps when possible so
    # both v7x TensorCores get work; per-step fixed overhead on v5e/v6e is
    # negligible at this size.
    if B % 2 == 0 and B >= 2:
        num_steps, bt = 2, B // 2
    else:
        num_steps, bt = B, 1

    # Per-layer spatial geometry.
    hw = [(H, W)]
    for s in STRIDES:
        hw.append(_conv_out_hw(hw[-1][0], hw[-1][1], s))
    ho_f, wo_f = hw[-1]
    pf = ho_f * wo_f
    p1_in = hw[1][0] * hw[1][1]

    # conv0 operands: XLA-side im2col of the HBM-resident input (tiny), bf16,
    # regrouped so each grid step sees bt samples lane-concatenated.
    p0 = _im2col_kp(x, STRIDES[0]).astype(jnp.bfloat16)          # (B, Cin*16, P1)
    k0 = p0.shape[1]
    p0 = p0.reshape(num_steps, bt, k0, p1_in).transpose(0, 2, 1, 3)
    p0 = p0.reshape(num_steps, k0, bt * p1_in)

    w0m = params["w0"].reshape(params["w0"].shape[0], -1).astype(jnp.bfloat16)
    biases = [params["b%d" % i].reshape(-1, 1).astype(jnp.float32) for i in range(5)]
    w_fold = [_weight_fold(params["w%d" % i]) for i in range(1, 5)]
    gmats = [jnp.asarray(_gather_matrices(hw[i][0], hw[i][1], STRIDES[i]), jnp.bfloat16)
             for i in range(1, 5)]
    cins = tuple(params["w%d" % i].shape[1] for i in range(1, 5))

    operands = [p0, w0m, biases[0]]
    for i in range(4):
        operands += [w_fold[i], biases[i + 1], gmats[i]]

    in_specs = [pl.BlockSpec((1, k0, bt * p1_in), lambda s: (s, 0, 0))]
    in_specs += [_const_spec(op) for op in operands[1:]]

    kernel = _make_kernel(bt, p1_in, cins)

    out = pl.pallas_call(
        kernel,
        out_shape=jax.ShapeDtypeStruct((num_steps, 1, bt * pf), jnp.float32),
        grid=(num_steps,),
        in_specs=in_specs,
        out_specs=pl.BlockSpec((1, 1, bt * pf), lambda s: (s, 0, 0)),
        compiler_params=pltpu.CompilerParams(dimension_semantics=("parallel",)),
    )(*operands)
    return out.reshape(B, 1, ho_f, wo_f)


# -----------------------------------------------------------------------------
# Parameters + pure-JAX references (for self-check)
# -----------------------------------------------------------------------------
def init_params(key, in_channels=3, filters=8):
    def conv_init(k, cin, cout):
        kw, kb = jax.random.split(k)
        bound = 1.0 / jnp.sqrt(cin * KSIZE * KSIZE)
        w = jax.random.uniform(kw, (cout, cin, KSIZE, KSIZE), jnp.float32, -bound, bound)
        b = jax.random.uniform(kb, (cout,), jnp.float32, -bound, bound)
        return w, b

    keys = jax.random.split(key, 5)
    f = filters
    params = {}
    params["w0"], params["b0"] = conv_init(keys[0], in_channels, f)
    params["w1"], params["b1"] = conv_init(keys[1], f, 2 * f)
    params["w2"], params["b2"] = conv_init(keys[2], 2 * f, 4 * f)
    params["w3"], params["b3"] = conv_init(keys[3], 4 * f, 8 * f)
    params["w4"], params["b4"] = conv_init(keys[4], 8 * f, 1)
    return params


def _ref_conv(x, w, b, stride, compute_dtype):
    y = jax.lax.conv_general_dilated(
        x.astype(compute_dtype), w.astype(compute_dtype),
        (stride, stride), ((PAD, PAD), (PAD, PAD)),
        dimension_numbers=("NCHW", "OIHW", "NCHW"),
        preferred_element_type=jnp.float32)
    return y + b.reshape(1, -1, 1, 1)


def _ref_forward(x, p, compute_dtype=jnp.float32):
    def leaky(z):
        return jnp.where(z >= 0.0, z, 0.2 * z)

    def inorm(z):
        m = jnp.mean(z, axis=(2, 3), keepdims=True)
        v = jnp.mean((z - m) ** 2, axis=(2, 3), keepdims=True)
        return (z - m) * jax.lax.rsqrt(v + EPS)

    h = leaky(_ref_conv(x, p["w0"], p["b0"], 2, compute_dtype))
    h = leaky(inorm(_ref_conv(h, p["w1"], p["b1"], 2, compute_dtype)))
    h = leaky(inorm(_ref_conv(h, p["w2"], p["b2"], 2, compute_dtype)))
    h = leaky(inorm(_ref_conv(h, p["w3"], p["b3"], 1, compute_dtype)))
    h = jax.nn.sigmoid(_ref_conv(h, p["w4"], p["b4"], 1, compute_dtype))
    return h


# -----------------------------------------------------------------------------
if __name__ == "__main__":
    key = jax.random.PRNGKey(0)
    k_x, k_p = jax.random.split(key)

    B, C_IN, H, W = 4, 3, 32, 32          # 32x32 -> 16 -> 8 -> 4 -> 3 -> 2x2 patch map
    FILTERS = 8

    x = jax.random.normal(k_x, (B, C_IN, H, W), jnp.float32)
    params = init_params(k_p, in_channels=C_IN, filters=FILTERS)

    fwd = jax.jit(discriminator_forward)
    out = jax.block_until_ready(fwd(x, params))

    # Reference with identical bf16-operand / f32-accumulate quantization points.
    ref_mixed = jax.block_until_ready(_ref_forward(x, params, jnp.bfloat16))
    # Pure-f32 reference (semantics of the original PyTorch module).
    ref_f32 = jax.block_until_ready(_ref_forward(x, params, jnp.float32))

    assert out.shape == ref_f32.shape, (out.shape, ref_f32.shape)
    err_mixed = float(jnp.max(jnp.abs(out - ref_mixed)))
    err_f32 = float(jnp.max(jnp.abs(out - ref_f32)))
    assert err_mixed < 5e-3, err_mixed      # tight: same mixed-precision recipe
    assert err_f32 < 5e-2, err_f32          # loose: bf16 operands vs f32 module
    print("KERNEL_OK")
</pallas_src>

<mosaic_0001>
module attributes {stable_mosaic.version = 11 : i64} {
  func.func @kernel(%arg0: i32, %arg1: memref<1x48x512xbf16, #tpu.memory_space<vmem>>, %arg2: memref<8x48xbf16, #tpu.memory_space<vmem>>, %arg3: memref<8x1xf32, #tpu.memory_space<vmem>>, %arg4: memref<16x128xbf16, #tpu.memory_space<vmem>>, %arg5: memref<16x1xf32, #tpu.memory_space<vmem>>, %arg6: memref<16x256x64xbf16, #tpu.memory_space<vmem>>, %arg7: memref<32x256xbf16, #tpu.memory_space<vmem>>, %arg8: memref<32x1xf32, #tpu.memory_space<vmem>>, %arg9: memref<16x64x16xbf16, #tpu.memory_space<vmem>>, %arg10: memref<64x512xbf16, #tpu.memory_space<vmem>>, %arg11: memref<64x1xf32, #tpu.memory_space<vmem>>, %arg12: memref<16x16x9xbf16, #tpu.memory_space<vmem>>, %arg13: memref<1x1024xbf16, #tpu.memory_space<vmem>>, %arg14: memref<1x1xf32, #tpu.memory_space<vmem>>, %arg15: memref<16x9x4xbf16, #tpu.memory_space<vmem>>, %arg16: memref<1x1x8xf32, #tpu.memory_space<vmem>>) attributes {dimension_semantics = [#tpu.dimension_semantics<parallel>], iteration_bounds = array<i64: 2>, scalar_prefetch = 0 : i64, scratch_operands = 0 : i64, tpu.core_type = #tpu.core_type<tc>, window_params = [{transform_indices = @transform_0, window_bounds = array<i64: 1, 48, 512>}, {pipeline_mode = #tpu.pipeline_mode<synchronous>, transform_indices = @transform_1, window_bounds = array<i64: 8, 48>}, {pipeline_mode = #tpu.pipeline_mode<synchronous>, transform_indices = @transform_2, window_bounds = array<i64: 8, 1>}, {pipeline_mode = #tpu.pipeline_mode<synchronous>, transform_indices = @transform_3, window_bounds = array<i64: 16, 128>}, {pipeline_mode = #tpu.pipeline_mode<synchronous>, transform_indices = @transform_4, window_bounds = array<i64: 16, 1>}, {pipeline_mode = #tpu.pipeline_mode<synchronous>, transform_indices = @transform_5, window_bounds = array<i64: 16, 256, 64>}, {pipeline_mode = #tpu.pipeline_mode<synchronous>, transform_indices = @transform_6, window_bounds = array<i64: 32, 256>}, {pipeline_mode = #tpu.pipeline_mode<synchronous>, transform_indices = @transform_7, window_bounds = array<i64: 32, 1>}, {pipeline_mode = #tpu.pipeline_mode<synchronous>, transform_indices = @transform_8, window_bounds = array<i64: 16, 64, 16>}, {pipeline_mode = #tpu.pipeline_mode<synchronous>, transform_indices = @transform_9, window_bounds = array<i64: 64, 512>}, {pipeline_mode = #tpu.pipeline_mode<synchronous>, transform_indices = @transform_10, window_bounds = array<i64: 64, 1>}, {pipeline_mode = #tpu.pipeline_mode<synchronous>, transform_indices = @transform_11, window_bounds = array<i64: 16, 16, 9>}, {pipeline_mode = #tpu.pipeline_mode<synchronous>, transform_indices = @transform_12, window_bounds = array<i64: 1, 1024>}, {pipeline_mode = #tpu.pipeline_mode<synchronous>, transform_indices = @transform_13, window_bounds = array<i64: 1, 1>}, {pipeline_mode = #tpu.pipeline_mode<synchronous>, transform_indices = @transform_14, window_bounds = array<i64: 16, 9, 4>}, {transform_indices = @transform_15, window_bounds = array<i64: 1, 1, 8>}]} {
    %c0 = arith.constant 0 : index
    %c0_0 = arith.constant 0 : index
    %0 = vector.load %arg2[%c0, %c0_0] : memref<8x48xbf16, #tpu.memory_space<vmem>>, vector<8x48xbf16>
    %c0_1 = arith.constant 0 : index
    %c0_2 = arith.constant 0 : index
    %c0_3 = arith.constant 0 : index
    %1 = vector.load %arg1[%c0_1, %c0_2, %c0_3] : memref<1x48x512xbf16, #tpu.memory_space<vmem>>, vector<1x48x512xbf16>
    %2 = vector.shape_cast %1 : vector<1x48x512xbf16> to vector<48x512xbf16>
    %cst = arith.constant dense<0.000000e+00> : vector<8x512xf32>
    %3 = tpu.matmul %0, %2, %cst {dimension_numbers = #tpu.dot_dimension_numbers<[1], [0], [0], [1], [0, 0, 1, 1], [], []>} : vector<8x48xbf16>, vector<48x512xbf16>, vector<8x512xf32> -> vector<8x512xf32>
    %c0_4 = arith.constant 0 : index
    %c0_5 = arith.constant 0 : index
    %4 = vector.load %arg3[%c0_4, %c0_5] : memref<8x1xf32, #tpu.memory_space<vmem>>, vector<8x1xf32>
    %5 = vector.broadcast %4 : vector<8x1xf32> to vector<8x512xf32>
    %6 = arith.addf %3, %5 : vector<8x512xf32>
    %cst_6 = arith.constant 0.000000e+00 : f32
    %7 = vector.broadcast %cst_6 : f32 to vector<8x512xf32>
    %8 = arith.cmpf oge, %6, %7 : vector<8x512xf32>
    %cst_7 = arith.constant 2.000000e-01 : f32
    %9 = vector.broadcast %cst_7 : f32 to vector<8x512xf32>
    %10 = arith.mulf %9, %6 : vector<8x512xf32>
    %11 = arith.select %8, %6, %10 : vector<8x512xi1>, vector<8x512xf32>
    %12 = vector.extract_strided_slice %11 {offsets = [0, 0], sizes = [8, 256], strides = [1, 1]} : vector<8x512xf32> to vector<8x256xf32>
    %13 = vector.extract_strided_slice %11 {offsets = [0, 256], sizes = [8, 256], strides = [1, 1]} : vector<8x512xf32> to vector<8x256xf32>
    %14 = tpu.concatenate %12, %13 in 0 : vector<8x256xf32>, vector<8x256xf32> -> vector<16x256xf32>
    %15 = arith.truncf %14 : vector<16x256xf32> to vector<16x256xbf16>
    %c0_8 = arith.constant 0 : index
    %c0_9 = arith.constant 0 : index
    %c0_10 = arith.constant 0 : index
    %16 = vector.load %arg6[%c0_8, %c0_9, %c0_10] : memref<16x256x64xbf16, #tpu.memory_space<vmem>>, vector<1x256x64xbf16>
    %17 = vector.shape_cast %16 : vector<1x256x64xbf16> to vector<256x64xbf16>
    %cst_11 = arith.constant dense<0.000000e+00> : vector<16x64xf32>
    %18 = tpu.matmul %15, %17, %cst_11 {dimension_numbers = #tpu.dot_dimension_numbers<[1], [0], [0], [1], [0, 0, 1, 1], [], []>} : vector<16x256xbf16>, vector<256x64xbf16>, vector<16x64xf32> -> vector<16x64xf32>
    %c1 = arith.constant 1 : index
    %c0_12 = arith.constant 0 : index
    %c0_13 = arith.constant 0 : index
    %19 = vector.load %arg6[%c1, %c0_12, %c0_13] : memref<16x256x64xbf16, #tpu.memory_space<vmem>>, vector<1x256x64xbf16>
    %20 = vector.shape_cast %19 : vector<1x256x64xbf16> to vector<256x64xbf16>
    %cst_14 = arith.constant dense<0.000000e+00> : vector<16x64xf32>
    %21 = tpu.matmul %15, %20, %cst_14 {dimension_numbers = #tpu.dot_dimension_numbers<[1], [0], [0], [1], [0, 0, 1, 1], [], []>} : vector<16x256xbf16>, vector<256x64xbf16>, vector<16x64xf32> -> vector<16x64xf32>
    %c2 = arith.constant 2 : index
    %c0_15 = arith.constant 0 : index
    %c0_16 = arith.constant 0 : index
    %22 = vector.load %arg6[%c2, %c0_15, %c0_16] : memref<16x256x64xbf16, #tpu.memory_space<vmem>>, vector<1x256x64xbf16>
    %23 = vector.shape_cast %22 : vector<1x256x64xbf16> to vector<256x64xbf16>
    %cst_17 = arith.constant dense<0.000000e+00> : vector<16x64xf32>
    %24 = tpu.matmul %15, %23, %cst_17 {dimension_numbers = #tpu.dot_dimension_numbers<[1], [0], [0], [1], [0, 0, 1, 1], [], []>} : vector<16x256xbf16>, vector<256x64xbf16>, vector<16x64xf32> -> vector<16x64xf32>
    %c3 = arith.constant 3 : index
    %c0_18 = arith.constant 0 : index
    %c0_19 = arith.constant 0 : index
    %25 = vector.load %arg6[%c3, %c0_18, %c0_19] : memref<16x256x64xbf16, #tpu.memory_space<vmem>>, vector<1x256x64xbf16>
    %26 = vector.shape_cast %25 : vector<1x256x64xbf16> to vector<256x64xbf16>
    %cst_20 = arith.constant dense<0.000000e+00> : vector<16x64xf32>
    %27 = tpu.matmul %15, %26, %cst_20 {dimension_numbers = #tpu.dot_dimension_numbers<[1], [0], [0], [1], [0, 0, 1, 1], [], []>} : vector<16x256xbf16>, vector<256x64xbf16>, vector<16x64xf32> -> vector<16x64xf32>
    %c4 = arith.constant 4 : index
    %c0_21 = arith.constant 0 : index
    %c0_22 = arith.constant 0 : index
    %28 = vector.load %arg6[%c4, %c0_21, %c0_22] : memref<16x256x64xbf16, #tpu.memory_space<vmem>>, vector<1x256x64xbf16>
    %29 = vector.shape_cast %28 : vector<1x256x64xbf16> to vector<256x64xbf16>
    %cst_23 = arith.constant dense<0.000000e+00> : vector<16x64xf32>
    %30 = tpu.matmul %15, %29, %cst_23 {dimension_numbers = #tpu.dot_dimension_numbers<[1], [0], [0], [1], [0, 0, 1, 1], [], []>} : vector<16x256xbf16>, vector<256x64xbf16>, vector<16x64xf32> -> vector<16x64xf32>
    %c5 = arith.constant 5 : index
    %c0_24 = arith.constant 0 : index
    %c0_25 = arith.constant 0 : index
    %31 = vector.load %arg6[%c5, %c0_24, %c0_25] : memref<16x256x64xbf16, #tpu.memory_space<vmem>>, vector<1x256x64xbf16>
    %32 = vector.shape_cast %31 : vector<1x256x64xbf16> to vector<256x64xbf16>
    %cst_26 = arith.constant dense<0.000000e+00> : vector<16x64xf32>
    %33 = tpu.matmul %15, %32, %cst_26 {dimension_numbers = #tpu.dot_dimension_numbers<[1], [0], [0], [1], [0, 0, 1, 1], [], []>} : vector<16x256xbf16>, vector<256x64xbf16>, vector<16x64xf32> -> vector<16x64xf32>
    %c6 = arith.constant 6 : index
    %c0_27 = arith.constant 0 : index
    %c0_28 = arith.constant 0 : index
    %34 = vector.load %arg6[%c6, %c0_27, %c0_28] : memref<16x256x64xbf16, #tpu.memory_space<vmem>>, vector<1x256x64xbf16>
    %35 = vector.shape_cast %34 : vector<1x256x64xbf16> to vector<256x64xbf16>
    %cst_29 = arith.constant dense<0.000000e+00> : vector<16x64xf32>
    %36 = tpu.matmul %15, %35, %cst_29 {dimension_numbers = #tpu.dot_dimension_numbers<[1], [0], [0], [1], [0, 0, 1, 1], [], []>} : vector<16x256xbf16>, vector<256x64xbf16>, vector<16x64xf32> -> vector<16x64xf32>
    %c7 = arith.constant 7 : index
    %c0_30 = arith.constant 0 : index
    %c0_31 = arith.constant 0 : index
    %37 = vector.load %arg6[%c7, %c0_30, %c0_31] : memref<16x256x64xbf16, #tpu.memory_space<vmem>>, vector<1x256x64xbf16>
    %38 = vector.shape_cast %37 : vector<1x256x64xbf16> to vector<256x64xbf16>
    %cst_32 = arith.constant dense<0.000000e+00> : vector<16x64xf32>
    %39 = tpu.matmul %15, %38, %cst_32 {dimension_numbers = #tpu.dot_dimension_numbers<[1], [0], [0], [1], [0, 0, 1, 1], [], []>} : vector<16x256xbf16>, vector<256x64xbf16>, vector<16x64xf32> -> vector<16x64xf32>
    %c8 = arith.constant 8 : index
    %c0_33 = arith.constant 0 : index
    %c0_34 = arith.constant 0 : index
    %40 = vector.load %arg6[%c8, %c0_33, %c0_34] : memref<16x256x64xbf16, #tpu.memory_space<vmem>>, vector<1x256x64xbf16>
    %41 = vector.shape_cast %40 : vector<1x256x64xbf16> to vector<256x64xbf16>
    %cst_35 = arith.constant dense<0.000000e+00> : vector<16x64xf32>
    %42 = tpu.matmul %15, %41, %cst_35 {dimension_numbers = #tpu.dot_dimension_numbers<[1], [0], [0], [1], [0, 0, 1, 1], [], []>} : vector<16x256xbf16>, vector<256x64xbf16>, vector<16x64xf32> -> vector<16x64xf32>
    %c9 = arith.constant 9 : index
    %c0_36 = arith.constant 0 : index
    %c0_37 = arith.constant 0 : index
    %43 = vector.load %arg6[%c9, %c0_36, %c0_37] : memref<16x256x64xbf16, #tpu.memory_space<vmem>>, vector<1x256x64xbf16>
    %44 = vector.shape_cast %43 : vector<1x256x64xbf16> to vector<256x64xbf16>
    %cst_38 = arith.constant dense<0.000000e+00> : vector<16x64xf32>
    %45 = tpu.matmul %15, %44, %cst_38 {dimension_numbers = #tpu.dot_dimension_numbers<[1], [0], [0], [1], [0, 0, 1, 1], [], []>} : vector<16x256xbf16>, vector<256x64xbf16>, vector<16x64xf32> -> vector<16x64xf32>
    %c10 = arith.constant 10 : index
    %c0_39 = arith.constant 0 : index
    %c0_40 = arith.constant 0 : index
    %46 = vector.load %arg6[%c10, %c0_39, %c0_40] : memref<16x256x64xbf16, #tpu.memory_space<vmem>>, vector<1x256x64xbf16>
    %47 = vector.shape_cast %46 : vector<1x256x64xbf16> to vector<256x64xbf16>
    %cst_41 = arith.constant dense<0.000000e+00> : vector<16x64xf32>
    %48 = tpu.matmul %15, %47, %cst_41 {dimension_numbers = #tpu.dot_dimension_numbers<[1], [0], [0], [1], [0, 0, 1, 1], [], []>} : vector<16x256xbf16>, vector<256x64xbf16>, vector<16x64xf32> -> vector<16x64xf32>
    %c11 = arith.constant 11 : index
    %c0_42 = arith.constant 0 : index
    %c0_43 = arith.constant 0 : index
    %49 = vector.load %arg6[%c11, %c0_42, %c0_43] : memref<16x256x64xbf16, #tpu.memory_space<vmem>>, vector<1x256x64xbf16>
    %50 = vector.shape_cast %49 : vector<1x256x64xbf16> to vector<256x64xbf16>
    %cst_44 = arith.constant dense<0.000000e+00> : vector<16x64xf32>
    %51 = tpu.matmul %15, %50, %cst_44 {dimension_numbers = #tpu.dot_dimension_numbers<[1], [0], [0], [1], [0, 0, 1, 1], [], []>} : vector<16x256xbf16>, vector<256x64xbf16>, vector<16x64xf32> -> vector<16x64xf32>
    %c12 = arith.constant 12 : index
    %c0_45 = arith.constant 0 : index
    %c0_46 = arith.constant 0 : index
    %52 = vector.load %arg6[%c12, %c0_45, %c0_46] : memref<16x256x64xbf16, #tpu.memory_space<vmem>>, vector<1x256x64xbf16>
    %53 = vector.shape_cast %52 : vector<1x256x64xbf16> to vector<256x64xbf16>
    %cst_47 = arith.constant dense<0.000000e+00> : vector<16x64xf32>
    %54 = tpu.matmul %15, %53, %cst_47 {dimension_numbers = #tpu.dot_dimension_numbers<[1], [0], [0], [1], [0, 0, 1, 1], [], []>} : vector<16x256xbf16>, vector<256x64xbf16>, vector<16x64xf32> -> vector<16x64xf32>
    %c13 = arith.constant 13 : index
    %c0_48 = arith.constant 0 : index
    %c0_49 = arith.constant 0 : index
    %55 = vector.load %arg6[%c13, %c0_48, %c0_49] : memref<16x256x64xbf16, #tpu.memory_space<vmem>>, vector<1x256x64xbf16>
    %56 = vector.shape_cast %55 : vector<1x256x64xbf16> to vector<256x64xbf16>
    %cst_50 = arith.constant dense<0.000000e+00> : vector<16x64xf32>
    %57 = tpu.matmul %15, %56, %cst_50 {dimension_numbers = #tpu.dot_dimension_numbers<[1], [0], [0], [1], [0, 0, 1, 1], [], []>} : vector<16x256xbf16>, vector<256x64xbf16>, vector<16x64xf32> -> vector<16x64xf32>
    %c14 = arith.constant 14 : index
    %c0_51 = arith.constant 0 : index
    %c0_52 = arith.constant 0 : index
    %58 = vector.load %arg6[%c14, %c0_51, %c0_52] : memref<16x256x64xbf16, #tpu.memory_space<vmem>>, vector<1x256x64xbf16>
    %59 = vector.shape_cast %58 : vector<1x256x64xbf16> to vector<256x64xbf16>
    %cst_53 = arith.constant dense<0.000000e+00> : vector<16x64xf32>
    %60 = tpu.matmul %15, %59, %cst_53 {dimension_numbers = #tpu.dot_dimension_numbers<[1], [0], [0], [1], [0, 0, 1, 1], [], []>} : vector<16x256xbf16>, vector<256x64xbf16>, vector<16x64xf32> -> vector<16x64xf32>
    %c15 = arith.constant 15 : index
    %c0_54 = arith.constant 0 : index
    %c0_55 = arith.constant 0 : index
    %61 = vector.load %arg6[%c15, %c0_54, %c0_55] : memref<16x256x64xbf16, #tpu.memory_space<vmem>>, vector<1x256x64xbf16>
    %62 = vector.shape_cast %61 : vector<1x256x64xbf16> to vector<256x64xbf16>
    %cst_56 = arith.constant dense<0.000000e+00> : vector<16x64xf32>
    %63 = tpu.matmul %15, %62, %cst_56 {dimension_numbers = #tpu.dot_dimension_numbers<[1], [0], [0], [1], [0, 0, 1, 1], [], []>} : vector<16x256xbf16>, vector<256x64xbf16>, vector<16x64xf32> -> vector<16x64xf32>
    %c0_57 = arith.constant 0 : index
    %c0_58 = arith.constant 0 : index
    %64 = vector.load %arg4[%c0_57, %c0_58] : memref<16x128xbf16, #tpu.memory_space<vmem>>, vector<16x128xbf16>
    %c0_59 = arith.constant 0 : index
    %c0_60 = arith.constant 0 : index
    %65 = vector.load %arg5[%c0_59, %c0_60] : memref<16x1xf32, #tpu.memory_space<vmem>>, vector<16x1xf32>
    %66 = vector.extract_strided_slice %18 {offsets = [0, 0], sizes = [8, 64], strides = [1, 1]} : vector<16x64xf32> to vector<8x64xf32>
    %67 = vector.extract_strided_slice %21 {offsets = [0, 0], sizes = [8, 64], strides = [1, 1]} : vector<16x64xf32> to vector<8x64xf32>
    %68 = vector.extract_strided_slice %24 {offsets = [0, 0], sizes = [8, 64], strides = [1, 1]} : vector<16x64xf32> to vector<8x64xf32>
    %69 = vector.extract_strided_slice %27 {offsets = [0, 0], sizes = [8, 64], strides = [1, 1]} : vector<16x64xf32> to vector<8x64xf32>
    %70 = vector.extract_strided_slice %30 {offsets = [0, 0], sizes = [8, 64], strides = [1, 1]} : vector<16x64xf32> to vector<8x64xf32>
    %71 = vector.extract_strided_slice %33 {offsets = [0, 0], sizes = [8, 64], strides = [1, 1]} : vector<16x64xf32> to vector<8x64xf32>
    %72 = vector.extract_strided_slice %36 {offsets = [0, 0], sizes = [8, 64], strides = [1, 1]} : vector<16x64xf32> to vector<8x64xf32>
    %73 = vector.extract_strided_slice %39 {offsets = [0, 0], sizes = [8, 64], strides = [1, 1]} : vector<16x64xf32> to vector<8x64xf32>
    %74 = vector.extract_strided_slice %42 {offsets = [0, 0], sizes = [8, 64], strides = [1, 1]} : vector<16x64xf32> to vector<8x64xf32>
    %75 = vector.extract_strided_slice %45 {offsets = [0, 0], sizes = [8, 64], strides = [1, 1]} : vector<16x64xf32> to vector<8x64xf32>
    %76 = vector.extract_strided_slice %48 {offsets = [0, 0], sizes = [8, 64], strides = [1, 1]} : vector<16x64xf32> to vector<8x64xf32>
    %77 = vector.extract_strided_slice %51 {offsets = [0, 0], sizes = [8, 64], strides = [1, 1]} : vector<16x64xf32> to vector<8x64xf32>
    %78 = vector.extract_strided_slice %54 {offsets = [0, 0], sizes = [8, 64], strides = [1, 1]} : vector<16x64xf32> to vector<8x64xf32>
    %79 = vector.extract_strided_slice %57 {offsets = [0, 0], sizes = [8, 64], strides = [1, 1]} : vector<16x64xf32> to vector<8x64xf32>
    %80 = vector.extract_strided_slice %60 {offsets = [0, 0], sizes = [8, 64], strides = [1, 1]} : vector<16x64xf32> to vector<8x64xf32>
    %81 = vector.extract_strided_slice %63 {offsets = [0, 0], sizes = [8, 64], strides = [1, 1]} : vector<16x64xf32> to vector<8x64xf32>
    %82 = tpu.concatenate %66, %67, %68, %69, %70, %71, %72, %73, %74, %75, %76, %77, %78, %79, %80, %81 in 0 : vector<8x64xf32>, vector<8x64xf32>, vector<8x64xf32>, vector<8x64xf32>, vector<8x64xf32>, vector<8x64xf32>, vector<8x64xf32>, vector<8x64xf32>, vector<8x64xf32>, vector<8x64xf32>, vector<8x64xf32>, vector<8x64xf32>, vector<8x64xf32>, vector<8x64xf32>, vector<8x64xf32>, vector<8x64xf32> -> vector<128x64xf32>
    %83 = arith.truncf %82 : vector<128x64xf32> to vector<128x64xbf16>
    %cst_61 = arith.constant dense<0.000000e+00> : vector<16x64xf32>
    %84 = tpu.matmul %64, %83, %cst_61 {dimension_numbers = #tpu.dot_dimension_numbers<[1], [0], [0], [1], [0, 0, 1, 1], [], []>} : vector<16x128xbf16>, vector<128x64xbf16>, vector<16x64xf32> -> vector<16x64xf32>
    %85 = vector.broadcast %65 : vector<16x1xf32> to vector<16x64xf32>
    %86 = arith.addf %84, %85 : vector<16x64xf32>
    %87 = vector.extract_strided_slice %18 {offsets = [8, 0], sizes = [8, 64], strides = [1, 1]} : vector<16x64xf32> to vector<8x64xf32>
    %88 = vector.extract_strided_slice %21 {offsets = [8, 0], sizes = [8, 64], strides = [1, 1]} : vector<16x64xf32> to vector<8x64xf32>
    %89 = vector.extract_strided_slice %24 {offsets = [8, 0], sizes = [8, 64], strides = [1, 1]} : vector<16x64xf32> to vector<8x64xf32>
    %90 = vector.extract_strided_slice %27 {offsets = [8, 0], sizes = [8, 64], strides = [1, 1]} : vector<16x64xf32> to vector<8x64xf32>
    %91 = vector.extract_strided_slice %30 {offsets = [8, 0], sizes = [8, 64], strides = [1, 1]} : vector<16x64xf32> to vector<8x64xf32>
    %92 = vector.extract_strided_slice %33 {offsets = [8, 0], sizes = [8, 64], strides = [1, 1]} : vector<16x64xf32> to vector<8x64xf32>
    %93 = vector.extract_strided_slice %36 {offsets = [8, 0], sizes = [8, 64], strides = [1, 1]} : vector<16x64xf32> to vector<8x64xf32>
    %94 = vector.extract_strided_slice %39 {offsets = [8, 0], sizes = [8, 64], strides = [1, 1]} : vector<16x64xf32> to vector<8x64xf32>
    %95 = vector.extract_strided_slice %42 {offsets = [8, 0], sizes = [8, 64], strides = [1, 1]} : vector<16x64xf32> to vector<8x64xf32>
    %96 = vector.extract_strided_slice %45 {offsets = [8, 0], sizes = [8, 64], strides = [1, 1]} : vector<16x64xf32> to vector<8x64xf32>
    %97 = vector.extract_strided_slice %48 {offsets = [8, 0], sizes = [8, 64], strides = [1, 1]} : vector<16x64xf32> to vector<8x64xf32>
    %98 = vector.extract_strided_slice %51 {offsets = [8, 0], sizes = [8, 64], strides = [1, 1]} : vector<16x64xf32> to vector<8x64xf32>
    %99 = vector.extract_strided_slice %54 {offsets = [8, 0], sizes = [8, 64], strides = [1, 1]} : vector<16x64xf32> to vector<8x64xf32>
    %100 = vector.extract_strided_slice %57 {offsets = [8, 0], sizes = [8, 64], strides = [1, 1]} : vector<16x64xf32> to vector<8x64xf32>
    %101 = vector.extract_strided_slice %60 {offsets = [8, 0], sizes = [8, 64], strides = [1, 1]} : vector<16x64xf32> to vector<8x64xf32>
    %102 = vector.extract_strided_slice %63 {offsets = [8, 0], sizes = [8, 64], strides = [1, 1]} : vector<16x64xf32> to vector<8x64xf32>
    %103 = tpu.concatenate %87, %88, %89, %90, %91, %92, %93, %94, %95, %96, %97, %98, %99, %100, %101, %102 in 0 : vector<8x64xf32>, vector<8x64xf32>, vector<8x64xf32>, vector<8x64xf32>, vector<8x64xf32>, vector<8x64xf32>, vector<8x64xf32>, vector<8x64xf32>, vector<8x64xf32>, vector<8x64xf32>, vector<8x64xf32>, vector<8x64xf32>, vector<8x64xf32>, vector<8x64xf32>, vector<8x64xf32>, vector<8x64xf32> -> vector<128x64xf32>
    %104 = arith.truncf %103 : vector<128x64xf32> to vector<128x64xbf16>
    %cst_62 = arith.constant dense<0.000000e+00> : vector<16x64xf32>
    %105 = tpu.matmul %64, %104, %cst_62 {dimension_numbers = #tpu.dot_dimension_numbers<[1], [0], [0], [1], [0, 0, 1, 1], [], []>} : vector<16x128xbf16>, vector<128x64xbf16>, vector<16x64xf32> -> vector<16x64xf32>
    %106 = vector.broadcast %65 : vector<16x1xf32> to vector<16x64xf32>
    %107 = arith.addf %105, %106 : vector<16x64xf32>
    %cst_63 = arith.constant dense<0.000000e+00> : vector<16xf32>
    %108 = vector.multi_reduction <add>, %86, %cst_63 [1] : vector<16x64xf32> to vector<16xf32>
    %109 = vector.shape_cast %108 : vector<16xf32> to vector<16x1xf32>
    %cst_64 = arith.constant 6.400000e+01 : f32
    %110 = vector.broadcast %cst_64 : f32 to vector<16x1xf32>
    %111 = arith.divf %109, %110 : vector<16x1xf32>
    %112 = vector.broadcast %111 : vector<16x1xf32> to vector<16x64xf32>
    %113 = arith.subf %86, %112 : vector<16x64xf32>
    %114 = arith.mulf %113, %113 : vector<16x64xf32>
    %cst_65 = arith.constant dense<0.000000e+00> : vector<16xf32>
    %115 = vector.multi_reduction <add>, %114, %cst_65 [1] : vector<16x64xf32> to vector<16xf32>
    %116 = vector.shape_cast %115 : vector<16xf32> to vector<16x1xf32>
    %cst_66 = arith.constant 6.400000e+01 : f32
    %117 = vector.broadcast %cst_66 : f32 to vector<16x1xf32>
    %118 = arith.divf %116, %117 : vector<16x1xf32>
    %cst_67 = arith.constant 9.99999974E-6 : f32
    %119 = vector.broadcast %cst_67 : f32 to vector<16x1xf32>
    %120 = arith.addf %118, %119 : vector<16x1xf32>
    %121 = math.rsqrt %120 : vector<16x1xf32>
    %122 = vector.broadcast %121 : vector<16x1xf32> to vector<16x64xf32>
    %123 = arith.mulf %113, %122 : vector<16x64xf32>
    %cst_68 = arith.constant 0.000000e+00 : f32
    %124 = vector.broadcast %cst_68 : f32 to vector<16x64xf32>
    %125 = arith.cmpf oge, %123, %124 : vector<16x64xf32>
    %cst_69 = arith.constant 2.000000e-01 : f32
    %126 = vector.broadcast %cst_69 : f32 to vector<16x64xf32>
    %127 = arith.mulf %126, %123 : vector<16x64xf32>
    %128 = arith.select %125, %123, %127 : vector<16x64xi1>, vector<16x64xf32>
    %cst_70 = arith.constant dense<0.000000e+00> : vector<16xf32>
    %129 = vector.multi_reduction <add>, %107, %cst_70 [1] : vector<16x64xf32> to vector<16xf32>
    %130 = vector.shape_cast %129 : vector<16xf32> to vector<16x1xf32>
    %cst_71 = arith.constant 6.400000e+01 : f32
    %131 = vector.broadcast %cst_71 : f32 to vector<16x1xf32>
    %132 = arith.divf %130, %131 : vector<16x1xf32>
    %133 = vector.broadcast %132 : vector<16x1xf32> to vector<16x64xf32>
    %134 = arith.subf %107, %133 : vector<16x64xf32>
    %135 = arith.mulf %134, %134 : vector<16x64xf32>
    %cst_72 = arith.constant dense<0.000000e+00> : vector<16xf32>
    %136 = vector.multi_reduction <add>, %135, %cst_72 [1] : vector<16x64xf32> to vector<16xf32>
    %137 = vector.shape_cast %136 : vector<16xf32> to vector<16x1xf32>
    %cst_73 = arith.constant 6.400000e+01 : f32
    %138 = vector.broadcast %cst_73 : f32 to vector<16x1xf32>
    %139 = arith.divf %137, %138 : vector<16x1xf32>
    %cst_74 = arith.constant 9.99999974E-6 : f32
    %140 = vector.broadcast %cst_74 : f32 to vector<16x1xf32>
    %141 = arith.addf %139, %140 : vector<16x1xf32>
    %142 = math.rsqrt %141 : vector<16x1xf32>
    %143 = vector.broadcast %142 : vector<16x1xf32> to vector<16x64xf32>
    %144 = arith.mulf %134, %143 : vector<16x64xf32>
    %cst_75 = arith.constant 0.000000e+00 : f32
    %145 = vector.broadcast %cst_75 : f32 to vector<16x64xf32>
    %146 = arith.cmpf oge, %144, %145 : vector<16x64xf32>
    %cst_76 = arith.constant 2.000000e-01 : f32
    %147 = vector.broadcast %cst_76 : f32 to vector<16x64xf32>
    %148 = arith.mulf %147, %144 : vector<16x64xf32>
    %149 = arith.select %146, %144, %148 : vector<16x64xi1>, vector<16x64xf32>
    %150 = tpu.concatenate %128, %149 in 0 : vector<16x64xf32>, vector<16x64xf32> -> vector<32x64xf32>
    %151 = arith.truncf %150 : vector<32x64xf32> to vector<32x64xbf16>
    %c0_77 = arith.constant 0 : index
    %c0_78 = arith.constant 0 : index
    %c0_79 = arith.constant 0 : index
    %152 = vector.load %arg9[%c0_77, %c0_78, %c0_79] : memref<16x64x16xbf16, #tpu.memory_space<vmem>>, vector<1x64x16xbf16>
    %153 = vector.shape_cast %152 : vector<1x64x16xbf16> to vector<64x16xbf16>
    %cst_80 = arith.constant dense<0.000000e+00> : vector<32x16xf32>
    %154 = tpu.matmul %151, %153, %cst_80 {dimension_numbers = #tpu.dot_dimension_numbers<[1], [0], [0], [1], [0, 0, 1, 1], [], []>} : vector<32x64xbf16>, vector<64x16xbf16>, vector<32x16xf32> -> vector<32x16xf32>
    %c1_81 = arith.constant 1 : index
    %c0_82 = arith.constant 0 : index
    %c0_83 = arith.constant 0 : index
    %155 = vector.load %arg9[%c1_81, %c0_82, %c0_83] : memref<16x64x16xbf16, #tpu.memory_space<vmem>>, vector<1x64x16xbf16>
    %156 = vector.shape_cast %155 : vector<1x64x16xbf16> to vector<64x16xbf16>
    %cst_84 = arith.constant dense<0.000000e+00> : vector<32x16xf32>
    %157 = tpu.matmul %151, %156, %cst_84 {dimension_numbers = #tpu.dot_dimension_numbers<[1], [0], [0], [1], [0, 0, 1, 1], [], []>} : vector<32x64xbf16>, vector<64x16xbf16>, vector<32x16xf32> -> vector<32x16xf32>
    %c2_85 = arith.constant 2 : index
    %c0_86 = arith.constant 0 : index
    %c0_87 = arith.constant 0 : index
    %158 = vector.load %arg9[%c2_85, %c0_86, %c0_87] : memref<16x64x16xbf16, #tpu.memory_space<vmem>>, vector<1x64x16xbf16>
    %159 = vector.shape_cast %158 : vector<1x64x16xbf16> to vector<64x16xbf16>
    %cst_88 = arith.constant dense<0.000000e+00> : vector<32x16xf32>
    %160 = tpu.matmul %151, %159, %cst_88 {dimension_numbers = #tpu.dot_dimension_numbers<[1], [0], [0], [1], [0, 0, 1, 1], [], []>} : vector<32x64xbf16>, vector<64x16xbf16>, vector<32x16xf32> -> vector<32x16xf32>
    %c3_89 = arith.constant 3 : index
    %c0_90 = arith.constant 0 : index
    %c0_91 = arith.constant 0 : index
    %161 = vector.load %arg9[%c3_89, %c0_90, %c0_91] : memref<16x64x16xbf16, #tpu.memory_space<vmem>>, vector<1x64x16xbf16>
    %162 = vector.shape_cast %161 : vector<1x64x16xbf16> to vector<64x16xbf16>
    %cst_92 = arith.constant dense<0.000000e+00> : vector<32x16xf32>
    %163 = tpu.matmul %151, %162, %cst_92 {dimension_numbers = #tpu.dot_dimension_numbers<[1], [0], [0], [1], [0, 0, 1, 1], [], []>} : vector<32x64xbf16>, vector<64x16xbf16>, vector<32x16xf32> -> vector<32x16xf32>
    %c4_93 = arith.constant 4 : index
    %c0_94 = arith.constant 0 : index
    %c0_95 = arith.constant 0 : index
    %164 = vector.load %arg9[%c4_93, %c0_94, %c0_95] : memref<16x64x16xbf16, #tpu.memory_space<vmem>>, vector<1x64x16xbf16>
    %165 = vector.shape_cast %164 : vector<1x64x16xbf16> to vector<64x16xbf16>
    %cst_96 = arith.constant dense<0.000000e+00> : vector<32x16xf32>
    %166 = tpu.matmul %151, %165, %cst_96 {dimension_numbers = #tpu.dot_dimension_numbers<[1], [0], [0], [1], [0, 0, 1, 1], [], []>} : vector<32x64xbf16>, vector<64x16xbf16>, vector<32x16xf32> -> vector<32x16xf32>
    %c5_97 = arith.constant 5 : index
    %c0_98 = arith.constant 0 : index
    %c0_99 = arith.constant 0 : index
    %167 = vector.load %arg9[%c5_97, %c0_98, %c0_99] : memref<16x64x16xbf16, #tpu.memory_space<vmem>>, vector<1x64x16xbf16>
    %168 = vector.shape_cast %167 : vector<1x64x16xbf16> to vector<64x16xbf16>
    %cst_100 = arith.constant dense<0.000000e+00> : vector<32x16xf32>
    %169 = tpu.matmul %151, %168, %cst_100 {dimension_numbers = #tpu.dot_dimension_numbers<[1], [0], [0], [1], [0, 0, 1, 1], [], []>} : vector<32x64xbf16>, vector<64x16xbf16>, vector<32x16xf32> -> vector<32x16xf32>
    %c6_101 = arith.constant 6 : index
    %c0_102 = arith.constant 0 : index
    %c0_103 = arith.constant 0 : index
    %170 = vector.load %arg9[%c6_101, %c0_102, %c0_103] : memref<16x64x16xbf16, #tpu.memory_space<vmem>>, vector<1x64x16xbf16>
    %171 = vector.shape_cast %170 : vector<1x64x16xbf16> to vector<64x16xbf16>
    %cst_104 = arith.constant dense<0.000000e+00> : vector<32x16xf32>
    %172 = tpu.matmul %151, %171, %cst_104 {dimension_numbers = #tpu.dot_dimension_numbers<[1], [0], [0], [1], [0, 0, 1, 1], [], []>} : vector<32x64xbf16>, vector<64x16xbf16>, vector<32x16xf32> -> vector<32x16xf32>
    %c7_105 = arith.constant 7 : index
    %c0_106 = arith.constant 0 : index
    %c0_107 = arith.constant 0 : index
    %173 = vector.load %arg9[%c7_105, %c0_106, %c0_107] : memref<16x64x16xbf16, #tpu.memory_space<vmem>>, vector<1x64x16xbf16>
    %174 = vector.shape_cast %173 : vector<1x64x16xbf16> to vector<64x16xbf16>
    %cst_108 = arith.constant dense<0.000000e+00> : vector<32x16xf32>
    %175 = tpu.matmul %151, %174, %cst_108 {dimension_numbers = #tpu.dot_dimension_numbers<[1], [0], [0], [1], [0, 0, 1, 1], [], []>} : vector<32x64xbf16>, vector<64x16xbf16>, vector<32x16xf32> -> vector<32x16xf32>
    %c8_109 = arith.constant 8 : index
    %c0_110 = arith.constant 0 : index
    %c0_111 = arith.constant 0 : index
    %176 = vector.load %arg9[%c8_109, %c0_110, %c0_111] : memref<16x64x16xbf16, #tpu.memory_space<vmem>>, vector<1x64x16xbf16>
    %177 = vector.shape_cast %176 : vector<1x64x16xbf16> to vector<64x16xbf16>
    %cst_112 = arith.constant dense<0.000000e+00> : vector<32x16xf32>
    %178 = tpu.matmul %151, %177, %cst_112 {dimension_numbers = #tpu.dot_dimension_numbers<[1], [0], [0], [1], [0, 0, 1, 1], [], []>} : vector<32x64xbf16>, vector<64x16xbf16>, vector<32x16xf32> -> vector<32x16xf32>
    %c9_113 = arith.constant 9 : index
    %c0_114 = arith.constant 0 : index
    %c0_115 = arith.constant 0 : index
    %179 = vector.load %arg9[%c9_113, %c0_114, %c0_115] : memref<16x64x16xbf16, #tpu.memory_space<vmem>>, vector<1x64x16xbf16>
    %180 = vector.shape_cast %179 : vector<1x64x16xbf16> to vector<64x16xbf16>
    %cst_116 = arith.constant dense<0.000000e+00> : vector<32x16xf32>
    %181 = tpu.matmul %151, %180, %cst_116 {dimension_numbers = #tpu.dot_dimension_numbers<[1], [0], [0], [1], [0, 0, 1, 1], [], []>} : vector<32x64xbf16>, vector<64x16xbf16>, vector<32x16xf32> -> vector<32x16xf32>
    %c10_117 = arith.constant 10 : index
    %c0_118 = arith.constant 0 : index
    %c0_119 = arith.constant 0 : index
    %182 = vector.load %arg9[%c10_117, %c0_118, %c0_119] : memref<16x64x16xbf16, #tpu.memory_space<vmem>>, vector<1x64x16xbf16>
    %183 = vector.shape_cast %182 : vector<1x64x16xbf16> to vector<64x16xbf16>
    %cst_120 = arith.constant dense<0.000000e+00> : vector<32x16xf32>
    %184 = tpu.matmul %151, %183, %cst_120 {dimension_numbers = #tpu.dot_dimension_numbers<[1], [0], [0], [1], [0, 0, 1, 1], [], []>} : vector<32x64xbf16>, vector<64x16xbf16>, vector<32x16xf32> -> vector<32x16xf32>
    %c11_121 = arith.constant 11 : index
    %c0_122 = arith.constant 0 : index
    %c0_123 = arith.constant 0 : index
    %185 = vector.load %arg9[%c11_121, %c0_122, %c0_123] : memref<16x64x16xbf16, #tpu.memory_space<vmem>>, vector<1x64x16xbf16>
    %186 = vector.shape_cast %185 : vector<1x64x16xbf16> to vector<64x16xbf16>
    %cst_124 = arith.constant dense<0.000000e+00> : vector<32x16xf32>
    %187 = tpu.matmul %151, %186, %cst_124 {dimension_numbers = #tpu.dot_dimension_numbers<[1], [0], [0], [1], [0, 0, 1, 1], [], []>} : vector<32x64xbf16>, vector<64x16xbf16>, vector<32x16xf32> -> vector<32x16xf32>
    %c12_125 = arith.constant 12 : index
    %c0_126 = arith.constant 0 : index
    %c0_127 = arith.constant 0 : index
    %188 = vector.load %arg9[%c12_125, %c0_126, %c0_127] : memref<16x64x16xbf16, #tpu.memory_space<vmem>>, vector<1x64x16xbf16>
    %189 = vector.shape_cast %188 : vector<1x64x16xbf16> to vector<64x16xbf16>
    %cst_128 = arith.constant dense<0.000000e+00> : vector<32x16xf32>
    %190 = tpu.matmul %151, %189, %cst_128 {dimension_numbers = #tpu.dot_dimension_numbers<[1], [0], [0], [1], [0, 0, 1, 1], [], []>} : vector<32x64xbf16>, vector<64x16xbf16>, vector<32x16xf32> -> vector<32x16xf32>
    %c13_129 = arith.constant 13 : index
    %c0_130 = arith.constant 0 : index
    %c0_131 = arith.constant 0 : index
    %191 = vector.load %arg9[%c13_129, %c0_130, %c0_131] : memref<16x64x16xbf16, #tpu.memory_space<vmem>>, vector<1x64x16xbf16>
    %192 = vector.shape_cast %191 : vector<1x64x16xbf16> to vector<64x16xbf16>
    %cst_132 = arith.constant dense<0.000000e+00> : vector<32x16xf32>
    %193 = tpu.matmul %151, %192, %cst_132 {dimension_numbers = #tpu.dot_dimension_numbers<[1], [0], [0], [1], [0, 0, 1, 1], [], []>} : vector<32x64xbf16>, vector<64x16xbf16>, vector<32x16xf32> -> vector<32x16xf32>
    %c14_133 = arith.constant 14 : index
    %c0_134 = arith.constant 0 : index
    %c0_135 = arith.constant 0 : index
    %194 = vector.load %arg9[%c14_133, %c0_134, %c0_135] : memref<16x64x16xbf16, #tpu.memory_space<vmem>>, vector<1x64x16xbf16>
    %195 = vector.shape_cast %194 : vector<1x64x16xbf16> to vector<64x16xbf16>
    %cst_136 = arith.constant dense<0.000000e+00> : vector<32x16xf32>
    %196 = tpu.matmul %151, %195, %cst_136 {dimension_numbers = #tpu.dot_dimension_numbers<[1], [0], [0], [1], [0, 0, 1, 1], [], []>} : vector<32x64xbf16>, vector<64x16xbf16>, vector<32x16xf32> -> vector<32x16xf32>
    %c15_137 = arith.constant 15 : index
    %c0_138 = arith.constant 0 : index
    %c0_139 = arith.constant 0 : index
    %197 = vector.load %arg9[%c15_137, %c0_138, %c0_139] : memref<16x64x16xbf16, #tpu.memory_space<vmem>>, vector<1x64x16xbf16>
    %198 = vector.shape_cast %197 : vector<1x64x16xbf16> to vector<64x16xbf16>
    %cst_140 = arith.constant dense<0.000000e+00> : vector<32x16xf32>
    %199 = tpu.matmul %151, %198, %cst_140 {dimension_numbers = #tpu.dot_dimension_numbers<[1], [0], [0], [1], [0, 0, 1, 1], [], []>} : vector<32x64xbf16>, vector<64x16xbf16>, vector<32x16xf32> -> vector<32x16xf32>
    %c0_141 = arith.constant 0 : index
    %c0_142 = arith.constant 0 : index
    %200 = vector.load %arg7[%c0_141, %c0_142] : memref<32x256xbf16, #tpu.memory_space<vmem>>, vector<32x256xbf16>
    %c0_143 = arith.constant 0 : index
    %c0_144 = arith.constant 0 : index
    %201 = vector.load %arg8[%c0_143, %c0_144] : memref<32x1xf32, #tpu.memory_space<vmem>>, vector<32x1xf32>
    %202 = vector.extract_strided_slice %154 {offsets = [0, 0], sizes = [16, 16], strides = [1, 1]} : vector<32x16xf32> to vector<16x16xf32>
    %203 = vector.extract_strided_slice %157 {offsets = [0, 0], sizes = [16, 16], strides = [1, 1]} : vector<32x16xf32> to vector<16x16xf32>
    %204 = vector.extract_strided_slice %160 {offsets = [0, 0], sizes = [16, 16], strides = [1, 1]} : vector<32x16xf32> to vector<16x16xf32>
    %205 = vector.extract_strided_slice %163 {offsets = [0, 0], sizes = [16, 16], strides = [1, 1]} : vector<32x16xf32> to vector<16x16xf32>
    %206 = vector.extract_strided_slice %166 {offsets = [0, 0], sizes = [16, 16], strides = [1, 1]} : vector<32x16xf32> to vector<16x16xf32>
    %207 = vector.extract_strided_slice %169 {offsets = [0, 0], sizes = [16, 16], strides = [1, 1]} : vector<32x16xf32> to vector<16x16xf32>
    %208 = vector.extract_strided_slice %172 {offsets = [0, 0], sizes = [16, 16], strides = [1, 1]} : vector<32x16xf32> to vector<16x16xf32>
    %209 = vector.extract_strided_slice %175 {offsets = [0, 0], sizes = [16, 16], strides = [1, 1]} : vector<32x16xf32> to vector<16x16xf32>
    %210 = vector.extract_strided_slice %178 {offsets = [0, 0], sizes = [16, 16], strides = [1, 1]} : vector<32x16xf32> to vector<16x16xf32>
    %211 = vector.extract_strided_slice %181 {offsets = [0, 0], sizes = [16, 16], strides = [1, 1]} : vector<32x16xf32> to vector<16x16xf32>
    %212 = vector.extract_strided_slice %184 {offsets = [0, 0], sizes = [16, 16], strides = [1, 1]} : vector<32x16xf32> to vector<16x16xf32>
    %213 = vector.extract_strided_slice %187 {offsets = [0, 0], sizes = [16, 16], strides = [1, 1]} : vector<32x16xf32> to vector<16x16xf32>
    %214 = vector.extract_strided_slice %190 {offsets = [0, 0], sizes = [16, 16], strides = [1, 1]} : vector<32x16xf32> to vector<16x16xf32>
    %215 = vector.extract_strided_slice %193 {offsets = [0, 0], sizes = [16, 16], strides = [1, 1]} : vector<32x16xf32> to vector<16x16xf32>
    %216 = vector.extract_strided_slice %196 {offsets = [0, 0], sizes = [16, 16], strides = [1, 1]} : vector<32x16xf32> to vector<16x16xf32>
    %217 = vector.extract_strided_slice %199 {offsets = [0, 0], sizes = [16, 16], strides = [1, 1]} : vector<32x16xf32> to vector<16x16xf32>
    %218 = tpu.concatenate %202, %203, %204, %205, %206, %207, %208, %209, %210, %211, %212, %213, %214, %215, %216, %217 in 0 : vector<16x16xf32>, vector<16x16xf32>, vector<16x16xf32>, vector<16x16xf32>, vector<16x16xf32>, vector<16x16xf32>, vector<16x16xf32>, vector<16x16xf32>, vector<16x16xf32>, vector<16x16xf32>, vector<16x16xf32>, vector<16x16xf32>, vector<16x16xf32>, vector<16x16xf32>, vector<16x16xf32>, vector<16x16xf32> -> vector<256x16xf32>
    %219 = arith.truncf %218 : vector<256x16xf32> to vector<256x16xbf16>
    %cst_145 = arith.constant dense<0.000000e+00> : vector<32x16xf32>
    %220 = tpu.matmul %200, %219, %cst_145 {dimension_numbers = #tpu.dot_dimension_numbers<[1], [0], [0], [1], [0, 0, 1, 1], [], []>} : vector<32x256xbf16>, vector<256x16xbf16>, vector<32x16xf32> -> vector<32x16xf32>
    %221 = vector.broadcast %201 : vector<32x1xf32> to vector<32x16xf32>
    %222 = arith.addf %220, %221 : vector<32x16xf32>
    %223 = vector.extract_strided_slice %154 {offsets = [16, 0], sizes = [16, 16], strides = [1, 1]} : vector<32x16xf32> to vector<16x16xf32>
    %224 = vector.extract_strided_slice %157 {offsets = [16, 0], sizes = [16, 16], strides = [1, 1]} : vector<32x16xf32> to vector<16x16xf32>
    %225 = vector.extract_strided_slice %160 {offsets = [16, 0], sizes = [16, 16], strides = [1, 1]} : vector<32x16xf32> to vector<16x16xf32>
    %226 = vector.extract_strided_slice %163 {offsets = [16, 0], sizes = [16, 16], strides = [1, 1]} : vector<32x16xf32> to vector<16x16xf32>
    %227 = vector.extract_strided_slice %166 {offsets = [16, 0], sizes = [16, 16], strides = [1, 1]} : vector<32x16xf32> to vector<16x16xf32>
    %228 = vector.extract_strided_slice %169 {offsets = [16, 0], sizes = [16, 16], strides = [1, 1]} : vector<32x16xf32> to vector<16x16xf32>
    %229 = vector.extract_strided_slice %172 {offsets = [16, 0], sizes = [16, 16], strides = [1, 1]} : vector<32x16xf32> to vector<16x16xf32>
    %230 = vector.extract_strided_slice %175 {offsets = [16, 0], sizes = [16, 16], strides = [1, 1]} : vector<32x16xf32> to vector<16x16xf32>
    %231 = vector.extract_strided_slice %178 {offsets = [16, 0], sizes = [16, 16], strides = [1, 1]} : vector<32x16xf32> to vector<16x16xf32>
    %232 = vector.extract_strided_slice %181 {offsets = [16, 0], sizes = [16, 16], strides = [1, 1]} : vector<32x16xf32> to vector<16x16xf32>
    %233 = vector.extract_strided_slice %184 {offsets = [16, 0], sizes = [16, 16], strides = [1, 1]} : vector<32x16xf32> to vector<16x16xf32>
    %234 = vector.extract_strided_slice %187 {offsets = [16, 0], sizes = [16, 16], strides = [1, 1]} : vector<32x16xf32> to vector<16x16xf32>
    %235 = vector.extract_strided_slice %190 {offsets = [16, 0], sizes = [16, 16], strides = [1, 1]} : vector<32x16xf32> to vector<16x16xf32>
    %236 = vector.extract_strided_slice %193 {offsets = [16, 0], sizes = [16, 16], strides = [1, 1]} : vector<32x16xf32> to vector<16x16xf32>
    %237 = vector.extract_strided_slice %196 {offsets = [16, 0], sizes = [16, 16], strides = [1, 1]} : vector<32x16xf32> to vector<16x16xf32>
    %238 = vector.extract_strided_slice %199 {offsets = [16, 0], sizes = [16, 16], strides = [1, 1]} : vector<32x16xf32> to vector<16x16xf32>
    %239 = tpu.concatenate %223, %224, %225, %226, %227, %228, %229, %230, %231, %232, %233, %234, %235, %236, %237, %238 in 0 : vector<16x16xf32>, vector<16x16xf32>, vector<16x16xf32>, vector<16x16xf32>, vector<16x16xf32>, vector<16x16xf32>, vector<16x16xf32>, vector<16x16xf32>, vector<16x16xf32>, vector<16x16xf32>, vector<16x16xf32>, vector<16x16xf32>, vector<16x16xf32>, vector<16x16xf32>, vector<16x16xf32>, vector<16x16xf32> -> vector<256x16xf32>
    %240 = arith.truncf %239 : vector<256x16xf32> to vector<256x16xbf16>
    %cst_146 = arith.constant dense<0.000000e+00> : vector<32x16xf32>
    %241 = tpu.matmul %200, %240, %cst_146 {dimension_numbers = #tpu.dot_dimension_numbers<[1], [0], [0], [1], [0, 0, 1, 1], [], []>} : vector<32x256xbf16>, vector<256x16xbf16>, vector<32x16xf32> -> vector<32x16xf32>
    %242 = vector.broadcast %201 : vector<32x1xf32> to vector<32x16xf32>
    %243 = arith.addf %241, %242 : vector<32x16xf32>
    %cst_147 = arith.constant dense<0.000000e+00> : vector<32xf32>
    %244 = vector.multi_reduction <add>, %222, %cst_147 [1] : vector<32x16xf32> to vector<32xf32>
    %245 = vector.shape_cast %244 : vector<32xf32> to vector<32x1xf32>
    %cst_148 = arith.constant 1.600000e+01 : f32
    %246 = vector.broadcast %cst_148 : f32 to vector<32x1xf32>
    %247 = arith.divf %245, %246 : vector<32x1xf32>
    %248 = vector.broadcast %247 : vector<32x1xf32> to vector<32x16xf32>
    %249 = arith.subf %222, %248 : vector<32x16xf32>
    %250 = arith.mulf %249, %249 : vector<32x16xf32>
    %cst_149 = arith.constant dense<0.000000e+00> : vector<32xf32>
    %251 = vector.multi_reduction <add>, %250, %cst_149 [1] : vector<32x16xf32> to vector<32xf32>
    %252 = vector.shape_cast %251 : vector<32xf32> to vector<32x1xf32>
    %cst_150 = arith.constant 1.600000e+01 : f32
    %253 = vector.broadcast %cst_150 : f32 to vector<32x1xf32>
    %254 = arith.divf %252, %253 : vector<32x1xf32>
    %cst_151 = arith.constant 9.99999974E-6 : f32
    %255 = vector.broadcast %cst_151 : f32 to vector<32x1xf32>
    %256 = arith.addf %254, %255 : vector<32x1xf32>
    %257 = math.rsqrt %256 : vector<32x1xf32>
    %258 = vector.broadcast %257 : vector<32x1xf32> to vector<32x16xf32>
    %259 = arith.mulf %249, %258 : vector<32x16xf32>
    %cst_152 = arith.constant 0.000000e+00 : f32
    %260 = vector.broadcast %cst_152 : f32 to vector<32x16xf32>
    %261 = arith.cmpf oge, %259, %260 : vector<32x16xf32>
    %cst_153 = arith.constant 2.000000e-01 : f32
    %262 = vector.broadcast %cst_153 : f32 to vector<32x16xf32>
    %263 = arith.mulf %262, %259 : vector<32x16xf32>
    %264 = arith.select %261, %259, %263 : vector<32x16xi1>, vector<32x16xf32>
    %cst_154 = arith.constant dense<0.000000e+00> : vector<32xf32>
    %265 = vector.multi_reduction <add>, %243, %cst_154 [1] : vector<32x16xf32> to vector<32xf32>
    %266 = vector.shape_cast %265 : vector<32xf32> to vector<32x1xf32>
    %cst_155 = arith.constant 1.600000e+01 : f32
    %267 = vector.broadcast %cst_155 : f32 to vector<32x1xf32>
    %268 = arith.divf %266, %267 : vector<32x1xf32>
    %269 = vector.broadcast %268 : vector<32x1xf32> to vector<32x16xf32>
    %270 = arith.subf %243, %269 : vector<32x16xf32>
    %271 = arith.mulf %270, %270 : vector<32x16xf32>
    %cst_156 = arith.constant dense<0.000000e+00> : vector<32xf32>
    %272 = vector.multi_reduction <add>, %271, %cst_156 [1] : vector<32x16xf32> to vector<32xf32>
    %273 = vector.shape_cast %272 : vector<32xf32> to vector<32x1xf32>
    %cst_157 = arith.constant 1.600000e+01 : f32
    %274 = vector.broadcast %cst_157 : f32 to vector<32x1xf32>
    %275 = arith.divf %273, %274 : vector<32x1xf32>
    %cst_158 = arith.constant 9.99999974E-6 : f32
    %276 = vector.broadcast %cst_158 : f32 to vector<32x1xf32>
    %277 = arith.addf %275, %276 : vector<32x1xf32>
    %278 = math.rsqrt %277 : vector<32x1xf32>
    %279 = vector.broadcast %278 : vector<32x1xf32> to vector<32x16xf32>
    %280 = arith.mulf %270, %279 : vector<32x16xf32>
    %cst_159 = arith.constant 0.000000e+00 : f32
    %281 = vector.broadcast %cst_159 : f32 to vector<32x16xf32>
    %282 = arith.cmpf oge, %280, %281 : vector<32x16xf32>
    %cst_160 = arith.constant 2.000000e-01 : f32
    %283 = vector.broadcast %cst_160 : f32 to vector<32x16xf32>
    %284 = arith.mulf %283, %280 : vector<32x16xf32>
    %285 = arith.select %282, %280, %284 : vector<32x16xi1>, vector<32x16xf32>
    %286 = tpu.concatenate %264, %285 in 0 : vector<32x16xf32>, vector<32x16xf32> -> vector<64x16xf32>
    %287 = arith.truncf %286 : vector<64x16xf32> to vector<64x16xbf16>
    %c0_161 = arith.constant 0 : index
    %c0_162 = arith.constant 0 : index
    %c0_163 = arith.constant 0 : index
    %288 = vector.load %arg12[%c0_161, %c0_162, %c0_163] : memref<16x16x9xbf16, #tpu.memory_space<vmem>>, vector<1x16x9xbf16>
    %289 = vector.shape_cast %288 : vector<1x16x9xbf16> to vector<16x9xbf16>
    %cst_164 = arith.constant dense<0.000000e+00> : vector<64x9xf32>
    %290 = tpu.matmul %287, %289, %cst_164 {dimension_numbers = #tpu.dot_dimension_numbers<[1], [0], [0], [1], [0, 0, 1, 1], [], []>} : vector<64x16xbf16>, vector<16x9xbf16>, vector<64x9xf32> -> vector<64x9xf32>
    %c1_165 = arith.constant 1 : index
    %c0_166 = arith.constant 0 : index
    %c0_167 = arith.constant 0 : index
    %291 = vector.load %arg12[%c1_165, %c0_166, %c0_167] : memref<16x16x9xbf16, #tpu.memory_space<vmem>>, vector<1x16x9xbf16>
    %292 = vector.shape_cast %291 : vector<1x16x9xbf16> to vector<16x9xbf16>
    %cst_168 = arith.constant dense<0.000000e+00> : vector<64x9xf32>
    %293 = tpu.matmul %287, %292, %cst_168 {dimension_numbers = #tpu.dot_dimension_numbers<[1], [0], [0], [1], [0, 0, 1, 1], [], []>} : vector<64x16xbf16>, vector<16x9xbf16>, vector<64x9xf32> -> vector<64x9xf32>
    %c2_169 = arith.constant 2 : index
    %c0_170 = arith.constant 0 : index
    %c0_171 = arith.constant 0 : index
    %294 = vector.load %arg12[%c2_169, %c0_170, %c0_171] : memref<16x16x9xbf16, #tpu.memory_space<vmem>>, vector<1x16x9xbf16>
    %295 = vector.shape_cast %294 : vector<1x16x9xbf16> to vector<16x9xbf16>
    %cst_172 = arith.constant dense<0.000000e+00> : vector<64x9xf32>
    %296 = tpu.matmul %287, %295, %cst_172 {dimension_numbers = #tpu.dot_dimension_numbers<[1], [0], [0], [1], [0, 0, 1, 1], [], []>} : vector<64x16xbf16>, vector<16x9xbf16>, vector<64x9xf32> -> vector<64x9xf32>
    %c3_173 = arith.constant 3 : index
    %c0_174 = arith.constant 0 : index
    %c0_175 = arith.constant 0 : index
    %297 = vector.load %arg12[%c3_173, %c0_174, %c0_175] : memref<16x16x9xbf16, #tpu.memory_space<vmem>>, vector<1x16x9xbf16>
    %298 = vector.shape_cast %297 : vector<1x16x9xbf16> to vector<16x9xbf16>
    %cst_176 = arith.constant dense<0.000000e+00> : vector<64x9xf32>
    %299 = tpu.matmul %287, %298, %cst_176 {dimension_numbers = #tpu.dot_dimension_numbers<[1], [0], [0], [1], [0, 0, 1, 1], [], []>} : vector<64x16xbf16>, vector<16x9xbf16>, vector<64x9xf32> -> vector<64x9xf32>
    %c4_177 = arith.constant 4 : index
    %c0_178 = arith.constant 0 : index
    %c0_179 = arith.constant 0 : index
    %300 = vector.load %arg12[%c4_177, %c0_178, %c0_179] : memref<16x16x9xbf16, #tpu.memory_space<vmem>>, vector<1x16x9xbf16>
    %301 = vector.shape_cast %300 : vector<1x16x9xbf16> to vector<16x9xbf16>
    %cst_180 = arith.constant dense<0.000000e+00> : vector<64x9xf32>
    %302 = tpu.matmul %287, %301, %cst_180 {dimension_numbers = #tpu.dot_dimension_numbers<[1], [0], [0], [1], [0, 0, 1, 1], [], []>} : vector<64x16xbf16>, vector<16x9xbf16>, vector<64x9xf32> -> vector<64x9xf32>
    %c5_181 = arith.constant 5 : index
    %c0_182 = arith.constant 0 : index
    %c0_183 = arith.constant 0 : index
    %303 = vector.load %arg12[%c5_181, %c0_182, %c0_183] : memref<16x16x9xbf16, #tpu.memory_space<vmem>>, vector<1x16x9xbf16>
    %304 = vector.shape_cast %303 : vector<1x16x9xbf16> to vector<16x9xbf16>
    %cst_184 = arith.constant dense<0.000000e+00> : vector<64x9xf32>
    %305 = tpu.matmul %287, %304, %cst_184 {dimension_numbers = #tpu.dot_dimension_numbers<[1], [0], [0], [1], [0, 0, 1, 1], [], []>} : vector<64x16xbf16>, vector<16x9xbf16>, vector<64x9xf32> -> vector<64x9xf32>
    %c6_185 = arith.constant 6 : index
    %c0_186 = arith.constant 0 : index
    %c0_187 = arith.constant 0 : index
    %306 = vector.load %arg12[%c6_185, %c0_186, %c0_187] : memref<16x16x9xbf16, #tpu.memory_space<vmem>>, vector<1x16x9xbf16>
    %307 = vector.shape_cast %306 : vector<1x16x9xbf16> to vector<16x9xbf16>
    %cst_188 = arith.constant dense<0.000000e+00> : vector<64x9xf32>
    %308 = tpu.matmul %287, %307, %cst_188 {dimension_numbers = #tpu.dot_dimension_numbers<[1], [0], [0], [1], [0, 0, 1, 1], [], []>} : vector<64x16xbf16>, vector<16x9xbf16>, vector<64x9xf32> -> vector<64x9xf32>
    %c7_189 = arith.constant 7 : index
    %c0_190 = arith.constant 0 : index
    %c0_191 = arith.constant 0 : index
    %309 = vector.load %arg12[%c7_189, %c0_190, %c0_191] : memref<16x16x9xbf16, #tpu.memory_space<vmem>>, vector<1x16x9xbf16>
    %310 = vector.shape_cast %309 : vector<1x16x9xbf16> to vector<16x9xbf16>
    %cst_192 = arith.constant dense<0.000000e+00> : vector<64x9xf32>
    %311 = tpu.matmul %287, %310, %cst_192 {dimension_numbers = #tpu.dot_dimension_numbers<[1], [0], [0], [1], [0, 0, 1, 1], [], []>} : vector<64x16xbf16>, vector<16x9xbf16>, vector<64x9xf32> -> vector<64x9xf32>
    %c8_193 = arith.constant 8 : index
    %c0_194 = arith.constant 0 : index
    %c0_195 = arith.constant 0 : index
    %312 = vector.load %arg12[%c8_193, %c0_194, %c0_195] : memref<16x16x9xbf16, #tpu.memory_space<vmem>>, vector<1x16x9xbf16>
    %313 = vector.shape_cast %312 : vector<1x16x9xbf16> to vector<16x9xbf16>
    %cst_196 = arith.constant dense<0.000000e+00> : vector<64x9xf32>
    %314 = tpu.matmul %287, %313, %cst_196 {dimension_numbers = #tpu.dot_dimension_numbers<[1], [0], [0], [1], [0, 0, 1, 1], [], []>} : vector<64x16xbf16>, vector<16x9xbf16>, vector<64x9xf32> -> vector<64x9xf32>
    %c9_197 = arith.constant 9 : index
    %c0_198 = arith.constant 0 : index
    %c0_199 = arith.constant 0 : index
    %315 = vector.load %arg12[%c9_197, %c0_198, %c0_199] : memref<16x16x9xbf16, #tpu.memory_space<vmem>>, vector<1x16x9xbf16>
    %316 = vector.shape_cast %315 : vector<1x16x9xbf16> to vector<16x9xbf16>
    %cst_200 = arith.constant dense<0.000000e+00> : vector<64x9xf32>
    %317 = tpu.matmul %287, %316, %cst_200 {dimension_numbers = #tpu.dot_dimension_numbers<[1], [0], [0], [1], [0, 0, 1, 1], [], []>} : vector<64x16xbf16>, vector<16x9xbf16>, vector<64x9xf32> -> vector<64x9xf32>
    %c10_201 = arith.constant 10 : index
    %c0_202 = arith.constant 0 : index
    %c0_203 = arith.constant 0 : index
    %318 = vector.load %arg12[%c10_201, %c0_202, %c0_203] : memref<16x16x9xbf16, #tpu.memory_space<vmem>>, vector<1x16x9xbf16>
    %319 = vector.shape_cast %318 : vector<1x16x9xbf16> to vector<16x9xbf16>
    %cst_204 = arith.constant dense<0.000000e+00> : vector<64x9xf32>
    %320 = tpu.matmul %287, %319, %cst_204 {dimension_numbers = #tpu.dot_dimension_numbers<[1], [0], [0], [1], [0, 0, 1, 1], [], []>} : vector<64x16xbf16>, vector<16x9xbf16>, vector<64x9xf32> -> vector<64x9xf32>
    %c11_205 = arith.constant 11 : index
    %c0_206 = arith.constant 0 : index
    %c0_207 = arith.constant 0 : index
    %321 = vector.load %arg12[%c11_205, %c0_206, %c0_207] : memref<16x16x9xbf16, #tpu.memory_space<vmem>>, vector<1x16x9xbf16>
    %322 = vector.shape_cast %321 : vector<1x16x9xbf16> to vector<16x9xbf16>
    %cst_208 = arith.constant dense<0.000000e+00> : vector<64x9xf32>
    %323 = tpu.matmul %287, %322, %cst_208 {dimension_numbers = #tpu.dot_dimension_numbers<[1], [0], [0], [1], [0, 0, 1, 1], [], []>} : vector<64x16xbf16>, vector<16x9xbf16>, vector<64x9xf32> -> vector<64x9xf32>
    %c12_209 = arith.constant 12 : index
    %c0_210 = arith.constant 0 : index
    %c0_211 = arith.constant 0 : index
    %324 = vector.load %arg12[%c12_209, %c0_210, %c0_211] : memref<16x16x9xbf16, #tpu.memory_space<vmem>>, vector<1x16x9xbf16>
    %325 = vector.shape_cast %324 : vector<1x16x9xbf16> to vector<16x9xbf16>
    %cst_212 = arith.constant dense<0.000000e+00> : vector<64x9xf32>
    %326 = tpu.matmul %287, %325, %cst_212 {dimension_numbers = #tpu.dot_dimension_numbers<[1], [0], [0], [1], [0, 0, 1, 1], [], []>} : vector<64x16xbf16>, vector<16x9xbf16>, vector<64x9xf32> -> vector<64x9xf32>
    %c13_213 = arith.constant 13 : index
    %c0_214 = arith.constant 0 : index
    %c0_215 = arith.constant 0 : index
    %327 = vector.load %arg12[%c13_213, %c0_214, %c0_215] : memref<16x16x9xbf16, #tpu.memory_space<vmem>>, vector<1x16x9xbf16>
    %328 = vector.shape_cast %327 : vector<1x16x9xbf16> to vector<16x9xbf16>
    %cst_216 = arith.constant dense<0.000000e+00> : vector<64x9xf32>
    %329 = tpu.matmul %287, %328, %cst_216 {dimension_numbers = #tpu.dot_dimension_numbers<[1], [0], [0], [1], [0, 0, 1, 1], [], []>} : vector<64x16xbf16>, vector<16x9xbf16>, vector<64x9xf32> -> vector<64x9xf32>
    %c14_217 = arith.constant 14 : index
    %c0_218 = arith.constant 0 : index
    %c0_219 = arith.constant 0 : index
    %330 = vector.load %arg12[%c14_217, %c0_218, %c0_219] : memref<16x16x9xbf16, #tpu.memory_space<vmem>>, vector<1x16x9xbf16>
    %331 = vector.shape_cast %330 : vector<1x16x9xbf16> to vector<16x9xbf16>
    %cst_220 = arith.constant dense<0.000000e+00> : vector<64x9xf32>
    %332 = tpu.matmul %287, %331, %cst_220 {dimension_numbers = #tpu.dot_dimension_numbers<[1], [0], [0], [1], [0, 0, 1, 1], [], []>} : vector<64x16xbf16>, vector<16x9xbf16>, vector<64x9xf32> -> vector<64x9xf32>
    %c15_221 = arith.constant 15 : index
    %c0_222 = arith.constant 0 : index
    %c0_223 = arith.constant 0 : index
    %333 = vector.load %arg12[%c15_221, %c0_222, %c0_223] : memref<16x16x9xbf16, #tpu.memory_space<vmem>>, vector<1x16x9xbf16>
    %334 = vector.shape_cast %333 : vector<1x16x9xbf16> to vector<16x9xbf16>
    %cst_224 = arith.constant dense<0.000000e+00> : vector<64x9xf32>
    %335 = tpu.matmul %287, %334, %cst_224 {dimension_numbers = #tpu.dot_dimension_numbers<[1], [0], [0], [1], [0, 0, 1, 1], [], []>} : vector<64x16xbf16>, vector<16x9xbf16>, vector<64x9xf32> -> vector<64x9xf32>
    %c0_225 = arith.constant 0 : index
    %c0_226 = arith.constant 0 : index
    %336 = vector.load %arg10[%c0_225, %c0_226] : memref<64x512xbf16, #tpu.memory_space<vmem>>, vector<64x512xbf16>
    %c0_227 = arith.constant 0 : index
    %c0_228 = arith.constant 0 : index
    %337 = vector.load %arg11[%c0_227, %c0_228] : memref<64x1xf32, #tpu.memory_space<vmem>>, vector<64x1xf32>
    %338 = vector.extract_strided_slice %290 {offsets = [0, 0], sizes = [32, 9], strides = [1, 1]} : vector<64x9xf32> to vector<32x9xf32>
    %339 = vector.extract_strided_slice %293 {offsets = [0, 0], sizes = [32, 9], strides = [1, 1]} : vector<64x9xf32> to vector<32x9xf32>
    %340 = vector.extract_strided_slice %296 {offsets = [0, 0], sizes = [32, 9], strides = [1, 1]} : vector<64x9xf32> to vector<32x9xf32>
    %341 = vector.extract_strided_slice %299 {offsets = [0, 0], sizes = [32, 9], strides = [1, 1]} : vector<64x9xf32> to vector<32x9xf32>
    %342 = vector.extract_strided_slice %302 {offsets = [0, 0], sizes = [32, 9], strides = [1, 1]} : vector<64x9xf32> to vector<32x9xf32>
    %343 = vector.extract_strided_slice %305 {offsets = [0, 0], sizes = [32, 9], strides = [1, 1]} : vector<64x9xf32> to vector<32x9xf32>
    %344 = vector.extract_strided_slice %308 {offsets = [0, 0], sizes = [32, 9], strides = [1, 1]} : vector<64x9xf32> to vector<32x9xf32>
    %345 = vector.extract_strided_slice %311 {offsets = [0, 0], sizes = [32, 9], strides = [1, 1]} : vector<64x9xf32> to vector<32x9xf32>
    %346 = vector.extract_strided_slice %314 {offsets = [0, 0], sizes = [32, 9], strides = [1, 1]} : vector<64x9xf32> to vector<32x9xf32>
    %347 = vector.extract_strided_slice %317 {offsets = [0, 0], sizes = [32, 9], strides = [1, 1]} : vector<64x9xf32> to vector<32x9xf32>
    %348 = vector.extract_strided_slice %320 {offsets = [0, 0], sizes = [32, 9], strides = [1, 1]} : vector<64x9xf32> to vector<32x9xf32>
    %349 = vector.extract_strided_slice %323 {offsets = [0, 0], sizes = [32, 9], strides = [1, 1]} : vector<64x9xf32> to vector<32x9xf32>
    %350 = vector.extract_strided_slice %326 {offsets = [0, 0], sizes = [32, 9], strides = [1, 1]} : vector<64x9xf32> to vector<32x9xf32>
    %351 = vector.extract_strided_slice %329 {offsets = [0, 0], sizes = [32, 9], strides = [1, 1]} : vector<64x9xf32> to vector<32x9xf32>
    %352 = vector.extract_strided_slice %332 {offsets = [0, 0], sizes = [32, 9], strides = [1, 1]} : vector<64x9xf32> to vector<32x9xf32>
    %353 = vector.extract_strided_slice %335 {offsets = [0, 0], sizes = [32, 9], strides = [1, 1]} : vector<64x9xf32> to vector<32x9xf32>
    %354 = tpu.concatenate %338, %339, %340, %341, %342, %343, %344, %345, %346, %347, %348, %349, %350, %351, %352, %353 in 0 : vector<32x9xf32>, vector<32x9xf32>, vector<32x9xf32>, vector<32x9xf32>, vector<32x9xf32>, vector<32x9xf32>, vector<32x9xf32>, vector<32x9xf32>, vector<32x9xf32>, vector<32x9xf32>, vector<32x9xf32>, vector<32x9xf32>, vector<32x9xf32>, vector<32x9xf32>, vector<32x9xf32>, vector<32x9xf32> -> vector<512x9xf32>
    %355 = arith.truncf %354 : vector<512x9xf32> to vector<512x9xbf16>
    %cst_229 = arith.constant dense<0.000000e+00> : vector<64x9xf32>
    %356 = tpu.matmul %336, %355, %cst_229 {dimension_numbers = #tpu.dot_dimension_numbers<[1], [0], [0], [1], [0, 0, 1, 1], [], []>} : vector<64x512xbf16>, vector<512x9xbf16>, vector<64x9xf32> -> vector<64x9xf32>
    %357 = vector.broadcast %337 : vector<64x1xf32> to vector<64x9xf32>
    %358 = arith.addf %356, %357 : vector<64x9xf32>
    %359 = vector.extract_strided_slice %290 {offsets = [32, 0], sizes = [32, 9], strides = [1, 1]} : vector<64x9xf32> to vector<32x9xf32>
    %360 = vector.extract_strided_slice %293 {offsets = [32, 0], sizes = [32, 9], strides = [1, 1]} : vector<64x9xf32> to vector<32x9xf32>
    %361 = vector.extract_strided_slice %296 {offsets = [32, 0], sizes = [32, 9], strides = [1, 1]} : vector<64x9xf32> to vector<32x9xf32>
    %362 = vector.extract_strided_slice %299 {offsets = [32, 0], sizes = [32, 9], strides = [1, 1]} : vector<64x9xf32> to vector<32x9xf32>
    %363 = vector.extract_strided_slice %302 {offsets = [32, 0], sizes = [32, 9], strides = [1, 1]} : vector<64x9xf32> to vector<32x9xf32>
    %364 = vector.extract_strided_slice %305 {offsets = [32, 0], sizes = [32, 9], strides = [1, 1]} : vector<64x9xf32> to vector<32x9xf32>
    %365 = vector.extract_strided_slice %308 {offsets = [32, 0], sizes = [32, 9], strides = [1, 1]} : vector<64x9xf32> to vector<32x9xf32>
    %366 = vector.extract_strided_slice %311 {offsets = [32, 0], sizes = [32, 9], strides = [1, 1]} : vector<64x9xf32> to vector<32x9xf32>
    %367 = vector.extract_strided_slice %314 {offsets = [32, 0], sizes = [32, 9], strides = [1, 1]} : vector<64x9xf32> to vector<32x9xf32>
    %368 = vector.extract_strided_slice %317 {offsets = [32, 0], sizes = [32, 9], strides = [1, 1]} : vector<64x9xf32> to vector<32x9xf32>
    %369 = vector.extract_strided_slice %320 {offsets = [32, 0], sizes = [32, 9], strides = [1, 1]} : vector<64x9xf32> to vector<32x9xf32>
    %370 = vector.extract_strided_slice %323 {offsets = [32, 0], sizes = [32, 9], strides = [1, 1]} : vector<64x9xf32> to vector<32x9xf32>
    %371 = vector.extract_strided_slice %326 {offsets = [32, 0], sizes = [32, 9], strides = [1, 1]} : vector<64x9xf32> to vector<32x9xf32>
    %372 = vector.extract_strided_slice %329 {offsets = [32, 0], sizes = [32, 9], strides = [1, 1]} : vector<64x9xf32> to vector<32x9xf32>
    %373 = vector.extract_strided_slice %332 {offsets = [32, 0], sizes = [32, 9], strides = [1, 1]} : vector<64x9xf32> to vector<32x9xf32>
    %374 = vector.extract_strided_slice %335 {offsets = [32, 0], sizes = [32, 9], strides = [1, 1]} : vector<64x9xf32> to vector<32x9xf32>
    %375 = tpu.concatenate %359, %360, %361, %362, %363, %364, %365, %366, %367, %368, %369, %370, %371, %372, %373, %374 in 0 : vector<32x9xf32>, vector<32x9xf32>, vector<32x9xf32>, vector<32x9xf32>, vector<32x9xf32>, vector<32x9xf32>, vector<32x9xf32>, vector<32x9xf32>, vector<32x9xf32>, vector<32x9xf32>, vector<32x9xf32>, vector<32x9xf32>, vector<32x9xf32>, vector<32x9xf32>, vector<32x9xf32>, vector<32x9xf32> -> vector<512x9xf32>
    %376 = arith.truncf %375 : vector<512x9xf32> to vector<512x9xbf16>
    %cst_230 = arith.constant dense<0.000000e+00> : vector<64x9xf32>
    %377 = tpu.matmul %336, %376, %cst_230 {dimension_numbers = #tpu.dot_dimension_numbers<[1], [0], [0], [1], [0, 0, 1, 1], [], []>} : vector<64x512xbf16>, vector<512x9xbf16>, vector<64x9xf32> -> vector<64x9xf32>
    %378 = vector.broadcast %337 : vector<64x1xf32> to vector<64x9xf32>
    %379 = arith.addf %377, %378 : vector<64x9xf32>
    %cst_231 = arith.constant dense<0.000000e+00> : vector<64xf32>
    %380 = vector.multi_reduction <add>, %358, %cst_231 [1] : vector<64x9xf32> to vector<64xf32>
    %381 = vector.shape_cast %380 : vector<64xf32> to vector<64x1xf32>
    %cst_232 = arith.constant 9.000000e+00 : f32
    %382 = vector.broadcast %cst_232 : f32 to vector<64x1xf32>
    %383 = arith.divf %381, %382 : vector<64x1xf32>
    %384 = vector.broadcast %383 : vector<64x1xf32> to vector<64x9xf32>
    %385 = arith.subf %358, %384 : vector<64x9xf32>
    %386 = arith.mulf %385, %385 : vector<64x9xf32>
    %cst_233 = arith.constant dense<0.000000e+00> : vector<64xf32>
    %387 = vector.multi_reduction <add>, %386, %cst_233 [1] : vector<64x9xf32> to vector<64xf32>
    %388 = vector.shape_cast %387 : vector<64xf32> to vector<64x1xf32>
    %cst_234 = arith.constant 9.000000e+00 : f32
    %389 = vector.broadcast %cst_234 : f32 to vector<64x1xf32>
    %390 = arith.divf %388, %389 : vector<64x1xf32>
    %cst_235 = arith.constant 9.99999974E-6 : f32
    %391 = vector.broadcast %cst_235 : f32 to vector<64x1xf32>
    %392 = arith.addf %390, %391 : vector<64x1xf32>
    %393 = math.rsqrt %392 : vector<64x1xf32>
    %394 = vector.broadcast %393 : vector<64x1xf32> to vector<64x9xf32>
    %395 = arith.mulf %385, %394 : vector<64x9xf32>
    %cst_236 = arith.constant 0.000000e+00 : f32
    %396 = vector.broadcast %cst_236 : f32 to vector<64x9xf32>
    %397 = arith.cmpf oge, %395, %396 : vector<64x9xf32>
    %cst_237 = arith.constant 2.000000e-01 : f32
    %398 = vector.broadcast %cst_237 : f32 to vector<64x9xf32>
    %399 = arith.mulf %398, %395 : vector<64x9xf32>
    %400 = arith.select %397, %395, %399 : vector<64x9xi1>, vector<64x9xf32>
    %cst_238 = arith.constant dense<0.000000e+00> : vector<64xf32>
    %401 = vector.multi_reduction <add>, %379, %cst_238 [1] : vector<64x9xf32> to vector<64xf32>
    %402 = vector.shape_cast %401 : vector<64xf32> to vector<64x1xf32>
    %cst_239 = arith.constant 9.000000e+00 : f32
    %403 = vector.broadcast %cst_239 : f32 to vector<64x1xf32>
    %404 = arith.divf %402, %403 : vector<64x1xf32>
    %405 = vector.broadcast %404 : vector<64x1xf32> to vector<64x9xf32>
    %406 = arith.subf %379, %405 : vector<64x9xf32>
    %407 = arith.mulf %406, %406 : vector<64x9xf32>
    %cst_240 = arith.constant dense<0.000000e+00> : vector<64xf32>
    %408 = vector.multi_reduction <add>, %407, %cst_240 [1] : vector<64x9xf32> to vector<64xf32>
    %409 = vector.shape_cast %408 : vector<64xf32> to vector<64x1xf32>
    %cst_241 = arith.constant 9.000000e+00 : f32
    %410 = vector.broadcast %cst_241 : f32 to vector<64x1xf32>
    %411 = arith.divf %409, %410 : vector<64x1xf32>
    %cst_242 = arith.constant 9.99999974E-6 : f32
    %412 = vector.broadcast %cst_242 : f32 to vector<64x1xf32>
    %413 = arith.addf %411, %412 : vector<64x1xf32>
    %414 = math.rsqrt %413 : vector<64x1xf32>
    %415 = vector.broadcast %414 : vector<64x1xf32> to vector<64x9xf32>
    %416 = arith.mulf %406, %415 : vector<64x9xf32>
    %cst_243 = arith.constant 0.000000e+00 : f32
    %417 = vector.broadcast %cst_243 : f32 to vector<64x9xf32>
    %418 = arith.cmpf oge, %416, %417 : vector<64x9xf32>
    %cst_244 = arith.constant 2.000000e-01 : f32
    %419 = vector.broadcast %cst_244 : f32 to vector<64x9xf32>
    %420 = arith.mulf %419, %416 : vector<64x9xf32>
    %421 = arith.select %418, %416, %420 : vector<64x9xi1>, vector<64x9xf32>
    %422 = tpu.concatenate %400, %421 in 0 : vector<64x9xf32>, vector<64x9xf32> -> vector<128x9xf32>
    %423 = arith.truncf %422 : vector<128x9xf32> to vector<128x9xbf16>
    %c0_245 = arith.constant 0 : index
    %c0_246 = arith.constant 0 : index
    %c0_247 = arith.constant 0 : index
    %424 = vector.load %arg15[%c0_245, %c0_246, %c0_247] : memref<16x9x4xbf16, #tpu.memory_space<vmem>>, vector<1x9x4xbf16>
    %425 = vector.shape_cast %424 : vector<1x9x4xbf16> to vector<9x4xbf16>
    %cst_248 = arith.constant dense<0.000000e+00> : vector<128x4xf32>
    %426 = tpu.matmul %423, %425, %cst_248 {dimension_numbers = #tpu.dot_dimension_numbers<[1], [0], [0], [1], [0, 0, 1, 1], [], []>} : vector<128x9xbf16>, vector<9x4xbf16>, vector<128x4xf32> -> vector<128x4xf32>
    %c1_249 = arith.constant 1 : index
    %c0_250 = arith.constant 0 : index
    %c0_251 = arith.constant 0 : index
    %427 = vector.load %arg15[%c1_249, %c0_250, %c0_251] : memref<16x9x4xbf16, #tpu.memory_space<vmem>>, vector<1x9x4xbf16>
    %428 = vector.shape_cast %427 : vector<1x9x4xbf16> to vector<9x4xbf16>
    %cst_252 = arith.constant dense<0.000000e+00> : vector<128x4xf32>
    %429 = tpu.matmul %423, %428, %cst_252 {dimension_numbers = #tpu.dot_dimension_numbers<[1], [0], [0], [1], [0, 0, 1, 1], [], []>} : vector<128x9xbf16>, vector<9x4xbf16>, vector<128x4xf32> -> vector<128x4xf32>
    %c2_253 = arith.constant 2 : index
    %c0_254 = arith.constant 0 : index
    %c0_255 = arith.constant 0 : index
    %430 = vector.load %arg15[%c2_253, %c0_254, %c0_255] : memref<16x9x4xbf16, #tpu.memory_space<vmem>>, vector<1x9x4xbf16>
    %431 = vector.shape_cast %430 : vector<1x9x4xbf16> to vector<9x4xbf16>
    %cst_256 = arith.constant dense<0.000000e+00> : vector<128x4xf32>
    %432 = tpu.matmul %423, %431, %cst_256 {dimension_numbers = #tpu.dot_dimension_numbers<[1], [0], [0], [1], [0, 0, 1, 1], [], []>} : vector<128x9xbf16>, vector<9x4xbf16>, vector<128x4xf32> -> vector<128x4xf32>
    %c3_257 = arith.constant 3 : index
    %c0_258 = arith.constant 0 : index
    %c0_259 = arith.constant 0 : index
    %433 = vector.load %arg15[%c3_257, %c0_258, %c0_259] : memref<16x9x4xbf16, #tpu.memory_space<vmem>>, vector<1x9x4xbf16>
    %434 = vector.shape_cast %433 : vector<1x9x4xbf16> to vector<9x4xbf16>
    %cst_260 = arith.constant dense<0.000000e+00> : vector<128x4xf32>
    %435 = tpu.matmul %423, %434, %cst_260 {dimension_numbers = #tpu.dot_dimension_numbers<[1], [0], [0], [1], [0, 0, 1, 1], [], []>} : vector<128x9xbf16>, vector<9x4xbf16>, vector<128x4xf32> -> vector<128x4xf32>
    %c4_261 = arith.constant 4 : index
    %c0_262 = arith.constant 0 : index
    %c0_263 = arith.constant 0 : index
    %436 = vector.load %arg15[%c4_261, %c0_262, %c0_263] : memref<16x9x4xbf16, #tpu.memory_space<vmem>>, vector<1x9x4xbf16>
    %437 = vector.shape_cast %436 : vector<1x9x4xbf16> to vector<9x4xbf16>
    %cst_264 = arith.constant dense<0.000000e+00> : vector<128x4xf32>
    %438 = tpu.matmul %423, %437, %cst_264 {dimension_numbers = #tpu.dot_dimension_numbers<[1], [0], [0], [1], [0, 0, 1, 1], [], []>} : vector<128x9xbf16>, vector<9x4xbf16>, vector<128x4xf32> -> vector<128x4xf32>
    %c5_265 = arith.constant 5 : index
    %c0_266 = arith.constant 0 : index
    %c0_267 = arith.constant 0 : index
    %439 = vector.load %arg15[%c5_265, %c0_266, %c0_267] : memref<16x9x4xbf16, #tpu.memory_space<vmem>>, vector<1x9x4xbf16>
    %440 = vector.shape_cast %439 : vector<1x9x4xbf16> to vector<9x4xbf16>
    %cst_268 = arith.constant dense<0.000000e+00> : vector<128x4xf32>
    %441 = tpu.matmul %423, %440, %cst_268 {dimension_numbers = #tpu.dot_dimension_numbers<[1], [0], [0], [1], [0, 0, 1, 1], [], []>} : vector<128x9xbf16>, vector<9x4xbf16>, vector<128x4xf32> -> vector<128x4xf32>
    %c6_269 = arith.constant 6 : index
    %c0_270 = arith.constant 0 : index
    %c0_271 = arith.constant 0 : index
    %442 = vector.load %arg15[%c6_269, %c0_270, %c0_271] : memref<16x9x4xbf16, #tpu.memory_space<vmem>>, vector<1x9x4xbf16>
    %443 = vector.shape_cast %442 : vector<1x9x4xbf16> to vector<9x4xbf16>
    %cst_272 = arith.constant dense<0.000000e+00> : vector<128x4xf32>
    %444 = tpu.matmul %423, %443, %cst_272 {dimension_numbers = #tpu.dot_dimension_numbers<[1], [0], [0], [1], [0, 0, 1, 1], [], []>} : vector<128x9xbf16>, vector<9x4xbf16>, vector<128x4xf32> -> vector<128x4xf32>
    %c7_273 = arith.constant 7 : index
    %c0_274 = arith.constant 0 : index
    %c0_275 = arith.constant 0 : index
    %445 = vector.load %arg15[%c7_273, %c0_274, %c0_275] : memref<16x9x4xbf16, #tpu.memory_space<vmem>>, vector<1x9x4xbf16>
    %446 = vector.shape_cast %445 : vector<1x9x4xbf16> to vector<9x4xbf16>
    %cst_276 = arith.constant dense<0.000000e+00> : vector<128x4xf32>
    %447 = tpu.matmul %423, %446, %cst_276 {dimension_numbers = #tpu.dot_dimension_numbers<[1], [0], [0], [1], [0, 0, 1, 1], [], []>} : vector<128x9xbf16>, vector<9x4xbf16>, vector<128x4xf32> -> vector<128x4xf32>
    %c8_277 = arith.constant 8 : index
    %c0_278 = arith.constant 0 : index
    %c0_279 = arith.constant 0 : index
    %448 = vector.load %arg15[%c8_277, %c0_278, %c0_279] : memref<16x9x4xbf16, #tpu.memory_space<vmem>>, vector<1x9x4xbf16>
    %449 = vector.shape_cast %448 : vector<1x9x4xbf16> to vector<9x4xbf16>
    %cst_280 = arith.constant dense<0.000000e+00> : vector<128x4xf32>
    %450 = tpu.matmul %423, %449, %cst_280 {dimension_numbers = #tpu.dot_dimension_numbers<[1], [0], [0], [1], [0, 0, 1, 1], [], []>} : vector<128x9xbf16>, vector<9x4xbf16>, vector<128x4xf32> -> vector<128x4xf32>
    %c9_281 = arith.constant 9 : index
    %c0_282 = arith.constant 0 : index
    %c0_283 = arith.constant 0 : index
    %451 = vector.load %arg15[%c9_281, %c0_282, %c0_283] : memref<16x9x4xbf16, #tpu.memory_space<vmem>>, vector<1x9x4xbf16>
    %452 = vector.shape_cast %451 : vector<1x9x4xbf16> to vector<9x4xbf16>
    %cst_284 = arith.constant dense<0.000000e+00> : vector<128x4xf32>
    %453 = tpu.matmul %423, %452, %cst_284 {dimension_numbers = #tpu.dot_dimension_numbers<[1], [0], [0], [1], [0, 0, 1, 1], [], []>} : vector<128x9xbf16>, vector<9x4xbf16>, vector<128x4xf32> -> vector<128x4xf32>
    %c10_285 = arith.constant 10 : index
    %c0_286 = arith.constant 0 : index
    %c0_287 = arith.constant 0 : index
    %454 = vector.load %arg15[%c10_285, %c0_286, %c0_287] : memref<16x9x4xbf16, #tpu.memory_space<vmem>>, vector<1x9x4xbf16>
    %455 = vector.shape_cast %454 : vector<1x9x4xbf16> to vector<9x4xbf16>
    %cst_288 = arith.constant dense<0.000000e+00> : vector<128x4xf32>
    %456 = tpu.matmul %423, %455, %cst_288 {dimension_numbers = #tpu.dot_dimension_numbers<[1], [0], [0], [1], [0, 0, 1, 1], [], []>} : vector<128x9xbf16>, vector<9x4xbf16>, vector<128x4xf32> -> vector<128x4xf32>
    %c11_289 = arith.constant 11 : index
    %c0_290 = arith.constant 0 : index
    %c0_291 = arith.constant 0 : index
    %457 = vector.load %arg15[%c11_289, %c0_290, %c0_291] : memref<16x9x4xbf16, #tpu.memory_space<vmem>>, vector<1x9x4xbf16>
    %458 = vector.shape_cast %457 : vector<1x9x4xbf16> to vector<9x4xbf16>
    %cst_292 = arith.constant dense<0.000000e+00> : vector<128x4xf32>
    %459 = tpu.matmul %423, %458, %cst_292 {dimension_numbers = #tpu.dot_dimension_numbers<[1], [0], [0], [1], [0, 0, 1, 1], [], []>} : vector<128x9xbf16>, vector<9x4xbf16>, vector<128x4xf32> -> vector<128x4xf32>
    %c12_293 = arith.constant 12 : index
    %c0_294 = arith.constant 0 : index
    %c0_295 = arith.constant 0 : index
    %460 = vector.load %arg15[%c12_293, %c0_294, %c0_295] : memref<16x9x4xbf16, #tpu.memory_space<vmem>>, vector<1x9x4xbf16>
    %461 = vector.shape_cast %460 : vector<1x9x4xbf16> to vector<9x4xbf16>
    %cst_296 = arith.constant dense<0.000000e+00> : vector<128x4xf32>
    %462 = tpu.matmul %423, %461, %cst_296 {dimension_numbers = #tpu.dot_dimension_numbers<[1], [0], [0], [1], [0, 0, 1, 1], [], []>} : vector<128x9xbf16>, vector<9x4xbf16>, vector<128x4xf32> -> vector<128x4xf32>
    %c13_297 = arith.constant 13 : index
    %c0_298 = arith.constant 0 : index
    %c0_299 = arith.constant 0 : index
    %463 = vector.load %arg15[%c13_297, %c0_298, %c0_299] : memref<16x9x4xbf16, #tpu.memory_space<vmem>>, vector<1x9x4xbf16>
    %464 = vector.shape_cast %463 : vector<1x9x4xbf16> to vector<9x4xbf16>
    %cst_300 = arith.constant dense<0.000000e+00> : vector<128x4xf32>
    %465 = tpu.matmul %423, %464, %cst_300 {dimension_numbers = #tpu.dot_dimension_numbers<[1], [0], [0], [1], [0, 0, 1, 1], [], []>} : vector<128x9xbf16>, vector<9x4xbf16>, vector<128x4xf32> -> vector<128x4xf32>
    %c14_301 = arith.constant 14 : index
    %c0_302 = arith.constant 0 : index
    %c0_303 = arith.constant 0 : index
    %466 = vector.load %arg15[%c14_301, %c0_302, %c0_303] : memref<16x9x4xbf16, #tpu.memory_space<vmem>>, vector<1x9x4xbf16>
    %467 = vector.shape_cast %466 : vector<1x9x4xbf16> to vector<9x4xbf16>
    %cst_304 = arith.constant dense<0.000000e+00> : vector<128x4xf32>
    %468 = tpu.matmul %423, %467, %cst_304 {dimension_numbers = #tpu.dot_dimension_numbers<[1], [0], [0], [1], [0, 0, 1, 1], [], []>} : vector<128x9xbf16>, vector<9x4xbf16>, vector<128x4xf32> -> vector<128x4xf32>
    %c15_305 = arith.constant 15 : index
    %c0_306 = arith.constant 0 : index
    %c0_307 = arith.constant 0 : index
    %469 = vector.load %arg15[%c15_305, %c0_306, %c0_307] : memref<16x9x4xbf16, #tpu.memory_space<vmem>>, vector<1x9x4xbf16>
    %470 = vector.shape_cast %469 : vector<1x9x4xbf16> to vector<9x4xbf16>
    %cst_308 = arith.constant dense<0.000000e+00> : vector<128x4xf32>
    %471 = tpu.matmul %423, %470, %cst_308 {dimension_numbers = #tpu.dot_dimension_numbers<[1], [0], [0], [1], [0, 0, 1, 1], [], []>} : vector<128x9xbf16>, vector<9x4xbf16>, vector<128x4xf32> -> vector<128x4xf32>
    %c0_309 = arith.constant 0 : index
    %c0_310 = arith.constant 0 : index
    %472 = vector.load %arg13[%c0_309, %c0_310] : memref<1x1024xbf16, #tpu.memory_space<vmem>>, vector<1x1024xbf16>
    %c0_311 = arith.constant 0 : index
    %c0_312 = arith.constant 0 : index
    %473 = vector.load %arg14[%c0_311, %c0_312] : memref<1x1xf32, #tpu.memory_space<vmem>>, vector<1x1xf32>
    %474 = vector.extract_strided_slice %426 {offsets = [0, 0], sizes = [64, 4], strides = [1, 1]} : vector<128x4xf32> to vector<64x4xf32>
    %475 = vector.extract_strided_slice %429 {offsets = [0, 0], sizes = [64, 4], strides = [1, 1]} : vector<128x4xf32> to vector<64x4xf32>
    %476 = vector.extract_strided_slice %432 {offsets = [0, 0], sizes = [64, 4], strides = [1, 1]} : vector<128x4xf32> to vector<64x4xf32>
    %477 = vector.extract_strided_slice %435 {offsets = [0, 0], sizes = [64, 4], strides = [1, 1]} : vector<128x4xf32> to vector<64x4xf32>
    %478 = vector.extract_strided_slice %438 {offsets = [0, 0], sizes = [64, 4], strides = [1, 1]} : vector<128x4xf32> to vector<64x4xf32>
    %479 = vector.extract_strided_slice %441 {offsets = [0, 0], sizes = [64, 4], strides = [1, 1]} : vector<128x4xf32> to vector<64x4xf32>
    %480 = vector.extract_strided_slice %444 {offsets = [0, 0], sizes = [64, 4], strides = [1, 1]} : vector<128x4xf32> to vector<64x4xf32>
    %481 = vector.extract_strided_slice %447 {offsets = [0, 0], sizes = [64, 4], strides = [1, 1]} : vector<128x4xf32> to vector<64x4xf32>
    %482 = vector.extract_strided_slice %450 {offsets = [0, 0], sizes = [64, 4], strides = [1, 1]} : vector<128x4xf32> to vector<64x4xf32>
    %483 = vector.extract_strided_slice %453 {offsets = [0, 0], sizes = [64, 4], strides = [1, 1]} : vector<128x4xf32> to vector<64x4xf32>
    %484 = vector.extract_strided_slice %456 {offsets = [0, 0], sizes = [64, 4], strides = [1, 1]} : vector<128x4xf32> to vector<64x4xf32>
    %485 = vector.extract_strided_slice %459 {offsets = [0, 0], sizes = [64, 4], strides = [1, 1]} : vector<128x4xf32> to vector<64x4xf32>
    %486 = vector.extract_strided_slice %462 {offsets = [0, 0], sizes = [64, 4], strides = [1, 1]} : vector<128x4xf32> to vector<64x4xf32>
    %487 = vector.extract_strided_slice %465 {offsets = [0, 0], sizes = [64, 4], strides = [1, 1]} : vector<128x4xf32> to vector<64x4xf32>
    %488 = vector.extract_strided_slice %468 {offsets = [0, 0], sizes = [64, 4], strides = [1, 1]} : vector<128x4xf32> to vector<64x4xf32>
    %489 = vector.extract_strided_slice %471 {offsets = [0, 0], sizes = [64, 4], strides = [1, 1]} : vector<128x4xf32> to vector<64x4xf32>
    %490 = tpu.concatenate %474, %475, %476, %477, %478, %479, %480, %481, %482, %483, %484, %485, %486, %487, %488, %489 in 0 : vector<64x4xf32>, vector<64x4xf32>, vector<64x4xf32>, vector<64x4xf32>, vector<64x4xf32>, vector<64x4xf32>, vector<64x4xf32>, vector<64x4xf32>, vector<64x4xf32>, vector<64x4xf32>, vector<64x4xf32>, vector<64x4xf32>, vector<64x4xf32>, vector<64x4xf32>, vector<64x4xf32>, vector<64x4xf32> -> vector<1024x4xf32>
    %491 = arith.truncf %490 : vector<1024x4xf32> to vector<1024x4xbf16>
    %cst_313 = arith.constant dense<0.000000e+00> : vector<1x4xf32>
    %492 = tpu.matmul %472, %491, %cst_313 {dimension_numbers = #tpu.dot_dimension_numbers<[1], [0], [0], [1], [0, 0, 1, 1], [], []>} : vector<1x1024xbf16>, vector<1024x4xbf16>, vector<1x4xf32> -> vector<1x4xf32>
    %493 = vector.broadcast %473 : vector<1x1xf32> to vector<1x4xf32>
    %494 = arith.addf %492, %493 : vector<1x4xf32>
    %495 = vector.extract_strided_slice %426 {offsets = [64, 0], sizes = [64, 4], strides = [1, 1]} : vector<128x4xf32> to vector<64x4xf32>
    %496 = vector.extract_strided_slice %429 {offsets = [64, 0], sizes = [64, 4], strides = [1, 1]} : vector<128x4xf32> to vector<64x4xf32>
    %497 = vector.extract_strided_slice %432 {offsets = [64, 0], sizes = [64, 4], strides = [1, 1]} : vector<128x4xf32> to vector<64x4xf32>
    %498 = vector.extract_strided_slice %435 {offsets = [64, 0], sizes = [64, 4], strides = [1, 1]} : vector<128x4xf32> to vector<64x4xf32>
    %499 = vector.extract_strided_slice %438 {offsets = [64, 0], sizes = [64, 4], strides = [1, 1]} : vector<128x4xf32> to vector<64x4xf32>
    %500 = vector.extract_strided_slice %441 {offsets = [64, 0], sizes = [64, 4], strides = [1, 1]} : vector<128x4xf32> to vector<64x4xf32>
    %501 = vector.extract_strided_slice %444 {offsets = [64, 0], sizes = [64, 4], strides = [1, 1]} : vector<128x4xf32> to vector<64x4xf32>
    %502 = vector.extract_strided_slice %447 {offsets = [64, 0], sizes = [64, 4], strides = [1, 1]} : vector<128x4xf32> to vector<64x4xf32>
    %503 = vector.extract_strided_slice %450 {offsets = [64, 0], sizes = [64, 4], strides = [1, 1]} : vector<128x4xf32> to vector<64x4xf32>
    %504 = vector.extract_strided_slice %453 {offsets = [64, 0], sizes = [64, 4], strides = [1, 1]} : vector<128x4xf32> to vector<64x4xf32>
    %505 = vector.extract_strided_slice %456 {offsets = [64, 0], sizes = [64, 4], strides = [1, 1]} : vector<128x4xf32> to vector<64x4xf32>
    %506 = vector.extract_strided_slice %459 {offsets = [64, 0], sizes = [64, 4], strides = [1, 1]} : vector<128x4xf32> to vector<64x4xf32>
    %507 = vector.extract_strided_slice %462 {offsets = [64, 0], sizes = [64, 4], strides = [1, 1]} : vector<128x4xf32> to vector<64x4xf32>
    %508 = vector.extract_strided_slice %465 {offsets = [64, 0], sizes = [64, 4], strides = [1, 1]} : vector<128x4xf32> to vector<64x4xf32>
    %509 = vector.extract_strided_slice %468 {offsets = [64, 0], sizes = [64, 4], strides = [1, 1]} : vector<128x4xf32> to vector<64x4xf32>
    %510 = vector.extract_strided_slice %471 {offsets = [64, 0], sizes = [64, 4], strides = [1, 1]} : vector<128x4xf32> to vector<64x4xf32>
    %511 = tpu.concatenate %495, %496, %497, %498, %499, %500, %501, %502, %503, %504, %505, %506, %507, %508, %509, %510 in 0 : vector<64x4xf32>, vector<64x4xf32>, vector<64x4xf32>, vector<64x4xf32>, vector<64x4xf32>, vector<64x4xf32>, vector<64x4xf32>, vector<64x4xf32>, vector<64x4xf32>, vector<64x4xf32>, vector<64x4xf32>, vector<64x4xf32>, vector<64x4xf32>, vector<64x4xf32>, vector<64x4xf32>, vector<64x4xf32> -> vector<1024x4xf32>
    %512 = arith.truncf %511 : vector<1024x4xf32> to vector<1024x4xbf16>
    %cst_314 = arith.constant dense<0.000000e+00> : vector<1x4xf32>
    %513 = tpu.matmul %472, %512, %cst_314 {dimension_numbers = #tpu.dot_dimension_numbers<[1], [0], [0], [1], [0, 0, 1, 1], [], []>} : vector<1x1024xbf16>, vector<1024x4xbf16>, vector<1x4xf32> -> vector<1x4xf32>
    %514 = vector.broadcast %473 : vector<1x1xf32> to vector<1x4xf32>
    %515 = arith.addf %513, %514 : vector<1x4xf32>
    %516 = arith.negf %494 : vector<1x4xf32>
    %517 = math.exp %516 : vector<1x4xf32>
    %cst_315 = arith.constant 1.000000e+00 : f32
    %518 = vector.broadcast %cst_315 : f32 to vector<1x4xf32>
    %519 = arith.addf %518, %517 : vector<1x4xf32>
    %520 = arith.divf %518, %519 : vector<1x4xf32>
    %521 = arith.negf %515 : vector<1x4xf32>
    %522 = math.exp %521 : vector<1x4xf32>
    %cst_316 = arith.constant 1.000000e+00 : f32
    %523 = vector.broadcast %cst_316 : f32 to vector<1x4xf32>
    %524 = arith.addf %523, %522 : vector<1x4xf32>
    %525 = arith.divf %523, %524 : vector<1x4xf32>
    %526 = tpu.concatenate %520, %525 in 1 : vector<1x4xf32>, vector<1x4xf32> -> vector<1x8xf32>
    %c0_317 = arith.constant 0 : index
    %c0_318 = arith.constant 0 : index
    %c0_319 = arith.constant 0 : index
    %527 = vector.load %arg16[%c0_317, %c0_318, %c0_319] : memref<1x1x8xf32, #tpu.memory_space<vmem>>, vector<1x1x8xf32>
    %528 = vector.shape_cast %527 : vector<1x1x8xf32> to vector<1x8xf32>
    %529 = vector.shape_cast %526 : vector<1x8xf32> to vector<1x1x8xf32>
    tpu.vector_store %arg16[%c0_317, %c0_318, %c0_319], %529 {strides = array<i32>} : memref<1x1x8xf32, #tpu.memory_space<vmem>>, vector<1x1x8xf32>,
    return
  }
  func.func @transform_0(%arg0: i32) -> (i32, i32, i32) {
    %c0_i32 = arith.constant 0 : i32
    %c0_i32_0 = arith.constant 0 : i32
    %c0_i32_1 = arith.constant 0 : i32
    return %arg0, %c0_i32, %c0_i32_0 : i32, i32, i32
  }
  func.func @transform_1(%arg0: i32) -> (i32, i32) {
    %c0_i32 = arith.constant 0 : i32
    %c0_i32_0 = arith.constant 0 : i32
    %c0_i32_1 = arith.constant 0 : i32
    return %c0_i32, %c0_i32_0 : i32, i32
  }
  func.func @transform_2(%arg0: i32) -> (i32, i32) {
    %c0_i32 = arith.constant 0 : i32
    %c0_i32_0 = arith.constant 0 : i32
    %c0_i32_1 = arith.constant 0 : i32
    return %c0_i32, %c0_i32_0 : i32, i32
  }
  func.func @transform_3(%arg0: i32) -> (i32, i32) {
    %c0_i32 = arith.constant 0 : i32
    %c0_i32_0 = arith.constant 0 : i32
    %c0_i32_1 = arith.constant 0 : i32
    return %c0_i32, %c0_i32_0 : i32, i32
  }
  func.func @transform_4(%arg0: i32) -> (i32, i32) {
    %c0_i32 = arith.constant 0 : i32
    %c0_i32_0 = arith.constant 0 : i32
    %c0_i32_1 = arith.constant 0 : i32
    return %c0_i32, %c0_i32_0 : i32, i32
  }
  func.func @transform_5(%arg0: i32) -> (i32, i32, i32) {
    %c0_i32 = arith.constant 0 : i32
    %c0_i32_0 = arith.constant 0 : i32
    %c0_i32_1 = arith.constant 0 : i32
    %c0_i32_2 = arith.constant 0 : i32
    return %c0_i32, %c0_i32_0, %c0_i32_1 : i32, i32, i32
  }
  func.func @transform_6(%arg0: i32) -> (i32, i32) {
    %c0_i32 = arith.constant 0 : i32
    %c0_i32_0 = arith.constant 0 : i32
    %c0_i32_1 = arith.constant 0 : i32
    return %c0_i32, %c0_i32_0 : i32, i32
  }
  func.func @transform_7(%arg0: i32) -> (i32, i32) {
    %c0_i32 = arith.constant 0 : i32
    %c0_i32_0 = arith.constant 0 : i32
    %c0_i32_1 = arith.constant 0 : i32
    return %c0_i32, %c0_i32_0 : i32, i32
  }
  func.func @transform_8(%arg0: i32) -> (i32, i32, i32) {
    %c0_i32 = arith.constant 0 : i32
    %c0_i32_0 = arith.constant 0 : i32
    %c0_i32_1 = arith.constant 0 : i32
    %c0_i32_2 = arith.constant 0 : i32
    return %c0_i32, %c0_i32_0, %c0_i32_1 : i32, i32, i32
  }
  func.func @transform_9(%arg0: i32) -> (i32, i32) {
    %c0_i32 = arith.constant 0 : i32
    %c0_i32_0 = arith.constant 0 : i32
    %c0_i32_1 = arith.constant 0 : i32
    return %c0_i32, %c0_i32_0 : i32, i32
  }
  func.func @transform_10(%arg0: i32) -> (i32, i32) {
    %c0_i32 = arith.constant 0 : i32
    %c0_i32_0 = arith.constant 0 : i32
    %c0_i32_1 = arith.constant 0 : i32
    return %c0_i32, %c0_i32_0 : i32, i32
  }
  func.func @transform_11(%arg0: i32) -> (i32, i32, i32) {
    %c0_i32 = arith.constant 0 : i32
    %c0_i32_0 = arith.constant 0 : i32
    %c0_i32_1 = arith.constant 0 : i32
    %c0_i32_2 = arith.constant 0 : i32
    return %c0_i32, %c0_i32_0, %c0_i32_1 : i32, i32, i32
  }
  func.func @transform_12(%arg0: i32) -> (i32, i32) {
    %c0_i32 = arith.constant 0 : i32
    %c0_i32_0 = arith.constant 0 : i32
    %c0_i32_1 = arith.constant 0 : i32
    return %c0_i32, %c0_i32_0 : i32, i32
  }
  func.func @transform_13(%arg0: i32) -> (i32, i32) {
    %c0_i32 = arith.constant 0 : i32
    %c0_i32_0 = arith.constant 0 : i32
    %c0_i32_1 = arith.constant 0 : i32
    return %c0_i32, %c0_i32_0 : i32, i32
  }
  func.func @transform_14(%arg0: i32) -> (i32, i32, i32) {
    %c0_i32 = arith.constant 0 : i32
    %c0_i32_0 = arith.constant 0 : i32
    %c0_i32_1 = arith.constant 0 : i32
    %c0_i32_2 = arith.constant 0 : i32
    return %c0_i32, %c0_i32_0, %c0_i32_1 : i32, i32, i32
  }
  func.func @transform_15(%arg0: i32) -> (i32, i32, i32) {
    %c0_i32 = arith.constant 0 : i32
    %c0_i32_0 = arith.constant 0 : i32
    %c0_i32_1 = arith.constant 0 : i32
    return %arg0, %c0_i32, %c0_i32_0 : i32, i32, i32
  }
}

</mosaic_0001>

<llo_original>
// kernel: discriminator_forward.1
$region0: #{discriminator_forward.1}
  #allocation0 [shape = 'u32[]', space=smem, size = 0x4, offset = 0x4, fixed_abs, tag = 'smem constant byte address 0x4 - core index']
  #allocation1 [shape = 'u32[144,128]{1,0:T(1,128)}', space=vmem, size = 0x12000, scoped, tag = 'internal scratch']
  #allocation2 [shape = 'f32[1,1]{1,0:T(1,128)S(1)}', space=vmem, size = 0x200, scoped, tag = 'scoped memory for discriminator_forward.1']
  %s0 = inlined_call_operand.vmem [shape: bf16[2,48,512], index: 0, kind: input, shape index: {}]
  %s1 = inlined_call_operand.vmem [shape: bf16[8,48], index: 1, kind: input, shape index: {}]
  %s2 = inlined_call_operand.vmem [shape: f32[8,1], index: 2, kind: input, shape index: {}]
  %s3 = inlined_call_operand.vmem [shape: bf16[16,128], index: 3, kind: input, shape index: {}]
  %s4 = inlined_call_operand.vmem [shape: f32[16,1], index: 4, kind: input, shape index: {}]
  %s5 = inlined_call_operand.vmem [shape: bf16[16,256,64], index: 5, kind: input, shape index: {}]
  %s6 = inlined_call_operand.vmem [shape: bf16[32,256], index: 6, kind: input, shape index: {}]
  %s7 = inlined_call_operand.vmem [shape: f32[32,1], index: 7, kind: input, shape index: {}]
  %s8 = inlined_call_operand.vmem [shape: bf16[16,64,16], index: 8, kind: input, shape index: {}]
  %s9 = inlined_call_operand.vmem [shape: bf16[64,512], index: 9, kind: input, shape index: {}]
  %s10 = inlined_call_operand.vmem [shape: f32[64,1], index: 10, kind: input, shape index: {}]
  %s11 = inlined_call_operand.vmem [shape: bf16[16,16,9], index: 11, kind: input, shape index: {}]
  %s12 = inlined_call_operand.vmem [shape: bf16[1,1024], index: 12, kind: input, shape index: {}]
  %s13 = inlined_call_operand.<no memory space> [shape: f32[1,1], index: 13, kind: input, shape index: {}]
  %s14 = inlined_call_operand.vmem [shape: bf16[16,9,4], index: 14, kind: input, shape index: {}]
  %s15 = inlined_call_operand.vmem [shape: f32[2,1,8], index: 15, kind: output, shape index: {}]
  %s16 = sld [smem:[#allocation0]]
  $region93: #{discriminator_forward.1} parent=0
    _
  %s18 = ssub.s32 1, %s16
  %s19 = scalar_select 0, %s18, %s16
  %v20 = vstv %s13
  %21 = vst [vmem:[#allocation2] sm:$0x1] %v20
  loop: start=0, step=1, limit=4
  $region2: #{discriminator_forward.1} parent=0 // loop_pre_header
    _
  $region3: #{discriminator_forward.1} parent=0 // loop_header
    %s23 = sphi 0, %s27
    %p24 = scmp.ge.s32.totalorder %s23, 4
    %s33 = sphi 0, %s35
    %s36 = sphi 0, %s33
    %s37 = sphi 0, %s36
    %s53 = sphi 0, %s37
    %s57 = sphi 0, %s57
    %s59 = sphi 0, %s57
    %s60 = sphi 0, %s59
    %s74 = sphi 0, %s60
    %s78 = sphi 0, %s78
    %s80 = sphi 0, %s78
    %s81 = sphi 0, %s80
    %s95 = sphi 0, %s81
    %s99 = sphi 0, %s99
    %s101 = sphi 0, %s99
    %s102 = sphi 0, %s101
    %s116 = sphi 0, %s102
    %s120 = sphi 0, %s120
    %s122 = sphi 0, %s120
    %s123 = sphi 0, %s122
    %s137 = sphi 0, %s123
    %s141 = sphi 0, %s141
    %s143 = sphi 0, %s141
    %s144 = sphi 0, %s143
    %s158 = sphi 0, %s144
    %s162 = sphi 0, %s162
    %s164 = sphi 0, %s162
    %s165 = sphi 0, %s164
    %s179 = sphi 0, %s165
    %s183 = sphi 0, %s183
    %s185 = sphi 0, %s183
    %s186 = sphi 0, %s185
    %s200 = sphi 0, %s186
    %s204 = sphi 0, %s204
    %s206 = sphi 0, %s204
    %s207 = sphi 0, %s206
    %s221 = sphi 0, %s207
    %s225 = sphi 0, %s225
    %s227 = sphi 0, %s225
    %s228 = sphi 0, %s227
    %s242 = sphi 0, %s228
    %s246 = sphi 0, %s246
    %s248 = sphi 0, %s246
    %s249 = sphi 0, %s248
    %s263 = sphi 0, %s249
    %s267 = sphi 0, %s267
    %s269 = sphi 0, %s267
    %s270 = sphi 0, %s269
    %s284 = sphi 0, %s270
    %s288 = sphi 0, %s288
    %s290 = sphi 0, %s288
    %s291 = sphi 0, %s290
    %s305 = sphi 0, %s291
    %s309 = sphi 0, %s309
    %s311 = sphi 0, %s309
    %s312 = sphi 0, %s311
    %s326 = sphi 0, %s312
    %s330 = sphi 0, %s330
    %s332 = sphi 0, %s330
    %s333 = sphi 0, %s332
    %s347 = sphi 0, %s333
    %s353 = sphi 0, %s355
    %s356 = sphi 0, %s353
    %s357 = sphi 0, %s356
    %s373 = sphi 0, %s357
  $region4: #{discriminator_forward.1} parent=0 // loop_header_branch
    %26 = sbr.rel (%p24) target = $region8
  $region5: #{discriminator_forward.1} parent=0 // loop_body
    %s28 = ssub.s32 %s23, 1
    %s29 = ssub.s32 %s23, 2
    %s30 = sadd.s32 %s23, 1
    %s31 = ssub.s32 %s23, %s30
    %p32 = scmp.eq.s32.totalorder %s31, 0
    %s34 = sadd.s32 %s33, 1
    %s35 = scalar_select %p32, %s33, %s34
    %p38 = pneg %p32
    %p39 = scmp.eq.s32.totalorder %s23, 1
    %p40 = por %p38, %p39
    %p41 = scmp.ne.s32.totalorder %s33, %s36
    %p42 = scmp.eq.s32.totalorder %s23, 0
    %p43 = por %p41, %p42
    %p44 = scmp.ne.s32.totalorder %s33, %s36
    %p45 = scmp.eq.s32.totalorder %s28, 1
    %p46 = por %p44, %p45
    %p47 = scmp.ne.s32.totalorder %s36, %s37
    %p48 = scmp.eq.s32.totalorder %s28, 0
    %p49 = por %p47, %p48
    %p50 = scmp.ne.s32.totalorder %s36, %s37
    %p51 = scmp.eq.s32.totalorder %s29, 1
    %p52 = por %p50, %p51
    %p54 = scmp.ne.s32.totalorder %s37, %s53
    %p55 = scmp.eq.s32.totalorder %s29, 0
    %p56 = por %p54, %p55
    %s58 = sadd.s32 %s57, 1
    %p61 = scmp.eq.s32.totalorder %s23, 1
    %p62 = scmp.ne.s32.totalorder %s57, %s59
    %p63 = scmp.eq.s32.totalorder %s23, 0
    %p64 = por %p62, %p63
    %p65 = scmp.ne.s32.totalorder %s57, %s59
    %p66 = scmp.eq.s32.totalorder %s28, 1
    %p67 = por %p65, %p66
    %p68 = scmp.ne.s32.totalorder %s59, %s60
    %p69 = scmp.eq.s32.totalorder %s28, 0
    %p70 = por %p68, %p69
    %p71 = scmp.ne.s32.totalorder %s59, %s60
    %p72 = scmp.eq.s32.totalorder %s29, 1
    %p73 = por %p71, %p72
    %p75 = scmp.ne.s32.totalorder %s60, %s74
    %p76 = scmp.eq.s32.totalorder %s29, 0
    %p77 = por %p75, %p76
    %s79 = sadd.s32 %s78, 1
    %p82 = scmp.eq.s32.totalorder %s23, 1
    %p83 = scmp.ne.s32.totalorder %s78, %s80
    %p84 = scmp.eq.s32.totalorder %s23, 0
    %p85 = por %p83, %p84
    %p86 = scmp.ne.s32.totalorder %s78, %s80
    %p87 = scmp.eq.s32.totalorder %s28, 1
    %p88 = por %p86, %p87
    %p89 = scmp.ne.s32.totalorder %s80, %s81
    %p90 = scmp.eq.s32.totalorder %s28, 0
    %p91 = por %p89, %p90
    %p92 = scmp.ne.s32.totalorder %s80, %s81
    %p93 = scmp.eq.s32.totalorder %s29, 1
    %p94 = por %p92, %p93
    %p96 = scmp.ne.s32.totalorder %s81, %s95
    %p97 = scmp.eq.s32.totalorder %s29, 0
    %p98 = por %p96, %p97
    %s100 = sadd.s32 %s99, 1
    %p103 = scmp.eq.s32.totalorder %s23, 1
    %p104 = scmp.ne.s32.totalorder %s99, %s101
    %p105 = scmp.eq.s32.totalorder %s23, 0
    %p106 = por %p104, %p105
    %p107 = scmp.ne.s32.totalorder %s99, %s101
    %p108 = scmp.eq.s32.totalorder %s28, 1
    %p109 = por %p107, %p108
    %p110 = scmp.ne.s32.totalorder %s101, %s102
    %p111 = scmp.eq.s32.totalorder %s28, 0
    %p112 = por %p110, %p111
    %p113 = scmp.ne.s32.totalorder %s101, %s102
    %p114 = scmp.eq.s32.totalorder %s29, 1
    %p115 = por %p113, %p114
    %p117 = scmp.ne.s32.totalorder %s102, %s116
    %p118 = scmp.eq.s32.totalorder %s29, 0
    %p119 = por %p117, %p118
    %s121 = sadd.s32 %s120, 1
    %p124 = scmp.eq.s32.totalorder %s23, 1
    %p125 = scmp.ne.s32.totalorder %s120, %s122
    %p126 = scmp.eq.s32.totalorder %s23, 0
    %p127 = por %p125, %p126
    %p128 = scmp.ne.s32.totalorder %s120, %s122
    %p129 = scmp.eq.s32.totalorder %s28, 1
    %p130 = por %p128, %p129
    %p131 = scmp.ne.s32.totalorder %s122, %s123
    %p132 = scmp.eq.s32.totalorder %s28, 0
    %p133 = por %p131, %p132
    %p134 = scmp.ne.s32.totalorder %s122, %s123
    %p135 = scmp.eq.s32.totalorder %s29, 1
    %p136 = por %p134, %p135
    %p138 = scmp.ne.s32.totalorder %s123, %s137
    %p139 = scmp.eq.s32.totalorder %s29, 0
    %p140 = por %p138, %p139
    %s142 = sadd.s32 %s141, 1
    %p145 = scmp.eq.s32.totalorder %s23, 1
    %p146 = scmp.ne.s32.totalorder %s141, %s143
    %p147 = scmp.eq.s32.totalorder %s23, 0
    %p148 = por %p146, %p147
    %p149 = scmp.ne.s32.totalorder %s141, %s143
    %p150 = scmp.eq.s32.totalorder %s28, 1
    %p151 = por %p149, %p150
    %p152 = scmp.ne.s32.totalorder %s143, %s144
    %p153 = scmp.eq.s32.totalorder %s28, 0
    %p154 = por %p152, %p153
    %p155 = scmp.ne.s32.totalorder %s143, %s144
    %p156 = scmp.eq.s32.totalorder %s29, 1
    %p157 = por %p155, %p156
    %p159 = scmp.ne.s32.totalorder %s144, %s158
    %p160 = scmp.eq.s32.totalorder %s29, 0
    %p161 = por %p159, %p160
    %s163 = sadd.s32 %s162, 1
    %p166 = scmp.eq.s32.totalorder %s23, 1
    %p167 = scmp.ne.s32.totalorder %s162, %s164
    %p168 = scmp.eq.s32.totalorder %s23, 0
    %p169 = por %p167, %p168
    %p170 = scmp.ne.s32.totalorder %s162, %s164
    %p171 = scmp.eq.s32.totalorder %s28, 1
    %p172 = por %p170, %p171
    %p173 = scmp.ne.s32.totalorder %s164, %s165
    %p174 = scmp.eq.s32.totalorder %s28, 0
    %p175 = por %p173, %p174
    %p176 = scmp.ne.s32.totalorder %s164, %s165
    %p177 = scmp.eq.s32.totalorder %s29, 1
    %p178 = por %p176, %p177
    %p180 = scmp.ne.s32.totalorder %s165, %s179
    %p181 = scmp.eq.s32.totalorder %s29, 0
    %p182 = por %p180, %p181
    %s184 = sadd.s32 %s183, 1
    %p187 = scmp.eq.s32.totalorder %s23, 1
    %p188 = scmp.ne.s32.totalorder %s183, %s185
    %p189 = scmp.eq.s32.totalorder %s23, 0
    %p190 = por %p188, %p189
    %p191 = scmp.ne.s32.totalorder %s183, %s185
    %p192 = scmp.eq.s32.totalorder %s28, 1
    %p193 = por %p191, %p192
    %p194 = scmp.ne.s32.totalorder %s185, %s186
    %p195 = scmp.eq.s32.totalorder %s28, 0
    %p196 = por %p194, %p195
    %p197 = scmp.ne.s32.totalorder %s185, %s186
    %p198 = scmp.eq.s32.totalorder %s29, 1
    %p199 = por %p197, %p198
    %p201 = scmp.ne.s32.totalorder %s186, %s200
    %p202 = scmp.eq.s32.totalorder %s29, 0
    %p203 = por %p201, %p202
    %s205 = sadd.s32 %s204, 1
    %p208 = scmp.eq.s32.totalorder %s23, 1
    %p209 = scmp.ne.s32.totalorder %s204, %s206
    %p210 = scmp.eq.s32.totalorder %s23, 0
    %p211 = por %p209, %p210
    %p212 = scmp.ne.s32.totalorder %s204, %s206
    %p213 = scmp.eq.s32.totalorder %s28, 1
    %p214 = por %p212, %p213
    %p215 = scmp.ne.s32.totalorder %s206, %s207
    %p216 = scmp.eq.s32.totalorder %s28, 0
    %p217 = por %p215, %p216
    %p218 = scmp.ne.s32.totalorder %s206, %s207
    %p219 = scmp.eq.s32.totalorder %s29, 1
    %p220 = por %p218, %p219
    %p222 = scmp.ne.s32.totalorder %s207, %s221
    %p223 = scmp.eq.s32.totalorder %s29, 0
    %p224 = por %p222, %p223
    %s226 = sadd.s32 %s225, 1
    %p229 = scmp.eq.s32.totalorder %s23, 1
    %p230 = scmp.ne.s32.totalorder %s225, %s227
    %p231 = scmp.eq.s32.totalorder %s23, 0
    %p232 = por %p230, %p231
    %p233 = scmp.ne.s32.totalorder %s225, %s227
    %p234 = scmp.eq.s32.totalorder %s28, 1
    %p235 = por %p233, %p234
    %p236 = scmp.ne.s32.totalorder %s227, %s228
    %p237 = scmp.eq.s32.totalorder %s28, 0
    %p238 = por %p236, %p237
    %p239 = scmp.ne.s32.totalorder %s227, %s228
    %p240 = scmp.eq.s32.totalorder %s29, 1
    %p241 = por %p239, %p240
    %p243 = scmp.ne.s32.totalorder %s228, %s242
    %p244 = scmp.eq.s32.totalorder %s29, 0
    %p245 = por %p243, %p244
    %s247 = sadd.s32 %s246, 1
    %p250 = scmp.eq.s32.totalorder %s23, 1
    %p251 = scmp.ne.s32.totalorder %s246, %s248
    %p252 = scmp.eq.s32.totalorder %s23, 0
    %p253 = por %p251, %p252
    %p254 = scmp.ne.s32.totalorder %s246, %s248
    %p255 = scmp.eq.s32.totalorder %s28, 1
    %p256 = por %p254, %p255
    %p257 = scmp.ne.s32.totalorder %s248, %s249
    %p258 = scmp.eq.s32.totalorder %s28, 0
    %p259 = por %p257, %p258
    %p260 = scmp.ne.s32.totalorder %s248, %s249
    %p261 = scmp.eq.s32.totalorder %s29, 1
    %p262 = por %p260, %p261
    %p264 = scmp.ne.s32.totalorder %s249, %s263
    %p265 = scmp.eq.s32.totalorder %s29, 0
    %p266 = por %p264, %p265
    %s268 = sadd.s32 %s267, 1
    %p271 = scmp.eq.s32.totalorder %s23, 1
    %p272 = scmp.ne.s32.totalorder %s267, %s269
    %p273 = scmp.eq.s32.totalorder %s23, 0
    %p274 = por %p272, %p273
    %p275 = scmp.ne.s32.totalorder %s267, %s269
    %p276 = scmp.eq.s32.totalorder %s28, 1
    %p277 = por %p275, %p276
    %p278 = scmp.ne.s32.totalorder %s269, %s270
    %p279 = scmp.eq.s32.totalorder %s28, 0
    %p280 = por %p278, %p279
    %p281 = scmp.ne.s32.totalorder %s269, %s270
    %p282 = scmp.eq.s32.totalorder %s29, 1
    %p283 = por %p281, %p282
    %p285 = scmp.ne.s32.totalorder %s270, %s284
    %p286 = scmp.eq.s32.totalorder %s29, 0
    %p287 = por %p285, %p286
    %s289 = sadd.s32 %s288, 1
    %p292 = scmp.eq.s32.totalorder %s23, 1
    %p293 = scmp.ne.s32.totalorder %s288, %s290
    %p294 = scmp.eq.s32.totalorder %s23, 0
    %p295 = por %p293, %p294
    %p296 = scmp.ne.s32.totalorder %s288, %s290
    %p297 = scmp.eq.s32.totalorder %s28, 1
    %p298 = por %p296, %p297
    %p299 = scmp.ne.s32.totalorder %s290, %s291
    %p300 = scmp.eq.s32.totalorder %s28, 0
    %p301 = por %p299, %p300
    %p302 = scmp.ne.s32.totalorder %s290, %s291
    %p303 = scmp.eq.s32.totalorder %s29, 1
    %p304 = por %p302, %p303
    %p306 = scmp.ne.s32.totalorder %s291, %s305
    %p307 = scmp.eq.s32.totalorder %s29, 0
    %p308 = por %p306, %p307
    %s310 = sadd.s32 %s309, 1
    %p313 = scmp.eq.s32.totalorder %s23, 1
    %p314 = scmp.ne.s32.totalorder %s309, %s311
    %p315 = scmp.eq.s32.totalorder %s23, 0
    %p316 = por %p314, %p315
    %p317 = scmp.ne.s32.totalorder %s309, %s311
    %p318 = scmp.eq.s32.totalorder %s28, 1
    %p319 = por %p317, %p318
    %p320 = scmp.ne.s32.totalorder %s311, %s312
    %p321 = scmp.eq.s32.totalorder %s28, 0
    %p322 = por %p320, %p321
    %p323 = scmp.ne.s32.totalorder %s311, %s312
    %p324 = scmp.eq.s32.totalorder %s29, 1
    %p325 = por %p323, %p324
    %p327 = scmp.ne.s32.totalorder %s312, %s326
    %p328 = scmp.eq.s32.totalorder %s29, 0
    %p329 = por %p327, %p328
    %s331 = sadd.s32 %s330, 1
    %p334 = scmp.eq.s32.totalorder %s23, 1
    %p335 = scmp.ne.s32.totalorder %s330, %s332
    %p336 = scmp.eq.s32.totalorder %s23, 0
    %p337 = por %p335, %p336
    %p338 = scmp.ne.s32.totalorder %s330, %s332
    %p339 = scmp.eq.s32.totalorder %s28, 1
    %p340 = por %p338, %p339
    %p341 = scmp.ne.s32.totalorder %s332, %s333
    %p342 = scmp.eq.s32.totalorder %s28, 0
    %p343 = por %p341, %p342
    %p344 = scmp.ne.s32.totalorder %s332, %s333
    %p345 = scmp.eq.s32.totalorder %s29, 1
    %p346 = por %p344, %p345
    %p348 = scmp.ne.s32.totalorder %s333, %s347
    %p349 = scmp.eq.s32.totalorder %s29, 0
    %p350 = por %p348, %p349
    %s351 = ssub.s32 %s23, %s30
    %p352 = scmp.eq.s32.totalorder %s351, 0
    %s354 = sadd.s32 %s353, 1
    %s355 = scalar_select %p352, %s353, %s354
    %p358 = pneg %p352
    %p359 = scmp.eq.s32.totalorder %s23, 1
    %p360 = por %p358, %p359
    %p361 = scmp.ne.s32.totalorder %s353, %s356
    %p362 = scmp.eq.s32.totalorder %s23, 0
    %p363 = por %p361, %p362
    %p364 = scmp.ne.s32.totalorder %s353, %s356
    %p365 = scmp.eq.s32.totalorder %s28, 1
    %p366 = por %p364, %p365
    %p367 = scmp.ne.s32.totalorder %s356, %s357
    %p368 = scmp.eq.s32.totalorder %s28, 0
    %p369 = por %p367, %p368
    %p370 = scmp.ne.s32.totalorder %s356, %s357
    %p371 = scmp.eq.s32.totalorder %s29, 1
    %p372 = por %p370, %p371
    %p374 = scmp.ne.s32.totalorder %s357, %s373
    %p375 = scmp.eq.s32.totalorder %s29, 0
    %p376 = por %p374, %p375
    %p377 = scmp.le.s32.totalorder 1, %s23
    %p378 = scmp.lt.s32.totalorder %s23, 3
    %p379 = pnand %p377, %p378
    %p380 = pneg %p379
    // Predicated region
    $region9: #{discriminator_forward.1} parent=5 // pred_check
      _
    $region10: #{discriminator_forward.1} parent=5 // pred_check_branch
      %382 = sbr.rel (%p379) target = $region12
    $region11: #{discriminator_forward.1} parent=5 // pred_region
      %s383 = ssub.s32 %s23, 1
      // Predicated region
      $region13: #{discriminator_forward.1} parent=11 // pred_check
        %p384 = pneg %p70
      $region14: #{discriminator_forward.1} parent=11 // pred_check_branch
        %386 = sbr.rel (%p384) target = $region16
      $region15: #{discriminator_forward.1} parent=11 // pred_region
        _
      $region16: #{discriminator_forward.1} parent=11 // pred_fallthru
        _
      // Predicated region
      $region17: #{discriminator_forward.1} parent=11 // pred_check
        %p387 = pneg %p91
      $region18: #{discriminator_forward.1} parent=11 // pred_check_branch
        %389 = sbr.rel (%p387) target = $region20
      $region19: #{discriminator_forward.1} parent=11 // pred_region
        _
      $region20: #{discriminator_forward.1} parent=11 // pred_fallthru
        _
      // Predicated region
      $region21: #{discriminator_forward.1} parent=11 // pred_check
        %p390 = pneg %p112
      $region22: #{discriminator_forward.1} parent=11 // pred_check_branch
        %392 = sbr.rel (%p390) target = $region24
      $region23: #{discriminator_forward.1} parent=11 // pred_region
        _
      $region24: #{discriminator_forward.1} parent=11 // pred_fallthru
        _
      // Predicated region
      $region25: #{discriminator_forward.1} parent=11 // pred_check
        %p393 = pneg %p133
      $region26: #{discriminator_forward.1} parent=11 // pred_check_branch
        %395 = sbr.rel (%p393) target = $region28
      $region27: #{discriminator_forward.1} parent=11 // pred_region
        _
      $region28: #{discriminator_forward.1} parent=11 // pred_fallthru
        _
      // Predicated region
      $region29: #{discriminator_forward.1} parent=11 // pred_check
        %p396 = pneg %p154
      $region30: #{discriminator_forward.1} parent=11 // pred_check_branch
        %398 = sbr.rel (%p396) target = $region32
      $region31: #{discriminator_forward.1} parent=11 // pred_region
        _
      $region32: #{discriminator_forward.1} parent=11 // pred_fallthru
        _
      // Predicated region
      $region33: #{discriminator_forward.1} parent=11 // pred_check
        %p399 = pneg %p175
      $region34: #{discriminator_forward.1} parent=11 // pred_check_branch
        %401 = sbr.rel (%p399) target = $region36
      $region35: #{discriminator_forward.1} parent=11 // pred_region
        _
      $region36: #{discriminator_forward.1} parent=11 // pred_fallthru
        _
      // Predicated region
      $region37: #{discriminator_forward.1} parent=11 // pred_check
        %p402 = pneg %p196
      $region38: #{discriminator_forward.1} parent=11 // pred_check_branch
        %404 = sbr.rel (%p402) target = $region40
      $region39: #{discriminator_forward.1} parent=11 // pred_region
        _
      $region40: #{discriminator_forward.1} parent=11 // pred_fallthru
        _
      // Predicated region
      $region41: #{discriminator_forward.1} parent=11 // pred_check
        %p405 = pneg %p217
      $region42: #{discriminator_forward.1} parent=11 // pred_check_branch
        %407 = sbr.rel (%p405) target = $region44
      $region43: #{discriminator_forward.1} parent=11 // pred_region
        _
      $region44: #{discriminator_forward.1} parent=11 // pred_fallthru
        _
      // Predicated region
      $region45: #{discriminator_forward.1} parent=11 // pred_check
        %p408 = pneg %p238
      $region46: #{discriminator_forward.1} parent=11 // pred_check_branch
        %410 = sbr.rel (%p408) target = $region48
      $region47: #{discriminator_forward.1} parent=11 // pred_region
        _
      $region48: #{discriminator_forward.1} parent=11 // pred_fallthru
        _
      // Predicated region
      $region49: #{discriminator_forward.1} parent=11 // pred_check
        %p411 = pneg %p259
      $region50: #{discriminator_forward.1} parent=11 // pred_check_branch
        %413 = sbr.rel (%p411) target = $region52
      $region51: #{discriminator_forward.1} parent=11 // pred_region
        _
      $region52: #{discriminator_forward.1} parent=11 // pred_fallthru
        _
      // Predicated region
      $region53: #{discriminator_forward.1} parent=11 // pred_check
        %p414 = pneg %p280
      $region54: #{discriminator_forward.1} parent=11 // pred_check_branch
        %416 = sbr.rel (%p414) target = $region56
      $region55: #{discriminator_forward.1} parent=11 // pred_region
        _
      $region56: #{discriminator_forward.1} parent=11 // pred_fallthru
        _
      // Predicated region
      $region57: #{discriminator_forward.1} parent=11 // pred_check
        %p417 = pneg %p301
      $region58: #{discriminator_forward.1} parent=11 // pred_check_branch
        %419 = sbr.rel (%p417) target = $region60
      $region59: #{discriminator_forward.1} parent=11 // pred_region
        _
      $region60: #{discriminator_forward.1} parent=11 // pred_fallthru
        _
      // Predicated region
      $region61: #{discriminator_forward.1} parent=11 // pred_check
        %p420 = pneg %p322
      $region62: #{discriminator_forward.1} parent=11 // pred_check_branch
        %422 = sbr.rel (%p420) target = $region64
      $region63: #{discriminator_forward.1} parent=11 // pred_region
        _
      $region64: #{discriminator_forward.1} parent=11 // pred_fallthru
        _
      // Predicated region
      $region65: #{discriminator_forward.1} parent=11 // pred_check
        %p423 = pneg %p343
      $region66: #{discriminator_forward.1} parent=11 // pred_check_branch
        %425 = sbr.rel (%p423) target = $region68
      $region67: #{discriminator_forward.1} parent=11 // pred_region
        _
      $region68: #{discriminator_forward.1} parent=11 // pred_fallthru
        _
    $region12: #{discriminator_forward.1} parent=5 // pred_fallthru
      _
    %p426 = scmp.lt.s32.totalorder %s23, 2
    // Predicated region
    $region69: #{discriminator_forward.1} parent=5 // pred_check
      %p427 = pneg %p426
    $region70: #{discriminator_forward.1} parent=5 // pred_check_branch
      %429 = sbr.rel (%p427) target = $region72
    $region71: #{discriminator_forward.1} parent=5 // pred_region
      // Predicated region
      $region73: #{discriminator_forward.1} parent=71 // pred_check
        %p430 = pneg %p43
      $region74: #{discriminator_forward.1} parent=71 // pred_check_branch
        %432 = sbr.rel (%p430) target = $region76
      $region75: #{discriminator_forward.1} parent=71 // pred_region
        %p433 = scmp.lt.s32.totalorder %s23, 1
        %s434 = scalar_select %p433, %s23, 1
        %s435 = smul.addr %s434, 24
        %s436 = smul.addr %s435, 4
        %s437 = scalar_lea.vmem %s0, %s436
      $region76: #{discriminator_forward.1} parent=71 // pred_fallthru
        _
    $region72: #{discriminator_forward.1} parent=5 // pred_fallthru
      _
    %p438 = scmp.le.s32.totalorder 1, %s23
    %p439 = scmp.lt.s32.totalorder %s23, 3
    %p440 = pnand %p438, %p439
    %p441 = pneg %p440
    // Predicated region
    $region77: #{discriminator_forward.1} parent=5 // pred_check
      _
    $region78: #{discriminator_forward.1} parent=5 // pred_check_branch
      %443 = sbr.rel (%p440) target = $region80
    $region79: #{discriminator_forward.1} parent=5 // pred_region
      %s444 = ssub.s32 %s23, 1
      %p445 = scmp.lt.s32.totalorder %s28, 1
      %s446 = scalar_select %p445, %s28, 1
      %s447 = smul.addr %s446, 24
      %s448 = smul.addr %s447, 4
      %s449 = scalar_lea.vmem %s0, %s448
      %p450 = pneg %p49
      %p451 = pneg %p46
      %p452 = pneg %p70
      %p453 = pneg %p67
      %p454 = pneg %p91
      %p455 = pneg %p88
      %p456 = pneg %p112
      %p457 = pneg %p109
      %p458 = pneg %p133
      %p459 = pneg %p130
      %p460 = pneg %p154
      %p461 = pneg %p151
      %p462 = pneg %p175
      %p463 = pneg %p172
      %p464 = pneg %p196
      %p465 = pneg %p193
      %p466 = pneg %p217
      %p467 = pneg %p214
      %p468 = pneg %p238
      %p469 = pneg %p235
      %p470 = pneg %p259
      %p471 = pneg %p256
      %p472 = pneg %p280
      %p473 = pneg %p277
      %p474 = pneg %p301
      %p475 = pneg %p298
      %p476 = pneg %p322
      %p477 = pneg %p319
      %p478 = pneg %p343
      %p479 = pneg %p340
      %p480 = pneg %p369
      %p481 = pneg %p366
      %p482 = scmp.lt.s32.totalorder %s28, 1
      %s483 = scalar_select %p482, %s28, 1
      %s484 = scalar_lea.vmem %s15, %s483
      %p485 = scmp.lt.s32.totalorder %s28, 1
      %s486 = scalar_select %p485, %s28, 1
      %s487 = smul.addr %s486, 24
      %s488 = smul.addr %s487, 4
      %s489 = scalar_lea.vmem %s0, %s488
      %p490 = scmp.lt.s32.totalorder %s28, 1
      %s491 = scalar_select %p490, %s28, 1
      %s492 = scalar_lea.vmem %s15, %s491
      %v494 = vld [vmem:[%s1] sm:$0xf]
      %v495 = vld [vmem:[%s489] sm:$0xff]
      %v496 = vld [vmem:[%s489 + $0x8] sm:$0xff]
      %v497 = vld [vmem:[%s489 + $0x10] sm:$0xff]
      %v498 = vld [vmem:[%s489 + $0x18] sm:$0xff]
      %v499 = vld [vmem:[%s489 + $0x20] sm:$0xff]
      %v500 = vld [vmem:[%s489 + $0x28] sm:$0xff]
      %v501 = vld [vmem:[%s489 + $0x30] sm:$0xff]
      %v502 = vld [vmem:[%s489 + $0x38] sm:$0xff]
      %v503 = vld [vmem:[%s489 + $0x40] sm:$0xff]
      %v504 = vld [vmem:[%s489 + $0x48] sm:$0xff]
      %v505 = vld [vmem:[%s489 + $0x50] sm:$0xff]
      %v506 = vld [vmem:[%s489 + $0x58] sm:$0xff]
      %v507 = vld [vmem:[%s2] sm:$0xff]
      %509 = vset.pattern.permute.xlu0 0
      %510 = vperm.xlu0 %509, %v507
      %v511 = vpop.permute.xlu0 %510
      %v525 = vunpack.c.l.b16 %v495
      %v526 = vunpack.c.h.b16 %v495
      %v527 = vunpack.c.l.b16 %v496
      %v528 = vunpack.c.h.b16 %v496
      %v529 = vunpack.c.l.b16 %v497
      %v530 = vunpack.c.h.b16 %v497
      %v531 = vunpack.c.l.b16 %v498
      %v532 = vunpack.c.h.b16 %v498
      %v533 = vunpack.c.l.b16 %v499
      %v534 = vunpack.c.h.b16 %v499
      %v535 = vunpack.c.l.b16 %v500
      %v536 = vunpack.c.h.b16 %v500
      %v537 = vunpack.c.l.b16 %v501
      %v538 = vunpack.c.h.b16 %v501
      %v539 = vunpack.c.l.b16 %v502
      %v540 = vunpack.c.h.b16 %v502
      %v541 = vunpack.c.l.b16 %v503
      %v542 = vunpack.c.h.b16 %v503
      %v543 = vunpack.c.l.b16 %v504
      %v544 = vunpack.c.h.b16 %v504
      %v545 = vunpack.c.l.b16 %v505
      %v546 = vunpack.c.h.b16 %v505
      %v547 = vunpack.c.l.b16 %v506
      %v548 = vunpack.c.h.b16 %v506
      %v549 = vpack.c.b16 %v529, %v525
      %v550 = vpack.c.b16 %v530, %v526
      %v551 = vpack.c.b16 %v531, %v527
      %v552 = vpack.c.b16 %v532, %v528
      %v553 = vpack.c.b16 %v537, %v533
      %v554 = vpack.c.b16 %v538, %v534
      %v555 = vpack.c.b16 %v539, %v535
      %v556 = vpack.c.b16 %v540, %v536
      %v557 = vpack.c.b16 %v545, %v541
      %v558 = vpack.c.b16 %v546, %v542
      %v559 = vpack.c.b16 %v547, %v543
      %v560 = vpack.c.b16 %v548, %v544
      %vm573 = vcmask 392192
      %v575 = vsel %vm573, %v494, 0
      %577 = vmatprep.subr.bf16.mxu0 %v550
      %578 = vmatpush1.bf16.msra.mxu0 %v549
      %579 = vmatprep.subr.bf16.mxu0 %v554
      %580 = vmatpush1.bf16.msra.mxu0 %v553
      %581 = vmatprep.subr.bf16.mxu0 %v558
      %582 = vmatpush1.bf16.msra.mxu0 %v557
      %583 = vmatprep.subr.bf16.mxu0 0
      %584 = vmatpush1.bf16.msra.mxu0 0
      %585 = vmatprep.subr.bf16.mxu0 0
      %586 = vmatpush1.bf16.msra.mxu0 0
      %587 = vmatprep.subr.bf16.mxu0 0
      %588 = vmatpush1.bf16.msra.mxu0 0
      %589 = vmatprep.subr.bf16.mxu0 0
      %590 = vmatpush1.bf16.msra.mxu0 0
      %591 = vmatprep.subr.bf16.mxu0 0
      %592 = vmatpush1.bf16.msra.mxu0 0
      %593 = vmatprep.subr.bf16.mxu0 0
      %594 = vmatpush1.bf16.msra.mxu0 0
      %595 = vmatprep.subr.bf16.mxu0 0
      %596 = vmatpush1.bf16.msra.mxu0 0
      %597 = vmatprep.subr.bf16.mxu0 0
      %598 = vmatpush1.bf16.msra.mxu0 0
      %599 = vmatprep.subr.bf16.mxu0 0
      %600 = vmatpush1.bf16.msra.mxu0 0
      %601 = vmatprep.subr.bf16.mxu0 0
      %602 = vmatpush1.bf16.msra.mxu0 0
      %603 = vmatprep.subr.bf16.mxu0 0
      %604 = vmatpush1.bf16.msra.mxu0 0
      %605 = vmatprep.subr.bf16.mxu0 0
      %606 = vmatpush1.bf16.msra.mxu0 0
      %607 = vmatprep.subr.bf16.mxu0 0
      %608 = vmatpush1.bf16.msra.mxu0 0
      %609 = vmatprep.mubr.bf16.mxu0 0
      %610 = vmatmul.mubr.bf16.gmra.mrb[0].mxu0 %v575
      %v611 = vpop.f32.mrb[0].mxu0
      %v612 = vadd.f32 %v511, %v611
      %v613 = vpop.f32.mrb[0].mxu0
      %v614 = vadd.f32 %v511, %v613
      %v615 = vpop.f32.mrb[0].mxu0
      %v616 = vpop.f32.mrb[0].mxu0
      %617 = vdwg.mxu0
      %618 = vmatprep.subr.bf16.mxu0 %v552
      %619 = vmatpush1.bf16.msra.mxu0 %v551
      %620 = vmatprep.subr.bf16.mxu0 %v556
      %621 = vmatpush1.bf16.msra.mxu0 %v555
      %622 = vmatprep.subr.bf16.mxu0 %v560
      %623 = vmatpush1.bf16.msra.mxu0 %v559
      %624 = vmatprep.subr.bf16.mxu0 0
      %625 = vmatpush1.bf16.msra.mxu0 0
      %626 = vmatprep.subr.bf16.mxu0 0
      %627 = vmatpush1.bf16.msra.mxu0 0
      %628 = vmatprep.subr.bf16.mxu0 0
      %629 = vmatpush1.bf16.msra.mxu0 0
      %630 = vmatprep.subr.bf16.mxu0 0
      %631 = vmatpush1.bf16.msra.mxu0 0
      %632 = vmatprep.subr.bf16.mxu0 0
      %633 = vmatpush1.bf16.msra.mxu0 0
      %634 = vmatprep.subr.bf16.mxu0 0
      %635 = vmatpush1.bf16.msra.mxu0 0
      %636 = vmatprep.subr.bf16.mxu0 0
      %637 = vmatpush1.bf16.msra.mxu0 0
      %638 = vmatprep.subr.bf16.mxu0 0
      %639 = vmatpush1.bf16.msra.mxu0 0
      %640 = vmatprep.subr.bf16.mxu0 0
      %641 = vmatpush1.bf16.msra.mxu0 0
      %642 = vmatprep.subr.bf16.mxu0 0
      %643 = vmatpush1.bf16.msra.mxu0 0
      %644 = vmatprep.subr.bf16.mxu0 0
      %645 = vmatpush1.bf16.msra.mxu0 0
      %646 = vmatprep.subr.bf16.mxu0 0
      %647 = vmatpush1.bf16.msra.mxu0 0
      %648 = vmatprep.subr.bf16.mxu0 0
      %649 = vmatpush1.bf16.msra.mxu0 0
      %650 = vmatprep.mubr.bf16.mxu0 0
      %651 = vmatmul.mubr.bf16.gmra.mrb[0].mxu0 %v575
      %v652 = vpop.f32.mrb[0].mxu0
      %v653 = vadd.f32 %v511, %v652
      %v654 = vpop.f32.mrb[0].mxu0
      %v655 = vadd.f32 %v511, %v654
      %v656 = vpop.f32.mrb[0].mxu0
      %v657 = vpop.f32.mrb[0].mxu0
      %658 = vdwg.mxu0
      %vm659 = vcmp.ge.f32.partialorder %v612, 0.0
      %vm660 = vcmp.ge.f32.partialorder %v614, 0.0
      %vm661 = vcmp.ge.f32.partialorder %v653, 0.0
      %vm662 = vcmp.ge.f32.partialorder %v655, 0.0
      %v663 = vmul.f32 %v612, 0.2
      %v664 = vmul.f32 %v614, 0.2
      %v665 = vmul.f32 %v653, 0.2
      %v666 = vmul.f32 %v655, 0.2
      %v667 = vsel %vm659, %v612, %v663
      %v668 = vsel %vm660, %v614, %v664
      %v669 = vsel %vm661, %v653, %v665
      %v670 = vsel %vm662, %v655, %v666
      %v671 = vpack.c.bf16 %v669, %v667
      %v672 = vpack.c.bf16 %v670, %v668
      %v673 = vld [vmem:[%s5] sm:$0xf]
      %v674 = vld [vmem:[%s5 + $0x4] sm:$0xf]
      %v675 = vld [vmem:[%s5 + $0x8] sm:$0xf]
      %v676 = vld [vmem:[%s5 + $0xc] sm:$0xf]
      %v677 = vld [vmem:[%s5 + $0x10] sm:$0xf]
      %v678 = vld [vmem:[%s5 + $0x14] sm:$0xf]
      %v679 = vld [vmem:[%s5 + $0x18] sm:$0xf]
      %v680 = vld [vmem:[%s5 + $0x1c] sm:$0xf]
      %v681 = vld [vmem:[%s5 + $0x20] sm:$0xf]
      %v682 = vld [vmem:[%s5 + $0x24] sm:$0xf]
      %v683 = vld [vmem:[%s5 + $0x28] sm:$0xf]
      %v684 = vld [vmem:[%s5 + $0x2c] sm:$0xf]
      %v685 = vld [vmem:[%s5 + $0x30] sm:$0xf]
      %v686 = vld [vmem:[%s5 + $0x34] sm:$0xf]
      %v687 = vld [vmem:[%s5 + $0x38] sm:$0xf]
      %v688 = vld [vmem:[%s5 + $0x3c] sm:$0xf]
      %v689 = vld [vmem:[%s5 + $0x40] sm:$0xf]
      %v690 = vld [vmem:[%s5 + $0x44] sm:$0xf]
      %v691 = vld [vmem:[%s5 + $0x48] sm:$0xf]
      %v692 = vld [vmem:[%s5 + $0x4c] sm:$0xf]
      %v693 = vld [vmem:[%s5 + $0x50] sm:$0xf]
      %v694 = vld [vmem:[%s5 + $0x54] sm:$0xf]
      %v695 = vld [vmem:[%s5 + $0x58] sm:$0xf]
      %v696 = vld [vmem:[%s5 + $0x5c] sm:$0xf]
      %v697 = vld [vmem:[%s5 + $0x60] sm:$0xf]
      %v698 = vld [vmem:[%s5 + $0x64] sm:$0xf]
      %v699 = vld [vmem:[%s5 + $0x68] sm:$0xf]
      %v700 = vld [vmem:[%s5 + $0x6c] sm:$0xf]
      %v701 = vld [vmem:[%s5 + $0x70] sm:$0xf]
      %v702 = vld [vmem:[%s5 + $0x74] sm:$0xf]
      %v703 = vld [vmem:[%s5 + $0x78] sm:$0xf]
      %v704 = vld [vmem:[%s5 + $0x7c] sm:$0xf]
      %v737 = vunpack.c.l.b16 %v673
      %v738 = vunpack.c.l.b16 %v674
      %v739 = vunpack.c.l.b16 %v675
      %v740 = vunpack.c.l.b16 %v676
      %v741 = vunpack.c.l.b16 %v677
      %v742 = vunpack.c.l.b16 %v678
      %v743 = vunpack.c.l.b16 %v679
      %v744 = vunpack.c.l.b16 %v680
      %v745 = vunpack.c.l.b16 %v681
      %v746 = vunpack.c.l.b16 %v682
      %v747 = vunpack.c.l.b16 %v683
      %v748 = vunpack.c.l.b16 %v684
      %v749 = vunpack.c.l.b16 %v685
      %v750 = vunpack.c.l.b16 %v686
      %v751 = vunpack.c.l.b16 %v687
      %v752 = vunpack.c.l.b16 %v688
      %v753 = vunpack.c.l.b16 %v689
      %v754 = vunpack.c.l.b16 %v690
      %v755 = vunpack.c.l.b16 %v691
      %v756 = vunpack.c.l.b16 %v692
      %v757 = vunpack.c.l.b16 %v693
      %v758 = vunpack.c.l.b16 %v694
      %v759 = vunpack.c.l.b16 %v695
      %v760 = vunpack.c.l.b16 %v696
      %v761 = vunpack.c.l.b16 %v697
      %v762 = vunpack.c.l.b16 %v698
      %v763 = vunpack.c.l.b16 %v699
      %v764 = vunpack.c.l.b16 %v700
      %v765 = vunpack.c.l.b16 %v701
      %v766 = vunpack.c.l.b16 %v702
      %v767 = vunpack.c.l.b16 %v703
      %v768 = vunpack.c.l.b16 %v704
      %v769 = vpack.c.b16 %v738, %v737
      %v770 = vpack.c.b16 %v740, %v739
      %v771 = vpack.c.b16 %v742, %v741
      %v772 = vpack.c.b16 %v744, %v743
      %v773 = vpack.c.b16 %v746, %v745
      %v774 = vpack.c.b16 %v748, %v747
      %v775 = vpack.c.b16 %v750, %v749
      %v776 = vpack.c.b16 %v752, %v751
      %v777 = vpack.c.b16 %v754, %v753
      %v778 = vpack.c.b16 %v756, %v755
      %v779 = vpack.c.b16 %v758, %v757
      %v780 = vpack.c.b16 %v760, %v759
      %v781 = vpack.c.b16 %v762, %v761
      %v782 = vpack.c.b16 %v764, %v763
      %v783 = vpack.c.b16 %v766, %v765
      %v784 = vpack.c.b16 %v768, %v767
      %801 = vmatprep.subr.bf16.mxu0 0
      %802 = vmatpush1.bf16.msra.mxu0 %v769
      %803 = vmatprep.subr.bf16.mxu0 0
      %804 = vmatpush1.bf16.msra.mxu0 %v770
      %805 = vmatprep.subr.bf16.mxu0 0
      %806 = vmatpush1.bf16.msra.mxu0 %v771
      %807 = vmatprep.subr.bf16.mxu0 0
      %808 = vmatpush1.bf16.msra.mxu0 %v772
      %809 = vmatprep.subr.bf16.mxu0 0
      %810 = vmatpush1.bf16.msra.mxu0 %v773
      %811 = vmatprep.subr.bf16.mxu0 0
      %812 = vmatpush1.bf16.msra.mxu0 %v774
      %813 = vmatprep.subr.bf16.mxu0 0
      %814 = vmatpush1.bf16.msra.mxu0 %v775
      %815 = vmatprep.subr.bf16.mxu0 0
      %816 = vmatpush1.bf16.msra.mxu0 %v776
      %817 = vmatprep.subr.bf16.mxu0 0
      %818 = vmatpush1.bf16.msra.mxu0 %v777
      %819 = vmatprep.subr.bf16.mxu0 0
      %820 = vmatpush1.bf16.msra.mxu0 %v778
      %821 = vmatprep.subr.bf16.mxu0 0
      %822 = vmatpush1.bf16.msra.mxu0 %v779
      %823 = vmatprep.subr.bf16.mxu0 0
      %824 = vmatpush1.bf16.msra.mxu0 %v780
      %825 = vmatprep.subr.bf16.mxu0 0
      %826 = vmatpush1.bf16.msra.mxu0 %v781
      %827 = vmatprep.subr.bf16.mxu0 0
      %828 = vmatpush1.bf16.msra.mxu0 %v782
      %829 = vmatprep.subr.bf16.mxu0 0
      %830 = vmatpush1.bf16.msra.mxu0 %v783
      %831 = vmatprep.subr.bf16.mxu0 0
      %832 = vmatpush1.bf16.msra.mxu0 %v784
      %833 = vmatprep.mubr.bf16.mxu0 %v672
      %834 = vmatmul.mubr.bf16.gmra.mrb[0].mxu0 %v671
      %v835 = vpop.f32.mrb[0].mxu0
      %v836 = vadd.f32 0.0, %v835
      %v837 = vpop.f32.mrb[0].mxu0
      %v838 = vpop.f32.mrb[0].mxu0
      %v839 = vadd.f32 0.0, %v838
      %v840 = vpop.f32.mrb[0].mxu0
      %841 = vdwg.mxu0
      %s842 = scalar_lea.vmem %s5, 128
      %v843 = vld [vmem:[%s842] sm:$0xf]
      %v844 = vld [vmem:[%s842 + $0x4] sm:$0xf]
      %v845 = vld [vmem:[%s842 + $0x8] sm:$0xf]
      %v846 = vld [vmem:[%s842 + $0xc] sm:$0xf]
      %v847 = vld [vmem:[%s842 + $0x10] sm:$0xf]
      %v848 = vld [vmem:[%s842 + $0x14] sm:$0xf]
      %v849 = vld [vmem:[%s842 + $0x18] sm:$0xf]
      %v850 = vld [vmem:[%s842 + $0x1c] sm:$0xf]
      %v851 = vld [vmem:[%s842 + $0x20] sm:$0xf]
      %v852 = vld [vmem:[%s842 + $0x24] sm:$0xf]
      %v853 = vld [vmem:[%s842 + $0x28] sm:$0xf]
      %v854 = vld [vmem:[%s842 + $0x2c] sm:$0xf]
      %v855 = vld [vmem:[%s842 + $0x30] sm:$0xf]
      %v856 = vld [vmem:[%s842 + $0x34] sm:$0xf]
      %v857 = vld [vmem:[%s842 + $0x38] sm:$0xf]
      %v858 = vld [vmem:[%s842 + $0x3c] sm:$0xf]
      %v859 = vld [vmem:[%s842 + $0x40] sm:$0xf]
      %v860 = vld [vmem:[%s842 + $0x44] sm:$0xf]
      %v861 = vld [vmem:[%s842 + $0x48] sm:$0xf]
      %v862 = vld [vmem:[%s842 + $0x4c] sm:$0xf]
      %v863 = vld [vmem:[%s842 + $0x50] sm:$0xf]
      %v864 = vld [vmem:[%s842 + $0x54] sm:$0xf]
      %v865 = vld [vmem:[%s842 + $0x58] sm:$0xf]
      %v866 = vld [vmem:[%s842 + $0x5c] sm:$0xf]
      %v867 = vld [vmem:[%s842 + $0x60] sm:$0xf]
      %v868 = vld [vmem:[%s842 + $0x64] sm:$0xf]
      %v869 = vld [vmem:[%s842 + $0x68] sm:$0xf]
      %v870 = vld [vmem:[%s842 + $0x6c] sm:$0xf]
      %v871 = vld [vmem:[%s842 + $0x70] sm:$0xf]
      %v872 = vld [vmem:[%s842 + $0x74] sm:$0xf]
      %v873 = vld [vmem:[%s842 + $0x78] sm:$0xf]
      %v874 = vld [vmem:[%s842 + $0x7c] sm:$0xf]
      %v907 = vunpack.c.l.b16 %v843
      %v908 = vunpack.c.l.b16 %v844
      %v909 = vunpack.c.l.b16 %v845
      %v910 = vunpack.c.l.b16 %v846
      %v911 = vunpack.c.l.b16 %v847
      %v912 = vunpack.c.l.b16 %v848
      %v913 = vunpack.c.l.b16 %v849
      %v914 = vunpack.c.l.b16 %v850
      %v915 = vunpack.c.l.b16 %v851
      %v916 = vunpack.c.l.b16 %v852
      %v917 = vunpack.c.l.b16 %v853
      %v918 = vunpack.c.l.b16 %v854
      %v919 = vunpack.c.l.b16 %v855
      %v920 = vunpack.c.l.b16 %v856
      %v921 = vunpack.c.l.b16 %v857
      %v922 = vunpack.c.l.b16 %v858
      %v923 = vunpack.c.l.b16 %v859
      %v924 = vunpack.c.l.b16 %v860
      %v925 = vunpack.c.l.b16 %v861
      %v926 = vunpack.c.l.b16 %v862
      %v927 = vunpack.c.l.b16 %v863
      %v928 = vunpack.c.l.b16 %v864
      %v929 = vunpack.c.l.b16 %v865
      %v930 = vunpack.c.l.b16 %v866
      %v931 = vunpack.c.l.b16 %v867
      %v932 = vunpack.c.l.b16 %v868
      %v933 = vunpack.c.l.b16 %v869
      %v934 = vunpack.c.l.b16 %v870
      %v935 = vunpack.c.l.b16 %v871
      %v936 = vunpack.c.l.b16 %v872
      %v937 = vunpack.c.l.b16 %v873
      %v938 = vunpack.c.l.b16 %v874
      %v939 = vpack.c.b16 %v908, %v907
      %v940 = vpack.c.b16 %v910, %v909
      %v941 = vpack.c.b16 %v912, %v911
      %v942 = vpack.c.b16 %v914, %v913
      %v943 = vpack.c.b16 %v916, %v915
      %v944 = vpack.c.b16 %v918, %v917
      %v945 = vpack.c.b16 %v920, %v919
      %v946 = vpack.c.b16 %v922, %v921
      %v947 = vpack.c.b16 %v924, %v923
      %v948 = vpack.c.b16 %v926, %v925
      %v949 = vpack.c.b16 %v928, %v927
      %v950 = vpack.c.b16 %v930, %v929
      %v951 = vpack.c.b16 %v932, %v931
      %v952 = vpack.c.b16 %v934, %v933
      %v953 = vpack.c.b16 %v936, %v935
      %v954 = vpack.c.b16 %v938, %v937
      %971 = vmatprep.subr.bf16.mxu0 0
      %972 = vmatpush1.bf16.msra.mxu0 %v939
      %973 = vmatprep.subr.bf16.mxu0 0
      %974 = vmatpush1.bf16.msra.mxu0 %v940
      %975 = vmatprep.subr.bf16.mxu0 0
      %976 = vmatpush1.bf16.msra.mxu0 %v941
      %977 = vmatprep.subr.bf16.mxu0 0
      %978 = vmatpush1.bf16.msra.mxu0 %v942
      %979 = vmatprep.subr.bf16.mxu0 0
      %980 = vmatpush1.bf16.msra.mxu0 %v943
      %981 = vmatprep.subr.bf16.mxu0 0
      %982 = vmatpush1.bf16.msra.mxu0 %v944
      %983 = vmatprep.subr.bf16.mxu0 0
      %984 = vmatpush1.bf16.msra.mxu0 %v945
      %985 = vmatprep.subr.bf16.mxu0 0
      %986 = vmatpush1.bf16.msra.mxu0 %v946
      %987 = vmatprep.subr.bf16.mxu0 0
      %988 = vmatpush1.bf16.msra.mxu0 %v947
      %989 = vmatprep.subr.bf16.mxu0 0
      %990 = vmatpush1.bf16.msra.mxu0 %v948
      %991 = vmatprep.subr.bf16.mxu0 0
      %992 = vmatpush1.bf16.msra.mxu0 %v949
      %993 = vmatprep.subr.bf16.mxu0 0
      %994 = vmatpush1.bf16.msra.mxu0 %v950
      %995 = vmatprep.subr.bf16.mxu0 0
      %996 = vmatpush1.bf16.msra.mxu0 %v951
      %997 = vmatprep.subr.bf16.mxu0 0
      %998 = vmatpush1.bf16.msra.mxu0 %v952
      %999 = vmatprep.subr.bf16.mxu0 0
      %1000 = vmatpush1.bf16.msra.mxu0 %v953
      %1001 = vmatprep.subr.bf16.mxu0 0
      %1002 = vmatpush1.bf16.msra.mxu0 %v954
      %1003 = vmatprep.mubr.bf16.mxu0 %v672
      %1004 = vmatmul.mubr.bf16.gmra.mrb[0].mxu0 %v671
      %v1005 = vpop.f32.mrb[0].mxu0
      %v1006 = vadd.f32 0.0, %v1005
      %v1007 = vpop.f32.mrb[0].mxu0
      %v1008 = vpop.f32.mrb[0].mxu0
      %v1009 = vadd.f32 0.0, %v1008
      %v1010 = vpop.f32.mrb[0].mxu0
      %1011 = vdwg.mxu0
      %s1012 = scalar_lea.vmem %s5, 256
      %v1013 = vld [vmem:[%s1012] sm:$0xf]
      %v1014 = vld [vmem:[%s1012 + $0x4] sm:$0xf]
      %v1015 = vld [vmem:[%s1012 + $0x8] sm:$0xf]
      %v1016 = vld [vmem:[%s1012 + $0xc] sm:$0xf]
      %v1017 = vld [vmem:[%s1012 + $0x10] sm:$0xf]
      %v1018 = vld [vmem:[%s1012 + $0x14] sm:$0xf]
      %v1019 = vld [vmem:[%s1012 + $0x18] sm:$0xf]
      %v1020 = vld [vmem:[%s1012 + $0x1c] sm:$0xf]
      %v1021 = vld [vmem:[%s1012 + $0x20] sm:$0xf]
      %v1022 = vld [vmem:[%s1012 + $0x24] sm:$0xf]
      %v1023 = vld [vmem:[%s1012 + $0x28] sm:$0xf]
      %v1024 = vld [vmem:[%s1012 + $0x2c] sm:$0xf]
      %v1025 = vld [vmem:[%s1012 + $0x30] sm:$0xf]
      %v1026 = vld [vmem:[%s1012 + $0x34] sm:$0xf]
      %v1027 = vld [vmem:[%s1012 + $0x38] sm:$0xf]
      %v1028 = vld [vmem:[%s1012 + $0x3c] sm:$0xf]
      %v1029 = vld [vmem:[%s1012 + $0x40] sm:$0xf]
      %v1030 = vld [vmem:[%s1012 + $0x44] sm:$0xf]
      %v1031 = vld [vmem:[%s1012 + $0x48] sm:$0xf]
      %v1032 = vld [vmem:[%s1012 + $0x4c] sm:$0xf]
      %v1033 = vld [vmem:[%s1012 + $0x50] sm:$0xf]
      %v1034 = vld [vmem:[%s1012 + $0x54] sm:$0xf]
      %v1035 = vld [vmem:[%s1012 + $0x58] sm:$0xf]
      %v1036 = vld [vmem:[%s1012 + $0x5c] sm:$0xf]
      %v1037 = vld [vmem:[%s1012 + $0x60] sm:$0xf]
      %v1038 = vld [vmem:[%s1012 + $0x64] sm:$0xf]
      %v1039 = vld [vmem:[%s1012 + $0x68] sm:$0xf]
      %v1040 = vld [vmem:[%s1012 + $0x6c] sm:$0xf]
      %v1041 = vld [vmem:[%s1012 + $0x70] sm:$0xf]
      %v1042 = vld [vmem:[%s1012 + $0x74] sm:$0xf]
      %v1043 = vld [vmem:[%s1012 + $0x78] sm:$0xf]
      %v1044 = vld [vmem:[%s1012 + $0x7c] sm:$0xf]
      %v1077 = vunpack.c.l.b16 %v1013
      %v1078 = vunpack.c.l.b16 %v1014
      %v1079 = vunpack.c.l.b16 %v1015
      %v1080 = vunpack.c.l.b16 %v1016
      %v1081 = vunpack.c.l.b16 %v1017
      %v1082 = vunpack.c.l.b16 %v1018
      %v1083 = vunpack.c.l.b16 %v1019
      %v1084 = vunpack.c.l.b16 %v1020
      %v1085 = vunpack.c.l.b16 %v1021
      %v1086 = vunpack.c.l.b16 %v1022
      %v1087 = vunpack.c.l.b16 %v1023
      %v1088 = vunpack.c.l.b16 %v1024
      %v1089 = vunpack.c.l.b16 %v1025
      %v1090 = vunpack.c.l.b16 %v1026
      %v1091 = vunpack.c.l.b16 %v1027
      %v1092 = vunpack.c.l.b16 %v1028
      %v1093 = vunpack.c.l.b16 %v1029
      %v1094 = vunpack.c.l.b16 %v1030
      %v1095 = vunpack.c.l.b16 %v1031
      %v1096 = vunpack.c.l.b16 %v1032
      %v1097 = vunpack.c.l.b16 %v1033
      %v1098 = vunpack.c.l.b16 %v1034
      %v1099 = vunpack.c.l.b16 %v1035
      %v1100 = vunpack.c.l.b16 %v1036
      %v1101 = vunpack.c.l.b16 %v1037
      %v1102 = vunpack.c.l.b16 %v1038
      %v1103 = vunpack.c.l.b16 %v1039
      %v1104 = vunpack.c.l.b16 %v1040
      %v1105 = vunpack.c.l.b16 %v1041
      %v1106 = vunpack.c.l.b16 %v1042
      %v1107 = vunpack.c.l.b16 %v1043
      %v1108 = vunpack.c.l.b16 %v1044
      %v1109 = vpack.c.b16 %v1078, %v1077
      %v1110 = vpack.c.b16 %v1080, %v1079
      %v1111 = vpack.c.b16 %v1082, %v1081
      %v1112 = vpack.c.b16 %v1084, %v1083
      %v1113 = vpack.c.b16 %v1086, %v1085
      %v1114 = vpack.c.b16 %v1088, %v1087
      %v1115 = vpack.c.b16 %v1090, %v1089
      %v1116 = vpack.c.b16 %v1092, %v1091
      %v1117 = vpack.c.b16 %v1094, %v1093
      %v1118 = vpack.c.b16 %v1096, %v1095
      %v1119 = vpack.c.b16 %v1098, %v1097
      %v1120 = vpack.c.b16 %v1100, %v1099
      %v1121 = vpack.c.b16 %v1102, %v1101
      %v1122 = vpack.c.b16 %v1104, %v1103
      %v1123 = vpack.c.b16 %v1106, %v1105
      %v1124 = vpack.c.b16 %v1108, %v1107
      %1141 = vmatprep.subr.bf16.mxu0 0
      %1142 = vmatpush1.bf16.msra.mxu0 %v1109
      %1143 = vmatprep.subr.bf16.mxu0 0
      %1144 = vmatpush1.bf16.msra.mxu0 %v1110
      %1145 = vmatprep.subr.bf16.mxu0 0
      %1146 = vmatpush1.bf16.msra.mxu0 %v1111
      %1147 = vmatprep.subr.bf16.mxu0 0
      %1148 = vmatpush1.bf16.msra.mxu0 %v1112
      %1149 = vmatprep.subr.bf16.mxu0 0
      %1150 = vmatpush1.bf16.msra.mxu0 %v1113
      %1151 = vmatprep.subr.bf16.mxu0 0
      %1152 = vmatpush1.bf16.msra.mxu0 %v1114
      %1153 = vmatprep.subr.bf16.mxu0 0
      %1154 = vmatpush1.bf16.msra.mxu0 %v1115
      %1155 = vmatprep.subr.bf16.mxu0 0
      %1156 = vmatpush1.bf16.msra.mxu0 %v1116
      %1157 = vmatprep.subr.bf16.mxu0 0
      %1158 = vmatpush1.bf16.msra.mxu0 %v1117
      %1159 = vmatprep.subr.bf16.mxu0 0
      %1160 = vmatpush1.bf16.msra.mxu0 %v1118
      %1161 = vmatprep.subr.bf16.mxu0 0
      %1162 = vmatpush1.bf16.msra.mxu0 %v1119
      %1163 = vmatprep.subr.bf16.mxu0 0
      %1164 = vmatpush1.bf16.msra.mxu0 %v1120
      %1165 = vmatprep.subr.bf16.mxu0 0
      %1166 = vmatpush1.bf16.msra.mxu0 %v1121
      %1167 = vmatprep.subr.bf16.mxu0 0
      %1168 = vmatpush1.bf16.msra.mxu0 %v1122
      %1169 = vmatprep.subr.bf16.mxu0 0
      %1170 = vmatpush1.bf16.msra.mxu0 %v1123
      %1171 = vmatprep.subr.bf16.mxu0 0
      %1172 = vmatpush1.bf16.msra.mxu0 %v1124
      %1173 = vmatprep.mubr.bf16.mxu0 %v672
      %1174 = vmatmul.mubr.bf16.gmra.mrb[0].mxu0 %v671
      %v1175 = vpop.f32.mrb[0].mxu0
      %v1176 = vadd.f32 0.0, %v1175
      %v1177 = vpop.f32.mrb[0].mxu0
      %v1178 = vpop.f32.mrb[0].mxu0
      %v1179 = vadd.f32 0.0, %v1178
      %v1180 = vpop.f32.mrb[0].mxu0
      %1181 = vdwg.mxu0
      %s1182 = scalar_lea.vmem %s5, 384
      %v1183 = vld [vmem:[%s1182] sm:$0xf]
      %v1184 = vld [vmem:[%s1182 + $0x4] sm:$0xf]
      %v1185 = vld [vmem:[%s1182 + $0x8] sm:$0xf]
      %v1186 = vld [vmem:[%s1182 + $0xc] sm:$0xf]
      %v1187 = vld [vmem:[%s1182 + $0x10] sm:$0xf]
      %v1188 = vld [vmem:[%s1182 + $0x14] sm:$0xf]
      %v1189 = vld [vmem:[%s1182 + $0x18] sm:$0xf]
      %v1190 = vld [vmem:[%s1182 + $0x1c] sm:$0xf]
      %v1191 = vld [vmem:[%s1182 + $0x20] sm:$0xf]
      %v1192 = vld [vmem:[%s1182 + $0x24] sm:$0xf]
      %v1193 = vld [vmem:[%s1182 + $0x28] sm:$0xf]
      %v1194 = vld [vmem:[%s1182 + $0x2c] sm:$0xf]
      %v1195 = vld [vmem:[%s1182 + $0x30] sm:$0xf]
      %v1196 = vld [vmem:[%s1182 + $0x34] sm:$0xf]
      %v1197 = vld [vmem:[%s1182 + $0x38] sm:$0xf]
      %v1198 = vld [vmem:[%s1182 + $0x3c] sm:$0xf]
      %v1199 = vld [vmem:[%s1182 + $0x40] sm:$0xf]
      %v1200 = vld [vmem:[%s1182 + $0x44] sm:$0xf]
      %v1201 = vld [vmem:[%s1182 + $0x48] sm:$0xf]
      %v1202 = vld [vmem:[%s1182 + $0x4c] sm:$0xf]
      %v1203 = vld [vmem:[%s1182 + $0x50] sm:$0xf]
      %v1204 = vld [vmem:[%s1182 + $0x54] sm:$0xf]
      %v1205 = vld [vmem:[%s1182 + $0x58] sm:$0xf]
      %v1206 = vld [vmem:[%s1182 + $0x5c] sm:$0xf]
      %v1207 = vld [vmem:[%s1182 + $0x60] sm:$0xf]
      %v1208 = vld [vmem:[%s1182 + $0x64] sm:$0xf]
      %v1209 = vld [vmem:[%s1182 + $0x68] sm:$0xf]
      %v1210 = vld [vmem:[%s1182 + $0x6c] sm:$0xf]
      %v1211 = vld [vmem:[%s1182 + $0x70] sm:$0xf]
      %v1212 = vld [vmem:[%s1182 + $0x74] sm:$0xf]
      %v1213 = vld [vmem:[%s1182 + $0x78] sm:$0xf]
      %v1214 = vld [vmem:[%s1182 + $0x7c] sm:$0xf]
      %v1247 = vunpack.c.l.b16 %v1183
      %v1248 = vunpack.c.l.b16 %v1184
      %v1249 = vunpack.c.l.b16 %v1185
      %v1250 = vunpack.c.l.b16 %v1186
      %v1251 = vunpack.c.l.b16 %v1187
      %v1252 = vunpack.c.l.b16 %v1188
      %v1253 = vunpack.c.l.b16 %v1189
      %v1254 = vunpack.c.l.b16 %v1190
      %v1255 = vunpack.c.l.b16 %v1191
      %v1256 = vunpack.c.l.b16 %v1192
      %v1257 = vunpack.c.l.b16 %v1193
      %v1258 = vunpack.c.l.b16 %v1194
      %v1259 = vunpack.c.l.b16 %v1195
      %v1260 = vunpack.c.l.b16 %v1196
      %v1261 = vunpack.c.l.b16 %v1197
      %v1262 = vunpack.c.l.b16 %v1198
      %v1263 = vunpack.c.l.b16 %v1199
      %v1264 = vunpack.c.l.b16 %v1200
      %v1265 = vunpack.c.l.b16 %v1201
      %v1266 = vunpack.c.l.b16 %v1202
      %v1267 = vunpack.c.l.b16 %v1203
      %v1268 = vunpack.c.l.b16 %v1204
      %v1269 = vunpack.c.l.b16 %v1205
      %v1270 = vunpack.c.l.b16 %v1206
      %v1271 = vunpack.c.l.b16 %v1207
      %v1272 = vunpack.c.l.b16 %v1208
      %v1273 = vunpack.c.l.b16 %v1209
      %v1274 = vunpack.c.l.b16 %v1210
      %v1275 = vunpack.c.l.b16 %v1211
      %v1276 = vunpack.c.l.b16 %v1212
      %v1277 = vunpack.c.l.b16 %v1213
      %v1278 = vunpack.c.l.b16 %v1214
      %v1279 = vpack.c.b16 %v1248, %v1247
      %v1280 = vpack.c.b16 %v1250, %v1249
      %v1281 = vpack.c.b16 %v1252, %v1251
      %v1282 = vpack.c.b16 %v1254, %v1253
      %v1283 = vpack.c.b16 %v1256, %v1255
      %v1284 = vpack.c.b16 %v1258, %v1257
      %v1285 = vpack.c.b16 %v1260, %v1259
      %v1286 = vpack.c.b16 %v1262, %v1261
      %v1287 = vpack.c.b16 %v1264, %v1263
      %v1288 = vpack.c.b16 %v1266, %v1265
      %v1289 = vpack.c.b16 %v1268, %v1267
      %v1290 = vpack.c.b16 %v1270, %v1269
      %v1291 = vpack.c.b16 %v1272, %v1271
      %v1292 = vpack.c.b16 %v1274, %v1273
      %v1293 = vpack.c.b16 %v1276, %v1275
      %v1294 = vpack.c.b16 %v1278, %v1277
      %1311 = vmatprep.subr.bf16.mxu0 0
      %1312 = vmatpush1.bf16.msra.mxu0 %v1279
      %1313 = vmatprep.subr.bf16.mxu0 0
      %1314 = vmatpush1.bf16.msra.mxu0 %v1280
      %1315 = vmatprep.subr.bf16.mxu0 0
      %1316 = vmatpush1.bf16.msra.mxu0 %v1281
      %1317 = vmatprep.subr.bf16.mxu0 0
      %1318 = vmatpush1.bf16.msra.mxu0 %v1282
      %1319 = vmatprep.subr.bf16.mxu0 0
      %1320 = vmatpush1.bf16.msra.mxu0 %v1283
      %1321 = vmatprep.subr.bf16.mxu0 0
      %1322 = vmatpush1.bf16.msra.mxu0 %v1284
      %1323 = vmatprep.subr.bf16.mxu0 0
      %1324 = vmatpush1.bf16.msra.mxu0 %v1285
      %1325 = vmatprep.subr.bf16.mxu0 0
      %1326 = vmatpush1.bf16.msra.mxu0 %v1286
      %1327 = vmatprep.subr.bf16.mxu0 0
      %1328 = vmatpush1.bf16.msra.mxu0 %v1287
      %1329 = vmatprep.subr.bf16.mxu0 0
      %1330 = vmatpush1.bf16.msra.mxu0 %v1288
      %1331 = vmatprep.subr.bf16.mxu0 0
      %1332 = vmatpush1.bf16.msra.mxu0 %v1289
      %1333 = vmatprep.subr.bf16.mxu0 0
      %1334 = vmatpush1.bf16.msra.mxu0 %v1290
      %1335 = vmatprep.subr.bf16.mxu0 0
      %1336 = vmatpush1.bf16.msra.mxu0 %v1291
      %1337 = vmatprep.subr.bf16.mxu0 0
      %1338 = vmatpush1.bf16.msra.mxu0 %v1292
      %1339 = vmatprep.subr.bf16.mxu0 0
      %1340 = vmatpush1.bf16.msra.mxu0 %v1293
      %1341 = vmatprep.subr.bf16.mxu0 0
      %1342 = vmatpush1.bf16.msra.mxu0 %v1294
      %1343 = vmatprep.mubr.bf16.mxu0 %v672
      %1344 = vmatmul.mubr.bf16.gmra.mrb[0].mxu0 %v671
      %v1345 = vpop.f32.mrb[0].mxu0
      %v1346 = vadd.f32 0.0, %v1345
      %v1347 = vpop.f32.mrb[0].mxu0
      %v1348 = vpop.f32.mrb[0].mxu0
      %v1349 = vadd.f32 0.0, %v1348
      %v1350 = vpop.f32.mrb[0].mxu0
      %1351 = vdwg.mxu0
      %s1352 = scalar_lea.vmem %s5, 512
      %v1353 = vld [vmem:[%s1352] sm:$0xf]
      %v1354 = vld [vmem:[%s1352 + $0x4] sm:$0xf]
      %v1355 = vld [vmem:[%s1352 + $0x8] sm:$0xf]
      %v1356 = vld [vmem:[%s1352 + $0xc] sm:$0xf]
      %v1357 = vld [vmem:[%s1352 + $0x10] sm:$0xf]
      %v1358 = vld [vmem:[%s1352 + $0x14] sm:$0xf]
      %v1359 = vld [vmem:[%s1352 + $0x18] sm:$0xf]
      %v1360 = vld [vmem:[%s1352 + $0x1c] sm:$0xf]
      %v1361 = vld [vmem:[%s1352 + $0x20] sm:$0xf]
      %v1362 = vld [vmem:[%s1352 + $0x24] sm:$0xf]
      %v1363 = vld [vmem:[%s1352 + $0x28] sm:$0xf]
      %v1364 = vld [vmem:[%s1352 + $0x2c] sm:$0xf]
      %v1365 = vld [vmem:[%s1352 + $0x30] sm:$0xf]
      %v1366 = vld [vmem:[%s1352 + $0x34] sm:$0xf]
      %v1367 = vld [vmem:[%s1352 + $0x38] sm:$0xf]
      %v1368 = vld [vmem:[%s1352 + $0x3c] sm:$0xf]
      %v1369 = vld [vmem:[%s1352 + $0x40] sm:$0xf]
      %v1370 = vld [vmem:[%s1352 + $0x44] sm:$0xf]
      %v1371 = vld [vmem:[%s1352 + $0x48] sm:$0xf]
      %v1372 = vld [vmem:[%s1352 + $0x4c] sm:$0xf]
      %v1373 = vld [vmem:[%s1352 + $0x50] sm:$0xf]
      %v1374 = vld [vmem:[%s1352 + $0x54] sm:$0xf]
      %v1375 = vld [vmem:[%s1352 + $0x58] sm:$0xf]
      %v1376 = vld [vmem:[%s1352 + $0x5c] sm:$0xf]
      %v1377 = vld [vmem:[%s1352 + $0x60] sm:$0xf]
      %v1378 = vld [vmem:[%s1352 + $0x64] sm:$0xf]
      %v1379 = vld [vmem:[%s1352 + $0x68] sm:$0xf]
      %v1380 = vld [vmem:[%s1352 + $0x6c] sm:$0xf]
      %v1381 = vld [vmem:[%s1352 + $0x70] sm:$0xf]
      %v1382 = vld [vmem:[%s1352 + $0x74] sm:$0xf]
      %v1383 = vld [vmem:[%s1352 + $0x78] sm:$0xf]
      %v1384 = vld [vmem:[%s1352 + $0x7c] sm:$0xf]
      %v1417 = vunpack.c.l.b16 %v1353
      %v1418 = vunpack.c.l.b16 %v1354
      %v1419 = vunpack.c.l.b16 %v1355
      %v1420 = vunpack.c.l.b16 %v1356
      %v1421 = vunpack.c.l.b16 %v1357
      %v1422 = vunpack.c.l.b16 %v1358
      %v1423 = vunpack.c.l.b16 %v1359
      %v1424 = vunpack.c.l.b16 %v1360
      %v1425 = vunpack.c.l.b16 %v1361
      %v1426 = vunpack.c.l.b16 %v1362
      %v1427 = vunpack.c.l.b16 %v1363
      %v1428 = vunpack.c.l.b16 %v1364
      %v1429 = vunpack.c.l.b16 %v1365
      %v1430 = vunpack.c.l.b16 %v1366
      %v1431 = vunpack.c.l.b16 %v1367
      %v1432 = vunpack.c.l.b16 %v1368
      %v1433 = vunpack.c.l.b16 %v1369
      %v1434 = vunpack.c.l.b16 %v1370
      %v1435 = vunpack.c.l.b16 %v1371
      %v1436 = vunpack.c.l.b16 %v1372
      %v1437 = vunpack.c.l.b16 %v1373
      %v1438 = vunpack.c.l.b16 %v1374
      %v1439 = vunpack.c.l.b16 %v1375
      %v1440 = vunpack.c.l.b16 %v1376
      %v1441 = vunpack.c.l.b16 %v1377
      %v1442 = vunpack.c.l.b16 %v1378
      %v1443 = vunpack.c.l.b16 %v1379
      %v1444 = vunpack.c.l.b16 %v1380
      %v1445 = vunpack.c.l.b16 %v1381
      %v1446 = vunpack.c.l.b16 %v1382
      %v1447 = vunpack.c.l.b16 %v1383
      %v1448 = vunpack.c.l.b16 %v1384
      %v1449 = vpack.c.b16 %v1418, %v1417
      %v1450 = vpack.c.b16 %v1420, %v1419
      %v1451 = vpack.c.b16 %v1422, %v1421
      %v1452 = vpack.c.b16 %v1424, %v1423
      %v1453 = vpack.c.b16 %v1426, %v1425
      %v1454 = vpack.c.b16 %v1428, %v1427
      %v1455 = vpack.c.b16 %v1430, %v1429
      %v1456 = vpack.c.b16 %v1432, %v1431
      %v1457 = vpack.c.b16 %v1434, %v1433
      %v1458 = vpack.c.b16 %v1436, %v1435
      %v1459 = vpack.c.b16 %v1438, %v1437
      %v1460 = vpack.c.b16 %v1440, %v1439
      %v1461 = vpack.c.b16 %v1442, %v1441
      %v1462 = vpack.c.b16 %v1444, %v1443
      %v1463 = vpack.c.b16 %v1446, %v1445
      %v1464 = vpack.c.b16 %v1448, %v1447
      %1481 = vmatprep.subr.bf16.mxu0 0
      %1482 = vmatpush1.bf16.msra.mxu0 %v1449
      %1483 = vmatprep.subr.bf16.mxu0 0
      %1484 = vmatpush1.bf16.msra.mxu0 %v1450
      %1485 = vmatprep.subr.bf16.mxu0 0
      %1486 = vmatpush1.bf16.msra.mxu0 %v1451
      %1487 = vmatprep.subr.bf16.mxu0 0
      %1488 = vmatpush1.bf16.msra.mxu0 %v1452
      %1489 = vmatprep.subr.bf16.mxu0 0
      %1490 = vmatpush1.bf16.msra.mxu0 %v1453
      %1491 = vmatprep.subr.bf16.mxu0 0
      %1492 = vmatpush1.bf16.msra.mxu0 %v1454
      %1493 = vmatprep.subr.bf16.mxu0 0
      %1494 = vmatpush1.bf16.msra.mxu0 %v1455
      %1495 = vmatprep.subr.bf16.mxu0 0
      %1496 = vmatpush1.bf16.msra.mxu0 %v1456
      %1497 = vmatprep.subr.bf16.mxu0 0
      %1498 = vmatpush1.bf16.msra.mxu0 %v1457
      %1499 = vmatprep.subr.bf16.mxu0 0
      %1500 = vmatpush1.bf16.msra.mxu0 %v1458
      %1501 = vmatprep.subr.bf16.mxu0 0
      %1502 = vmatpush1.bf16.msra.mxu0 %v1459
      %1503 = vmatprep.subr.bf16.mxu0 0
      %1504 = vmatpush1.bf16.msra.mxu0 %v1460
      %1505 = vmatprep.subr.bf16.mxu0 0
      %1506 = vmatpush1.bf16.msra.mxu0 %v1461
      %1507 = vmatprep.subr.bf16.mxu0 0
      %1508 = vmatpush1.bf16.msra.mxu0 %v1462
      %1509 = vmatprep.subr.bf16.mxu0 0
      %1510 = vmatpush1.bf16.msra.mxu0 %v1463
      %1511 = vmatprep.subr.bf16.mxu0 0
      %1512 = vmatpush1.bf16.msra.mxu0 %v1464
      %1513 = vmatprep.mubr.bf16.mxu0 %v672
      %1514 = vmatmul.mubr.bf16.gmra.mrb[0].mxu0 %v671
      %v1515 = vpop.f32.mrb[0].mxu0
      %v1516 = vadd.f32 0.0, %v1515
      %v1517 = vpop.f32.mrb[0].mxu0
      %v1518 = vpop.f32.mrb[0].mxu0
      %v1519 = vadd.f32 0.0, %v1518
      %v1520 = vpop.f32.mrb[0].mxu0
      %1521 = vdwg.mxu0
      %s1522 = scalar_lea.vmem %s5, 640
      %v1523 = vld [vmem:[%s1522] sm:$0xf]
      %v1524 = vld [vmem:[%s1522 + $0x4] sm:$0xf]
      %v1525 = vld [vmem:[%s1522 + $0x8] sm:$0xf]
      %v1526 = vld [vmem:[%s1522 + $0xc] sm:$0xf]
      %v1527 = vld [vmem:[%s1522 + $0x10] sm:$0xf]
      %v1528 = vld [vmem:[%s1522 + $0x14] sm:$0xf]
      %v1529 = vld [vmem:[%s1522 + $0x18] sm:$0xf]
      %v1530 = vld [vmem:[%s1522 + $0x1c] sm:$0xf]
      %v1531 = vld [vmem:[%s1522 + $0x20] sm:$0xf]
      %v1532 = vld [vmem:[%s1522 + $0x24] sm:$0xf]
      %v1533 = vld [vmem:[%s1522 + $0x28] sm:$0xf]
      %v1534 = vld [vmem:[%s1522 + $0x2c] sm:$0xf]
      %v1535 = vld [vmem:[%s1522 + $0x30] sm:$0xf]
      %v1536 = vld [vmem:[%s1522 + $0x34] sm:$0xf]
      %v1537 = vld [vmem:[%s1522 + $0x38] sm:$0xf]
      %v1538 = vld [vmem:[%s1522 + $0x3c] sm:$0xf]
      %v1539 = vld [vmem:[%s1522 + $0x40] sm:$0xf]
      %v1540 = vld [vmem:[%s1522 + $0x44] sm:$0xf]
      %v1541 = vld [vmem:[%s1522 + $0x48] sm:$0xf]
      %v1542 = vld [vmem:[%s1522 + $0x4c] sm:$0xf]
      %v1543 = vld [vmem:[%s1522 + $0x50] sm:$0xf]
      %v1544 = vld [vmem:[%s1522 + $0x54] sm:$0xf]
      %v1545 = vld [vmem:[%s1522 + $0x58] sm:$0xf]
      %v1546 = vld [vmem:[%s1522 + $0x5c] sm:$0xf]
      %v1547 = vld [vmem:[%s1522 + $0x60] sm:$0xf]
      %v1548 = vld [vmem:[%s1522 + $0x64] sm:$0xf]
      %v1549 = vld [vmem:[%s1522 + $0x68] sm:$0xf]
      %v1550 = vld [vmem:[%s1522 + $0x6c] sm:$0xf]
      %v1551 = vld [vmem:[%s1522 + $0x70] sm:$0xf]
      %v1552 = vld [vmem:[%s1522 + $0x74] sm:$0xf]
      %v1553 = vld [vmem:[%s1522 + $0x78] sm:$0xf]
      %v1554 = vld [vmem:[%s1522 + $0x7c] sm:$0xf]
      %v1587 = vunpack.c.l.b16 %v1523
      %v1588 = vunpack.c.l.b16 %v1524
      %v1589 = vunpack.c.l.b16 %v1525
      %v1590 = vunpack.c.l.b16 %v1526
      %v1591 = vunpack.c.l.b16 %v1527
      %v1592 = vunpack.c.l.b16 %v1528
      %v1593 = vunpack.c.l.b16 %v1529
      %v1594 = vunpack.c.l.b16 %v1530
      %v1595 = vunpack.c.l.b16 %v1531
      %v1596 = vunpack.c.l.b16 %v1532
      %v1597 = vunpack.c.l.b16 %v1533
      %v1598 = vunpack.c.l.b16 %v1534
      %v1599 = vunpack.c.l.b16 %v1535
      %v1600 = vunpack.c.l.b16 %v1536
      %v1601 = vunpack.c.l.b16 %v1537
      %v1602 = vunpack.c.l.b16 %v1538
      %v1603 = vunpack.c.l.b16 %v1539
      %v1604 = vunpack.c.l.b16 %v1540
      %v1605 = vunpack.c.l.b16 %v1541
      %v1606 = vunpack.c.l.b16 %v1542
      %v1607 = vunpack.c.l.b16 %v1543
      %v1608 = vunpack.c.l.b16 %v1544
      %v1609 = vunpack.c.l.b16 %v1545
      %v1610 = vunpack.c.l.b16 %v1546
      %v1611 = vunpack.c.l.b16 %v1547
      %v1612 = vunpack.c.l.b16 %v1548
      %v1613 = vunpack.c.l.b16 %v1549
      %v1614 = vunpack.c.l.b16 %v1550
      %v1615 = vunpack.c.l.b16 %v1551
      %v1616 = vunpack.c.l.b16 %v1552
      %v1617 = vunpack.c.l.b16 %v1553
      %v1618 = vunpack.c.l.b16 %v1554
      %v1619 = vpack.c.b16 %v1588, %v1587
      %v1620 = vpack.c.b16 %v1590, %v1589
      %v1621 = vpack.c.b16 %v1592, %v1591
      %v1622 = vpack.c.b16 %v1594, %v1593
      %v1623 = vpack.c.b16 %v1596, %v1595
      %v1624 = vpack.c.b16 %v1598, %v1597
      %v1625 = vpack.c.b16 %v1600, %v1599
      %v1626 = vpack.c.b16 %v1602, %v1601
      %v1627 = vpack.c.b16 %v1604, %v1603
      %v1628 = vpack.c.b16 %v1606, %v1605
      %v1629 = vpack.c.b16 %v1608, %v1607
      %v1630 = vpack.c.b16 %v1610, %v1609
      %v1631 = vpack.c.b16 %v1612, %v1611
      %v1632 = vpack.c.b16 %v1614, %v1613
      %v1633 = vpack.c.b16 %v1616, %v1615
      %v1634 = vpack.c.b16 %v1618, %v1617
      %1651 = vmatprep.subr.bf16.mxu0 0
      %1652 = vmatpush1.bf16.msra.mxu0 %v1619
      %1653 = vmatprep.subr.bf16.mxu0 0
      %1654 = vmatpush1.bf16.msra.mxu0 %v1620
      %1655 = vmatprep.subr.bf16.mxu0 0
      %1656 = vmatpush1.bf16.msra.mxu0 %v1621
      %1657 = vmatprep.subr.bf16.mxu0 0
      %1658 = vmatpush1.bf16.msra.mxu0 %v1622
      %1659 = vmatprep.subr.bf16.mxu0 0
      %1660 = vmatpush1.bf16.msra.mxu0 %v1623
      %1661 = vmatprep.subr.bf16.mxu0 0
      %1662 = vmatpush1.bf16.msra.mxu0 %v1624
      %1663 = vmatprep.subr.bf16.mxu0 0
      %1664 = vmatpush1.bf16.msra.mxu0 %v1625
      %1665 = vmatprep.subr.bf16.mxu0 0
      %1666 = vmatpush1.bf16.msra.mxu0 %v1626
      %1667 = vmatprep.subr.bf16.mxu0 0
      %1668 = vmatpush1.bf16.msra.mxu0 %v1627
      %1669 = vmatprep.subr.bf16.mxu0 0
      %1670 = vmatpush1.bf16.msra.mxu0 %v1628
      %1671 = vmatprep.subr.bf16.mxu0 0
      %1672 = vmatpush1.bf16.msra.mxu0 %v1629
      %1673 = vmatprep.subr.bf16.mxu0 0
      %1674 = vmatpush1.bf16.msra.mxu0 %v1630
      %1675 = vmatprep.subr.bf16.mxu0 0
      %1676 = vmatpush1.bf16.msra.mxu0 %v1631
      %1677 = vmatprep.subr.bf16.mxu0 0
      %1678 = vmatpush1.bf16.msra.mxu0 %v1632
      %1679 = vmatprep.subr.bf16.mxu0 0
      %1680 = vmatpush1.bf16.msra.mxu0 %v1633
      %1681 = vmatprep.subr.bf16.mxu0 0
      %1682 = vmatpush1.bf16.msra.mxu0 %v1634
      %1683 = vmatprep.mubr.bf16.mxu0 %v672
      %1684 = vmatmul.mubr.bf16.gmra.mrb[0].mxu0 %v671
      %v1685 = vpop.f32.mrb[0].mxu0
      %v1686 = vadd.f32 0.0, %v1685
      %v1687 = vpop.f32.mrb[0].mxu0
      %v1688 = vpop.f32.mrb[0].mxu0
      %v1689 = vadd.f32 0.0, %v1688
      %v1690 = vpop.f32.mrb[0].mxu0
      %1691 = vdwg.mxu0
      %s1692 = scalar_lea.vmem %s5, 768
      %v1693 = vld [vmem:[%s1692] sm:$0xf]
      %v1694 = vld [vmem:[%s1692 + $0x4] sm:$0xf]
      %v1695 = vld [vmem:[%s1692 + $0x8] sm:$0xf]
      %v1696 = vld [vmem:[%s1692 + $0xc] sm:$0xf]
      %v1697 = vld [vmem:[%s1692 + $0x10] sm:$0xf]
      %v1698 = vld [vmem:[%s1692 + $0x14] sm:$0xf]
      %v1699 = vld [vmem:[%s1692 + $0x18] sm:$0xf]
      %v1700 = vld [vmem:[%s1692 + $0x1c] sm:$0xf]
      %v1701 = vld [vmem:[%s1692 + $0x20] sm:$0xf]
      %v1702 = vld [vmem:[%s1692 + $0x24] sm:$0xf]
      %v1703 = vld [vmem:[%s1692 + $0x28] sm:$0xf]
      %v1704 = vld [vmem:[%s1692 + $0x2c] sm:$0xf]
      %v1705 = vld [vmem:[%s1692 + $0x30] sm:$0xf]
      %v1706 = vld [vmem:[%s1692 + $0x34] sm:$0xf]
      %v1707 = vld [vmem:[%s1692 + $0x38] sm:$0xf]
      %v1708 = vld [vmem:[%s1692 + $0x3c] sm:$0xf]
      %v1709 = vld [vmem:[%s1692 + $0x40] sm:$0xf]
      %v1710 = vld [vmem:[%s1692 + $0x44] sm:$0xf]
      %v1711 = vld [vmem:[%s1692 + $0x48] sm:$0xf]
      %v1712 = vld [vmem:[%s1692 + $0x4c] sm:$0xf]
      %v1713 = vld [vmem:[%s1692 + $0x50] sm:$0xf]
      %v1714 = vld [vmem:[%s1692 + $0x54] sm:$0xf]
      %v1715 = vld [vmem:[%s1692 + $0x58] sm:$0xf]
      %v1716 = vld [vmem:[%s1692 + $0x5c] sm:$0xf]
      %v1717 = vld [vmem:[%s1692 + $0x60] sm:$0xf]
      %v1718 = vld [vmem:[%s1692 + $0x64] sm:$0xf]
      %v1719 = vld [vmem:[%s1692 + $0x68] sm:$0xf]
      %v1720 = vld [vmem:[%s1692 + $0x6c] sm:$0xf]
      %v1721 = vld [vmem:[%s1692 + $0x70] sm:$0xf]
      %v1722 = vld [vmem:[%s1692 + $0x74] sm:$0xf]
      %v1723 = vld [vmem:[%s1692 + $0x78] sm:$0xf]
      %v1724 = vld [vmem:[%s1692 + $0x7c] sm:$0xf]
      %v1757 = vunpack.c.l.b16 %v1693
      %v1758 = vunpack.c.l.b16 %v1694
      %v1759 = vunpack.c.l.b16 %v1695
      %v1760 = vunpack.c.l.b16 %v1696
      %v1761 = vunpack.c.l.b16 %v1697
      %v1762 = vunpack.c.l.b16 %v1698
      %v1763 = vunpack.c.l.b16 %v1699
      %v1764 = vunpack.c.l.b16 %v1700
      %v1765 = vunpack.c.l.b16 %v1701
      %v1766 = vunpack.c.l.b16 %v1702
      %v1767 = vunpack.c.l.b16 %v1703
      %v1768 = vunpack.c.l.b16 %v1704
      %v1769 = vunpack.c.l.b16 %v1705
      %v1770 = vunpack.c.l.b16 %v1706
      %v1771 = vunpack.c.l.b16 %v1707
      %v1772 = vunpack.c.l.b16 %v1708
      %v1773 = vunpack.c.l.b16 %v1709
      %v1774 = vunpack.c.l.b16 %v1710
      %v1775 = vunpack.c.l.b16 %v1711
      %v1776 = vunpack.c.l.b16 %v1712
      %v1777 = vunpack.c.l.b16 %v1713
      %v1778 = vunpack.c.l.b16 %v1714
      %v1779 = vunpack.c.l.b16 %v1715
      %v1780 = vunpack.c.l.b16 %v1716
      %v1781 = vunpack.c.l.b16 %v1717
      %v1782 = vunpack.c.l.b16 %v1718
      %v1783 = vunpack.c.l.b16 %v1719
      %v1784 = vunpack.c.l.b16 %v1720
      %v1785 = vunpack.c.l.b16 %v1721
      %v1786 = vunpack.c.l.b16 %v1722
      %v1787 = vunpack.c.l.b16 %v1723
      %v1788 = vunpack.c.l.b16 %v1724
      %v1789 = vpack.c.b16 %v1758, %v1757
      %v1790 = vpack.c.b16 %v1760, %v1759
      %v1791 = vpack.c.b16 %v1762, %v1761
      %v1792 = vpack.c.b16 %v1764, %v1763
      %v1793 = vpack.c.b16 %v1766, %v1765
      %v1794 = vpack.c.b16 %v1768, %v1767
      %v1795 = vpack.c.b16 %v1770, %v1769
      %v1796 = vpack.c.b16 %v1772, %v1771
      %v1797 = vpack.c.b16 %v1774, %v1773
      %v1798 = vpack.c.b16 %v1776, %v1775
      %v1799 = vpack.c.b16 %v1778, %v1777
      %v1800 = vpack.c.b16 %v1780, %v1779
      %v1801 = vpack.c.b16 %v1782, %v1781
      %v1802 = vpack.c.b16 %v1784, %v1783
      %v1803 = vpack.c.b16 %v1786, %v1785
      %v1804 = vpack.c.b16 %v1788, %v1787
      %1821 = vmatprep.subr.bf16.mxu0 0
      %1822 = vmatpush1.bf16.msra.mxu0 %v1789
      %1823 = vmatprep.subr.bf16.mxu0 0
      %1824 = vmatpush1.bf16.msra.mxu0 %v1790
      %1825 = vmatprep.subr.bf16.mxu0 0
      %1826 = vmatpush1.bf16.msra.mxu0 %v1791
      %1827 = vmatprep.subr.bf16.mxu0 0
      %1828 = vmatpush1.bf16.msra.mxu0 %v1792
      %1829 = vmatprep.subr.bf16.mxu0 0
      %1830 = vmatpush1.bf16.msra.mxu0 %v1793
      %1831 = vmatprep.subr.bf16.mxu0 0
      %1832 = vmatpush1.bf16.msra.mxu0 %v1794
      %1833 = vmatprep.subr.bf16.mxu0 0
      %1834 = vmatpush1.bf16.msra.mxu0 %v1795
      %1835 = vmatprep.subr.bf16.mxu0 0
      %1836 = vmatpush1.bf16.msra.mxu0 %v1796
      %1837 = vmatprep.subr.bf16.mxu0 0
      %1838 = vmatpush1.bf16.msra.mxu0 %v1797
      %1839 = vmatprep.subr.bf16.mxu0 0
      %1840 = vmatpush1.bf16.msra.mxu0 %v1798
      %1841 = vmatprep.subr.bf16.mxu0 0
      %1842 = vmatpush1.bf16.msra.mxu0 %v1799
      %1843 = vmatprep.subr.bf16.mxu0 0
      %1844 = vmatpush1.bf16.msra.mxu0 %v1800
      %1845 = vmatprep.subr.bf16.mxu0 0
      %1846 = vmatpush1.bf16.msra.mxu0 %v1801
      %1847 = vmatprep.subr.bf16.mxu0 0
      %1848 = vmatpush1.bf16.msra.mxu0 %v1802
      %1849 = vmatprep.subr.bf16.mxu0 0
      %1850 = vmatpush1.bf16.msra.mxu0 %v1803
      %1851 = vmatprep.subr.bf16.mxu0 0
      %1852 = vmatpush1.bf16.msra.mxu0 %v1804
      %1853 = vmatprep.mubr.bf16.mxu0 %v672
      %1854 = vmatmul.mubr.bf16.gmra.mrb[0].mxu0 %v671
      %v1855 = vpop.f32.mrb[0].mxu0
      %v1856 = vadd.f32 0.0, %v1855
      %v1857 = vpop.f32.mrb[0].mxu0
      %v1858 = vpop.f32.mrb[0].mxu0
      %v1859 = vadd.f32 0.0, %v1858
      %v1860 = vpop.f32.mrb[0].mxu0
      %1861 = vdwg.mxu0
      %s1862 = scalar_lea.vmem %s5, 896
      %v1863 = vld [vmem:[%s1862] sm:$0xf]
      %v1864 = vld [vmem:[%s1862 + $0x4] sm:$0xf]
      %v1865 = vld [vmem:[%s1862 + $0x8] sm:$0xf]
      %v1866 = vld [vmem:[%s1862 + $0xc] sm:$0xf]
      %v1867 = vld [vmem:[%s1862 + $0x10] sm:$0xf]
      %v1868 = vld [vmem:[%s1862 + $0x14] sm:$0xf]
      %v1869 = vld [vmem:[%s1862 + $0x18] sm:$0xf]
      %v1870 = vld [vmem:[%s1862 + $0x1c] sm:$0xf]
      %v1871 = vld [vmem:[%s1862 + $0x20] sm:$0xf]
      %v1872 = vld [vmem:[%s1862 + $0x24] sm:$0xf]
      %v1873 = vld [vmem:[%s1862 + $0x28] sm:$0xf]
      %v1874 = vld [vmem:[%s1862 + $0x2c] sm:$0xf]
      %v1875 = vld [vmem:[%s1862 + $0x30] sm:$0xf]
      %v1876 = vld [vmem:[%s1862 + $0x34] sm:$0xf]
      %v1877 = vld [vmem:[%s1862 + $0x38] sm:$0xf]
      %v1878 = vld [vmem:[%s1862 + $0x3c] sm:$0xf]
      %v1879 = vld [vmem:[%s1862 + $0x40] sm:$0xf]
      %v1880 = vld [vmem:[%s1862 + $0x44] sm:$0xf]
      %v1881 = vld [vmem:[%s1862 + $0x48] sm:$0xf]
      %v1882 = vld [vmem:[%s1862 + $0x4c] sm:$0xf]
      %v1883 = vld [vmem:[%s1862 + $0x50] sm:$0xf]
      %v1884 = vld [vmem:[%s1862 + $0x54] sm:$0xf]
      %v1885 = vld [vmem:[%s1862 + $0x58] sm:$0xf]
      %v1886 = vld [vmem:[%s1862 + $0x5c] sm:$0xf]
      %v1887 = vld [vmem:[%s1862 + $0x60] sm:$0xf]
      %v1888 = vld [vmem:[%s1862 + $0x64] sm:$0xf]
      %v1889 = vld [vmem:[%s1862 + $0x68] sm:$0xf]
      %v1890 = vld [vmem:[%s1862 + $0x6c] sm:$0xf]
      %v1891 = vld [vmem:[%s1862 + $0x70] sm:$0xf]
      %v1892 = vld [vmem:[%s1862 + $0x74] sm:$0xf]
      %v1893 = vld [vmem:[%s1862 + $0x78] sm:$0xf]
      %v1894 = vld [vmem:[%s1862 + $0x7c] sm:$0xf]
      %v1927 = vunpack.c.l.b16 %v1863
      %v1928 = vunpack.c.l.b16 %v1864
      %v1929 = vunpack.c.l.b16 %v1865
      %v1930 = vunpack.c.l.b16 %v1866
      %v1931 = vunpack.c.l.b16 %v1867
      %v1932 = vunpack.c.l.b16 %v1868
      %v1933 = vunpack.c.l.b16 %v1869
      %v1934 = vunpack.c.l.b16 %v1870
      %v1935 = vunpack.c.l.b16 %v1871
      %v1936 = vunpack.c.l.b16 %v1872
      %v1937 = vunpack.c.l.b16 %v1873
      %v1938 = vunpack.c.l.b16 %v1874
      %v1939 = vunpack.c.l.b16 %v1875
      %v1940 = vunpack.c.l.b16 %v1876
      %v1941 = vunpack.c.l.b16 %v1877
      %v1942 = vunpack.c.l.b16 %v1878
      %v1943 = vunpack.c.l.b16 %v1879
      %v1944 = vunpack.c.l.b16 %v1880
      %v1945 = vunpack.c.l.b16 %v1881
      %v1946 = vunpack.c.l.b16 %v1882
      %v1947 = vunpack.c.l.b16 %v1883
      %v1948 = vunpack.c.l.b16 %v1884
      %v1949 = vunpack.c.l.b16 %v1885
      %v1950 = vunpack.c.l.b16 %v1886
      %v1951 = vunpack.c.l.b16 %v1887
      %v1952 = vunpack.c.l.b16 %v1888
      %v1953 = vunpack.c.l.b16 %v1889
      %v1954 = vunpack.c.l.b16 %v1890
      %v1955 = vunpack.c.l.b16 %v1891
      %v1956 = vunpack.c.l.b16 %v1892
      %v1957 = vunpack.c.l.b16 %v1893
      %v1958 = vunpack.c.l.b16 %v1894
      %v1959 = vpack.c.b16 %v1928, %v1927
      %v1960 = vpack.c.b16 %v1930, %v1929
      %v1961 = vpack.c.b16 %v1932, %v1931
      %v1962 = vpack.c.b16 %v1934, %v1933
      %v1963 = vpack.c.b16 %v1936, %v1935
      %v1964 = vpack.c.b16 %v1938, %v1937
      %v1965 = vpack.c.b16 %v1940, %v1939
      %v1966 = vpack.c.b16 %v1942, %v1941
      %v1967 = vpack.c.b16 %v1944, %v1943
      %v1968 = vpack.c.b16 %v1946, %v1945
      %v1969 = vpack.c.b16 %v1948, %v1947
      %v1970 = vpack.c.b16 %v1950, %v1949
      %v1971 = vpack.c.b16 %v1952, %v1951
      %v1972 = vpack.c.b16 %v1954, %v1953
      %v1973 = vpack.c.b16 %v1956, %v1955
      %v1974 = vpack.c.b16 %v1958, %v1957
      %1991 = vmatprep.subr.bf16.mxu0 0
      %1992 = vmatpush1.bf16.msra.mxu0 %v1959
      %1993 = vmatprep.subr.bf16.mxu0 0
      %1994 = vmatpush1.bf16.msra.mxu0 %v1960
      %1995 = vmatprep.subr.bf16.mxu0 0
      %1996 = vmatpush1.bf16.msra.mxu0 %v1961
      %1997 = vmatprep.subr.bf16.mxu0 0
      %1998 = vmatpush1.bf16.msra.mxu0 %v1962
      %1999 = vmatprep.subr.bf16.mxu0 0
      %2000 = vmatpush1.bf16.msra.mxu0 %v1963
      %2001 = vmatprep.subr.bf16.mxu0 0
      %2002 = vmatpush1.bf16.msra.mxu0 %v1964
      %2003 = vmatprep.subr.bf16.mxu0 0
      %2004 = vmatpush1.bf16.msra.mxu0 %v1965
      %2005 = vmatprep.subr.bf16.mxu0 0
      %2006 = vmatpush1.bf16.msra.mxu0 %v1966
      %2007 = vmatprep.subr.bf16.mxu0 0
      %2008 = vmatpush1.bf16.msra.mxu0 %v1967
      %2009 = vmatprep.subr.bf16.mxu0 0
      %2010 = vmatpush1.bf16.msra.mxu0 %v1968
      %2011 = vmatprep.subr.bf16.mxu0 0
      %2012 = vmatpush1.bf16.msra.mxu0 %v1969
      %2013 = vmatprep.subr.bf16.mxu0 0
      %2014 = vmatpush1.bf16.msra.mxu0 %v1970
      %2015 = vmatprep.subr.bf16.mxu0 0
      %2016 = vmatpush1.bf16.msra.mxu0 %v1971
      %2017 = vmatprep.subr.bf16.mxu0 0
      %2018 = vmatpush1.bf16.msra.mxu0 %v1972
      %2019 = vmatprep.subr.bf16.mxu0 0
      %2020 = vmatpush1.bf16.msra.mxu0 %v1973
      %2021 = vmatprep.subr.bf16.mxu0 0
      %2022 = vmatpush1.bf16.msra.mxu0 %v1974
      %2023 = vmatprep.mubr.bf16.mxu0 %v672
      %2024 = vmatmul.mubr.bf16.gmra.mrb[0].mxu0 %v671
      %v2025 = vpop.f32.mrb[0].mxu0
      %v2026 = vadd.f32 0.0, %v2025
      %v2027 = vpop.f32.mrb[0].mxu0
      %v2028 = vpop.f32.mrb[0].mxu0
      %v2029 = vadd.f32 0.0, %v2028
      %v2030 = vpop.f32.mrb[0].mxu0
      %2031 = vdwg.mxu0
      %s2032 = scalar_lea.vmem %s5, 1024
      %v2033 = vld [vmem:[%s2032] sm:$0xf]
      %v2034 = vld [vmem:[%s2032 + $0x4] sm:$0xf]
      %v2035 = vld [vmem:[%s2032 + $0x8] sm:$0xf]
      %v2036 = vld [vmem:[%s2032 + $0xc] sm:$0xf]
      %v2037 = vld [vmem:[%s2032 + $0x10] sm:$0xf]
      %v2038 = vld [vmem:[%s2032 + $0x14] sm:$0xf]
      %v2039 = vld [vmem:[%s2032 + $0x18] sm:$0xf]
      %v2040 = vld [vmem:[%s2032 + $0x1c] sm:$0xf]
      %v2041 = vld [vmem:[%s2032 + $0x20] sm:$0xf]
      %v2042 = vld [vmem:[%s2032 + $0x24] sm:$0xf]
      %v2043 = vld [vmem:[%s2032 + $0x28] sm:$0xf]
      %v2044 = vld [vmem:[%s2032 + $0x2c] sm:$0xf]
      %v2045 = vld [vmem:[%s2032 + $0x30] sm:$0xf]
      %v2046 = vld [vmem:[%s2032 + $0x34] sm:$0xf]
      %v2047 = vld [vmem:[%s2032 + $0x38] sm:$0xf]
      %v2048 = vld [vmem:[%s2032 + $0x3c] sm:$0xf]
      %v2049 = vld [vmem:[%s2032 + $0x40] sm:$0xf]
      %v2050 = vld [vmem:[%s2032 + $0x44] sm:$0xf]
      %v2051 = vld [vmem:[%s2032 + $0x48] sm:$0xf]
      %v2052 = vld [vmem:[%s2032 + $0x4c] sm:$0xf]
      %v2053 = vld [vmem:[%s2032 + $0x50] sm:$0xf]
      %v2054 = vld [vmem:[%s2032 + $0x54] sm:$0xf]
      %v2055 = vld [vmem:[%s2032 + $0x58] sm:$0xf]
      %v2056 = vld [vmem:[%s2032 + $0x5c] sm:$0xf]
      %v2057 = vld [vmem:[%s2032 + $0x60] sm:$0xf]
      %v2058 = vld [vmem:[%s2032 + $0x64] sm:$0xf]
      %v2059 = vld [vmem:[%s2032 + $0x68] sm:$0xf]
      %v2060 = vld [vmem:[%s2032 + $0x6c] sm:$0xf]
      %v2061 = vld [vmem:[%s2032 + $0x70] sm:$0xf]
      %v2062 = vld [vmem:[%s2032 + $0x74] sm:$0xf]
      %v2063 = vld [vmem:[%s2032 + $0x78] sm:$0xf]
      %v2064 = vld [vmem:[%s2032 + $0x7c] sm:$0xf]
      %v2097 = vunpack.c.l.b16 %v2033
      %v2098 = vunpack.c.l.b16 %v2034
      %v2099 = vunpack.c.l.b16 %v2035
      %v2100 = vunpack.c.l.b16 %v2036
      %v2101 = vunpack.c.l.b16 %v2037
      %v2102 = vunpack.c.l.b16 %v2038
      %v2103 = vunpack.c.l.b16 %v2039
      %v2104 = vunpack.c.l.b16 %v2040
      %v2105 = vunpack.c.l.b16 %v2041
      %v2106 = vunpack.c.l.b16 %v2042
      %v2107 = vunpack.c.l.b16 %v2043
      %v2108 = vunpack.c.l.b16 %v2044
      %v2109 = vunpack.c.l.b16 %v2045
      %v2110 = vunpack.c.l.b16 %v2046
      %v2111 = vunpack.c.l.b16 %v2047
      %v2112 = vunpack.c.l.b16 %v2048
      %v2113 = vunpack.c.l.b16 %v2049
      %v2114 = vunpack.c.l.b16 %v2050
      %v2115 = vunpack.c.l.b16 %v2051
      %v2116 = vunpack.c.l.b16 %v2052
      %v2117 = vunpack.c.l.b16 %v2053
      %v2118 = vunpack.c.l.b16 %v2054
      %v2119 = vunpack.c.l.b16 %v2055
      %v2120 = vunpack.c.l.b16 %v2056
      %v2121 = vunpack.c.l.b16 %v2057
      %v2122 = vunpack.c.l.b16 %v2058
      %v2123 = vunpack.c.l.b16 %v2059
      %v2124 = vunpack.c.l.b16 %v2060
      %v2125 = vunpack.c.l.b16 %v2061
      %v2126 = vunpack.c.l.b16 %v2062
      %v2127 = vunpack.c.l.b16 %v2063
      %v2128 = vunpack.c.l.b16 %v2064
      %v2129 = vpack.c.b16 %v2098, %v2097
      %v2130 = vpack.c.b16 %v2100, %v2099
      %v2131 = vpack.c.b16 %v2102, %v2101
      %v2132 = vpack.c.b16 %v2104, %v2103
      %v2133 = vpack.c.b16 %v2106, %v2105
      %v2134 = vpack.c.b16 %v2108, %v2107
      %v2135 = vpack.c.b16 %v2110, %v2109
      %v2136 = vpack.c.b16 %v2112, %v2111
      %v2137 = vpack.c.b16 %v2114, %v2113
      %v2138 = vpack.c.b16 %v2116, %v2115
      %v2139 = vpack.c.b16 %v2118, %v2117
      %v2140 = vpack.c.b16 %v2120, %v2119
      %v2141 = vpack.c.b16 %v2122, %v2121
      %v2142 = vpack.c.b16 %v2124, %v2123
      %v2143 = vpack.c.b16 %v2126, %v2125
      %v2144 = vpack.c.b16 %v2128, %v2127
      %2161 = vmatprep.subr.bf16.mxu0 0
      %2162 = vmatpush1.bf16.msra.mxu0 %v2129
      %2163 = vmatprep.subr.bf16.mxu0 0
      %2164 = vmatpush1.bf16.msra.mxu0 %v2130
      %2165 = vmatprep.subr.bf16.mxu0 0
      %2166 = vmatpush1.bf16.msra.mxu0 %v2131
      %2167 = vmatprep.subr.bf16.mxu0 0
      %2168 = vmatpush1.bf16.msra.mxu0 %v2132
      %2169 = vmatprep.subr.bf16.mxu0 0
      %2170 = vmatpush1.bf16.msra.mxu0 %v2133
      %2171 = vmatprep.subr.bf16.mxu0 0
      %2172 = vmatpush1.bf16.msra.mxu0 %v2134
      %2173 = vmatprep.subr.bf16.mxu0 0
      %2174 = vmatpush1.bf16.msra.mxu0 %v2135
      %2175 = vmatprep.subr.bf16.mxu0 0
      %2176 = vmatpush1.bf16.msra.mxu0 %v2136
      %2177 = vmatprep.subr.bf16.mxu0 0
      %2178 = vmatpush1.bf16.msra.mxu0 %v2137
      %2179 = vmatprep.subr.bf16.mxu0 0
      %2180 = vmatpush1.bf16.msra.mxu0 %v2138
      %2181 = vmatprep.subr.bf16.mxu0 0
      %2182 = vmatpush1.bf16.msra.mxu0 %v2139
      %2183 = vmatprep.subr.bf16.mxu0 0
      %2184 = vmatpush1.bf16.msra.mxu0 %v2140
      %2185 = vmatprep.subr.bf16.mxu0 0
      %2186 = vmatpush1.bf16.msra.mxu0 %v2141
      %2187 = vmatprep.subr.bf16.mxu0 0
      %2188 = vmatpush1.bf16.msra.mxu0 %v2142
      %2189 = vmatprep.subr.bf16.mxu0 0
      %2190 = vmatpush1.bf16.msra.mxu0 %v2143
      %2191 = vmatprep.subr.bf16.mxu0 0
      %2192 = vmatpush1.bf16.msra.mxu0 %v2144
      %2193 = vmatprep.mubr.bf16.mxu0 %v672
      %2194 = vmatmul.mubr.bf16.gmra.mrb[0].mxu0 %v671
      %v2195 = vpop.f32.mrb[0].mxu0
      %v2196 = vadd.f32 0.0, %v2195
      %v2197 = vpop.f32.mrb[0].mxu0
      %v2198 = vpop.f32.mrb[0].mxu0
      %v2199 = vadd.f32 0.0, %v2198
      %v2200 = vpop.f32.mrb[0].mxu0
      %2201 = vdwg.mxu0
      %s2202 = scalar_lea.vmem %s5, 1152
      %v2203 = vld [vmem:[%s2202] sm:$0xf]
      %v2204 = vld [vmem:[%s2202 + $0x4] sm:$0xf]
      %v2205 = vld [vmem:[%s2202 + $0x8] sm:$0xf]
      %v2206 = vld [vmem:[%s2202 + $0xc] sm:$0xf]
      %v2207 = vld [vmem:[%s2202 + $0x10] sm:$0xf]
      %v2208 = vld [vmem:[%s2202 + $0x14] sm:$0xf]
      %v2209 = vld [vmem:[%s2202 + $0x18] sm:$0xf]
      %v2210 = vld [vmem:[%s2202 + $0x1c] sm:$0xf]
      %v2211 = vld [vmem:[%s2202 + $0x20] sm:$0xf]
      %v2212 = vld [vmem:[%s2202 + $0x24] sm:$0xf]
      %v2213 = vld [vmem:[%s2202 + $0x28] sm:$0xf]
      %v2214 = vld [vmem:[%s2202 + $0x2c] sm:$0xf]
      %v2215 = vld [vmem:[%s2202 + $0x30] sm:$0xf]
      %v2216 = vld [vmem:[%s2202 + $0x34] sm:$0xf]
      %v2217 = vld [vmem:[%s2202 + $0x38] sm:$0xf]
      %v2218 = vld [vmem:[%s2202 + $0x3c] sm:$0xf]
      %v2219 = vld [vmem:[%s2202 + $0x40] sm:$0xf]
      %v2220 = vld [vmem:[%s2202 + $0x44] sm:$0xf]
      %v2221 = vld [vmem:[%s2202 + $0x48] sm:$0xf]
      %v2222 = vld [vmem:[%s2202 + $0x4c] sm:$0xf]
      %v2223 = vld [vmem:[%s2202 + $0x50] sm:$0xf]
      %v2224 = vld [vmem:[%s2202 + $0x54] sm:$0xf]
      %v2225 = vld [vmem:[%s2202 + $0x58] sm:$0xf]
      %v2226 = vld [vmem:[%s2202 + $0x5c] sm:$0xf]
      %v2227 = vld [vmem:[%s2202 + $0x60] sm:$0xf]
      %v2228 = vld [vmem:[%s2202 + $0x64] sm:$0xf]
      %v2229 = vld [vmem:[%s2202 + $0x68] sm:$0xf]
      %v2230 = vld [vmem:[%s2202 + $0x6c] sm:$0xf]
      %v2231 = vld [vmem:[%s2202 + $0x70] sm:$0xf]
      %v2232 = vld [vmem:[%s2202 + $0x74] sm:$0xf]
      %v2233 = vld [vmem:[%s2202 + $0x78] sm:$0xf]
      %v2234 = vld [vmem:[%s2202 + $0x7c] sm:$0xf]
      %v2267 = vunpack.c.l.b16 %v2203
      %v2268 = vunpack.c.l.b16 %v2204
      %v2269 = vunpack.c.l.b16 %v2205
      %v2270 = vunpack.c.l.b16 %v2206
      %v2271 = vunpack.c.l.b16 %v2207
      %v2272 = vunpack.c.l.b16 %v2208
      %v2273 = vunpack.c.l.b16 %v2209
      %v2274 = vunpack.c.l.b16 %v2210
      %v2275 = vunpack.c.l.b16 %v2211
      %v2276 = vunpack.c.l.b16 %v2212
      %v2277 = vunpack.c.l.b16 %v2213
      %v2278 = vunpack.c.l.b16 %v2214
      %v2279 = vunpack.c.l.b16 %v2215
      %v2280 = vunpack.c.l.b16 %v2216
      %v2281 = vunpack.c.l.b16 %v2217
      %v2282 = vunpack.c.l.b16 %v2218
      %v2283 = vunpack.c.l.b16 %v2219
      %v2284 = vunpack.c.l.b16 %v2220
      %v2285 = vunpack.c.l.b16 %v2221
      %v2286 = vunpack.c.l.b16 %v2222
      %v2287 = vunpack.c.l.b16 %v2223
      %v2288 = vunpack.c.l.b16 %v2224
      %v2289 = vunpack.c.l.b16 %v2225
      %v2290 = vunpack.c.l.b16 %v2226
      %v2291 = vunpack.c.l.b16 %v2227
      %v2292 = vunpack.c.l.b16 %v2228
      %v2293 = vunpack.c.l.b16 %v2229
      %v2294 = vunpack.c.l.b16 %v2230
      %v2295 = vunpack.c.l.b16 %v2231
      %v2296 = vunpack.c.l.b16 %v2232
      %v2297 = vunpack.c.l.b16 %v2233
      %v2298 = vunpack.c.l.b16 %v2234
      %v2299 = vpack.c.b16 %v2268, %v2267
      %v2300 = vpack.c.b16 %v2270, %v2269
      %v2301 = vpack.c.b16 %v2272, %v2271
      %v2302 = vpack.c.b16 %v2274, %v2273
      %v2303 = vpack.c.b16 %v2276, %v2275
      %v2304 = vpack.c.b16 %v2278, %v2277
      %v2305 = vpack.c.b16 %v2280, %v2279
      %v2306 = vpack.c.b16 %v2282, %v2281
      %v2307 = vpack.c.b16 %v2284, %v2283
      %v2308 = vpack.c.b16 %v2286, %v2285
      %v2309 = vpack.c.b16 %v2288, %v2287
      %v2310 = vpack.c.b16 %v2290, %v2289
      %v2311 = vpack.c.b16 %v2292, %v2291
      %v2312 = vpack.c.b16 %v2294, %v2293
      %v2313 = vpack.c.b16 %v2296, %v2295
      %v2314 = vpack.c.b16 %v2298, %v2297
      %2331 = vmatprep.subr.bf16.mxu0 0
      %2332 = vmatpush1.bf16.msra.mxu0 %v2299
      %2333 = vmatprep.subr.bf16.mxu0 0
      %2334 = vmatpush1.bf16.msra.mxu0 %v2300
      %2335 = vmatprep.subr.bf16.mxu0 0
      %2336 = vmatpush1.bf16.msra.mxu0 %v2301
      %2337 = vmatprep.subr.bf16.mxu0 0
      %2338 = vmatpush1.bf16.msra.mxu0 %v2302
      %2339 = vmatprep.subr.bf16.mxu0 0
      %2340 = vmatpush1.bf16.msra.mxu0 %v2303
      %2341 = vmatprep.subr.bf16.mxu0 0
      %2342 = vmatpush1.bf16.msra.mxu0 %v2304
      %2343 = vmatprep.subr.bf16.mxu0 0
      %2344 = vmatpush1.bf16.msra.mxu0 %v2305
      %2345 = vmatprep.subr.bf16.mxu0 0
      %2346 = vmatpush1.bf16.msra.mxu0 %v2306
      %2347 = vmatprep.subr.bf16.mxu0 0
      %2348 = vmatpush1.bf16.msra.mxu0 %v2307
      %2349 = vmatprep.subr.bf16.mxu0 0
      %2350 = vmatpush1.bf16.msra.mxu0 %v2308
      %2351 = vmatprep.subr.bf16.mxu0 0
      %2352 = vmatpush1.bf16.msra.mxu0 %v2309
      %2353 = vmatprep.subr.bf16.mxu0 0
      %2354 = vmatpush1.bf16.msra.mxu0 %v2310
      %2355 = vmatprep.subr.bf16.mxu0 0
      %2356 = vmatpush1.bf16.msra.mxu0 %v2311
      %2357 = vmatprep.subr.bf16.mxu0 0
      %2358 = vmatpush1.bf16.msra.mxu0 %v2312
      %2359 = vmatprep.subr.bf16.mxu0 0
      %2360 = vmatpush1.bf16.msra.mxu0 %v2313
      %2361 = vmatprep.subr.bf16.mxu0 0
      %2362 = vmatpush1.bf16.msra.mxu0 %v2314
      %2363 = vmatprep.mubr.bf16.mxu0 %v672
      %2364 = vmatmul.mubr.bf16.gmra.mrb[0].mxu0 %v671
      %v2365 = vpop.f32.mrb[0].mxu0
      %v2366 = vadd.f32 0.0, %v2365
      %v2367 = vpop.f32.mrb[0].mxu0
      %v2368 = vpop.f32.mrb[0].mxu0
      %v2369 = vadd.f32 0.0, %v2368
      %v2370 = vpop.f32.mrb[0].mxu0
      %2371 = vdwg.mxu0
      %s2372 = scalar_lea.vmem %s5, 1280
      %v2373 = vld [vmem:[%s2372] sm:$0xf]
      %v2374 = vld [vmem:[%s2372 + $0x4] sm:$0xf]
      %v2375 = vld [vmem:[%s2372 + $0x8] sm:$0xf]
      %v2376 = vld [vmem:[%s2372 + $0xc] sm:$0xf]
      %v2377 = vld [vmem:[%s2372 + $0x10] sm:$0xf]
      %v2378 = vld [vmem:[%s2372 + $0x14] sm:$0xf]
      %v2379 = vld [vmem:[%s2372 + $0x18] sm:$0xf]
      %v2380 = vld [vmem:[%s2372 + $0x1c] sm:$0xf]
      %v2381 = vld [vmem:[%s2372 + $0x20] sm:$0xf]
      %v2382 = vld [vmem:[%s2372 + $0x24] sm:$0xf]
      %v2383 = vld [vmem:[%s2372 + $0x28] sm:$0xf]
      %v2384 = vld [vmem:[%s2372 + $0x2c] sm:$0xf]
      %v2385 = vld [vmem:[%s2372 + $0x30] sm:$0xf]
      %v2386 = vld [vmem:[%s2372 + $0x34] sm:$0xf]
      %v2387 = vld [vmem:[%s2372 + $0x38] sm:$0xf]
      %v2388 = vld [vmem:[%s2372 + $0x3c] sm:$0xf]
      %v2389 = vld [vmem:[%s2372 + $0x40] sm:$0xf]
      %v2390 = vld [vmem:[%s2372 + $0x44] sm:$0xf]
      %v2391 = vld [vmem:[%s2372 + $0x48] sm:$0xf]
      %v2392 = vld [vmem:[%s2372 + $0x4c] sm:$0xf]
      %v2393 = vld [vmem:[%s2372 + $0x50] sm:$0xf]
      %v2394 = vld [vmem:[%s2372 + $0x54] sm:$0xf]
      %v2395 = vld [vmem:[%s2372 + $0x58] sm:$0xf]
      %v2396 = vld [vmem:[%s2372 + $0x5c] sm:$0xf]
      %v2397 = vld [vmem:[%s2372 + $0x60] sm:$0xf]
      %v2398 = vld [vmem:[%s2372 + $0x64] sm:$0xf]
      %v2399 = vld [vmem:[%s2372 + $0x68] sm:$0xf]
      %v2400 = vld [vmem:[%s2372 + $0x6c] sm:$0xf]
      %v2401 = vld [vmem:[%s2372 + $0x70] sm:$0xf]
      %v2402 = vld [vmem:[%s2372 + $0x74] sm:$0xf]
      %v2403 = vld [vmem:[%s2372 + $0x78] sm:$0xf]
      %v2404 = vld [vmem:[%s2372 + $0x7c] sm:$0xf]
      %v2437 = vunpack.c.l.b16 %v2373
      %v2438 = vunpack.c.l.b16 %v2374
      %v2439 = vunpack.c.l.b16 %v2375
      %v2440 = vunpack.c.l.b16 %v2376
      %v2441 = vunpack.c.l.b16 %v2377
      %v2442 = vunpack.c.l.b16 %v2378
      %v2443 = vunpack.c.l.b16 %v2379
      %v2444 = vunpack.c.l.b16 %v2380
      %v2445 = vunpack.c.l.b16 %v2381
      %v2446 = vunpack.c.l.b16 %v2382
      %v2447 = vunpack.c.l.b16 %v2383
      %v2448 = vunpack.c.l.b16 %v2384
      %v2449 = vunpack.c.l.b16 %v2385
      %v2450 = vunpack.c.l.b16 %v2386
      %v2451 = vunpack.c.l.b16 %v2387
      %v2452 = vunpack.c.l.b16 %v2388
      %v2453 = vunpack.c.l.b16 %v2389
      %v2454 = vunpack.c.l.b16 %v2390
      %v2455 = vunpack.c.l.b16 %v2391
      %v2456 = vunpack.c.l.b16 %v2392
      %v2457 = vunpack.c.l.b16 %v2393
      %v2458 = vunpack.c.l.b16 %v2394
      %v2459 = vunpack.c.l.b16 %v2395
      %v2460 = vunpack.c.l.b16 %v2396
      %v2461 = vunpack.c.l.b16 %v2397
      %v2462 = vunpack.c.l.b16 %v2398
      %v2463 = vunpack.c.l.b16 %v2399
      %v2464 = vunpack.c.l.b16 %v2400
      %v2465 = vunpack.c.l.b16 %v2401
      %v2466 = vunpack.c.l.b16 %v2402
      %v2467 = vunpack.c.l.b16 %v2403
      %v2468 = vunpack.c.l.b16 %v2404
      %v2469 = vpack.c.b16 %v2438, %v2437
      %v2470 = vpack.c.b16 %v2440, %v2439
      %v2471 = vpack.c.b16 %v2442, %v2441
      %v2472 = vpack.c.b16 %v2444, %v2443
      %v2473 = vpack.c.b16 %v2446, %v2445
      %v2474 = vpack.c.b16 %v2448, %v2447
      %v2475 = vpack.c.b16 %v2450, %v2449
      %v2476 = vpack.c.b16 %v2452, %v2451
      %v2477 = vpack.c.b16 %v2454, %v2453
      %v2478 = vpack.c.b16 %v2456, %v2455
      %v2479 = vpack.c.b16 %v2458, %v2457
      %v2480 = vpack.c.b16 %v2460, %v2459
      %v2481 = vpack.c.b16 %v2462, %v2461
      %v2482 = vpack.c.b16 %v2464, %v2463
      %v2483 = vpack.c.b16 %v2466, %v2465
      %v2484 = vpack.c.b16 %v2468, %v2467
      %2501 = vmatprep.subr.bf16.mxu0 0
      %2502 = vmatpush1.bf16.msra.mxu0 %v2469
      %2503 = vmatprep.subr.bf16.mxu0 0
      %2504 = vmatpush1.bf16.msra.mxu0 %v2470
      %2505 = vmatprep.subr.bf16.mxu0 0
      %2506 = vmatpush1.bf16.msra.mxu0 %v2471
      %2507 = vmatprep.subr.bf16.mxu0 0
      %2508 = vmatpush1.bf16.msra.mxu0 %v2472
      %2509 = vmatprep.subr.bf16.mxu0 0
      %2510 = vmatpush1.bf16.msra.mxu0 %v2473
      %2511 = vmatprep.subr.bf16.mxu0 0
      %2512 = vmatpush1.bf16.msra.mxu0 %v2474
      %2513 = vmatprep.subr.bf16.mxu0 0
      %2514 = vmatpush1.bf16.msra.mxu0 %v2475
      %2515 = vmatprep.subr.bf16.mxu0 0
      %2516 = vmatpush1.bf16.msra.mxu0 %v2476
      %2517 = vmatprep.subr.bf16.mxu0 0
      %2518 = vmatpush1.bf16.msra.mxu0 %v2477
      %2519 = vmatprep.subr.bf16.mxu0 0
      %2520 = vmatpush1.bf16.msra.mxu0 %v2478
      %2521 = vmatprep.subr.bf16.mxu0 0
      %2522 = vmatpush1.bf16.msra.mxu0 %v2479
      %2523 = vmatprep.subr.bf16.mxu0 0
      %2524 = vmatpush1.bf16.msra.mxu0 %v2480
      %2525 = vmatprep.subr.bf16.mxu0 0
      %2526 = vmatpush1.bf16.msra.mxu0 %v2481
      %2527 = vmatprep.subr.bf16.mxu0 0
      %2528 = vmatpush1.bf16.msra.mxu0 %v2482
      %2529 = vmatprep.subr.bf16.mxu0 0
      %2530 = vmatpush1.bf16.msra.mxu0 %v2483
      %2531 = vmatprep.subr.bf16.mxu0 0
      %2532 = vmatpush1.bf16.msra.mxu0 %v2484
      %2533 = vmatprep.mubr.bf16.mxu0 %v672
      %2534 = vmatmul.mubr.bf16.gmra.mrb[0].mxu0 %v671
      %v2535 = vpop.f32.mrb[0].mxu0
      %v2536 = vadd.f32 0.0, %v2535
      %v2537 = vpop.f32.mrb[0].mxu0
      %v2538 = vpop.f32.mrb[0].mxu0
      %v2539 = vadd.f32 0.0, %v2538
      %v2540 = vpop.f32.mrb[0].mxu0
      %2541 = vdwg.mxu0
      %s2542 = scalar_lea.vmem %s5, 1408
      %v2543 = vld [vmem:[%s2542] sm:$0xf]
      %v2544 = vld [vmem:[%s2542 + $0x4] sm:$0xf]
      %v2545 = vld [vmem:[%s2542 + $0x8] sm:$0xf]
      %v2546 = vld [vmem:[%s2542 + $0xc] sm:$0xf]
      %v2547 = vld [vmem:[%s2542 + $0x10] sm:$0xf]
      %v2548 = vld [vmem:[%s2542 + $0x14] sm:$0xf]
      %v2549 = vld [vmem:[%s2542 + $0x18] sm:$0xf]
      %v2550 = vld [vmem:[%s2542 + $0x1c] sm:$0xf]
      %v2551 = vld [vmem:[%s2542 + $0x20] sm:$0xf]
      %v2552 = vld [vmem:[%s2542 + $0x24] sm:$0xf]
      %v2553 = vld [vmem:[%s2542 + $0x28] sm:$0xf]
      %v2554 = vld [vmem:[%s2542 + $0x2c] sm:$0xf]
      %v2555 = vld [vmem:[%s2542 + $0x30] sm:$0xf]
      %v2556 = vld [vmem:[%s2542 + $0x34] sm:$0xf]
      %v2557 = vld [vmem:[%s2542 + $0x38] sm:$0xf]
      %v2558 = vld [vmem:[%s2542 + $0x3c] sm:$0xf]
      %v2559 = vld [vmem:[%s2542 + $0x40] sm:$0xf]
      %v2560 = vld [vmem:[%s2542 + $0x44] sm:$0xf]
      %v2561 = vld [vmem:[%s2542 + $0x48] sm:$0xf]
      %v2562 = vld [vmem:[%s2542 + $0x4c] sm:$0xf]
      %v2563 = vld [vmem:[%s2542 + $0x50] sm:$0xf]
      %v2564 = vld [vmem:[%s2542 + $0x54] sm:$0xf]
      %v2565 = vld [vmem:[%s2542 + $0x58] sm:$0xf]
      %v2566 = vld [vmem:[%s2542 + $0x5c] sm:$0xf]
      %v2567 = vld [vmem:[%s2542 + $0x60] sm:$0xf]
      %v2568 = vld [vmem:[%s2542 + $0x64] sm:$0xf]
      %v2569 = vld [vmem:[%s2542 + $0x68] sm:$0xf]
      %v2570 = vld [vmem:[%s2542 + $0x6c] sm:$0xf]
      %v2571 = vld [vmem:[%s2542 + $0x70] sm:$0xf]
      %v2572 = vld [vmem:[%s2542 + $0x74] sm:$0xf]
      %v2573 = vld [vmem:[%s2542 + $0x78] sm:$0xf]
      %v2574 = vld [vmem:[%s2542 + $0x7c] sm:$0xf]
      %v2607 = vunpack.c.l.b16 %v2543
      %v2608 = vunpack.c.l.b16 %v2544
      %v2609 = vunpack.c.l.b16 %v2545
      %v2610 = vunpack.c.l.b16 %v2546
      %v2611 = vunpack.c.l.b16 %v2547
      %v2612 = vunpack.c.l.b16 %v2548
      %v2613 = vunpack.c.l.b16 %v2549
      %v2614 = vunpack.c.l.b16 %v2550
      %v2615 = vunpack.c.l.b16 %v2551
      %v2616 = vunpack.c.l.b16 %v2552
      %v2617 = vunpack.c.l.b16 %v2553
      %v2618 = vunpack.c.l.b16 %v2554
      %v2619 = vunpack.c.l.b16 %v2555
      %v2620 = vunpack.c.l.b16 %v2556
      %v2621 = vunpack.c.l.b16 %v2557
      %v2622 = vunpack.c.l.b16 %v2558
      %v2623 = vunpack.c.l.b16 %v2559
      %v2624 = vunpack.c.l.b16 %v2560
      %v2625 = vunpack.c.l.b16 %v2561
      %v2626 = vunpack.c.l.b16 %v2562
      %v2627 = vunpack.c.l.b16 %v2563
      %v2628 = vunpack.c.l.b16 %v2564
      %v2629 = vunpack.c.l.b16 %v2565
      %v2630 = vunpack.c.l.b16 %v2566
      %v2631 = vunpack.c.l.b16 %v2567
      %v2632 = vunpack.c.l.b16 %v2568
      %v2633 = vunpack.c.l.b16 %v2569
      %v2634 = vunpack.c.l.b16 %v2570
      %v2635 = vunpack.c.l.b16 %v2571
      %v2636 = vunpack.c.l.b16 %v2572
      %v2637 = vunpack.c.l.b16 %v2573
      %v2638 = vunpack.c.l.b16 %v2574
      %v2639 = vpack.c.b16 %v2608, %v2607
      %v2640 = vpack.c.b16 %v2610, %v2609
      %v2641 = vpack.c.b16 %v2612, %v2611
      %v2642 = vpack.c.b16 %v2614, %v2613
      %v2643 = vpack.c.b16 %v2616, %v2615
      %v2644 = vpack.c.b16 %v2618, %v2617
      %v2645 = vpack.c.b16 %v2620, %v2619
      %v2646 = vpack.c.b16 %v2622, %v2621
      %v2647 = vpack.c.b16 %v2624, %v2623
      %v2648 = vpack.c.b16 %v2626, %v2625
      %v2649 = vpack.c.b16 %v2628, %v2627
      %v2650 = vpack.c.b16 %v2630, %v2629
      %v2651 = vpack.c.b16 %v2632, %v2631
      %v2652 = vpack.c.b16 %v2634, %v2633
      %v2653 = vpack.c.b16 %v2636, %v2635
      %v2654 = vpack.c.b16 %v2638, %v2637
      %2671 = vmatprep.subr.bf16.mxu0 0
      %2672 = vmatpush1.bf16.msra.mxu0 %v2639
      %2673 = vmatprep.subr.bf16.mxu0 0
      %2674 = vmatpush1.bf16.msra.mxu0 %v2640
      %2675 = vmatprep.subr.bf16.mxu0 0
      %2676 = vmatpush1.bf16.msra.mxu0 %v2641
      %2677 = vmatprep.subr.bf16.mxu0 0
      %2678 = vmatpush1.bf16.msra.mxu0 %v2642
      %2679 = vmatprep.subr.bf16.mxu0 0
      %2680 = vmatpush1.bf16.msra.mxu0 %v2643
      %2681 = vmatprep.subr.bf16.mxu0 0
      %2682 = vmatpush1.bf16.msra.mxu0 %v2644
      %2683 = vmatprep.subr.bf16.mxu0 0
      %2684 = vmatpush1.bf16.msra.mxu0 %v2645
      %2685 = vmatprep.subr.bf16.mxu0 0
      %2686 = vmatpush1.bf16.msra.mxu0 %v2646
      %2687 = vmatprep.subr.bf16.mxu0 0
      %2688 = vmatpush1.bf16.msra.mxu0 %v2647
      %2689 = vmatprep.subr.bf16.mxu0 0
      %2690 = vmatpush1.bf16.msra.mxu0 %v2648
      %2691 = vmatprep.subr.bf16.mxu0 0
      %2692 = vmatpush1.bf16.msra.mxu0 %v2649
      %2693 = vmatprep.subr.bf16.mxu0 0
      %2694 = vmatpush1.bf16.msra.mxu0 %v2650
      %2695 = vmatprep.subr.bf16.mxu0 0
      %2696 = vmatpush1.bf16.msra.mxu0 %v2651
      %2697 = vmatprep.subr.bf16.mxu0 0
      %2698 = vmatpush1.bf16.msra.mxu0 %v2652
      %2699 = vmatprep.subr.bf16.mxu0 0
      %2700 = vmatpush1.bf16.msra.mxu0 %v2653
      %2701 = vmatprep.subr.bf16.mxu0 0
      %2702 = vmatpush1.bf16.msra.mxu0 %v2654
      %2703 = vmatprep.mubr.bf16.mxu0 %v672
      %2704 = vmatmul.mubr.bf16.gmra.mrb[0].mxu0 %v671
      %v2705 = vpop.f32.mrb[0].mxu0
      %v2706 = vadd.f32 0.0, %v2705
      %v2707 = vpop.f32.mrb[0].mxu0
      %v2708 = vpop.f32.mrb[0].mxu0
      %v2709 = vadd.f32 0.0, %v2708
      %v2710 = vpop.f32.mrb[0].mxu0
      %2711 = vdwg.mxu0
      %s2712 = scalar_lea.vmem %s5, 1536
      %v2713 = vld [vmem:[%s2712] sm:$0xf]
      %v2714 = vld [vmem:[%s2712 + $0x4] sm:$0xf]
      %v2715 = vld [vmem:[%s2712 + $0x8] sm:$0xf]
      %v2716 = vld [vmem:[%s2712 + $0xc] sm:$0xf]
      %v2717 = vld [vmem:[%s2712 + $0x10] sm:$0xf]
      %v2718 = vld [vmem:[%s2712 + $0x14] sm:$0xf]
      %v2719 = vld [vmem:[%s2712 + $0x18] sm:$0xf]
      %v2720 = vld [vmem:[%s2712 + $0x1c] sm:$0xf]
      %v2721 = vld [vmem:[%s2712 + $0x20] sm:$0xf]
      %v2722 = vld [vmem:[%s2712 + $0x24] sm:$0xf]
      %v2723 = vld [vmem:[%s2712 + $0x28] sm:$0xf]
      %v2724 = vld [vmem:[%s2712 + $0x2c] sm:$0xf]
      %v2725 = vld [vmem:[%s2712 + $0x30] sm:$0xf]
      %v2726 = vld [vmem:[%s2712 + $0x34] sm:$0xf]
      %v2727 = vld [vmem:[%s2712 + $0x38] sm:$0xf]
      %v2728 = vld [vmem:[%s2712 + $0x3c] sm:$0xf]
      %v2729 = vld [vmem:[%s2712 + $0x40] sm:$0xf]
      %v2730 = vld [vmem:[%s2712 + $0x44] sm:$0xf]
      %v2731 = vld [vmem:[%s2712 + $0x48] sm:$0xf]
      %v2732 = vld [vmem:[%s2712 + $0x4c] sm:$0xf]
      %v2733 = vld [vmem:[%s2712 + $0x50] sm:$0xf]
      %v2734 = vld [vmem:[%s2712 + $0x54] sm:$0xf]
      %v2735 = vld [vmem:[%s2712 + $0x58] sm:$0xf]
      %v2736 = vld [vmem:[%s2712 + $0x5c] sm:$0xf]
      %v2737 = vld [vmem:[%s2712 + $0x60] sm:$0xf]
      %v2738 = vld [vmem:[%s2712 + $0x64] sm:$0xf]
      %v2739 = vld [vmem:[%s2712 + $0x68] sm:$0xf]
      %v2740 = vld [vmem:[%s2712 + $0x6c] sm:$0xf]
      %v2741 = vld [vmem:[%s2712 + $0x70] sm:$0xf]
      %v2742 = vld [vmem:[%s2712 + $0x74] sm:$0xf]
      %v2743 = vld [vmem:[%s2712 + $0x78] sm:$0xf]
      %v2744 = vld [vmem:[%s2712 + $0x7c] sm:$0xf]
      %v2777 = vunpack.c.l.b16 %v2713
      %v2778 = vunpack.c.l.b16 %v2714
      %v2779 = vunpack.c.l.b16 %v2715
      %v2780 = vunpack.c.l.b16 %v2716
      %v2781 = vunpack.c.l.b16 %v2717
      %v2782 = vunpack.c.l.b16 %v2718
      %v2783 = vunpack.c.l.b16 %v2719
      %v2784 = vunpack.c.l.b16 %v2720
      %v2785 = vunpack.c.l.b16 %v2721
      %v2786 = vunpack.c.l.b16 %v2722
      %v2787 = vunpack.c.l.b16 %v2723
      %v2788 = vunpack.c.l.b16 %v2724
      %v2789 = vunpack.c.l.b16 %v2725
      %v2790 = vunpack.c.l.b16 %v2726
      %v2791 = vunpack.c.l.b16 %v2727
      %v2792 = vunpack.c.l.b16 %v2728
      %v2793 = vunpack.c.l.b16 %v2729
      %v2794 = vunpack.c.l.b16 %v2730
      %v2795 = vunpack.c.l.b16 %v2731
      %v2796 = vunpack.c.l.b16 %v2732
      %v2797 = vunpack.c.l.b16 %v2733
      %v2798 = vunpack.c.l.b16 %v2734
      %v2799 = vunpack.c.l.b16 %v2735
      %v2800 = vunpack.c.l.b16 %v2736
      %v2801 = vunpack.c.l.b16 %v2737
      %v2802 = vunpack.c.l.b16 %v2738
      %v2803 = vunpack.c.l.b16 %v2739
      %v2804 = vunpack.c.l.b16 %v2740
      %v2805 = vunpack.c.l.b16 %v2741
      %v2806 = vunpack.c.l.b16 %v2742
      %v2807 = vunpack.c.l.b16 %v2743
      %v2808 = vunpack.c.l.b16 %v2744
      %v2809 = vpack.c.b16 %v2778, %v2777
      %v2810 = vpack.c.b16 %v2780, %v2779
      %v2811 = vpack.c.b16 %v2782, %v2781
      %v2812 = vpack.c.b16 %v2784, %v2783
      %v2813 = vpack.c.b16 %v2786, %v2785
      %v2814 = vpack.c.b16 %v2788, %v2787
      %v2815 = vpack.c.b16 %v2790, %v2789
      %v2816 = vpack.c.b16 %v2792, %v2791
      %v2817 = vpack.c.b16 %v2794, %v2793
      %v2818 = vpack.c.b16 %v2796, %v2795
      %v2819 = vpack.c.b16 %v2798, %v2797
      %v2820 = vpack.c.b16 %v2800, %v2799
      %v2821 = vpack.c.b16 %v2802, %v2801
      %v2822 = vpack.c.b16 %v2804, %v2803
      %v2823 = vpack.c.b16 %v2806, %v2805
      %v2824 = vpack.c.b16 %v2808, %v2807
      %2841 = vmatprep.subr.bf16.mxu0 0
      %2842 = vmatpush1.bf16.msra.mxu0 %v2809
      %2843 = vmatprep.subr.bf16.mxu0 0
      %2844 = vmatpush1.bf16.msra.mxu0 %v2810
      %2845 = vmatprep.subr.bf16.mxu0 0
      %2846 = vmatpush1.bf16.msra.mxu0 %v2811
      %2847 = vmatprep.subr.bf16.mxu0 0
      %2848 = vmatpush1.bf16.msra.mxu0 %v2812
      %2849 = vmatprep.subr.bf16.mxu0 0
      %2850 = vmatpush1.bf16.msra.mxu0 %v2813
      %2851 = vmatprep.subr.bf16.mxu0 0
      %2852 = vmatpush1.bf16.msra.mxu0 %v2814
      %2853 = vmatprep.subr.bf16.mxu0 0
      %2854 = vmatpush1.bf16.msra.mxu0 %v2815
      %2855 = vmatprep.subr.bf16.mxu0 0
      %2856 = vmatpush1.bf16.msra.mxu0 %v2816
      %2857 = vmatprep.subr.bf16.mxu0 0
      %2858 = vmatpush1.bf16.msra.mxu0 %v2817
      %2859 = vmatprep.subr.bf16.mxu0 0
      %2860 = vmatpush1.bf16.msra.mxu0 %v2818
      %2861 = vmatprep.subr.bf16.mxu0 0
      %2862 = vmatpush1.bf16.msra.mxu0 %v2819
      %2863 = vmatprep.subr.bf16.mxu0 0
      %2864 = vmatpush1.bf16.msra.mxu0 %v2820
      %2865 = vmatprep.subr.bf16.mxu0 0
      %2866 = vmatpush1.bf16.msra.mxu0 %v2821
      %2867 = vmatprep.subr.bf16.mxu0 0
      %2868 = vmatpush1.bf16.msra.mxu0 %v2822
      %2869 = vmatprep.subr.bf16.mxu0 0
      %2870 = vmatpush1.bf16.msra.mxu0 %v2823
      %2871 = vmatprep.subr.bf16.mxu0 0
      %2872 = vmatpush1.bf16.msra.mxu0 %v2824
      %2873 = vmatprep.mubr.bf16.mxu0 %v672
      %2874 = vmatmul.mubr.bf16.gmra.mrb[0].mxu0 %v671
      %v2875 = vpop.f32.mrb[0].mxu0
      %v2876 = vadd.f32 0.0, %v2875
      %v2877 = vpop.f32.mrb[0].mxu0
      %v2878 = vpop.f32.mrb[0].mxu0
      %v2879 = vadd.f32 0.0, %v2878
      %v2880 = vpop.f32.mrb[0].mxu0
      %2881 = vdwg.mxu0
      %s2882 = scalar_lea.vmem %s5, 1664
      %v2883 = vld [vmem:[%s2882] sm:$0xf]
      %v2884 = vld [vmem:[%s2882 + $0x4] sm:$0xf]
      %v2885 = vld [vmem:[%s2882 + $0x8] sm:$0xf]
      %v2886 = vld [vmem:[%s2882 + $0xc] sm:$0xf]
      %v2887 = vld [vmem:[%s2882 + $0x10] sm:$0xf]
      %v2888 = vld [vmem:[%s2882 + $0x14] sm:$0xf]
      %v2889 = vld [vmem:[%s2882 + $0x18] sm:$0xf]
      %v2890 = vld [vmem:[%s2882 + $0x1c] sm:$0xf]
      %v2891 = vld [vmem:[%s2882 + $0x20] sm:$0xf]
      %v2892 = vld [vmem:[%s2882 + $0x24] sm:$0xf]
      %v2893 = vld [vmem:[%s2882 + $0x28] sm:$0xf]
      %v2894 = vld [vmem:[%s2882 + $0x2c] sm:$0xf]
      %v2895 = vld [vmem:[%s2882 + $0x30] sm:$0xf]
      %v2896 = vld [vmem:[%s2882 + $0x34] sm:$0xf]
      %v2897 = vld [vmem:[%s2882 + $0x38] sm:$0xf]
      %v2898 = vld [vmem:[%s2882 + $0x3c] sm:$0xf]
      %v2899 = vld [vmem:[%s2882 + $0x40] sm:$0xf]
      %v2900 = vld [vmem:[%s2882 + $0x44] sm:$0xf]
      %v2901 = vld [vmem:[%s2882 + $0x48] sm:$0xf]
      %v2902 = vld [vmem:[%s2882 + $0x4c] sm:$0xf]
      %v2903 = vld [vmem:[%s2882 + $0x50] sm:$0xf]
      %v2904 = vld [vmem:[%s2882 + $0x54] sm:$0xf]
      %v2905 = vld [vmem:[%s2882 + $0x58] sm:$0xf]
      %v2906 = vld [vmem:[%s2882 + $0x5c] sm:$0xf]
      %v2907 = vld [vmem:[%s2882 + $0x60] sm:$0xf]
      %v2908 = vld [vmem:[%s2882 + $0x64] sm:$0xf]
      %v2909 = vld [vmem:[%s2882 + $0x68] sm:$0xf]
      %v2910 = vld [vmem:[%s2882 + $0x6c] sm:$0xf]
      %v2911 = vld [vmem:[%s2882 + $0x70] sm:$0xf]
      %v2912 = vld [vmem:[%s2882 + $0x74] sm:$0xf]
      %v2913 = vld [vmem:[%s2882 + $0x78] sm:$0xf]
      %v2914 = vld [vmem:[%s2882 + $0x7c] sm:$0xf]
      %v2947 = vunpack.c.l.b16 %v2883
      %v2948 = vunpack.c.l.b16 %v2884
      %v2949 = vunpack.c.l.b16 %v2885
      %v2950 = vunpack.c.l.b16 %v2886
      %v2951 = vunpack.c.l.b16 %v2887
      %v2952 = vunpack.c.l.b16 %v2888
      %v2953 = vunpack.c.l.b16 %v2889
      %v2954 = vunpack.c.l.b16 %v2890
      %v2955 = vunpack.c.l.b16 %v2891
      %v2956 = vunpack.c.l.b16 %v2892
      %v2957 = vunpack.c.l.b16 %v2893
      %v2958 = vunpack.c.l.b16 %v2894
      %v2959 = vunpack.c.l.b16 %v2895
      %v2960 = vunpack.c.l.b16 %v2896
      %v2961 = vunpack.c.l.b16 %v2897
      %v2962 = vunpack.c.l.b16 %v2898
      %v2963 = vunpack.c.l.b16 %v2899
      %v2964 = vunpack.c.l.b16 %v2900
      %v2965 = vunpack.c.l.b16 %v2901
      %v2966 = vunpack.c.l.b16 %v2902
      %v2967 = vunpack.c.l.b16 %v2903
      %v2968 = vunpack.c.l.b16 %v2904
      %v2969 = vunpack.c.l.b16 %v2905
      %v2970 = vunpack.c.l.b16 %v2906
      %v2971 = vunpack.c.l.b16 %v2907
      %v2972 = vunpack.c.l.b16 %v2908
      %v2973 = vunpack.c.l.b16 %v2909
      %v2974 = vunpack.c.l.b16 %v2910
      %v2975 = vunpack.c.l.b16 %v2911
      %v2976 = vunpack.c.l.b16 %v2912
      %v2977 = vunpack.c.l.b16 %v2913
      %v2978 = vunpack.c.l.b16 %v2914
      %v2979 = vpack.c.b16 %v2948, %v2947
      %v2980 = vpack.c.b16 %v2950, %v2949
      %v2981 = vpack.c.b16 %v2952, %v2951
      %v2982 = vpack.c.b16 %v2954, %v2953
      %v2983 = vpack.c.b16 %v2956, %v2955
      %v2984 = vpack.c.b16 %v2958, %v2957
      %v2985 = vpack.c.b16 %v2960, %v2959
      %v2986 = vpack.c.b16 %v2962, %v2961
      %v2987 = vpack.c.b16 %v2964, %v2963
      %v2988 = vpack.c.b16 %v2966, %v2965
      %v2989 = vpack.c.b16 %v2968, %v2967
      %v2990 = vpack.c.b16 %v2970, %v2969
      %v2991 = vpack.c.b16 %v2972, %v2971
      %v2992 = vpack.c.b16 %v2974, %v2973
      %v2993 = vpack.c.b16 %v2976, %v2975
      %v2994 = vpack.c.b16 %v2978, %v2977
      %3011 = vmatprep.subr.bf16.mxu0 0
      %3012 = vmatpush1.bf16.msra.mxu0 %v2979
      %3013 = vmatprep.subr.bf16.mxu0 0
      %3014 = vmatpush1.bf16.msra.mxu0 %v2980
      %3015 = vmatprep.subr.bf16.mxu0 0
      %3016 = vmatpush1.bf16.msra.mxu0 %v2981
      %3017 = vmatprep.subr.bf16.mxu0 0
      %3018 = vmatpush1.bf16.msra.mxu0 %v2982
      %3019 = vmatprep.subr.bf16.mxu0 0
      %3020 = vmatpush1.bf16.msra.mxu0 %v2983
      %3021 = vmatprep.subr.bf16.mxu0 0
      %3022 = vmatpush1.bf16.msra.mxu0 %v2984
      %3023 = vmatprep.subr.bf16.mxu0 0
      %3024 = vmatpush1.bf16.msra.mxu0 %v2985
      %3025 = vmatprep.subr.bf16.mxu0 0
      %3026 = vmatpush1.bf16.msra.mxu0 %v2986
      %3027 = vmatprep.subr.bf16.mxu0 0
      %3028 = vmatpush1.bf16.msra.mxu0 %v2987
      %3029 = vmatprep.subr.bf16.mxu0 0
      %3030 = vmatpush1.bf16.msra.mxu0 %v2988
      %3031 = vmatprep.subr.bf16.mxu0 0
      %3032 = vmatpush1.bf16.msra.mxu0 %v2989
      %3033 = vmatprep.subr.bf16.mxu0 0
      %3034 = vmatpush1.bf16.msra.mxu0 %v2990
      %3035 = vmatprep.subr.bf16.mxu0 0
      %3036 = vmatpush1.bf16.msra.mxu0 %v2991
      %3037 = vmatprep.subr.bf16.mxu0 0
      %3038 = vmatpush1.bf16.msra.mxu0 %v2992
      %3039 = vmatprep.subr.bf16.mxu0 0
      %3040 = vmatpush1.bf16.msra.mxu0 %v2993
      %3041 = vmatprep.subr.bf16.mxu0 0
      %3042 = vmatpush1.bf16.msra.mxu0 %v2994
      %3043 = vmatprep.mubr.bf16.mxu0 %v672
      %3044 = vmatmul.mubr.bf16.gmra.mrb[0].mxu0 %v671
      %v3045 = vpop.f32.mrb[0].mxu0
      %v3046 = vadd.f32 0.0, %v3045
      %v3047 = vpop.f32.mrb[0].mxu0
      %v3048 = vpop.f32.mrb[0].mxu0
      %v3049 = vadd.f32 0.0, %v3048
      %v3050 = vpop.f32.mrb[0].mxu0
      %3051 = vdwg.mxu0
      %s3052 = scalar_lea.vmem %s5, 1792
      %v3053 = vld [vmem:[%s3052] sm:$0xf]
      %v3054 = vld [vmem:[%s3052 + $0x4] sm:$0xf]
      %v3055 = vld [vmem:[%s3052 + $0x8] sm:$0xf]
      %v3056 = vld [vmem:[%s3052 + $0xc] sm:$0xf]
      %v3057 = vld [vmem:[%s3052 + $0x10] sm:$0xf]
      %v3058 = vld [vmem:[%s3052 + $0x14] sm:$0xf]
      %v3059 = vld [vmem:[%s3052 + $0x18] sm:$0xf]
      %v3060 = vld [vmem:[%s3052 + $0x1c] sm:$0xf]
      %v3061 = vld [vmem:[%s3052 + $0x20] sm:$0xf]
      %v3062 = vld [vmem:[%s3052 + $0x24] sm:$0xf]
      %v3063 = vld [vmem:[%s3052 + $0x28] sm:$0xf]
      %v3064 = vld [vmem:[%s3052 + $0x2c] sm:$0xf]
      %v3065 = vld [vmem:[%s3052 + $0x30] sm:$0xf]
      %v3066 = vld [vmem:[%s3052 + $0x34] sm:$0xf]
      %v3067 = vld [vmem:[%s3052 + $0x38] sm:$0xf]
      %v3068 = vld [vmem:[%s3052 + $0x3c] sm:$0xf]
      %v3069 = vld [vmem:[%s3052 + $0x40] sm:$0xf]
      %v3070 = vld [vmem:[%s3052 + $0x44] sm:$0xf]
      %v3071 = vld [vmem:[%s3052 + $0x48] sm:$0xf]
      %v3072 = vld [vmem:[%s3052 + $0x4c] sm:$0xf]
      %v3073 = vld [vmem:[%s3052 + $0x50] sm:$0xf]
      %v3074 = vld [vmem:[%s3052 + $0x54] sm:$0xf]
      %v3075 = vld [vmem:[%s3052 + $0x58] sm:$0xf]
      %v3076 = vld [vmem:[%s3052 + $0x5c] sm:$0xf]
      %v3077 = vld [vmem:[%s3052 + $0x60] sm:$0xf]
      %v3078 = vld [vmem:[%s3052 + $0x64] sm:$0xf]
      %v3079 = vld [vmem:[%s3052 + $0x68] sm:$0xf]
      %v3080 = vld [vmem:[%s3052 + $0x6c] sm:$0xf]
      %v3081 = vld [vmem:[%s3052 + $0x70] sm:$0xf]
      %v3082 = vld [vmem:[%s3052 + $0x74] sm:$0xf]
      %v3083 = vld [vmem:[%s3052 + $0x78] sm:$0xf]
      %v3084 = vld [vmem:[%s3052 + $0x7c] sm:$0xf]
      %v3117 = vunpack.c.l.b16 %v3053
      %v3118 = vunpack.c.l.b16 %v3054
      %v3119 = vunpack.c.l.b16 %v3055
      %v3120 = vunpack.c.l.b16 %v3056
      %v3121 = vunpack.c.l.b16 %v3057
      %v3122 = vunpack.c.l.b16 %v3058
      %v3123 = vunpack.c.l.b16 %v3059
      %v3124 = vunpack.c.l.b16 %v3060
      %v3125 = vunpack.c.l.b16 %v3061
      %v3126 = vunpack.c.l.b16 %v3062
      %v3127 = vunpack.c.l.b16 %v3063
      %v3128 = vunpack.c.l.b16 %v3064
      %v3129 = vunpack.c.l.b16 %v3065
      %v3130 = vunpack.c.l.b16 %v3066
      %v3131 = vunpack.c.l.b16 %v3067
      %v3132 = vunpack.c.l.b16 %v3068
      %v3133 = vunpack.c.l.b16 %v3069
      %v3134 = vunpack.c.l.b16 %v3070
      %v3135 = vunpack.c.l.b16 %v3071
      %v3136 = vunpack.c.l.b16 %v3072
      %v3137 = vunpack.c.l.b16 %v3073
      %v3138 = vunpack.c.l.b16 %v3074
      %v3139 = vunpack.c.l.b16 %v3075
      %v3140 = vunpack.c.l.b16 %v3076
      %v3141 = vunpack.c.l.b16 %v3077
      %v3142 = vunpack.c.l.b16 %v3078
      %v3143 = vunpack.c.l.b16 %v3079
      %v3144 = vunpack.c.l.b16 %v3080
      %v3145 = vunpack.c.l.b16 %v3081
      %v3146 = vunpack.c.l.b16 %v3082
      %v3147 = vunpack.c.l.b16 %v3083
      %v3148 = vunpack.c.l.b16 %v3084
      %v3149 = vpack.c.b16 %v3118, %v3117
      %v3150 = vpack.c.b16 %v3120, %v3119
      %v3151 = vpack.c.b16 %v3122, %v3121
      %v3152 = vpack.c.b16 %v3124, %v3123
      %v3153 = vpack.c.b16 %v3126, %v3125
      %v3154 = vpack.c.b16 %v3128, %v3127
      %v3155 = vpack.c.b16 %v3130, %v3129
      %v3156 = vpack.c.b16 %v3132, %v3131
      %v3157 = vpack.c.b16 %v3134, %v3133
      %v3158 = vpack.c.b16 %v3136, %v3135
      %v3159 = vpack.c.b16 %v3138, %v3137
      %v3160 = vpack.c.b16 %v3140, %v3139
      %v3161 = vpack.c.b16 %v3142, %v3141
      %v3162 = vpack.c.b16 %v3144, %v3143
      %v3163 = vpack.c.b16 %v3146, %v3145
      %v3164 = vpack.c.b16 %v3148, %v3147
      %3181 = vmatprep.subr.bf16.mxu0 0
      %3182 = vmatpush1.bf16.msra.mxu0 %v3149
      %3183 = vmatprep.subr.bf16.mxu0 0
      %3184 = vmatpush1.bf16.msra.mxu0 %v3150
      %3185 = vmatprep.subr.bf16.mxu0 0
      %3186 = vmatpush1.bf16.msra.mxu0 %v3151
      %3187 = vmatprep.subr.bf16.mxu0 0
      %3188 = vmatpush1.bf16.msra.mxu0 %v3152
      %3189 = vmatprep.subr.bf16.mxu0 0
      %3190 = vmatpush1.bf16.msra.mxu0 %v3153
      %3191 = vmatprep.subr.bf16.mxu0 0
      %3192 = vmatpush1.bf16.msra.mxu0 %v3154
      %3193 = vmatprep.subr.bf16.mxu0 0
      %3194 = vmatpush1.bf16.msra.mxu0 %v3155
      %3195 = vmatprep.subr.bf16.mxu0 0
      %3196 = vmatpush1.bf16.msra.mxu0 %v3156
      %3197 = vmatprep.subr.bf16.mxu0 0
      %3198 = vmatpush1.bf16.msra.mxu0 %v3157
      %3199 = vmatprep.subr.bf16.mxu0 0
      %3200 = vmatpush1.bf16.msra.mxu0 %v3158
      %3201 = vmatprep.subr.bf16.mxu0 0
      %3202 = vmatpush1.bf16.msra.mxu0 %v3159
      %3203 = vmatprep.subr.bf16.mxu0 0
      %3204 = vmatpush1.bf16.msra.mxu0 %v3160
      %3205 = vmatprep.subr.bf16.mxu0 0
      %3206 = vmatpush1.bf16.msra.mxu0 %v3161
      %3207 = vmatprep.subr.bf16.mxu0 0
      %3208 = vmatpush1.bf16.msra.mxu0 %v3162
      %3209 = vmatprep.subr.bf16.mxu0 0
      %3210 = vmatpush1.bf16.msra.mxu0 %v3163
      %3211 = vmatprep.subr.bf16.mxu0 0
      %3212 = vmatpush1.bf16.msra.mxu0 %v3164
      %3213 = vmatprep.mubr.bf16.mxu0 %v672
      %3214 = vmatmul.mubr.bf16.gmra.mrb[0].mxu0 %v671
      %v3215 = vpop.f32.mrb[0].mxu0
      %v3216 = vadd.f32 0.0, %v3215
      %v3217 = vpop.f32.mrb[0].mxu0
      %v3218 = vpop.f32.mrb[0].mxu0
      %v3219 = vadd.f32 0.0, %v3218
      %v3220 = vpop.f32.mrb[0].mxu0
      %3221 = vdwg.mxu0
      %s3222 = scalar_lea.vmem %s5, 1920
      %v3223 = vld [vmem:[%s3222] sm:$0xf]
      %v3224 = vld [vmem:[%s3222 + $0x4] sm:$0xf]
      %v3225 = vld [vmem:[%s3222 + $0x8] sm:$0xf]
      %v3226 = vld [vmem:[%s3222 + $0xc] sm:$0xf]
      %v3227 = vld [vmem:[%s3222 + $0x10] sm:$0xf]
      %v3228 = vld [vmem:[%s3222 + $0x14] sm:$0xf]
      %v3229 = vld [vmem:[%s3222 + $0x18] sm:$0xf]
      %v3230 = vld [vmem:[%s3222 + $0x1c] sm:$0xf]
      %v3231 = vld [vmem:[%s3222 + $0x20] sm:$0xf]
      %v3232 = vld [vmem:[%s3222 + $0x24] sm:$0xf]
      %v3233 = vld [vmem:[%s3222 + $0x28] sm:$0xf]
      %v3234 = vld [vmem:[%s3222 + $0x2c] sm:$0xf]
      %v3235 = vld [vmem:[%s3222 + $0x30] sm:$0xf]
      %v3236 = vld [vmem:[%s3222 + $0x34] sm:$0xf]
      %v3237 = vld [vmem:[%s3222 + $0x38] sm:$0xf]
      %v3238 = vld [vmem:[%s3222 + $0x3c] sm:$0xf]
      %v3239 = vld [vmem:[%s3222 + $0x40] sm:$0xf]
      %v3240 = vld [vmem:[%s3222 + $0x44] sm:$0xf]
      %v3241 = vld [vmem:[%s3222 + $0x48] sm:$0xf]
      %v3242 = vld [vmem:[%s3222 + $0x4c] sm:$0xf]
      %v3243 = vld [vmem:[%s3222 + $0x50] sm:$0xf]
      %v3244 = vld [vmem:[%s3222 + $0x54] sm:$0xf]
      %v3245 = vld [vmem:[%s3222 + $0x58] sm:$0xf]
      %v3246 = vld [vmem:[%s3222 + $0x5c] sm:$0xf]
      %v3247 = vld [vmem:[%s3222 + $0x60] sm:$0xf]
      %v3248 = vld [vmem:[%s3222 + $0x64] sm:$0xf]
      %v3249 = vld [vmem:[%s3222 + $0x68] sm:$0xf]
      %v3250 = vld [vmem:[%s3222 + $0x6c] sm:$0xf]
      %v3251 = vld [vmem:[%s3222 + $0x70] sm:$0xf]
      %v3252 = vld [vmem:[%s3222 + $0x74] sm:$0xf]
      %v3253 = vld [vmem:[%s3222 + $0x78] sm:$0xf]
      %v3254 = vld [vmem:[%s3222 + $0x7c] sm:$0xf]
      %v3287 = vunpack.c.l.b16 %v3223
      %v3288 = vunpack.c.l.b16 %v3224
      %v3289 = vunpack.c.l.b16 %v3225
      %v3290 = vunpack.c.l.b16 %v3226
      %v3291 = vunpack.c.l.b16 %v3227
      %v3292 = vunpack.c.l.b16 %v3228
      %v3293 = vunpack.c.l.b16 %v3229
      %v3294 = vunpack.c.l.b16 %v3230
      %v3295 = vunpack.c.l.b16 %v3231
      %v3296 = vunpack.c.l.b16 %v3232
      %v3297 = vunpack.c.l.b16 %v3233
      %v3298 = vunpack.c.l.b16 %v3234
      %v3299 = vunpack.c.l.b16 %v3235
      %v3300 = vunpack.c.l.b16 %v3236
      %v3301 = vunpack.c.l.b16 %v3237
      %v3302 = vunpack.c.l.b16 %v3238
      %v3303 = vunpack.c.l.b16 %v3239
      %v3304 = vunpack.c.l.b16 %v3240
      %v3305 = vunpack.c.l.b16 %v3241
      %v3306 = vunpack.c.l.b16 %v3242
      %v3307 = vunpack.c.l.b16 %v3243
      %v3308 = vunpack.c.l.b16 %v3244
      %v3309 = vunpack.c.l.b16 %v3245
      %v3310 = vunpack.c.l.b16 %v3246
      %v3311 = vunpack.c.l.b16 %v3247
      %v3312 = vunpack.c.l.b16 %v3248
      %v3313 = vunpack.c.l.b16 %v3249
      %v3314 = vunpack.c.l.b16 %v3250
      %v3315 = vunpack.c.l.b16 %v3251
      %v3316 = vunpack.c.l.b16 %v3252
      %v3317 = vunpack.c.l.b16 %v3253
      %v3318 = vunpack.c.l.b16 %v3254
      %v3319 = vpack.c.b16 %v3288, %v3287
      %v3320 = vpack.c.b16 %v3290, %v3289
      %v3321 = vpack.c.b16 %v3292, %v3291
      %v3322 = vpack.c.b16 %v3294, %v3293
      %v3323 = vpack.c.b16 %v3296, %v3295
      %v3324 = vpack.c.b16 %v3298, %v3297
      %v3325 = vpack.c.b16 %v3300, %v3299
      %v3326 = vpack.c.b16 %v3302, %v3301
      %v3327 = vpack.c.b16 %v3304, %v3303
      %v3328 = vpack.c.b16 %v3306, %v3305
      %v3329 = vpack.c.b16 %v3308, %v3307
      %v3330 = vpack.c.b16 %v3310, %v3309
      %v3331 = vpack.c.b16 %v3312, %v3311
      %v3332 = vpack.c.b16 %v3314, %v3313
      %v3333 = vpack.c.b16 %v3316, %v3315
      %v3334 = vpack.c.b16 %v3318, %v3317
      %3351 = vmatprep.subr.bf16.mxu0 0
      %3352 = vmatpush1.bf16.msra.mxu0 %v3319
      %3353 = vmatprep.subr.bf16.mxu0 0
      %3354 = vmatpush1.bf16.msra.mxu0 %v3320
      %3355 = vmatprep.subr.bf16.mxu0 0
      %3356 = vmatpush1.bf16.msra.mxu0 %v3321
      %3357 = vmatprep.subr.bf16.mxu0 0
      %3358 = vmatpush1.bf16.msra.mxu0 %v3322
      %3359 = vmatprep.subr.bf16.mxu0 0
      %3360 = vmatpush1.bf16.msra.mxu0 %v3323
      %3361 = vmatprep.subr.bf16.mxu0 0
      %3362 = vmatpush1.bf16.msra.mxu0 %v3324
      %3363 = vmatprep.subr.bf16.mxu0 0
      %3364 = vmatpush1.bf16.msra.mxu0 %v3325
      %3365 = vmatprep.subr.bf16.mxu0 0
      %3366 = vmatpush1.bf16.msra.mxu0 %v3326
      %3367 = vmatprep.subr.bf16.mxu0 0
      %3368 = vmatpush1.bf16.msra.mxu0 %v3327
      %3369 = vmatprep.subr.bf16.mxu0 0
      %3370 = vmatpush1.bf16.msra.mxu0 %v3328
      %3371 = vmatprep.subr.bf16.mxu0 0
      %3372 = vmatpush1.bf16.msra.mxu0 %v3329
      %3373 = vmatprep.subr.bf16.mxu0 0
      %3374 = vmatpush1.bf16.msra.mxu0 %v3330
      %3375 = vmatprep.subr.bf16.mxu0 0
      %3376 = vmatpush1.bf16.msra.mxu0 %v3331
      %3377 = vmatprep.subr.bf16.mxu0 0
      %3378 = vmatpush1.bf16.msra.mxu0 %v3332
      %3379 = vmatprep.subr.bf16.mxu0 0
      %3380 = vmatpush1.bf16.msra.mxu0 %v3333
      %3381 = vmatprep.subr.bf16.mxu0 0
      %3382 = vmatpush1.bf16.msra.mxu0 %v3334
      %3383 = vmatprep.mubr.bf16.mxu0 %v672
      %3384 = vmatmul.mubr.bf16.gmra.mrb[0].mxu0 %v671
      %v3385 = vpop.f32.mrb[0].mxu0
      %v3386 = vadd.f32 0.0, %v3385
      %v3387 = vpop.f32.mrb[0].mxu0
      %v3388 = vpop.f32.mrb[0].mxu0
      %v3389 = vadd.f32 0.0, %v3388
      %v3390 = vpop.f32.mrb[0].mxu0
      %3391 = vdwg.mxu0
      %v3392 = vld [vmem:[%s3] sm:$0xf]
      %v3393 = vld [vmem:[%s3 + $0x4] sm:$0xf]
      %v3394 = vld [vmem:[%s4] sm:$0xff]
      %v3395 = vld [vmem:[%s4 + $0x8] sm:$0xff]
      %v3396 = vpack.c.bf16 %v1006, %v836
      %v3397 = vpack.c.bf16 %v1346, %v1176
      %v3398 = vpack.c.bf16 %v1686, %v1516
      %v3399 = vpack.c.bf16 %v2026, %v1856
      %v3400 = vpack.c.bf16 %v2366, %v2196
      %v3401 = vpack.c.bf16 %v2706, %v2536
      %v3402 = vpack.c.bf16 %v3046, %v2876
      %v3403 = vpack.c.bf16 %v3386, %v3216
      %3405 = vset.pattern.permute.xlu0 0
      %3406 = vperm.xlu0 %3405, %v3394
      %v3407 = vpop.permute.xlu0 %3406
      %3410 = vset.pattern.permute.xlu0 0
      %3411 = vperm.xlu0 %3410, %v3395
      %v3412 = vpop.permute.xlu0 %3411
      %v3416 = vunpack.c.l.b16 %v3392
      %v3417 = vunpack.c.l.b16 %v3393
      %v3418 = vpack.c.b16 %v3417, %v3416
      %3420 = vmatprep.subr.bf16.mxu0 0
      %3421 = vmatpush1.bf16.msra.mxu0 %v3396
      %3422 = vmatprep.subr.bf16.mxu0 0
      %3423 = vmatpush1.bf16.msra.mxu0 %v3397
      %3424 = vmatprep.subr.bf16.mxu0 0
      %3425 = vmatpush1.bf16.msra.mxu0 %v3398
      %3426 = vmatprep.subr.bf16.mxu0 0
      %3427 = vmatpush1.bf16.msra.mxu0 %v3399
      %3428 = vmatprep.subr.bf16.mxu0 0
      %3429 = vmatpush1.bf16.msra.mxu0 %v3400
      %3430 = vmatprep.subr.bf16.mxu0 0
      %3431 = vmatpush1.bf16.msra.mxu0 %v3401
      %3432 = vmatprep.subr.bf16.mxu0 0
      %3433 = vmatpush1.bf16.msra.mxu0 %v3402
      %3434 = vmatprep.subr.bf16.mxu0 0
      %3435 = vmatpush1.bf16.msra.mxu0 %v3403
      %3436 = vmatprep.subr.bf16.mxu0 0
      %3437 = vmatpush1.bf16.msra.mxu0 0
      %3438 = vmatprep.subr.bf16.mxu0 0
      %3439 = vmatpush1.bf16.msra.mxu0 0
      %3440 = vmatprep.subr.bf16.mxu0 0
      %3441 = vmatpush1.bf16.msra.mxu0 0
      %3442 = vmatprep.subr.bf16.mxu0 0
      %3443 = vmatpush1.bf16.msra.mxu0 0
      %3444 = vmatprep.subr.bf16.mxu0 0
      %3445 = vmatpush1.bf16.msra.mxu0 0
      %3446 = vmatprep.subr.bf16.mxu0 0
      %3447 = vmatpush1.bf16.msra.mxu0 0
      %3448 = vmatprep.subr.bf16.mxu0 0
      %3449 = vmatpush1.bf16.msra.mxu0 0
      %3450 = vmatprep.subr.bf16.mxu0 0
      %3451 = vmatpush1.bf16.msra.mxu0 0
      %3452 = vmatprep.mubr.bf16.mxu0 0
      %3453 = vmatmul.mubr.bf16.gmra.mrb[0].mxu0 %v3418
      %v3454 = vpop.f32.mrb[0].mxu0
      %v3455 = vadd.f32 %v3407, %v3454
      %v3456 = vpop.f32.mrb[0].mxu0
      %v3457 = vpop.f32.mrb[0].mxu0
      %v3458 = vadd.f32 %v3412, %v3457
      %v3459 = vpop.f32.mrb[0].mxu0
      %3460 = vdwg.mxu0
      %v3461 = vpack.c.bf16 %v1009, %v839
      %v3462 = vpack.c.bf16 %v1349, %v1179
      %v3463 = vpack.c.bf16 %v1689, %v1519
      %v3464 = vpack.c.bf16 %v2029, %v1859
      %v3465 = vpack.c.bf16 %v2369, %v2199
      %v3466 = vpack.c.bf16 %v2709, %v2539
      %v3467 = vpack.c.bf16 %v3049, %v2879
      %v3468 = vpack.c.bf16 %v3389, %v3219
      %3469 = vmatprep.subr.bf16.mxu0 0
      %3470 = vmatpush1.bf16.msra.mxu0 %v3461
      %3471 = vmatprep.subr.bf16.mxu0 0
      %3472 = vmatpush1.bf16.msra.mxu0 %v3462
      %3473 = vmatprep.subr.bf16.mxu0 0
      %3474 = vmatpush1.bf16.msra.mxu0 %v3463
      %3475 = vmatprep.subr.bf16.mxu0 0
      %3476 = vmatpush1.bf16.msra.mxu0 %v3464
      %3477 = vmatprep.subr.bf16.mxu0 0
      %3478 = vmatpush1.bf16.msra.mxu0 %v3465
      %3479 = vmatprep.subr.bf16.mxu0 0
      %3480 = vmatpush1.bf16.msra.mxu0 %v3466
      %3481 = vmatprep.subr.bf16.mxu0 0
      %3482 = vmatpush1.bf16.msra.mxu0 %v3467
      %3483 = vmatprep.subr.bf16.mxu0 0
      %3484 = vmatpush1.bf16.msra.mxu0 %v3468
      %3485 = vmatprep.subr.bf16.mxu0 0
      %3486 = vmatpush1.bf16.msra.mxu0 0
      %3487 = vmatprep.subr.bf16.mxu0 0
      %3488 = vmatpush1.bf16.msra.mxu0 0
      %3489 = vmatprep.subr.bf16.mxu0 0
      %3490 = vmatpush1.bf16.msra.mxu0 0
      %3491 = vmatprep.subr.bf16.mxu0 0
      %3492 = vmatpush1.bf16.msra.mxu0 0
      %3493 = vmatprep.subr.bf16.mxu0 0
      %3494 = vmatpush1.bf16.msra.mxu0 0
      %3495 = vmatprep.subr.bf16.mxu0 0
      %3496 = vmatpush1.bf16.msra.mxu0 0
      %3497 = vmatprep.subr.bf16.mxu0 0
      %3498 = vmatpush1.bf16.msra.mxu0 0
      %3499 = vmatprep.subr.bf16.mxu0 0
      %3500 = vmatpush1.bf16.msra.mxu0 0
      %3501 = vmatprep.mubr.bf16.mxu0 0
      %3502 = vmatmul.mubr.bf16.gmra.mrb[0].mxu0 %v3418
      %v3503 = vpop.f32.mrb[0].mxu0
      %v3504 = vadd.f32 %v3407, %v3503
      %v3505 = vpop.f32.mrb[0].mxu0
      %v3506 = vpop.f32.mrb[0].mxu0
      %v3507 = vadd.f32 %v3412, %v3506
      %v3508 = vpop.f32.mrb[0].mxu0
      %3509 = vdwg.mxu0
      %vm3510 = vcmask 523264
      %v3511 = vsel %vm3510, %v3455, 0.0
      %3512 = vadd.xlane.f32.xlu0 %v3511
      %v3513 = vpop.xlane.xlu0 %3512
      %v3514 = vsel %vm3510, %v3458, 0.0
      %3515 = vadd.xlane.f32.xlu0 %v3514
      %v3516 = vpop.xlane.xlu0 %3515
      %v3517 = vrcp.pop 64.0
      %v3518 = vmul.f32 %v3513, %v3517
      %v3519 = vmul.f32 %v3516, %v3517
      %v3520 = vsub.f32 %v3455, %v3518
      %v3521 = vsub.f32 %v3458, %v3519
      %v3522 = vmul.f32 %v3520, %v3520
      %v3523 = vmul.f32 %v3521, %v3521
      %v3524 = vsel %vm3510, %v3522, 0.0
      %3525 = vadd.xlane.f32.xlu0 %v3524
      %v3526 = vpop.xlane.xlu0 %3525
      %v3527 = vsel %vm3510, %v3523, 0.0
      %3528 = vadd.xlane.f32.xlu0 %v3527
      %v3529 = vpop.xlane.xlu0 %3528
      %v3530 = vmul.f32 %v3526, %v3517
      %v3531 = vmul.f32 %v3529, %v3517
      %v3532 = vadd.f32 %v3530, 1e-05
      %v3533 = vadd.f32 %v3531, 1e-05
      %v3534 = vrsqrt.pop %v3532
      %v3535 = vrsqrt.pop %v3533
      %v3536 = vmul.f32 %v3520, %v3534
      %v3537 = vmul.f32 %v3521, %v3535
      %vm3538 = vcmp.ge.f32.partialorder %v3536, 0.0
      %vm3539 = vcmp.ge.f32.partialorder %v3537, 0.0
      %v3540 = vmul.f32 %v3536, 0.2
      %v3541 = vmul.f32 %v3537, 0.2
      %v3542 = vsel %vm3538, %v3536, %v3540
      %v3543 = vsel %vm3539, %v3537, %v3541
      %v3544 = vsel %vm3510, %v3504, 0.0
      %3545 = vadd.xlane.f32.xlu0 %v3544
      %v3546 = vpop.xlane.xlu0 %3545
      %v3547 = vsel %vm3510, %v3507, 0.0
      %3548 = vadd.xlane.f32.xlu0 %v3547
      %v3549 = vpop.xlane.xlu0 %3548
      %v3550 = vmul.f32 %v3546, %v3517
      %v3551 = vmul.f32 %v3549, %v3517
      %v3552 = vsub.f32 %v3504, %v3550
      %v3553 = vsub.f32 %v3507, %v3551
      %v3554 = vmul.f32 %v3552, %v3552
      %v3555 = vmul.f32 %v3553, %v3553
      %v3556 = vsel %vm3510, %v3554, 0.0
      %3557 = vadd.xlane.f32.xlu0 %v3556
      %v3558 = vpop.xlane.xlu0 %3557
      %v3559 = vsel %vm3510, %v3555, 0.0
      %3560 = vadd.xlane.f32.xlu0 %v3559
      %v3561 = vpop.xlane.xlu0 %3560
      %v3562 = vmul.f32 %v3558, %v3517
      %v3563 = vmul.f32 %v3561, %v3517
      %v3564 = vadd.f32 %v3562, 1e-05
      %v3565 = vadd.f32 %v3563, 1e-05
      %v3566 = vrsqrt.pop %v3564
      %v3567 = vrsqrt.pop %v3565
      %v3568 = vmul.f32 %v3552, %v3566
      %v3569 = vmul.f32 %v3553, %v3567
      %vm3570 = vcmp.ge.f32.partialorder %v3568, 0.0
      %vm3571 = vcmp.ge.f32.partialorder %v3569, 0.0
      %v3572 = vmul.f32 %v3568, 0.2
      %v3573 = vmul.f32 %v3569, 0.2
      %v3574 = vsel %vm3570, %v3568, %v3572
      %v3575 = vsel %vm3571, %v3569, %v3573
      %v3576 = vpack.c.bf16 %v3543, %v3542
      %v3577 = vpack.c.bf16 %v3575, %v3574
      %v3578 = vld [vmem:[%s8] sm:$0xf]
      %v3579 = vld [vmem:[%s8 + $0x4] sm:$0xf]
      %v3580 = vld [vmem:[%s8 + $0x8] sm:$0xf]
      %v3581 = vld [vmem:[%s8 + $0xc] sm:$0xf]
      %v3582 = vld [vmem:[%s8 + $0x10] sm:$0xf]
      %v3583 = vld [vmem:[%s8 + $0x14] sm:$0xf]
      %v3584 = vld [vmem:[%s8 + $0x18] sm:$0xf]
      %v3585 = vld [vmem:[%s8 + $0x1c] sm:$0xf]
      %v3594 = vunpack.c.l.b16 %v3578
      %v3595 = vunpack.c.l.b16 %v3579
      %v3596 = vunpack.c.l.b16 %v3580
      %v3597 = vunpack.c.l.b16 %v3581
      %v3598 = vunpack.c.l.b16 %v3582
      %v3599 = vunpack.c.l.b16 %v3583
      %v3600 = vunpack.c.l.b16 %v3584
      %v3601 = vunpack.c.l.b16 %v3585
      %v3602 = vpack.c.b16 %v3595, %v3594
      %v3603 = vpack.c.b16 %v3597, %v3596
      %v3604 = vpack.c.b16 %v3599, %v3598
      %v3605 = vpack.c.b16 %v3601, %v3600
      %v3611 = vsel %vm3510, %v3576, 0
      %v3614 = vsel %vm3510, %v3577, 0
      %3616 = vmatprep.subr.bf16.mxu0 0
      %3617 = vmatpush1.bf16.msra.mxu0 %v3602
      %3618 = vmatprep.subr.bf16.mxu0 0
      %3619 = vmatpush1.bf16.msra.mxu0 %v3603
      %3620 = vmatprep.subr.bf16.mxu0 0
      %3621 = vmatpush1.bf16.msra.mxu0 %v3604
      %3622 = vmatprep.subr.bf16.mxu0 0
      %3623 = vmatpush1.bf16.msra.mxu0 %v3605
      %3624 = vmatprep.subr.bf16.mxu0 0
      %3625 = vmatpush1.bf16.msra.mxu0 0
      %3626 = vmatprep.subr.bf16.mxu0 0
      %3627 = vmatpush1.bf16.msra.mxu0 0
      %3628 = vmatprep.subr.bf16.mxu0 0
      %3629 = vmatpush1.bf16.msra.mxu0 0
      %3630 = vmatprep.subr.bf16.mxu0 0
      %3631 = vmatpush1.bf16.msra.mxu0 0
      %3632 = vmatprep.subr.bf16.mxu0 0
      %3633 = vmatpush1.bf16.msra.mxu0 0
      %3634 = vmatprep.subr.bf16.mxu0 0
      %3635 = vmatpush1.bf16.msra.mxu0 0
      %3636 = vmatprep.subr.bf16.mxu0 0
      %3637 = vmatpush1.bf16.msra.mxu0 0
      %3638 = vmatprep.subr.bf16.mxu0 0
      %3639 = vmatpush1.bf16.msra.mxu0 0
      %3640 = vmatprep.subr.bf16.mxu0 0
      %3641 = vmatpush1.bf16.msra.mxu0 0
      %3642 = vmatprep.subr.bf16.mxu0 0
      %3643 = vmatpush1.bf16.msra.mxu0 0
      %3644 = vmatprep.subr.bf16.mxu0 0
      %3645 = vmatpush1.bf16.msra.mxu0 0
      %3646 = vmatprep.subr.bf16.mxu0 0
      %3647 = vmatpush1.bf16.msra.mxu0 0
      %3648 = vmatprep.mubr.bf16.mxu0 0
      %3649 = vmatmul.mubr.bf16.gmra.mrb[0].mxu0 %v3611
      %v3650 = vpop.f32.mrb[0].mxu0
      %v3651 = vadd.f32 0.0, %v3650
      %v3652 = vpop.f32.mrb[0].mxu0
      %v3653 = vpop.f32.mrb[0].mxu0
      %v3654 = vadd.f32 0.0, %v3653
      %v3655 = vpop.f32.mrb[0].mxu0
      %3656 = vmatprep.mubr.bf16.mxu0 0
      %3657 = vmatmul.mubr.bf16.gmra.mrb[0].mxu0 %v3614
      %v3658 = vpop.f32.mrb[0].mxu0
      %v3659 = vadd.f32 0.0, %v3658
      %v3660 = vpop.f32.mrb[0].mxu0
      %v3661 = vpop.f32.mrb[0].mxu0
      %v3662 = vadd.f32 0.0, %v3661
      %v3663 = vpop.f32.mrb[0].mxu0
      %3664 = vdwg.mxu0
      %s3665 = scalar_lea.vmem %s8, 32
      %v3666 = vld [vmem:[%s3665] sm:$0xf]
      %v3667 = vld [vmem:[%s3665 + $0x4] sm:$0xf]
      %v3668 = vld [vmem:[%s3665 + $0x8] sm:$0xf]
      %v3669 = vld [vmem:[%s3665 + $0xc] sm:$0xf]
      %v3670 = vld [vmem:[%s3665 + $0x10] sm:$0xf]
      %v3671 = vld [vmem:[%s3665 + $0x14] sm:$0xf]
      %v3672 = vld [vmem:[%s3665 + $0x18] sm:$0xf]
      %v3673 = vld [vmem:[%s3665 + $0x1c] sm:$0xf]
      %v3682 = vunpack.c.l.b16 %v3666
      %v3683 = vunpack.c.l.b16 %v3667
      %v3684 = vunpack.c.l.b16 %v3668
      %v3685 = vunpack.c.l.b16 %v3669
      %v3686 = vunpack.c.l.b16 %v3670
      %v3687 = vunpack.c.l.b16 %v3671
      %v3688 = vunpack.c.l.b16 %v3672
      %v3689 = vunpack.c.l.b16 %v3673
      %v3690 = vpack.c.b16 %v3683, %v3682
      %v3691 = vpack.c.b16 %v3685, %v3684
      %v3692 = vpack.c.b16 %v3687, %v3686
      %v3693 = vpack.c.b16 %v3689, %v3688
      %3698 = vmatprep.subr.bf16.mxu0 0
      %3699 = vmatpush1.bf16.msra.mxu0 %v3690
      %3700 = vmatprep.subr.bf16.mxu0 0
      %3701 = vmatpush1.bf16.msra.mxu0 %v3691
      %3702 = vmatprep.subr.bf16.mxu0 0
      %3703 = vmatpush1.bf16.msra.mxu0 %v3692
      %3704 = vmatprep.subr.bf16.mxu0 0
      %3705 = vmatpush1.bf16.msra.mxu0 %v3693
      %3706 = vmatprep.subr.bf16.mxu0 0
      %3707 = vmatpush1.bf16.msra.mxu0 0
      %3708 = vmatprep.subr.bf16.mxu0 0
      %3709 = vmatpush1.bf16.msra.mxu0 0
      %3710 = vmatprep.subr.bf16.mxu0 0
      %3711 = vmatpush1.bf16.msra.mxu0 0
      %3712 = vmatprep.subr.bf16.mxu0 0
      %3713 = vmatpush1.bf16.msra.mxu0 0
      %3714 = vmatprep.subr.bf16.mxu0 0
      %3715 = vmatpush1.bf16.msra.mxu0 0
      %3716 = vmatprep.subr.bf16.mxu0 0
      %3717 = vmatpush1.bf16.msra.mxu0 0
      %3718 = vmatprep.subr.bf16.mxu0 0
      %3719 = vmatpush1.bf16.msra.mxu0 0
      %3720 = vmatprep.subr.bf16.mxu0 0
      %3721 = vmatpush1.bf16.msra.mxu0 0
      %3722 = vmatprep.subr.bf16.mxu0 0
      %3723 = vmatpush1.bf16.msra.mxu0 0
      %3724 = vmatprep.subr.bf16.mxu0 0
      %3725 = vmatpush1.bf16.msra.mxu0 0
      %3726 = vmatprep.subr.bf16.mxu0 0
      %3727 = vmatpush1.bf16.msra.mxu0 0
      %3728 = vmatprep.subr.bf16.mxu0 0
      %3729 = vmatpush1.bf16.msra.mxu0 0
      %3730 = vmatprep.mubr.bf16.mxu0 0
      %3731 = vmatmul.mubr.bf16.gmra.mrb[0].mxu0 %v3611
      %v3732 = vpop.f32.mrb[0].mxu0
      %v3733 = vadd.f32 0.0, %v3732
      %v3734 = vpop.f32.mrb[0].mxu0
      %v3735 = vpop.f32.mrb[0].mxu0
      %v3736 = vadd.f32 0.0, %v3735
      %v3737 = vpop.f32.mrb[0].mxu0
      %3738 = vmatprep.mubr.bf16.mxu0 0
      %3739 = vmatmul.mubr.bf16.gmra.mrb[0].mxu0 %v3614
      %v3740 = vpop.f32.mrb[0].mxu0
      %v3741 = vadd.f32 0.0, %v3740
      %v3742 = vpop.f32.mrb[0].mxu0
      %v3743 = vpop.f32.mrb[0].mxu0
      %v3744 = vadd.f32 0.0, %v3743
      %v3745 = vpop.f32.mrb[0].mxu0
      %3746 = vdwg.mxu0
      %s3747 = scalar_lea.vmem %s8, 64
      %v3748 = vld [vmem:[%s3747] sm:$0xf]
      %v3749 = vld [vmem:[%s3747 + $0x4] sm:$0xf]
      %v3750 = vld [vmem:[%s3747 + $0x8] sm:$0xf]
      %v3751 = vld [vmem:[%s3747 + $0xc] sm:$0xf]
      %v3752 = vld [vmem:[%s3747 + $0x10] sm:$0xf]
      %v3753 = vld [vmem:[%s3747 + $0x14] sm:$0xf]
      %v3754 = vld [vmem:[%s3747 + $0x18] sm:$0xf]
      %v3755 = vld [vmem:[%s3747 + $0x1c] sm:$0xf]
      %v3764 = vunpack.c.l.b16 %v3748
      %v3765 = vunpack.c.l.b16 %v3749
      %v3766 = vunpack.c.l.b16 %v3750
      %v3767 = vunpack.c.l.b16 %v3751
      %v3768 = vunpack.c.l.b16 %v3752
      %v3769 = vunpack.c.l.b16 %v3753
      %v3770 = vunpack.c.l.b16 %v3754
      %v3771 = vunpack.c.l.b16 %v3755
      %v3772 = vpack.c.b16 %v3765, %v3764
      %v3773 = vpack.c.b16 %v3767, %v3766
      %v3774 = vpack.c.b16 %v3769, %v3768
      %v3775 = vpack.c.b16 %v3771, %v3770
      %3780 = vmatprep.subr.bf16.mxu0 0
      %3781 = vmatpush1.bf16.msra.mxu0 %v3772
      %3782 = vmatprep.subr.bf16.mxu0 0
      %3783 = vmatpush1.bf16.msra.mxu0 %v3773
      %3784 = vmatprep.subr.bf16.mxu0 0
      %3785 = vmatpush1.bf16.msra.mxu0 %v3774
      %3786 = vmatprep.subr.bf16.mxu0 0
      %3787 = vmatpush1.bf16.msra.mxu0 %v3775
      %3788 = vmatprep.subr.bf16.mxu0 0
      %3789 = vmatpush1.bf16.msra.mxu0 0
      %3790 = vmatprep.subr.bf16.mxu0 0
      %3791 = vmatpush1.bf16.msra.mxu0 0
      %3792 = vmatprep.subr.bf16.mxu0 0
      %3793 = vmatpush1.bf16.msra.mxu0 0
      %3794 = vmatprep.subr.bf16.mxu0 0
      %3795 = vmatpush1.bf16.msra.mxu0 0
      %3796 = vmatprep.subr.bf16.mxu0 0
      %3797 = vmatpush1.bf16.msra.mxu0 0
      %3798 = vmatprep.subr.bf16.mxu0 0
      %3799 = vmatpush1.bf16.msra.mxu0 0
      %3800 = vmatprep.subr.bf16.mxu0 0
      %3801 = vmatpush1.bf16.msra.mxu0 0
      %3802 = vmatprep.subr.bf16.mxu0 0
      %3803 = vmatpush1.bf16.msra.mxu0 0
      %3804 = vmatprep.subr.bf16.mxu0 0
      %3805 = vmatpush1.bf16.msra.mxu0 0
      %3806 = vmatprep.subr.bf16.mxu0 0
      %3807 = vmatpush1.bf16.msra.mxu0 0
      %3808 = vmatprep.subr.bf16.mxu0 0
      %3809 = vmatpush1.bf16.msra.mxu0 0
      %3810 = vmatprep.subr.bf16.mxu0 0
      %3811 = vmatpush1.bf16.msra.mxu0 0
      %3812 = vmatprep.mubr.bf16.mxu0 0
      %3813 = vmatmul.mubr.bf16.gmra.mrb[0].mxu0 %v3611
      %v3814 = vpop.f32.mrb[0].mxu0
      %v3815 = vadd.f32 0.0, %v3814
      %v3816 = vpop.f32.mrb[0].mxu0
      %v3817 = vpop.f32.mrb[0].mxu0
      %v3818 = vadd.f32 0.0, %v3817
      %v3819 = vpop.f32.mrb[0].mxu0
      %3820 = vmatprep.mubr.bf16.mxu0 0
      %3821 = vmatmul.mubr.bf16.gmra.mrb[0].mxu0 %v3614
      %v3822 = vpop.f32.mrb[0].mxu0
      %v3823 = vadd.f32 0.0, %v3822
      %v3824 = vpop.f32.mrb[0].mxu0
      %v3825 = vpop.f32.mrb[0].mxu0
      %v3826 = vadd.f32 0.0, %v3825
      %v3827 = vpop.f32.mrb[0].mxu0
      %3828 = vdwg.mxu0
      %s3829 = scalar_lea.vmem %s8, 96
      %v3830 = vld [vmem:[%s3829] sm:$0xf]
      %v3831 = vld [vmem:[%s3829 + $0x4] sm:$0xf]
      %v3832 = vld [vmem:[%s3829 + $0x8] sm:$0xf]
      %v3833 = vld [vmem:[%s3829 + $0xc] sm:$0xf]
      %v3834 = vld [vmem:[%s3829 + $0x10] sm:$0xf]
      %v3835 = vld [vmem:[%s3829 + $0x14] sm:$0xf]
      %v3836 = vld [vmem:[%s3829 + $0x18] sm:$0xf]
      %v3837 = vld [vmem:[%s3829 + $0x1c] sm:$0xf]
      %v3846 = vunpack.c.l.b16 %v3830
      %v3847 = vunpack.c.l.b16 %v3831
      %v3848 = vunpack.c.l.b16 %v3832
      %v3849 = vunpack.c.l.b16 %v3833
      %v3850 = vunpack.c.l.b16 %v3834
      %v3851 = vunpack.c.l.b16 %v3835
      %v3852 = vunpack.c.l.b16 %v3836
      %v3853 = vunpack.c.l.b16 %v3837
      %v3854 = vpack.c.b16 %v3847, %v3846
      %v3855 = vpack.c.b16 %v3849, %v3848
      %v3856 = vpack.c.b16 %v3851, %v3850
      %v3857 = vpack.c.b16 %v3853, %v3852
      %3862 = vmatprep.subr.bf16.mxu0 0
      %3863 = vmatpush1.bf16.msra.mxu0 %v3854
      %3864 = vmatprep.subr.bf16.mxu0 0
      %3865 = vmatpush1.bf16.msra.mxu0 %v3855
      %3866 = vmatprep.subr.bf16.mxu0 0
      %3867 = vmatpush1.bf16.msra.mxu0 %v3856
      %3868 = vmatprep.subr.bf16.mxu0 0
      %3869 = vmatpush1.bf16.msra.mxu0 %v3857
      %3870 = vmatprep.subr.bf16.mxu0 0
      %3871 = vmatpush1.bf16.msra.mxu0 0
      %3872 = vmatprep.subr.bf16.mxu0 0
      %3873 = vmatpush1.bf16.msra.mxu0 0
      %3874 = vmatprep.subr.bf16.mxu0 0
      %3875 = vmatpush1.bf16.msra.mxu0 0
      %3876 = vmatprep.subr.bf16.mxu0 0
      %3877 = vmatpush1.bf16.msra.mxu0 0
      %3878 = vmatprep.subr.bf16.mxu0 0
      %3879 = vmatpush1.bf16.msra.mxu0 0
      %3880 = vmatprep.subr.bf16.mxu0 0
      %3881 = vmatpush1.bf16.msra.mxu0 0
      %3882 = vmatprep.subr.bf16.mxu0 0
      %3883 = vmatpush1.bf16.msra.mxu0 0
      %3884 = vmatprep.subr.bf16.mxu0 0
      %3885 = vmatpush1.bf16.msra.mxu0 0
      %3886 = vmatprep.subr.bf16.mxu0 0
      %3887 = vmatpush1.bf16.msra.mxu0 0
      %3888 = vmatprep.subr.bf16.mxu0 0
      %3889 = vmatpush1.bf16.msra.mxu0 0
      %3890 = vmatprep.subr.bf16.mxu0 0
      %3891 = vmatpush1.bf16.msra.mxu0 0
      %3892 = vmatprep.subr.bf16.mxu0 0
      %3893 = vmatpush1.bf16.msra.mxu0 0
      %3894 = vmatprep.mubr.bf16.mxu0 0
      %3895 = vmatmul.mubr.bf16.gmra.mrb[0].mxu0 %v3611
      %v3896 = vpop.f32.mrb[0].mxu0
      %v3897 = vadd.f32 0.0, %v3896
      %v3898 = vpop.f32.mrb[0].mxu0
      %v3899 = vpop.f32.mrb[0].mxu0
      %v3900 = vadd.f32 0.0, %v3899
      %v3901 = vpop.f32.mrb[0].mxu0
      %3902 = vmatprep.mubr.bf16.mxu0 0
      %3903 = vmatmul.mubr.bf16.gmra.mrb[0].mxu0 %v3614
      %v3904 = vpop.f32.mrb[0].mxu0
      %v3905 = vadd.f32 0.0, %v3904
      %v3906 = vpop.f32.mrb[0].mxu0
      %v3907 = vpop.f32.mrb[0].mxu0
      %v3908 = vadd.f32 0.0, %v3907
      %v3909 = vpop.f32.mrb[0].mxu0
      %3910 = vdwg.mxu0
      %s3911 = scalar_lea.vmem %s8, 128
      %v3912 = vld [vmem:[%s3911] sm:$0xf]
      %v3913 = vld [vmem:[%s3911 + $0x4] sm:$0xf]
      %v3914 = vld [vmem:[%s3911 + $0x8] sm:$0xf]
      %v3915 = vld [vmem:[%s3911 + $0xc] sm:$0xf]
      %v3916 = vld [vmem:[%s3911 + $0x10] sm:$0xf]
      %v3917 = vld [vmem:[%s3911 + $0x14] sm:$0xf]
      %v3918 = vld [vmem:[%s3911 + $0x18] sm:$0xf]
      %v3919 = vld [vmem:[%s3911 + $0x1c] sm:$0xf]
      %v3928 = vunpack.c.l.b16 %v3912
      %v3929 = vunpack.c.l.b16 %v3913
      %v3930 = vunpack.c.l.b16 %v3914
      %v3931 = vunpack.c.l.b16 %v3915
      %v3932 = vunpack.c.l.b16 %v3916
      %v3933 = vunpack.c.l.b16 %v3917
      %v3934 = vunpack.c.l.b16 %v3918
      %v3935 = vunpack.c.l.b16 %v3919
      %v3936 = vpack.c.b16 %v3929, %v3928
      %v3937 = vpack.c.b16 %v3931, %v3930
      %v3938 = vpack.c.b16 %v3933, %v3932
      %v3939 = vpack.c.b16 %v3935, %v3934
      %3944 = vmatprep.subr.bf16.mxu0 0
      %3945 = vmatpush1.bf16.msra.mxu0 %v3936
      %3946 = vmatprep.subr.bf16.mxu0 0
      %3947 = vmatpush1.bf16.msra.mxu0 %v3937
      %3948 = vmatprep.subr.bf16.mxu0 0
      %3949 = vmatpush1.bf16.msra.mxu0 %v3938
      %3950 = vmatprep.subr.bf16.mxu0 0
      %3951 = vmatpush1.bf16.msra.mxu0 %v3939
      %3952 = vmatprep.subr.bf16.mxu0 0
      %3953 = vmatpush1.bf16.msra.mxu0 0
      %3954 = vmatprep.subr.bf16.mxu0 0
      %3955 = vmatpush1.bf16.msra.mxu0 0
      %3956 = vmatprep.subr.bf16.mxu0 0
      %3957 = vmatpush1.bf16.msra.mxu0 0
      %3958 = vmatprep.subr.bf16.mxu0 0
      %3959 = vmatpush1.bf16.msra.mxu0 0
      %3960 = vmatprep.subr.bf16.mxu0 0
      %3961 = vmatpush1.bf16.msra.mxu0 0
      %3962 = vmatprep.subr.bf16.mxu0 0
      %3963 = vmatpush1.bf16.msra.mxu0 0
      %3964 = vmatprep.subr.bf16.mxu0 0
      %3965 = vmatpush1.bf16.msra.mxu0 0
      %3966 = vmatprep.subr.bf16.mxu0 0
      %3967 = vmatpush1.bf16.msra.mxu0 0
      %3968 = vmatprep.subr.bf16.mxu0 0
      %3969 = vmatpush1.bf16.msra.mxu0 0
      %3970 = vmatprep.subr.bf16.mxu0 0
      %3971 = vmatpush1.bf16.msra.mxu0 0
      %3972 = vmatprep.subr.bf16.mxu0 0
      %3973 = vmatpush1.bf16.msra.mxu0 0
      %3974 = vmatprep.subr.bf16.mxu0 0
      %3975 = vmatpush1.bf16.msra.mxu0 0
      %3976 = vmatprep.mubr.bf16.mxu0 0
      %3977 = vmatmul.mubr.bf16.gmra.mrb[0].mxu0 %v3611
      %v3978 = vpop.f32.mrb[0].mxu0
      %v3979 = vadd.f32 0.0, %v3978
      %v3980 = vpop.f32.mrb[0].mxu0
      %v3981 = vpop.f32.mrb[0].mxu0
      %v3982 = vadd.f32 0.0, %v3981
      %v3983 = vpop.f32.mrb[0].mxu0
      %3984 = vmatprep.mubr.bf16.mxu0 0
      %3985 = vmatmul.mubr.bf16.gmra.mrb[0].mxu0 %v3614
      %v3986 = vpop.f32.mrb[0].mxu0
      %v3987 = vadd.f32 0.0, %v3986
      %v3988 = vpop.f32.mrb[0].mxu0
      %v3989 = vpop.f32.mrb[0].mxu0
      %v3990 = vadd.f32 0.0, %v3989
      %v3991 = vpop.f32.mrb[0].mxu0
      %3992 = vdwg.mxu0
      %s3993 = scalar_lea.vmem %s8, 160
      %v3994 = vld [vmem:[%s3993] sm:$0xf]
      %v3995 = vld [vmem:[%s3993 + $0x4] sm:$0xf]
      %v3996 = vld [vmem:[%s3993 + $0x8] sm:$0xf]
      %v3997 = vld [vmem:[%s3993 + $0xc] sm:$0xf]
      %v3998 = vld [vmem:[%s3993 + $0x10] sm:$0xf]
      %v3999 = vld [vmem:[%s3993 + $0x14] sm:$0xf]
      %v4000 = vld [vmem:[%s3993 + $0x18] sm:$0xf]
      %v4001 = vld [vmem:[%s3993 + $0x1c] sm:$0xf]
      %v4010 = vunpack.c.l.b16 %v3994
      %v4011 = vunpack.c.l.b16 %v3995
      %v4012 = vunpack.c.l.b16 %v3996
      %v4013 = vunpack.c.l.b16 %v3997
      %v4014 = vunpack.c.l.b16 %v3998
      %v4015 = vunpack.c.l.b16 %v3999
      %v4016 = vunpack.c.l.b16 %v4000
      %v4017 = vunpack.c.l.b16 %v4001
      %v4018 = vpack.c.b16 %v4011, %v4010
      %v4019 = vpack.c.b16 %v4013, %v4012
      %v4020 = vpack.c.b16 %v4015, %v4014
      %v4021 = vpack.c.b16 %v4017, %v4016
      %4026 = vmatprep.subr.bf16.mxu0 0
      %4027 = vmatpush1.bf16.msra.mxu0 %v4018
      %4028 = vmatprep.subr.bf16.mxu0 0
      %4029 = vmatpush1.bf16.msra.mxu0 %v4019
      %4030 = vmatprep.subr.bf16.mxu0 0
      %4031 = vmatpush1.bf16.msra.mxu0 %v4020
      %4032 = vmatprep.subr.bf16.mxu0 0
      %4033 = vmatpush1.bf16.msra.mxu0 %v4021
      %4034 = vmatprep.subr.bf16.mxu0 0
      %4035 = vmatpush1.bf16.msra.mxu0 0
      %4036 = vmatprep.subr.bf16.mxu0 0
      %4037 = vmatpush1.bf16.msra.mxu0 0
      %4038 = vmatprep.subr.bf16.mxu0 0
      %4039 = vmatpush1.bf16.msra.mxu0 0
      %4040 = vmatprep.subr.bf16.mxu0 0
      %4041 = vmatpush1.bf16.msra.mxu0 0
      %4042 = vmatprep.subr.bf16.mxu0 0
      %4043 = vmatpush1.bf16.msra.mxu0 0
      %4044 = vmatprep.subr.bf16.mxu0 0
      %4045 = vmatpush1.bf16.msra.mxu0 0
      %4046 = vmatprep.subr.bf16.mxu0 0
      %4047 = vmatpush1.bf16.msra.mxu0 0
      %4048 = vmatprep.subr.bf16.mxu0 0
      %4049 = vmatpush1.bf16.msra.mxu0 0
      %4050 = vmatprep.subr.bf16.mxu0 0
      %4051 = vmatpush1.bf16.msra.mxu0 0
      %4052 = vmatprep.subr.bf16.mxu0 0
      %4053 = vmatpush1.bf16.msra.mxu0 0
      %4054 = vmatprep.subr.bf16.mxu0 0
      %4055 = vmatpush1.bf16.msra.mxu0 0
      %4056 = vmatprep.subr.bf16.mxu0 0
      %4057 = vmatpush1.bf16.msra.mxu0 0
      %4058 = vmatprep.mubr.bf16.mxu0 0
      %4059 = vmatmul.mubr.bf16.gmra.mrb[0].mxu0 %v3611
      %v4060 = vpop.f32.mrb[0].mxu0
      %v4061 = vadd.f32 0.0, %v4060
      %v4062 = vpop.f32.mrb[0].mxu0
      %v4063 = vpop.f32.mrb[0].mxu0
      %v4064 = vadd.f32 0.0, %v4063
      %v4065 = vpop.f32.mrb[0].mxu0
      %4066 = vmatprep.mubr.bf16.mxu0 0
      %4067 = vmatmul.mubr.bf16.gmra.mrb[0].mxu0 %v3614
      %v4068 = vpop.f32.mrb[0].mxu0
      %v4069 = vadd.f32 0.0, %v4068
      %v4070 = vpop.f32.mrb[0].mxu0
      %v4071 = vpop.f32.mrb[0].mxu0
      %v4072 = vadd.f32 0.0, %v4071
      %v4073 = vpop.f32.mrb[0].mxu0
      %4074 = vdwg.mxu0
      %s4075 = scalar_lea.vmem %s8, 192
      %v4076 = vld [vmem:[%s4075] sm:$0xf]
      %v4077 = vld [vmem:[%s4075 + $0x4] sm:$0xf]
      %v4078 = vld [vmem:[%s4075 + $0x8] sm:$0xf]
      %v4079 = vld [vmem:[%s4075 + $0xc] sm:$0xf]
      %v4080 = vld [vmem:[%s4075 + $0x10] sm:$0xf]
      %v4081 = vld [vmem:[%s4075 + $0x14] sm:$0xf]
      %v4082 = vld [vmem:[%s4075 + $0x18] sm:$0xf]
      %v4083 = vld [vmem:[%s4075 + $0x1c] sm:$0xf]
      %v4092 = vunpack.c.l.b16 %v4076
      %v4093 = vunpack.c.l.b16 %v4077
      %v4094 = vunpack.c.l.b16 %v4078
      %v4095 = vunpack.c.l.b16 %v4079
      %v4096 = vunpack.c.l.b16 %v4080
      %v4097 = vunpack.c.l.b16 %v4081
      %v4098 = vunpack.c.l.b16 %v4082
      %v4099 = vunpack.c.l.b16 %v4083
      %v4100 = vpack.c.b16 %v4093, %v4092
      %v4101 = vpack.c.b16 %v4095, %v4094
      %v4102 = vpack.c.b16 %v4097, %v4096
      %v4103 = vpack.c.b16 %v4099, %v4098
      %4108 = vmatprep.subr.bf16.mxu0 0
      %4109 = vmatpush1.bf16.msra.mxu0 %v4100
      %4110 = vmatprep.subr.bf16.mxu0 0
      %4111 = vmatpush1.bf16.msra.mxu0 %v4101
      %4112 = vmatprep.subr.bf16.mxu0 0
      %4113 = vmatpush1.bf16.msra.mxu0 %v4102
      %4114 = vmatprep.subr.bf16.mxu0 0
      %4115 = vmatpush1.bf16.msra.mxu0 %v4103
      %4116 = vmatprep.subr.bf16.mxu0 0
      %4117 = vmatpush1.bf16.msra.mxu0 0
      %4118 = vmatprep.subr.bf16.mxu0 0
      %4119 = vmatpush1.bf16.msra.mxu0 0
      %4120 = vmatprep.subr.bf16.mxu0 0
      %4121 = vmatpush1.bf16.msra.mxu0 0
      %4122 = vmatprep.subr.bf16.mxu0 0
      %4123 = vmatpush1.bf16.msra.mxu0 0
      %4124 = vmatprep.subr.bf16.mxu0 0
      %4125 = vmatpush1.bf16.msra.mxu0 0
      %4126 = vmatprep.subr.bf16.mxu0 0
      %4127 = vmatpush1.bf16.msra.mxu0 0
      %4128 = vmatprep.subr.bf16.mxu0 0
      %4129 = vmatpush1.bf16.msra.mxu0 0
      %4130 = vmatprep.subr.bf16.mxu0 0
      %4131 = vmatpush1.bf16.msra.mxu0 0
      %4132 = vmatprep.subr.bf16.mxu0 0
      %4133 = vmatpush1.bf16.msra.mxu0 0
      %4134 = vmatprep.subr.bf16.mxu0 0
      %4135 = vmatpush1.bf16.msra.mxu0 0
      %4136 = vmatprep.subr.bf16.mxu0 0
      %4137 = vmatpush1.bf16.msra.mxu0 0
      %4138 = vmatprep.subr.bf16.mxu0 0
      %4139 = vmatpush1.bf16.msra.mxu0 0
      %4140 = vmatprep.mubr.bf16.mxu0 0
      %4141 = vmatmul.mubr.bf16.gmra.mrb[0].mxu0 %v3611
      %v4142 = vpop.f32.mrb[0].mxu0
      %v4143 = vadd.f32 0.0, %v4142
      %v4144 = vpop.f32.mrb[0].mxu0
      %v4145 = vpop.f32.mrb[0].mxu0
      %v4146 = vadd.f32 0.0, %v4145
      %v4147 = vpop.f32.mrb[0].mxu0
      %4148 = vmatprep.mubr.bf16.mxu0 0
      %4149 = vmatmul.mubr.bf16.gmra.mrb[0].mxu0 %v3614
      %v4150 = vpop.f32.mrb[0].mxu0
      %v4151 = vadd.f32 0.0, %v4150
      %v4152 = vpop.f32.mrb[0].mxu0
      %v4153 = vpop.f32.mrb[0].mxu0
      %v4154 = vadd.f32 0.0, %v4153
      %v4155 = vpop.f32.mrb[0].mxu0
      %4156 = vdwg.mxu0
      %s4157 = scalar_lea.vmem %s8, 224
      %v4158 = vld [vmem:[%s4157] sm:$0xf]
      %v4159 = vld [vmem:[%s4157 + $0x4] sm:$0xf]
      %v4160 = vld [vmem:[%s4157 + $0x8] sm:$0xf]
      %v4161 = vld [vmem:[%s4157 + $0xc] sm:$0xf]
      %v4162 = vld [vmem:[%s4157 + $0x10] sm:$0xf]
      %v4163 = vld [vmem:[%s4157 + $0x14] sm:$0xf]
      %v4164 = vld [vmem:[%s4157 + $0x18] sm:$0xf]
      %v4165 = vld [vmem:[%s4157 + $0x1c] sm:$0xf]
      %v4174 = vunpack.c.l.b16 %v4158
      %v4175 = vunpack.c.l.b16 %v4159
      %v4176 = vunpack.c.l.b16 %v4160
      %v4177 = vunpack.c.l.b16 %v4161
      %v4178 = vunpack.c.l.b16 %v4162
      %v4179 = vunpack.c.l.b16 %v4163
      %v4180 = vunpack.c.l.b16 %v4164
      %v4181 = vunpack.c.l.b16 %v4165
      %v4182 = vpack.c.b16 %v4175, %v4174
      %v4183 = vpack.c.b16 %v4177, %v4176
      %v4184 = vpack.c.b16 %v4179, %v4178
      %v4185 = vpack.c.b16 %v4181, %v4180
      %4190 = vmatprep.subr.bf16.mxu0 0
      %4191 = vmatpush1.bf16.msra.mxu0 %v4182
      %4192 = vmatprep.subr.bf16.mxu0 0
      %4193 = vmatpush1.bf16.msra.mxu0 %v4183
      %4194 = vmatprep.subr.bf16.mxu0 0
      %4195 = vmatpush1.bf16.msra.mxu0 %v4184
      %4196 = vmatprep.subr.bf16.mxu0 0
      %4197 = vmatpush1.bf16.msra.mxu0 %v4185
      %4198 = vmatprep.subr.bf16.mxu0 0
      %4199 = vmatpush1.bf16.msra.mxu0 0
      %4200 = vmatprep.subr.bf16.mxu0 0
      %4201 = vmatpush1.bf16.msra.mxu0 0
      %4202 = vmatprep.subr.bf16.mxu0 0
      %4203 = vmatpush1.bf16.msra.mxu0 0
      %4204 = vmatprep.subr.bf16.mxu0 0
      %4205 = vmatpush1.bf16.msra.mxu0 0
      %4206 = vmatprep.subr.bf16.mxu0 0
      %4207 = vmatpush1.bf16.msra.mxu0 0
      %4208 = vmatprep.subr.bf16.mxu0 0
      %4209 = vmatpush1.bf16.msra.mxu0 0
      %4210 = vmatprep.subr.bf16.mxu0 0
      %4211 = vmatpush1.bf16.msra.mxu0 0
      %4212 = vmatprep.subr.bf16.mxu0 0
      %4213 = vmatpush1.bf16.msra.mxu0 0
      %4214 = vmatprep.subr.bf16.mxu0 0
      %4215 = vmatpush1.bf16.msra.mxu0 0
      %4216 = vmatprep.subr.bf16.mxu0 0
      %4217 = vmatpush1.bf16.msra.mxu0 0
      %4218 = vmatprep.subr.bf16.mxu0 0
      %4219 = vmatpush1.bf16.msra.mxu0 0
      %4220 = vmatprep.subr.bf16.mxu0 0
      %4221 = vmatpush1.bf16.msra.mxu0 0
      %4222 = vmatprep.mubr.bf16.mxu0 0
      %4223 = vmatmul.mubr.bf16.gmra.mrb[0].mxu0 %v3611
      %v4224 = vpop.f32.mrb[0].mxu0
      %v4225 = vadd.f32 0.0, %v4224
      %v4226 = vpop.f32.mrb[0].mxu0
      %v4227 = vpop.f32.mrb[0].mxu0
      %v4228 = vadd.f32 0.0, %v4227
      %v4229 = vpop.f32.mrb[0].mxu0
      %4230 = vmatprep.mubr.bf16.mxu0 0
      %4231 = vmatmul.mubr.bf16.gmra.mrb[0].mxu0 %v3614
      %v4232 = vpop.f32.mrb[0].mxu0
      %v4233 = vadd.f32 0.0, %v4232
      %v4234 = vpop.f32.mrb[0].mxu0
      %v4235 = vpop.f32.mrb[0].mxu0
      %v4236 = vadd.f32 0.0, %v4235
      %v4237 = vpop.f32.mrb[0].mxu0
      %4238 = vdwg.mxu0
      %s4239 = scalar_lea.vmem %s8, 256
      %v4240 = vld [vmem:[%s4239] sm:$0xf]
      %v4241 = vld [vmem:[%s4239 + $0x4] sm:$0xf]
      %v4242 = vld [vmem:[%s4239 + $0x8] sm:$0xf]
      %v4243 = vld [vmem:[%s4239 + $0xc] sm:$0xf]
      %v4244 = vld [vmem:[%s4239 + $0x10] sm:$0xf]
      %v4245 = vld [vmem:[%s4239 + $0x14] sm:$0xf]
      %v4246 = vld [vmem:[%s4239 + $0x18] sm:$0xf]
      %v4247 = vld [vmem:[%s4239 + $0x1c] sm:$0xf]
      %v4256 = vunpack.c.l.b16 %v4240
      %v4257 = vunpack.c.l.b16 %v4241
      %v4258 = vunpack.c.l.b16 %v4242
      %v4259 = vunpack.c.l.b16 %v4243
      %v4260 = vunpack.c.l.b16 %v4244
      %v4261 = vunpack.c.l.b16 %v4245
      %v4262 = vunpack.c.l.b16 %v4246
      %v4263 = vunpack.c.l.b16 %v4247
      %v4264 = vpack.c.b16 %v4257, %v4256
      %v4265 = vpack.c.b16 %v4259, %v4258
      %v4266 = vpack.c.b16 %v4261, %v4260
      %v4267 = vpack.c.b16 %v4263, %v4262
      %4272 = vmatprep.subr.bf16.mxu0 0
      %4273 = vmatpush1.bf16.msra.mxu0 %v4264
      %4274 = vmatprep.subr.bf16.mxu0 0
      %4275 = vmatpush1.bf16.msra.mxu0 %v4265
      %4276 = vmatprep.subr.bf16.mxu0 0
      %4277 = vmatpush1.bf16.msra.mxu0 %v4266
      %4278 = vmatprep.subr.bf16.mxu0 0
      %4279 = vmatpush1.bf16.msra.mxu0 %v4267
      %4280 = vmatprep.subr.bf16.mxu0 0
      %4281 = vmatpush1.bf16.msra.mxu0 0
      %4282 = vmatprep.subr.bf16.mxu0 0
      %4283 = vmatpush1.bf16.msra.mxu0 0
      %4284 = vmatprep.subr.bf16.mxu0 0
      %4285 = vmatpush1.bf16.msra.mxu0 0
      %4286 = vmatprep.subr.bf16.mxu0 0
      %4287 = vmatpush1.bf16.msra.mxu0 0
      %4288 = vmatprep.subr.bf16.mxu0 0
      %4289 = vmatpush1.bf16.msra.mxu0 0
      %4290 = vmatprep.subr.bf16.mxu0 0
      %4291 = vmatpush1.bf16.msra.mxu0 0
      %4292 = vmatprep.subr.bf16.mxu0 0
      %4293 = vmatpush1.bf16.msra.mxu0 0
      %4294 = vmatprep.subr.bf16.mxu0 0
      %4295 = vmatpush1.bf16.msra.mxu0 0
      %4296 = vmatprep.subr.bf16.mxu0 0
      %4297 = vmatpush1.bf16.msra.mxu0 0
      %4298 = vmatprep.subr.bf16.mxu0 0
      %4299 = vmatpush1.bf16.msra.mxu0 0
      %4300 = vmatprep.subr.bf16.mxu0 0
      %4301 = vmatpush1.bf16.msra.mxu0 0
      %4302 = vmatprep.subr.bf16.mxu0 0
      %4303 = vmatpush1.bf16.msra.mxu0 0
      %4304 = vmatprep.mubr.bf16.mxu0 0
      %4305 = vmatmul.mubr.bf16.gmra.mrb[0].mxu0 %v3611
      %v4306 = vpop.f32.mrb[0].mxu0
      %v4307 = vadd.f32 0.0, %v4306
      %v4308 = vpop.f32.mrb[0].mxu0
      %v4309 = vpop.f32.mrb[0].mxu0
      %v4310 = vadd.f32 0.0, %v4309
      %v4311 = vpop.f32.mrb[0].mxu0
      %4312 = vmatprep.mubr.bf16.mxu0 0
      %4313 = vmatmul.mubr.bf16.gmra.mrb[0].mxu0 %v3614
      %v4314 = vpop.f32.mrb[0].mxu0
      %v4315 = vadd.f32 0.0, %v4314
      %v4316 = vpop.f32.mrb[0].mxu0
      %v4317 = vpop.f32.mrb[0].mxu0
      %v4318 = vadd.f32 0.0, %v4317
      %v4319 = vpop.f32.mrb[0].mxu0
      %4320 = vdwg.mxu0
      %s4321 = scalar_lea.vmem %s8, 288
      %v4322 = vld [vmem:[%s4321] sm:$0xf]
      %v4323 = vld [vmem:[%s4321 + $0x4] sm:$0xf]
      %v4324 = vld [vmem:[%s4321 + $0x8] sm:$0xf]
      %v4325 = vld [vmem:[%s4321 + $0xc] sm:$0xf]
      %v4326 = vld [vmem:[%s4321 + $0x10] sm:$0xf]
      %v4327 = vld [vmem:[%s4321 + $0x14] sm:$0xf]
      %v4328 = vld [vmem:[%s4321 + $0x18] sm:$0xf]
      %v4329 = vld [vmem:[%s4321 + $0x1c] sm:$0xf]
      %v4338 = vunpack.c.l.b16 %v4322
      %v4339 = vunpack.c.l.b16 %v4323
      %v4340 = vunpack.c.l.b16 %v4324
      %v4341 = vunpack.c.l.b16 %v4325
      %v4342 = vunpack.c.l.b16 %v4326
      %v4343 = vunpack.c.l.b16 %v4327
      %v4344 = vunpack.c.l.b16 %v4328
      %v4345 = vunpack.c.l.b16 %v4329
      %v4346 = vpack.c.b16 %v4339, %v4338
      %v4347 = vpack.c.b16 %v4341, %v4340
      %v4348 = vpack.c.b16 %v4343, %v4342
      %v4349 = vpack.c.b16 %v4345, %v4344
      %4354 = vmatprep.subr.bf16.mxu0 0
      %4355 = vmatpush1.bf16.msra.mxu0 %v4346
      %4356 = vmatprep.subr.bf16.mxu0 0
      %4357 = vmatpush1.bf16.msra.mxu0 %v4347
      %4358 = vmatprep.subr.bf16.mxu0 0
      %4359 = vmatpush1.bf16.msra.mxu0 %v4348
      %4360 = vmatprep.subr.bf16.mxu0 0
      %4361 = vmatpush1.bf16.msra.mxu0 %v4349
      %4362 = vmatprep.subr.bf16.mxu0 0
      %4363 = vmatpush1.bf16.msra.mxu0 0
      %4364 = vmatprep.subr.bf16.mxu0 0
      %4365 = vmatpush1.bf16.msra.mxu0 0
      %4366 = vmatprep.subr.bf16.mxu0 0
      %4367 = vmatpush1.bf16.msra.mxu0 0
      %4368 = vmatprep.subr.bf16.mxu0 0
      %4369 = vmatpush1.bf16.msra.mxu0 0
      %4370 = vmatprep.subr.bf16.mxu0 0
      %4371 = vmatpush1.bf16.msra.mxu0 0
      %4372 = vmatprep.subr.bf16.mxu0 0
      %4373 = vmatpush1.bf16.msra.mxu0 0
      %4374 = vmatprep.subr.bf16.mxu0 0
      %4375 = vmatpush1.bf16.msra.mxu0 0
      %4376 = vmatprep.subr.bf16.mxu0 0
      %4377 = vmatpush1.bf16.msra.mxu0 0
      %4378 = vmatprep.subr.bf16.mxu0 0
      %4379 = vmatpush1.bf16.msra.mxu0 0
      %4380 = vmatprep.subr.bf16.mxu0 0
      %4381 = vmatpush1.bf16.msra.mxu0 0
      %4382 = vmatprep.subr.bf16.mxu0 0
      %4383 = vmatpush1.bf16.msra.mxu0 0
      %4384 = vmatprep.subr.bf16.mxu0 0
      %4385 = vmatpush1.bf16.msra.mxu0 0
      %4386 = vmatprep.mubr.bf16.mxu0 0
      %4387 = vmatmul.mubr.bf16.gmra.mrb[0].mxu0 %v3611
      %v4388 = vpop.f32.mrb[0].mxu0
      %v4389 = vadd.f32 0.0, %v4388
      %v4390 = vpop.f32.mrb[0].mxu0
      %v4391 = vpop.f32.mrb[0].mxu0
      %v4392 = vadd.f32 0.0, %v4391
      %v4393 = vpop.f32.mrb[0].mxu0
      %4394 = vmatprep.mubr.bf16.mxu0 0
      %4395 = vmatmul.mubr.bf16.gmra.mrb[0].mxu0 %v3614
      %v4396 = vpop.f32.mrb[0].mxu0
      %v4397 = vadd.f32 0.0, %v4396
      %v4398 = vpop.f32.mrb[0].mxu0
      %v4399 = vpop.f32.mrb[0].mxu0
      %v4400 = vadd.f32 0.0, %v4399
      %v4401 = vpop.f32.mrb[0].mxu0
      %4402 = vdwg.mxu0
      %s4403 = scalar_lea.vmem %s8, 320
      %v4404 = vld [vmem:[%s4403] sm:$0xf]
      %v4405 = vld [vmem:[%s4403 + $0x4] sm:$0xf]
      %v4406 = vld [vmem:[%s4403 + $0x8] sm:$0xf]
      %v4407 = vld [vmem:[%s4403 + $0xc] sm:$0xf]
      %v4408 = vld [vmem:[%s4403 + $0x10] sm:$0xf]
      %v4409 = vld [vmem:[%s4403 + $0x14] sm:$0xf]
      %v4410 = vld [vmem:[%s4403 + $0x18] sm:$0xf]
      %v4411 = vld [vmem:[%s4403 + $0x1c] sm:$0xf]
      %v4420 = vunpack.c.l.b16 %v4404
      %v4421 = vunpack.c.l.b16 %v4405
      %v4422 = vunpack.c.l.b16 %v4406
      %v4423 = vunpack.c.l.b16 %v4407
      %v4424 = vunpack.c.l.b16 %v4408
      %v4425 = vunpack.c.l.b16 %v4409
      %v4426 = vunpack.c.l.b16 %v4410
      %v4427 = vunpack.c.l.b16 %v4411
      %v4428 = vpack.c.b16 %v4421, %v4420
      %v4429 = vpack.c.b16 %v4423, %v4422
      %v4430 = vpack.c.b16 %v4425, %v4424
      %v4431 = vpack.c.b16 %v4427, %v4426
      %4436 = vmatprep.subr.bf16.mxu0 0
      %4437 = vmatpush1.bf16.msra.mxu0 %v4428
      %4438 = vmatprep.subr.bf16.mxu0 0
      %4439 = vmatpush1.bf16.msra.mxu0 %v4429
      %4440 = vmatprep.subr.bf16.mxu0 0
      %4441 = vmatpush1.bf16.msra.mxu0 %v4430
      %4442 = vmatprep.subr.bf16.mxu0 0
      %4443 = vmatpush1.bf16.msra.mxu0 %v4431
      %4444 = vmatprep.subr.bf16.mxu0 0
      %4445 = vmatpush1.bf16.msra.mxu0 0
      %4446 = vmatprep.subr.bf16.mxu0 0
      %4447 = vmatpush1.bf16.msra.mxu0 0
      %4448 = vmatprep.subr.bf16.mxu0 0
      %4449 = vmatpush1.bf16.msra.mxu0 0
      %4450 = vmatprep.subr.bf16.mxu0 0
      %4451 = vmatpush1.bf16.msra.mxu0 0
      %4452 = vmatprep.subr.bf16.mxu0 0
      %4453 = vmatpush1.bf16.msra.mxu0 0
      %4454 = vmatprep.subr.bf16.mxu0 0
      %4455 = vmatpush1.bf16.msra.mxu0 0
      %4456 = vmatprep.subr.bf16.mxu0 0
      %4457 = vmatpush1.bf16.msra.mxu0 0
      %4458 = vmatprep.subr.bf16.mxu0 0
      %4459 = vmatpush1.bf16.msra.mxu0 0
      %4460 = vmatprep.subr.bf16.mxu0 0
      %4461 = vmatpush1.bf16.msra.mxu0 0
      %4462 = vmatprep.subr.bf16.mxu0 0
      %4463 = vmatpush1.bf16.msra.mxu0 0
      %4464 = vmatprep.subr.bf16.mxu0 0
      %4465 = vmatpush1.bf16.msra.mxu0 0
      %4466 = vmatprep.subr.bf16.mxu0 0
      %4467 = vmatpush1.bf16.msra.mxu0 0
      %4468 = vmatprep.mubr.bf16.mxu0 0
      %4469 = vmatmul.mubr.bf16.gmra.mrb[0].mxu0 %v3611
      %v4470 = vpop.f32.mrb[0].mxu0
      %v4471 = vadd.f32 0.0, %v4470
      %v4472 = vpop.f32.mrb[0].mxu0
      %v4473 = vpop.f32.mrb[0].mxu0
      %v4474 = vadd.f32 0.0, %v4473
      %v4475 = vpop.f32.mrb[0].mxu0
      %4476 = vmatprep.mubr.bf16.mxu0 0
      %4477 = vmatmul.mubr.bf16.gmra.mrb[0].mxu0 %v3614
      %v4478 = vpop.f32.mrb[0].mxu0
      %v4479 = vadd.f32 0.0, %v4478
      %v4480 = vpop.f32.mrb[0].mxu0
      %v4481 = vpop.f32.mrb[0].mxu0
      %v4482 = vadd.f32 0.0, %v4481
      %v4483 = vpop.f32.mrb[0].mxu0
      %4484 = vdwg.mxu0
      %s4485 = scalar_lea.vmem %s8, 352
      %v4486 = vld [vmem:[%s4485] sm:$0xf]
      %v4487 = vld [vmem:[%s4485 + $0x4] sm:$0xf]
      %v4488 = vld [vmem:[%s4485 + $0x8] sm:$0xf]
      %v4489 = vld [vmem:[%s4485 + $0xc] sm:$0xf]
      %v4490 = vld [vmem:[%s4485 + $0x10] sm:$0xf]
      %v4491 = vld [vmem:[%s4485 + $0x14] sm:$0xf]
      %v4492 = vld [vmem:[%s4485 + $0x18] sm:$0xf]
      %v4493 = vld [vmem:[%s4485 + $0x1c] sm:$0xf]
      %v4502 = vunpack.c.l.b16 %v4486
      %v4503 = vunpack.c.l.b16 %v4487
      %v4504 = vunpack.c.l.b16 %v4488
      %v4505 = vunpack.c.l.b16 %v4489
      %v4506 = vunpack.c.l.b16 %v4490
      %v4507 = vunpack.c.l.b16 %v4491
      %v4508 = vunpack.c.l.b16 %v4492
      %v4509 = vunpack.c.l.b16 %v4493
      %v4510 = vpack.c.b16 %v4503, %v4502
      %v4511 = vpack.c.b16 %v4505, %v4504
      %v4512 = vpack.c.b16 %v4507, %v4506
      %v4513 = vpack.c.b16 %v4509, %v4508
      %4518 = vmatprep.subr.bf16.mxu0 0
      %4519 = vmatpush1.bf16.msra.mxu0 %v4510
      %4520 = vmatprep.subr.bf16.mxu0 0
      %4521 = vmatpush1.bf16.msra.mxu0 %v4511
      %4522 = vmatprep.subr.bf16.mxu0 0
      %4523 = vmatpush1.bf16.msra.mxu0 %v4512
      %4524 = vmatprep.subr.bf16.mxu0 0
      %4525 = vmatpush1.bf16.msra.mxu0 %v4513
      %4526 = vmatprep.subr.bf16.mxu0 0
      %4527 = vmatpush1.bf16.msra.mxu0 0
      %4528 = vmatprep.subr.bf16.mxu0 0
      %4529 = vmatpush1.bf16.msra.mxu0 0
      %4530 = vmatprep.subr.bf16.mxu0 0
      %4531 = vmatpush1.bf16.msra.mxu0 0
      %4532 = vmatprep.subr.bf16.mxu0 0
      %4533 = vmatpush1.bf16.msra.mxu0 0
      %4534 = vmatprep.subr.bf16.mxu0 0
      %4535 = vmatpush1.bf16.msra.mxu0 0
      %4536 = vmatprep.subr.bf16.mxu0 0
      %4537 = vmatpush1.bf16.msra.mxu0 0
      %4538 = vmatprep.subr.bf16.mxu0 0
      %4539 = vmatpush1.bf16.msra.mxu0 0
      %4540 = vmatprep.subr.bf16.mxu0 0
      %4541 = vmatpush1.bf16.msra.mxu0 0
      %4542 = vmatprep.subr.bf16.mxu0 0
      %4543 = vmatpush1.bf16.msra.mxu0 0
      %4544 = vmatprep.subr.bf16.mxu0 0
      %4545 = vmatpush1.bf16.msra.mxu0 0
      %4546 = vmatprep.subr.bf16.mxu0 0
      %4547 = vmatpush1.bf16.msra.mxu0 0
      %4548 = vmatprep.subr.bf16.mxu0 0
      %4549 = vmatpush1.bf16.msra.mxu0 0
      %4550 = vmatprep.mubr.bf16.mxu0 0
      %4551 = vmatmul.mubr.bf16.gmra.mrb[0].mxu0 %v3611
      %v4552 = vpop.f32.mrb[0].mxu0
      %v4553 = vadd.f32 0.0, %v4552
      %v4554 = vpop.f32.mrb[0].mxu0
      %v4555 = vpop.f32.mrb[0].mxu0
      %v4556 = vadd.f32 0.0, %v4555
      %v4557 = vpop.f32.mrb[0].mxu0
      %4558 = vmatprep.mubr.bf16.mxu0 0
      %4559 = vmatmul.mubr.bf16.gmra.mrb[0].mxu0 %v3614
      %v4560 = vpop.f32.mrb[0].mxu0
      %v4561 = vadd.f32 0.0, %v4560
      %v4562 = vpop.f32.mrb[0].mxu0
      %v4563 = vpop.f32.mrb[0].mxu0
      %v4564 = vadd.f32 0.0, %v4563
      %v4565 = vpop.f32.mrb[0].mxu0
      %4566 = vdwg.mxu0
      %s4567 = scalar_lea.vmem %s8, 384
      %v4568 = vld [vmem:[%s4567] sm:$0xf]
      %v4569 = vld [vmem:[%s4567 + $0x4] sm:$0xf]
      %v4570 = vld [vmem:[%s4567 + $0x8] sm:$0xf]
      %v4571 = vld [vmem:[%s4567 + $0xc] sm:$0xf]
      %v4572 = vld [vmem:[%s4567 + $0x10] sm:$0xf]
      %v4573 = vld [vmem:[%s4567 + $0x14] sm:$0xf]
      %v4574 = vld [vmem:[%s4567 + $0x18] sm:$0xf]
      %v4575 = vld [vmem:[%s4567 + $0x1c] sm:$0xf]
      %v4584 = vunpack.c.l.b16 %v4568
      %v4585 = vunpack.c.l.b16 %v4569
      %v4586 = vunpack.c.l.b16 %v4570
      %v4587 = vunpack.c.l.b16 %v4571
      %v4588 = vunpack.c.l.b16 %v4572
      %v4589 = vunpack.c.l.b16 %v4573
      %v4590 = vunpack.c.l.b16 %v4574
      %v4591 = vunpack.c.l.b16 %v4575
      %v4592 = vpack.c.b16 %v4585, %v4584
      %v4593 = vpack.c.b16 %v4587, %v4586
      %v4594 = vpack.c.b16 %v4589, %v4588
      %v4595 = vpack.c.b16 %v4591, %v4590
      %4600 = vmatprep.subr.bf16.mxu0 0
      %4601 = vmatpush1.bf16.msra.mxu0 %v4592
      %4602 = vmatprep.subr.bf16.mxu0 0
      %4603 = vmatpush1.bf16.msra.mxu0 %v4593
      %4604 = vmatprep.subr.bf16.mxu0 0
      %4605 = vmatpush1.bf16.msra.mxu0 %v4594
      %4606 = vmatprep.subr.bf16.mxu0 0
      %4607 = vmatpush1.bf16.msra.mxu0 %v4595
      %4608 = vmatprep.subr.bf16.mxu0 0
      %4609 = vmatpush1.bf16.msra.mxu0 0
      %4610 = vmatprep.subr.bf16.mxu0 0
      %4611 = vmatpush1.bf16.msra.mxu0 0
      %4612 = vmatprep.subr.bf16.mxu0 0
      %4613 = vmatpush1.bf16.msra.mxu0 0
      %4614 = vmatprep.subr.bf16.mxu0 0
      %4615 = vmatpush1.bf16.msra.mxu0 0
      %4616 = vmatprep.subr.bf16.mxu0 0
      %4617 = vmatpush1.bf16.msra.mxu0 0
      %4618 = vmatprep.subr.bf16.mxu0 0
      %4619 = vmatpush1.bf16.msra.mxu0 0
      %4620 = vmatprep.subr.bf16.mxu0 0
      %4621 = vmatpush1.bf16.msra.mxu0 0
      %4622 = vmatprep.subr.bf16.mxu0 0
      %4623 = vmatpush1.bf16.msra.mxu0 0
      %4624 = vmatprep.subr.bf16.mxu0 0
      %4625 = vmatpush1.bf16.msra.mxu0 0
      %4626 = vmatprep.subr.bf16.mxu0 0
      %4627 = vmatpush1.bf16.msra.mxu0 0
      %4628 = vmatprep.subr.bf16.mxu0 0
      %4629 = vmatpush1.bf16.msra.mxu0 0
      %4630 = vmatprep.subr.bf16.mxu0 0
      %4631 = vmatpush1.bf16.msra.mxu0 0
      %4632 = vmatprep.mubr.bf16.mxu0 0
      %4633 = vmatmul.mubr.bf16.gmra.mrb[0].mxu0 %v3611
      %v4634 = vpop.f32.mrb[0].mxu0
      %v4635 = vadd.f32 0.0, %v4634
      %v4636 = vpop.f32.mrb[0].mxu0
      %v4637 = vpop.f32.mrb[0].mxu0
      %v4638 = vadd.f32 0.0, %v4637
      %v4639 = vpop.f32.mrb[0].mxu0
      %4640 = vmatprep.mubr.bf16.mxu0 0
      %4641 = vmatmul.mubr.bf16.gmra.mrb[0].mxu0 %v3614
      %v4642 = vpop.f32.mrb[0].mxu0
      %v4643 = vadd.f32 0.0, %v4642
      %v4644 = vpop.f32.mrb[0].mxu0
      %v4645 = vpop.f32.mrb[0].mxu0
      %v4646 = vadd.f32 0.0, %v4645
      %v4647 = vpop.f32.mrb[0].mxu0
      %4648 = vdwg.mxu0
      %s4649 = scalar_lea.vmem %s8, 416
      %v4650 = vld [vmem:[%s4649] sm:$0xf]
      %v4651 = vld [vmem:[%s4649 + $0x4] sm:$0xf]
      %v4652 = vld [vmem:[%s4649 + $0x8] sm:$0xf]
      %v4653 = vld [vmem:[%s4649 + $0xc] sm:$0xf]
      %v4654 = vld [vmem:[%s4649 + $0x10] sm:$0xf]
      %v4655 = vld [vmem:[%s4649 + $0x14] sm:$0xf]
      %v4656 = vld [vmem:[%s4649 + $0x18] sm:$0xf]
      %v4657 = vld [vmem:[%s4649 + $0x1c] sm:$0xf]
      %v4666 = vunpack.c.l.b16 %v4650
      %v4667 = vunpack.c.l.b16 %v4651
      %v4668 = vunpack.c.l.b16 %v4652
      %v4669 = vunpack.c.l.b16 %v4653
      %v4670 = vunpack.c.l.b16 %v4654
      %v4671 = vunpack.c.l.b16 %v4655
      %v4672 = vunpack.c.l.b16 %v4656
      %v4673 = vunpack.c.l.b16 %v4657
      %v4674 = vpack.c.b16 %v4667, %v4666
      %v4675 = vpack.c.b16 %v4669, %v4668
      %v4676 = vpack.c.b16 %v4671, %v4670
      %v4677 = vpack.c.b16 %v4673, %v4672
      %4682 = vmatprep.subr.bf16.mxu0 0
      %4683 = vmatpush1.bf16.msra.mxu0 %v4674
      %4684 = vmatprep.subr.bf16.mxu0 0
      %4685 = vmatpush1.bf16.msra.mxu0 %v4675
      %4686 = vmatprep.subr.bf16.mxu0 0
      %4687 = vmatpush1.bf16.msra.mxu0 %v4676
      %4688 = vmatprep.subr.bf16.mxu0 0
      %4689 = vmatpush1.bf16.msra.mxu0 %v4677
      %4690 = vmatprep.subr.bf16.mxu0 0
      %4691 = vmatpush1.bf16.msra.mxu0 0
      %4692 = vmatprep.subr.bf16.mxu0 0
      %4693 = vmatpush1.bf16.msra.mxu0 0
      %4694 = vmatprep.subr.bf16.mxu0 0
      %4695 = vmatpush1.bf16.msra.mxu0 0
      %4696 = vmatprep.subr.bf16.mxu0 0
      %4697 = vmatpush1.bf16.msra.mxu0 0
      %4698 = vmatprep.subr.bf16.mxu0 0
      %4699 = vmatpush1.bf16.msra.mxu0 0
      %4700 = vmatprep.subr.bf16.mxu0 0
      %4701 = vmatpush1.bf16.msra.mxu0 0
      %4702 = vmatprep.subr.bf16.mxu0 0
      %4703 = vmatpush1.bf16.msra.mxu0 0
      %4704 = vmatprep.subr.bf16.mxu0 0
      %4705 = vmatpush1.bf16.msra.mxu0 0
      %4706 = vmatprep.subr.bf16.mxu0 0
      %4707 = vmatpush1.bf16.msra.mxu0 0
      %4708 = vmatprep.subr.bf16.mxu0 0
      %4709 = vmatpush1.bf16.msra.mxu0 0
      %4710 = vmatprep.subr.bf16.mxu0 0
      %4711 = vmatpush1.bf16.msra.mxu0 0
      %4712 = vmatprep.subr.bf16.mxu0 0
      %4713 = vmatpush1.bf16.msra.mxu0 0
      %4714 = vmatprep.mubr.bf16.mxu0 0
      %4715 = vmatmul.mubr.bf16.gmra.mrb[0].mxu0 %v3611
      %v4716 = vpop.f32.mrb[0].mxu0
      %v4717 = vadd.f32 0.0, %v4716
      %v4718 = vpop.f32.mrb[0].mxu0
      %v4719 = vpop.f32.mrb[0].mxu0
      %v4720 = vadd.f32 0.0, %v4719
      %v4721 = vpop.f32.mrb[0].mxu0
      %4722 = vmatprep.mubr.bf16.mxu0 0
      %4723 = vmatmul.mubr.bf16.gmra.mrb[0].mxu0 %v3614
      %v4724 = vpop.f32.mrb[0].mxu0
      %v4725 = vadd.f32 0.0, %v4724
      %v4726 = vpop.f32.mrb[0].mxu0
      %v4727 = vpop.f32.mrb[0].mxu0
      %v4728 = vadd.f32 0.0, %v4727
      %v4729 = vpop.f32.mrb[0].mxu0
      %4730 = vdwg.mxu0
      %s4731 = scalar_lea.vmem %s8, 448
      %v4732 = vld [vmem:[%s4731] sm:$0xf]
      %v4733 = vld [vmem:[%s4731 + $0x4] sm:$0xf]
      %v4734 = vld [vmem:[%s4731 + $0x8] sm:$0xf]
      %v4735 = vld [vmem:[%s4731 + $0xc] sm:$0xf]
      %v4736 = vld [vmem:[%s4731 + $0x10] sm:$0xf]
      %v4737 = vld [vmem:[%s4731 + $0x14] sm:$0xf]
      %v4738 = vld [vmem:[%s4731 + $0x18] sm:$0xf]
      %v4739 = vld [vmem:[%s4731 + $0x1c] sm:$0xf]
      %v4748 = vunpack.c.l.b16 %v4732
      %v4749 = vunpack.c.l.b16 %v4733
      %v4750 = vunpack.c.l.b16 %v4734
      %v4751 = vunpack.c.l.b16 %v4735
      %v4752 = vunpack.c.l.b16 %v4736
      %v4753 = vunpack.c.l.b16 %v4737
      %v4754 = vunpack.c.l.b16 %v4738
      %v4755 = vunpack.c.l.b16 %v4739
      %v4756 = vpack.c.b16 %v4749, %v4748
      %v4757 = vpack.c.b16 %v4751, %v4750
      %v4758 = vpack.c.b16 %v4753, %v4752
      %v4759 = vpack.c.b16 %v4755, %v4754
      %4764 = vmatprep.subr.bf16.mxu0 0
      %4765 = vmatpush1.bf16.msra.mxu0 %v4756
      %4766 = vmatprep.subr.bf16.mxu0 0
      %4767 = vmatpush1.bf16.msra.mxu0 %v4757
      %4768 = vmatprep.subr.bf16.mxu0 0
      %4769 = vmatpush1.bf16.msra.mxu0 %v4758
      %4770 = vmatprep.subr.bf16.mxu0 0
      %4771 = vmatpush1.bf16.msra.mxu0 %v4759
      %4772 = vmatprep.subr.bf16.mxu0 0
      %4773 = vmatpush1.bf16.msra.mxu0 0
      %4774 = vmatprep.subr.bf16.mxu0 0
      %4775 = vmatpush1.bf16.msra.mxu0 0
      %4776 = vmatprep.subr.bf16.mxu0 0
      %4777 = vmatpush1.bf16.msra.mxu0 0
      %4778 = vmatprep.subr.bf16.mxu0 0
      %4779 = vmatpush1.bf16.msra.mxu0 0
      %4780 = vmatprep.subr.bf16.mxu0 0
      %4781 = vmatpush1.bf16.msra.mxu0 0
      %4782 = vmatprep.subr.bf16.mxu0 0
      %4783 = vmatpush1.bf16.msra.mxu0 0
      %4784 = vmatprep.subr.bf16.mxu0 0
      %4785 = vmatpush1.bf16.msra.mxu0 0
      %4786 = vmatprep.subr.bf16.mxu0 0
      %4787 = vmatpush1.bf16.msra.mxu0 0
      %4788 = vmatprep.subr.bf16.mxu0 0
      %4789 = vmatpush1.bf16.msra.mxu0 0
      %4790 = vmatprep.subr.bf16.mxu0 0
      %4791 = vmatpush1.bf16.msra.mxu0 0
      %4792 = vmatprep.subr.bf16.mxu0 0
      %4793 = vmatpush1.bf16.msra.mxu0 0
      %4794 = vmatprep.subr.bf16.mxu0 0
      %4795 = vmatpush1.bf16.msra.mxu0 0
      %4796 = vmatprep.mubr.bf16.mxu0 0
      %4797 = vmatmul.mubr.bf16.gmra.mrb[0].mxu0 %v3611
      %v4798 = vpop.f32.mrb[0].mxu0
      %v4799 = vadd.f32 0.0, %v4798
      %v4800 = vpop.f32.mrb[0].mxu0
      %v4801 = vpop.f32.mrb[0].mxu0
      %v4802 = vadd.f32 0.0, %v4801
      %v4803 = vpop.f32.mrb[0].mxu0
      %4804 = vmatprep.mubr.bf16.mxu0 0
      %4805 = vmatmul.mubr.bf16.gmra.mrb[0].mxu0 %v3614
      %v4806 = vpop.f32.mrb[0].mxu0
      %v4807 = vadd.f32 0.0, %v4806
      %v4808 = vpop.f32.mrb[0].mxu0
      %v4809 = vpop.f32.mrb[0].mxu0
      %v4810 = vadd.f32 0.0, %v4809
      %v4811 = vpop.f32.mrb[0].mxu0
      %4812 = vdwg.mxu0
      %s4813 = scalar_lea.vmem %s8, 480
      %v4814 = vld [vmem:[%s4813] sm:$0xf]
      %v4815 = vld [vmem:[%s4813 + $0x4] sm:$0xf]
      %v4816 = vld [vmem:[%s4813 + $0x8] sm:$0xf]
      %v4817 = vld [vmem:[%s4813 + $0xc] sm:$0xf]
      %v4818 = vld [vmem:[%s4813 + $0x10] sm:$0xf]
      %v4819 = vld [vmem:[%s4813 + $0x14] sm:$0xf]
      %v4820 = vld [vmem:[%s4813 + $0x18] sm:$0xf]
      %v4821 = vld [vmem:[%s4813 + $0x1c] sm:$0xf]
      %v4830 = vunpack.c.l.b16 %v4814
      %v4831 = vunpack.c.l.b16 %v4815
      %v4832 = vunpack.c.l.b16 %v4816
      %v4833 = vunpack.c.l.b16 %v4817
      %v4834 = vunpack.c.l.b16 %v4818
      %v4835 = vunpack.c.l.b16 %v4819
      %v4836 = vunpack.c.l.b16 %v4820
      %v4837 = vunpack.c.l.b16 %v4821
      %v4838 = vpack.c.b16 %v4831, %v4830
      %v4839 = vpack.c.b16 %v4833, %v4832
      %v4840 = vpack.c.b16 %v4835, %v4834
      %v4841 = vpack.c.b16 %v4837, %v4836
      %4846 = vmatprep.subr.bf16.mxu0 0
      %4847 = vmatpush1.bf16.msra.mxu0 %v4838
      %4848 = vmatprep.subr.bf16.mxu0 0
      %4849 = vmatpush1.bf16.msra.mxu0 %v4839
      %4850 = vmatprep.subr.bf16.mxu0 0
      %4851 = vmatpush1.bf16.msra.mxu0 %v4840
      %4852 = vmatprep.subr.bf16.mxu0 0
      %4853 = vmatpush1.bf16.msra.mxu0 %v4841
      %4854 = vmatprep.subr.bf16.mxu0 0
      %4855 = vmatpush1.bf16.msra.mxu0 0
      %4856 = vmatprep.subr.bf16.mxu0 0
      %4857 = vmatpush1.bf16.msra.mxu0 0
      %4858 = vmatprep.subr.bf16.mxu0 0
      %4859 = vmatpush1.bf16.msra.mxu0 0
      %4860 = vmatprep.subr.bf16.mxu0 0
      %4861 = vmatpush1.bf16.msra.mxu0 0
      %4862 = vmatprep.subr.bf16.mxu0 0
      %4863 = vmatpush1.bf16.msra.mxu0 0
      %4864 = vmatprep.subr.bf16.mxu0 0
      %4865 = vmatpush1.bf16.msra.mxu0 0
      %4866 = vmatprep.subr.bf16.mxu0 0
      %4867 = vmatpush1.bf16.msra.mxu0 0
      %4868 = vmatprep.subr.bf16.mxu0 0
      %4869 = vmatpush1.bf16.msra.mxu0 0
      %4870 = vmatprep.subr.bf16.mxu0 0
      %4871 = vmatpush1.bf16.msra.mxu0 0
      %4872 = vmatprep.subr.bf16.mxu0 0
      %4873 = vmatpush1.bf16.msra.mxu0 0
      %4874 = vmatprep.subr.bf16.mxu0 0
      %4875 = vmatpush1.bf16.msra.mxu0 0
      %4876 = vmatprep.subr.bf16.mxu0 0
      %4877 = vmatpush1.bf16.msra.mxu0 0
      %4878 = vmatprep.mubr.bf16.mxu0 0
      %4879 = vmatmul.mubr.bf16.gmra.mrb[0].mxu0 %v3611
      %v4880 = vpop.f32.mrb[0].mxu0
      %v4881 = vadd.f32 0.0, %v4880
      %v4882 = vpop.f32.mrb[0].mxu0
      %v4883 = vpop.f32.mrb[0].mxu0
      %v4884 = vadd.f32 0.0, %v4883
      %v4885 = vpop.f32.mrb[0].mxu0
      %4886 = vmatprep.mubr.bf16.mxu0 0
      %4887 = vmatmul.mubr.bf16.gmra.mrb[0].mxu0 %v3614
      %v4888 = vpop.f32.mrb[0].mxu0
      %v4889 = vadd.f32 0.0, %v4888
      %v4890 = vpop.f32.mrb[0].mxu0
      %v4891 = vpop.f32.mrb[0].mxu0
      %v4892 = vadd.f32 0.0, %v4891
      %v4893 = vpop.f32.mrb[0].mxu0
      %4894 = vdwg.mxu0
      %v4895 = vld [vmem:[%s6] sm:$0xff]
      %v4896 = vld [vmem:[%s6 + $0x8] sm:$0xff]
      %v4897 = vld [vmem:[%s6 + $0x10] sm:$0xff]
      %v4898 = vld [vmem:[%s6 + $0x18] sm:$0xff]
      %v4899 = vld [vmem:[%s7] sm:$0xff]
      %v4900 = vld [vmem:[%s7 + $0x8] sm:$0xff]
      %v4901 = vld [vmem:[%s7 + $0x10] sm:$0xff]
      %v4902 = vld [vmem:[%s7 + $0x18] sm:$0xff]
      %v4903 = vpack.c.bf16 %v3654, %v3651
      %v4904 = vpack.c.bf16 %v3736, %v3733
      %v4905 = vpack.c.bf16 %v3818, %v3815
      %v4906 = vpack.c.bf16 %v3900, %v3897
      %v4907 = vpack.c.bf16 %v3982, %v3979
      %v4908 = vpack.c.bf16 %v4064, %v4061
      %v4909 = vpack.c.bf16 %v4146, %v4143
      %v4910 = vpack.c.bf16 %v4228, %v4225
      %v4911 = vpack.c.bf16 %v4310, %v4307
      %v4912 = vpack.c.bf16 %v4392, %v4389
      %v4913 = vpack.c.bf16 %v4474, %v4471
      %v4914 = vpack.c.bf16 %v4556, %v4553
      %v4915 = vpack.c.bf16 %v4638, %v4635
      %v4916 = vpack.c.bf16 %v4720, %v4717
      %v4917 = vpack.c.bf16 %v4802, %v4799
      %v4918 = vpack.c.bf16 %v4884, %v4881
      %4920 = vset.pattern.permute.xlu0 0
      %4921 = vperm.xlu0 %4920, %v4899
      %v4922 = vpop.permute.xlu0 %4921
      %4925 = vset.pattern.permute.xlu0 0
      %4926 = vperm.xlu0 %4925, %v4900
      %v4927 = vpop.permute.xlu0 %4926
      %4930 = vset.pattern.permute.xlu0 0
      %4931 = vperm.xlu0 %4930, %v4901
      %v4932 = vpop.permute.xlu0 %4931
      %4935 = vset.pattern.permute.xlu0 0
      %4936 = vperm.xlu0 %4935, %v4902
      %v4937 = vpop.permute.xlu0 %4936
      %v4943 = vunpack.c.l.b16 %v4895
      %v4944 = vunpack.c.h.b16 %v4895
      %v4945 = vunpack.c.l.b16 %v4896
      %v4946 = vunpack.c.h.b16 %v4896
      %v4947 = vunpack.c.l.b16 %v4897
      %v4948 = vunpack.c.h.b16 %v4897
      %v4949 = vunpack.c.l.b16 %v4898
      %v4950 = vunpack.c.h.b16 %v4898
      %v4951 = vpack.c.b16 %v4945, %v4943
      %v4952 = vpack.c.b16 %v4946, %v4944
      %v4953 = vpack.c.b16 %v4949, %v4947
      %v4954 = vpack.c.b16 %v4950, %v4948
      %4959 = vmatprep.subr.bf16.mxu0 0
      %4960 = vmatpush1.bf16.msra.mxu0 %v4903
      %4961 = vmatprep.subr.bf16.mxu0 0
      %4962 = vmatpush1.bf16.msra.mxu0 %v4904
      %4963 = vmatprep.subr.bf16.mxu0 0
      %4964 = vmatpush1.bf16.msra.mxu0 %v4905
      %4965 = vmatprep.subr.bf16.mxu0 0
      %4966 = vmatpush1.bf16.msra.mxu0 %v4906
      %4967 = vmatprep.subr.bf16.mxu0 0
      %4968 = vmatpush1.bf16.msra.mxu0 %v4907
      %4969 = vmatprep.subr.bf16.mxu0 0
      %4970 = vmatpush1.bf16.msra.mxu0 %v4908
      %4971 = vmatprep.subr.bf16.mxu0 0
      %4972 = vmatpush1.bf16.msra.mxu0 %v4909
      %4973 = vmatprep.subr.bf16.mxu0 0
      %4974 = vmatpush1.bf16.msra.mxu0 %v4910
      %4975 = vmatprep.subr.bf16.mxu0 0
      %4976 = vmatpush1.bf16.msra.mxu0 %v4911
      %4977 = vmatprep.subr.bf16.mxu0 0
      %4978 = vmatpush1.bf16.msra.mxu0 %v4912
      %4979 = vmatprep.subr.bf16.mxu0 0
      %4980 = vmatpush1.bf16.msra.mxu0 %v4913
      %4981 = vmatprep.subr.bf16.mxu0 0
      %4982 = vmatpush1.bf16.msra.mxu0 %v4914
      %4983 = vmatprep.subr.bf16.mxu0 0
      %4984 = vmatpush1.bf16.msra.mxu0 %v4915
      %4985 = vmatprep.subr.bf16.mxu0 0
      %4986 = vmatpush1.bf16.msra.mxu0 %v4916
      %4987 = vmatprep.subr.bf16.mxu0 0
      %4988 = vmatpush1.bf16.msra.mxu0 %v4917
      %4989 = vmatprep.subr.bf16.mxu0 0
      %4990 = vmatpush1.bf16.msra.mxu0 %v4918
      %4991 = vmatprep.mubr.bf16.mxu0 %v4952
      %4992 = vmatmul.mubr.bf16.gmra.mrb[0].mxu0 %v4951
      %v4993 = vpop.f32.mrb[0].mxu0
      %v4994 = vadd.f32 %v4922, %v4993
      %v4995 = vpop.f32.mrb[0].mxu0
      %v4996 = vpop.f32.mrb[0].mxu0
      %v4997 = vadd.f32 %v4927, %v4996
      %v4998 = vpop.f32.mrb[0].mxu0
      %4999 = vmatprep.mubr.bf16.mxu0 %v4954
      %5000 = vmatmul.mubr.bf16.gmra.mrb[0].mxu0 %v4953
      %v5001 = vpop.f32.mrb[0].mxu0
      %v5002 = vadd.f32 %v4932, %v5001
      %v5003 = vpop.f32.mrb[0].mxu0
      %v5004 = vpop.f32.mrb[0].mxu0
      %v5005 = vadd.f32 %v4937, %v5004
      %v5006 = vpop.f32.mrb[0].mxu0
      %5007 = vdwg.mxu0
      %v5008 = vpack.c.bf16 %v3662, %v3659
      %v5009 = vpack.c.bf16 %v3744, %v3741
      %v5010 = vpack.c.bf16 %v3826, %v3823
      %v5011 = vpack.c.bf16 %v3908, %v3905
      %v5012 = vpack.c.bf16 %v3990, %v3987
      %v5013 = vpack.c.bf16 %v4072, %v4069
      %v5014 = vpack.c.bf16 %v4154, %v4151
      %v5015 = vpack.c.bf16 %v4236, %v4233
      %v5016 = vpack.c.bf16 %v4318, %v4315
      %v5017 = vpack.c.bf16 %v4400, %v4397
      %v5018 = vpack.c.bf16 %v4482, %v4479
      %v5019 = vpack.c.bf16 %v4564, %v4561
      %v5020 = vpack.c.bf16 %v4646, %v4643
      %v5021 = vpack.c.bf16 %v4728, %v4725
      %v5022 = vpack.c.bf16 %v4810, %v4807
      %v5023 = vpack.c.bf16 %v4892, %v4889
      %5024 = vmatprep.subr.bf16.mxu0 0
      %5025 = vmatpush1.bf16.msra.mxu0 %v5008
      %5026 = vmatprep.subr.bf16.mxu0 0
      %5027 = vmatpush1.bf16.msra.mxu0 %v5009
      %5028 = vmatprep.subr.bf16.mxu0 0
      %5029 = vmatpush1.bf16.msra.mxu0 %v5010
      %5030 = vmatprep.subr.bf16.mxu0 0
      %5031 = vmatpush1.bf16.msra.mxu0 %v5011
      %5032 = vmatprep.subr.bf16.mxu0 0
      %5033 = vmatpush1.bf16.msra.mxu0 %v5012
      %5034 = vmatprep.subr.bf16.mxu0 0
      %5035 = vmatpush1.bf16.msra.mxu0 %v5013
      %5036 = vmatprep.subr.bf16.mxu0 0
      %5037 = vmatpush1.bf16.msra.mxu0 %v5014
      %5038 = vmatprep.subr.bf16.mxu0 0
      %5039 = vmatpush1.bf16.msra.mxu0 %v5015
      %5040 = vmatprep.subr.bf16.mxu0 0
      %5041 = vmatpush1.bf16.msra.mxu0 %v5016
      %5042 = vmatprep.subr.bf16.mxu0 0
      %5043 = vmatpush1.bf16.msra.mxu0 %v5017
      %5044 = vmatprep.subr.bf16.mxu0 0
      %5045 = vmatpush1.bf16.msra.mxu0 %v5018
      %5046 = vmatprep.subr.bf16.mxu0 0
      %5047 = vmatpush1.bf16.msra.mxu0 %v5019
      %5048 = vmatprep.subr.bf16.mxu0 0
      %5049 = vmatpush1.bf16.msra.mxu0 %v5020
      %5050 = vmatprep.subr.bf16.mxu0 0
      %5051 = vmatpush1.bf16.msra.mxu0 %v5021
      %5052 = vmatprep.subr.bf16.mxu0 0
      %5053 = vmatpush1.bf16.msra.mxu0 %v5022
      %5054 = vmatprep.subr.bf16.mxu0 0
      %5055 = vmatpush1.bf16.msra.mxu0 %v5023
      %5056 = vmatprep.mubr.bf16.mxu0 %v4952
      %5057 = vmatmul.mubr.bf16.gmra.mrb[0].mxu0 %v4951
      %v5058 = vpop.f32.mrb[0].mxu0
      %v5059 = vadd.f32 %v4922, %v5058
      %v5060 = vpop.f32.mrb[0].mxu0
      %v5061 = vpop.f32.mrb[0].mxu0
      %v5062 = vadd.f32 %v4927, %v5061
      %v5063 = vpop.f32.mrb[0].mxu0
      %5064 = vmatprep.mubr.bf16.mxu0 %v4954
      %5065 = vmatmul.mubr.bf16.gmra.mrb[0].mxu0 %v4953
      %v5066 = vpop.f32.mrb[0].mxu0
      %v5067 = vadd.f32 %v4932, %v5066
      %v5068 = vpop.f32.mrb[0].mxu0
      %v5069 = vpop.f32.mrb[0].mxu0
      %v5070 = vadd.f32 %v4937, %v5069
      %v5071 = vpop.f32.mrb[0].mxu0
      %5072 = vdwg.mxu0
      %vm5073 = vcmask 130048
      %v5074 = vsel %vm5073, %v4994, 0.0
      %5075 = vadd.xlane.f32.xlu0 %v5074
      %v5076 = vpop.xlane.xlu0 %5075
      %v5077 = vsel %vm5073, %v4997, 0.0
      %5078 = vadd.xlane.f32.xlu0 %v5077
      %v5079 = vpop.xlane.xlu0 %5078
      %v5080 = vsel %vm5073, %v5002, 0.0
      %5081 = vadd.xlane.f32.xlu0 %v5080
      %v5082 = vpop.xlane.xlu0 %5081
      %v5083 = vsel %vm5073, %v5005, 0.0
      %5084 = vadd.xlane.f32.xlu0 %v5083
      %v5085 = vpop.xlane.xlu0 %5084
      %v5086 = vrcp.pop 16.0
      %v5087 = vmul.f32 %v5076, %v5086
      %v5088 = vmul.f32 %v5079, %v5086
      %v5089 = vmul.f32 %v5082, %v5086
      %v5090 = vmul.f32 %v5085, %v5086
      %v5091 = vsub.f32 %v4994, %v5087
      %v5092 = vsub.f32 %v4997, %v5088
      %v5093 = vsub.f32 %v5002, %v5089
      %v5094 = vsub.f32 %v5005, %v5090
      %v5095 = vmul.f32 %v5091, %v5091
      %v5096 = vmul.f32 %v5092, %v5092
      %v5097 = vmul.f32 %v5093, %v5093
      %v5098 = vmul.f32 %v5094, %v5094
      %v5099 = vsel %vm5073, %v5095, 0.0
      %5100 = vadd.xlane.f32.xlu0 %v5099
      %v5101 = vpop.xlane.xlu0 %5100
      %v5102 = vsel %vm5073, %v5096, 0.0
      %5103 = vadd.xlane.f32.xlu0 %v5102
      %v5104 = vpop.xlane.xlu0 %5103
      %v5105 = vsel %vm5073, %v5097, 0.0
      %5106 = vadd.xlane.f32.xlu0 %v5105
      %v5107 = vpop.xlane.xlu0 %5106
      %v5108 = vsel %vm5073, %v5098, 0.0
      %5109 = vadd.xlane.f32.xlu0 %v5108
      %v5110 = vpop.xlane.xlu0 %5109
      %v5111 = vmul.f32 %v5101, %v5086
      %v5112 = vmul.f32 %v5104, %v5086
      %v5113 = vmul.f32 %v5107, %v5086
      %v5114 = vmul.f32 %v5110, %v5086
      %v5115 = vadd.f32 %v5111, 1e-05
      %v5116 = vadd.f32 %v5112, 1e-05
      %v5117 = vadd.f32 %v5113, 1e-05
      %v5118 = vadd.f32 %v5114, 1e-05
      %v5119 = vrsqrt.pop %v5115
      %v5120 = vrsqrt.pop %v5116
      %v5121 = vrsqrt.pop %v5117
      %v5122 = vrsqrt.pop %v5118
      %v5123 = vmul.f32 %v5091, %v5119
      %v5124 = vmul.f32 %v5092, %v5120
      %v5125 = vmul.f32 %v5093, %v5121
      %v5126 = vmul.f32 %v5094, %v5122
      %vm5127 = vcmp.ge.f32.partialorder %v5123, 0.0
      %vm5128 = vcmp.ge.f32.partialorder %v5124, 0.0
      %vm5129 = vcmp.ge.f32.partialorder %v5125, 0.0
      %vm5130 = vcmp.ge.f32.partialorder %v5126, 0.0
      %v5131 = vmul.f32 %v5123, 0.2
      %v5132 = vmul.f32 %v5124, 0.2
      %v5133 = vmul.f32 %v5125, 0.2
      %v5134 = vmul.f32 %v5126, 0.2
      %v5135 = vsel %vm5127, %v5123, %v5131
      %v5136 = vsel %vm5128, %v5124, %v5132
      %v5137 = vsel %vm5129, %v5125, %v5133
      %v5138 = vsel %vm5130, %v5126, %v5134
      %v5139 = vsel %vm5073, %v5059, 0.0
      %5140 = vadd.xlane.f32.xlu0 %v5139
      %v5141 = vpop.xlane.xlu0 %5140
      %v5142 = vsel %vm5073, %v5062, 0.0
      %5143 = vadd.xlane.f32.xlu0 %v5142
      %v5144 = vpop.xlane.xlu0 %5143
      %v5145 = vsel %vm5073, %v5067, 0.0
      %5146 = vadd.xlane.f32.xlu0 %v5145
      %v5147 = vpop.xlane.xlu0 %5146
      %v5148 = vsel %vm5073, %v5070, 0.0
      %5149 = vadd.xlane.f32.xlu0 %v5148
      %v5150 = vpop.xlane.xlu0 %5149
      %v5151 = vmul.f32 %v5141, %v5086
      %v5152 = vmul.f32 %v5144, %v5086
      %v5153 = vmul.f32 %v5147, %v5086
      %v5154 = vmul.f32 %v5150, %v5086
      %v5155 = vsub.f32 %v5059, %v5151
      %v5156 = vsub.f32 %v5062, %v5152
      %v5157 = vsub.f32 %v5067, %v5153
      %v5158 = vsub.f32 %v5070, %v5154
      %v5159 = vmul.f32 %v5155, %v5155
      %v5160 = vmul.f32 %v5156, %v5156
      %v5161 = vmul.f32 %v5157, %v5157
      %v5162 = vmul.f32 %v5158, %v5158
      %v5163 = vsel %vm5073, %v5159, 0.0
      %5164 = vadd.xlane.f32.xlu0 %v5163
      %v5165 = vpop.xlane.xlu0 %5164
      %v5166 = vsel %vm5073, %v5160, 0.0
      %5167 = vadd.xlane.f32.xlu0 %v5166
      %v5168 = vpop.xlane.xlu0 %5167
      %v5169 = vsel %vm5073, %v5161, 0.0
      %5170 = vadd.xlane.f32.xlu0 %v5169
      %v5171 = vpop.xlane.xlu0 %5170
      %v5172 = vsel %vm5073, %v5162, 0.0
      %5173 = vadd.xlane.f32.xlu0 %v5172
      %v5174 = vpop.xlane.xlu0 %5173
      %v5175 = vmul.f32 %v5165, %v5086
      %v5176 = vmul.f32 %v5168, %v5086
      %v5177 = vmul.f32 %v5171, %v5086
      %v5178 = vmul.f32 %v5174, %v5086
      %v5179 = vadd.f32 %v5175, 1e-05
      %v5180 = vadd.f32 %v5176, 1e-05
      %v5181 = vadd.f32 %v5177, 1e-05
      %v5182 = vadd.f32 %v5178, 1e-05
      %v5183 = vrsqrt.pop %v5179
      %v5184 = vrsqrt.pop %v5180
      %v5185 = vrsqrt.pop %v5181
      %v5186 = vrsqrt.pop %v5182
      %v5187 = vmul.f32 %v5155, %v5183
      %v5188 = vmul.f32 %v5156, %v5184
      %v5189 = vmul.f32 %v5157, %v5185
      %v5190 = vmul.f32 %v5158, %v5186
      %vm5191 = vcmp.ge.f32.partialorder %v5187, 0.0
      %vm5192 = vcmp.ge.f32.partialorder %v5188, 0.0
      %vm5193 = vcmp.ge.f32.partialorder %v5189, 0.0
      %vm5194 = vcmp.ge.f32.partialorder %v5190, 0.0
      %v5195 = vmul.f32 %v5187, 0.2
      %v5196 = vmul.f32 %v5188, 0.2
      %v5197 = vmul.f32 %v5189, 0.2
      %v5198 = vmul.f32 %v5190, 0.2
      %v5199 = vsel %vm5191, %v5187, %v5195
      %v5200 = vsel %vm5192, %v5188, %v5196
      %v5201 = vsel %vm5193, %v5189, %v5197
      %v5202 = vsel %vm5194, %v5190, %v5198
      %v5203 = vpack.c.bf16 %v5136, %v5135
      %v5204 = vpack.c.bf16 %v5138, %v5137
      %v5205 = vpack.c.bf16 %v5200, %v5199
      %v5206 = vpack.c.bf16 %v5202, %v5201
      %v5207 = vld [vmem:[%s11] sm:$0xf]
      %v5208 = vld [vmem:[%s11 + $0x4] sm:$0xf]
      %v5211 = vunpack.c.l.b16 %v5207
      %v5212 = vunpack.c.l.b16 %v5208
      %v5213 = vpack.c.b16 %v5212, %v5211
      %v5216 = vsel %vm5073, %v5203, 0
      %v5219 = vsel %vm5073, %v5204, 0
      %v5222 = vsel %vm5073, %v5205, 0
      %v5225 = vsel %vm5073, %v5206, 0
      %5227 = vmatprep.subr.bf16.mxu0 0
      %5228 = vmatpush1.bf16.msra.mxu0 %v5213
      %5229 = vmatprep.subr.bf16.mxu0 0
      %5230 = vmatpush1.bf16.msra.mxu0 0
      %5231 = vmatprep.subr.bf16.mxu0 0
      %5232 = vmatpush1.bf16.msra.mxu0 0
      %5233 = vmatprep.subr.bf16.mxu0 0
      %5234 = vmatpush1.bf16.msra.mxu0 0
      %5235 = vmatprep.subr.bf16.mxu0 0
      %5236 = vmatpush1.bf16.msra.mxu0 0
      %5237 = vmatprep.subr.bf16.mxu0 0
      %5238 = vmatpush1.bf16.msra.mxu0 0
      %5239 = vmatprep.subr.bf16.mxu0 0
      %5240 = vmatpush1.bf16.msra.mxu0 0
      %5241 = vmatprep.subr.bf16.mxu0 0
      %5242 = vmatpush1.bf16.msra.mxu0 0
      %5243 = vmatprep.subr.bf16.mxu0 0
      %5244 = vmatpush1.bf16.msra.mxu0 0
      %5245 = vmatprep.subr.bf16.mxu0 0
      %5246 = vmatpush1.bf16.msra.mxu0 0
      %5247 = vmatprep.subr.bf16.mxu0 0
      %5248 = vmatpush1.bf16.msra.mxu0 0
      %5249 = vmatprep.subr.bf16.mxu0 0
      %5250 = vmatpush1.bf16.msra.mxu0 0
      %5251 = vmatprep.subr.bf16.mxu0 0
      %5252 = vmatpush1.bf16.msra.mxu0 0
      %5253 = vmatprep.subr.bf16.mxu0 0
      %5254 = vmatpush1.bf16.msra.mxu0 0
      %5255 = vmatprep.subr.bf16.mxu0 0
      %5256 = vmatpush1.bf16.msra.mxu0 0
      %5257 = vmatprep.subr.bf16.mxu0 0
      %5258 = vmatpush1.bf16.msra.mxu0 0
      %5259 = vmatprep.mubr.bf16.mxu0 0
      %5260 = vmatmul.mubr.bf16.gmra.mrb[0].mxu0 %v5216
      %v5261 = vpop.f32.mrb[0].mxu0
      %v5262 = vadd.f32 0.0, %v5261
      %v5263 = vpop.f32.mrb[0].mxu0
      %v5264 = vpop.f32.mrb[0].mxu0
      %v5265 = vadd.f32 0.0, %v5264
      %v5266 = vpop.f32.mrb[0].mxu0
      %5267 = vmatprep.mubr.bf16.mxu0 0
      %5268 = vmatmul.mubr.bf16.gmra.mrb[0].mxu0 %v5219
      %v5269 = vpop.f32.mrb[0].mxu0
      %v5270 = vadd.f32 0.0, %v5269
      %v5271 = vpop.f32.mrb[0].mxu0
      %v5272 = vpop.f32.mrb[0].mxu0
      %v5273 = vadd.f32 0.0, %v5272
      %v5274 = vpop.f32.mrb[0].mxu0
      %5275 = vmatprep.mubr.bf16.mxu0 0
      %5276 = vmatmul.mubr.bf16.gmra.mrb[0].mxu0 %v5222
      %v5277 = vpop.f32.mrb[0].mxu0
      %v5278 = vadd.f32 0.0, %v5277
      %v5279 = vpop.f32.mrb[0].mxu0
      %v5280 = vpop.f32.mrb[0].mxu0
      %v5281 = vadd.f32 0.0, %v5280
      %v5282 = vpop.f32.mrb[0].mxu0
      %5283 = vmatprep.mubr.bf16.mxu0 0
      %5284 = vmatmul.mubr.bf16.gmra.mrb[0].mxu0 %v5225
      %v5285 = vpop.f32.mrb[0].mxu0
      %v5286 = vadd.f32 0.0, %v5285
      %v5287 = vpop.f32.mrb[0].mxu0
      %v5288 = vpop.f32.mrb[0].mxu0
      %v5289 = vadd.f32 0.0, %v5288
      %v5290 = vpop.f32.mrb[0].mxu0
      %5291 = vdwg.mxu0
      %s5292 = scalar_lea.vmem %s11, 8
      %v5293 = vld [vmem:[%s5292] sm:$0xf]
      %v5294 = vld [vmem:[%s5292 + $0x4] sm:$0xf]
      %v5297 = vunpack.c.l.b16 %v5293
      %v5298 = vunpack.c.l.b16 %v5294
      %v5299 = vpack.c.b16 %v5298, %v5297
      %5301 = vmatprep.subr.bf16.mxu0 0
      %5302 = vmatpush1.bf16.msra.mxu0 %v5299
      %5303 = vmatprep.subr.bf16.mxu0 0
      %5304 = vmatpush1.bf16.msra.mxu0 0
      %5305 = vmatprep.subr.bf16.mxu0 0
      %5306 = vmatpush1.bf16.msra.mxu0 0
      %5307 = vmatprep.subr.bf16.mxu0 0
      %5308 = vmatpush1.bf16.msra.mxu0 0
      %5309 = vmatprep.subr.bf16.mxu0 0
      %5310 = vmatpush1.bf16.msra.mxu0 0
      %5311 = vmatprep.subr.bf16.mxu0 0
      %5312 = vmatpush1.bf16.msra.mxu0 0
      %5313 = vmatprep.subr.bf16.mxu0 0
      %5314 = vmatpush1.bf16.msra.mxu0 0
      %5315 = vmatprep.subr.bf16.mxu0 0
      %5316 = vmatpush1.bf16.msra.mxu0 0
      %5317 = vmatprep.subr.bf16.mxu0 0
      %5318 = vmatpush1.bf16.msra.mxu0 0
      %5319 = vmatprep.subr.bf16.mxu0 0
      %5320 = vmatpush1.bf16.msra.mxu0 0
      %5321 = vmatprep.subr.bf16.mxu0 0
      %5322 = vmatpush1.bf16.msra.mxu0 0
      %5323 = vmatprep.subr.bf16.mxu0 0
      %5324 = vmatpush1.bf16.msra.mxu0 0
      %5325 = vmatprep.subr.bf16.mxu0 0
      %5326 = vmatpush1.bf16.msra.mxu0 0
      %5327 = vmatprep.subr.bf16.mxu0 0
      %5328 = vmatpush1.bf16.msra.mxu0 0
      %5329 = vmatprep.subr.bf16.mxu0 0
      %5330 = vmatpush1.bf16.msra.mxu0 0
      %5331 = vmatprep.subr.bf16.mxu0 0
      %5332 = vmatpush1.bf16.msra.mxu0 0
      %5333 = vmatprep.mubr.bf16.mxu0 0
      %5334 = vmatmul.mubr.bf16.gmra.mrb[0].mxu0 %v5216
      %v5335 = vpop.f32.mrb[0].mxu0
      %v5336 = vadd.f32 0.0, %v5335
      %v5337 = vpop.f32.mrb[0].mxu0
      %v5338 = vpop.f32.mrb[0].mxu0
      %v5339 = vadd.f32 0.0, %v5338
      %v5340 = vpop.f32.mrb[0].mxu0
      %5341 = vmatprep.mubr.bf16.mxu0 0
      %5342 = vmatmul.mubr.bf16.gmra.mrb[0].mxu0 %v5219
      %v5343 = vpop.f32.mrb[0].mxu0
      %v5344 = vadd.f32 0.0, %v5343
      %v5345 = vpop.f32.mrb[0].mxu0
      %v5346 = vpop.f32.mrb[0].mxu0
      %v5347 = vadd.f32 0.0, %v5346
      %v5348 = vpop.f32.mrb[0].mxu0
      %5349 = vmatprep.mubr.bf16.mxu0 0
      %5350 = vmatmul.mubr.bf16.gmra.mrb[0].mxu0 %v5222
      %v5351 = vpop.f32.mrb[0].mxu0
      %v5352 = vadd.f32 0.0, %v5351
      %v5353 = vpop.f32.mrb[0].mxu0
      %v5354 = vpop.f32.mrb[0].mxu0
      %v5355 = vadd.f32 0.0, %v5354
      %v5356 = vpop.f32.mrb[0].mxu0
      %5357 = vmatprep.mubr.bf16.mxu0 0
      %5358 = vmatmul.mubr.bf16.gmra.mrb[0].mxu0 %v5225
      %v5359 = vpop.f32.mrb[0].mxu0
      %v5360 = vadd.f32 0.0, %v5359
      %v5361 = vpop.f32.mrb[0].mxu0
      %v5362 = vpop.f32.mrb[0].mxu0
      %v5363 = vadd.f32 0.0, %v5362
      %v5364 = vpop.f32.mrb[0].mxu0
      %5365 = vdwg.mxu0
      %s5366 = scalar_lea.vmem %s11, 16
      %v5367 = vld [vmem:[%s5366] sm:$0xf]
      %v5368 = vld [vmem:[%s5366 + $0x4] sm:$0xf]
      %v5371 = vunpack.c.l.b16 %v5367
      %v5372 = vunpack.c.l.b16 %v5368
      %v5373 = vpack.c.b16 %v5372, %v5371
      %5375 = vmatprep.subr.bf16.mxu0 0
      %5376 = vmatpush1.bf16.msra.mxu0 %v5373
      %5377 = vmatprep.subr.bf16.mxu0 0
      %5378 = vmatpush1.bf16.msra.mxu0 0
      %5379 = vmatprep.subr.bf16.mxu0 0
      %5380 = vmatpush1.bf16.msra.mxu0 0
      %5381 = vmatprep.subr.bf16.mxu0 0
      %5382 = vmatpush1.bf16.msra.mxu0 0
      %5383 = vmatprep.subr.bf16.mxu0 0
      %5384 = vmatpush1.bf16.msra.mxu0 0
      %5385 = vmatprep.subr.bf16.mxu0 0
      %5386 = vmatpush1.bf16.msra.mxu0 0
      %5387 = vmatprep.subr.bf16.mxu0 0
      %5388 = vmatpush1.bf16.msra.mxu0 0
      %5389 = vmatprep.subr.bf16.mxu0 0
      %5390 = vmatpush1.bf16.msra.mxu0 0
      %5391 = vmatprep.subr.bf16.mxu0 0
      %5392 = vmatpush1.bf16.msra.mxu0 0
      %5393 = vmatprep.subr.bf16.mxu0 0
      %5394 = vmatpush1.bf16.msra.mxu0 0
      %5395 = vmatprep.subr.bf16.mxu0 0
      %5396 = vmatpush1.bf16.msra.mxu0 0
      %5397 = vmatprep.subr.bf16.mxu0 0
      %5398 = vmatpush1.bf16.msra.mxu0 0
      %5399 = vmatprep.subr.bf16.mxu0 0
      %5400 = vmatpush1.bf16.msra.mxu0 0
      %5401 = vmatprep.subr.bf16.mxu0 0
      %5402 = vmatpush1.bf16.msra.mxu0 0
      %5403 = vmatprep.subr.bf16.mxu0 0
      %5404 = vmatpush1.bf16.msra.mxu0 0
      %5405 = vmatprep.subr.bf16.mxu0 0
      %5406 = vmatpush1.bf16.msra.mxu0 0
      %5407 = vmatprep.mubr.bf16.mxu0 0
      %5408 = vmatmul.mubr.bf16.gmra.mrb[0].mxu0 %v5216
      %v5409 = vpop.f32.mrb[0].mxu0
      %v5410 = vadd.f32 0.0, %v5409
      %v5411 = vpop.f32.mrb[0].mxu0
      %v5412 = vpop.f32.mrb[0].mxu0
      %v5413 = vadd.f32 0.0, %v5412
      %v5414 = vpop.f32.mrb[0].mxu0
      %5415 = vmatprep.mubr.bf16.mxu0 0
      %5416 = vmatmul.mubr.bf16.gmra.mrb[0].mxu0 %v5219
      %v5417 = vpop.f32.mrb[0].mxu0
      %v5418 = vadd.f32 0.0, %v5417
      %v5419 = vpop.f32.mrb[0].mxu0
      %v5420 = vpop.f32.mrb[0].mxu0
      %v5421 = vadd.f32 0.0, %v5420
      %v5422 = vpop.f32.mrb[0].mxu0
      %5423 = vmatprep.mubr.bf16.mxu0 0
      %5424 = vmatmul.mubr.bf16.gmra.mrb[0].mxu0 %v5222
      %v5425 = vpop.f32.mrb[0].mxu0
      %v5426 = vadd.f32 0.0, %v5425
      %v5427 = vpop.f32.mrb[0].mxu0
      %v5428 = vpop.f32.mrb[0].mxu0
      %v5429 = vadd.f32 0.0, %v5428
      %v5430 = vpop.f32.mrb[0].mxu0
      %5431 = vmatprep.mubr.bf16.mxu0 0
      %5432 = vmatmul.mubr.bf16.gmra.mrb[0].mxu0 %v5225
      %v5433 = vpop.f32.mrb[0].mxu0
      %v5434 = vadd.f32 0.0, %v5433
      %v5435 = vpop.f32.mrb[0].mxu0
      %v5436 = vpop.f32.mrb[0].mxu0
      %v5437 = vadd.f32 0.0, %v5436
      %v5438 = vpop.f32.mrb[0].mxu0
      %5439 = vdwg.mxu0
      %s5440 = scalar_lea.vmem %s11, 24
      %v5441 = vld [vmem:[%s5440] sm:$0xf]
      %v5442 = vld [vmem:[%s5440 + $0x4] sm:$0xf]
      %v5445 = vunpack.c.l.b16 %v5441
      %v5446 = vunpack.c.l.b16 %v5442
      %v5447 = vpack.c.b16 %v5446, %v5445
      %5449 = vmatprep.subr.bf16.mxu0 0
      %5450 = vmatpush1.bf16.msra.mxu0 %v5447
      %5451 = vmatprep.subr.bf16.mxu0 0
      %5452 = vmatpush1.bf16.msra.mxu0 0
      %5453 = vmatprep.subr.bf16.mxu0 0
      %5454 = vmatpush1.bf16.msra.mxu0 0
      %5455 = vmatprep.subr.bf16.mxu0 0
      %5456 = vmatpush1.bf16.msra.mxu0 0
      %5457 = vmatprep.subr.bf16.mxu0 0
      %5458 = vmatpush1.bf16.msra.mxu0 0
      %5459 = vmatprep.subr.bf16.mxu0 0
      %5460 = vmatpush1.bf16.msra.mxu0 0
      %5461 = vmatprep.subr.bf16.mxu0 0
      %5462 = vmatpush1.bf16.msra.mxu0 0
      %5463 = vmatprep.subr.bf16.mxu0 0
      %5464 = vmatpush1.bf16.msra.mxu0 0
      %5465 = vmatprep.subr.bf16.mxu0 0
      %5466 = vmatpush1.bf16.msra.mxu0 0
      %5467 = vmatprep.subr.bf16.mxu0 0
      %5468 = vmatpush1.bf16.msra.mxu0 0
      %5469 = vmatprep.subr.bf16.mxu0 0
      %5470 = vmatpush1.bf16.msra.mxu0 0
      %5471 = vmatprep.subr.bf16.mxu0 0
      %5472 = vmatpush1.bf16.msra.mxu0 0
      %5473 = vmatprep.subr.bf16.mxu0 0
      %5474 = vmatpush1.bf16.msra.mxu0 0
      %5475 = vmatprep.subr.bf16.mxu0 0
      %5476 = vmatpush1.bf16.msra.mxu0 0
      %5477 = vmatprep.subr.bf16.mxu0 0
      %5478 = vmatpush1.bf16.msra.mxu0 0
      %5479 = vmatprep.subr.bf16.mxu0 0
      %5480 = vmatpush1.bf16.msra.mxu0 0
      %5481 = vmatprep.mubr.bf16.mxu0 0
      %5482 = vmatmul.mubr.bf16.gmra.mrb[0].mxu0 %v5216
      %v5483 = vpop.f32.mrb[0].mxu0
      %v5484 = vadd.f32 0.0, %v5483
      %v5485 = vpop.f32.mrb[0].mxu0
      %v5486 = vpop.f32.mrb[0].mxu0
      %v5487 = vadd.f32 0.0, %v5486
      %v5488 = vpop.f32.mrb[0].mxu0
      %5489 = vmatprep.mubr.bf16.mxu0 0
      %5490 = vmatmul.mubr.bf16.gmra.mrb[0].mxu0 %v5219
      %v5491 = vpop.f32.mrb[0].mxu0
      %v5492 = vadd.f32 0.0, %v5491
      %v5493 = vpop.f32.mrb[0].mxu0
      %v5494 = vpop.f32.mrb[0].mxu0
      %v5495 = vadd.f32 0.0, %v5494
      %v5496 = vpop.f32.mrb[0].mxu0
      %5497 = vmatprep.mubr.bf16.mxu0 0
      %5498 = vmatmul.mubr.bf16.gmra.mrb[0].mxu0 %v5222
      %v5499 = vpop.f32.mrb[0].mxu0
      %v5500 = vadd.f32 0.0, %v5499
      %v5501 = vpop.f32.mrb[0].mxu0
      %v5502 = vpop.f32.mrb[0].mxu0
      %v5503 = vadd.f32 0.0, %v5502
      %v5504 = vpop.f32.mrb[0].mxu0
      %5505 = vmatprep.mubr.bf16.mxu0 0
      %5506 = vmatmul.mubr.bf16.gmra.mrb[0].mxu0 %v5225
      %v5507 = vpop.f32.mrb[0].mxu0
      %v5508 = vadd.f32 0.0, %v5507
      %v5509 = vpop.f32.mrb[0].mxu0
      %v5510 = vpop.f32.mrb[0].mxu0
      %v5511 = vadd.f32 0.0, %v5510
      %v5512 = vpop.f32.mrb[0].mxu0
      %5513 = vdwg.mxu0
      %s5514 = scalar_lea.vmem %s11, 32
      %v5515 = vld [vmem:[%s5514] sm:$0xf]
      %v5516 = vld [vmem:[%s5514 + $0x4] sm:$0xf]
      %v5519 = vunpack.c.l.b16 %v5515
      %v5520 = vunpack.c.l.b16 %v5516
      %v5521 = vpack.c.b16 %v5520, %v5519
      %5523 = vmatprep.subr.bf16.mxu0 0
      %5524 = vmatpush1.bf16.msra.mxu0 %v5521
      %5525 = vmatprep.subr.bf16.mxu0 0
      %5526 = vmatpush1.bf16.msra.mxu0 0
      %5527 = vmatprep.subr.bf16.mxu0 0
      %5528 = vmatpush1.bf16.msra.mxu0 0
      %5529 = vmatprep.subr.bf16.mxu0 0
      %5530 = vmatpush1.bf16.msra.mxu0 0
      %5531 = vmatprep.subr.bf16.mxu0 0
      %5532 = vmatpush1.bf16.msra.mxu0 0
      %5533 = vmatprep.subr.bf16.mxu0 0
      %5534 = vmatpush1.bf16.msra.mxu0 0
      %5535 = vmatprep.subr.bf16.mxu0 0
      %5536 = vmatpush1.bf16.msra.mxu0 0
      %5537 = vmatprep.subr.bf16.mxu0 0
      %5538 = vmatpush1.bf16.msra.mxu0 0
      %5539 = vmatprep.subr.bf16.mxu0 0
      %5540 = vmatpush1.bf16.msra.mxu0 0
      %5541 = vmatprep.subr.bf16.mxu0 0
      %5542 = vmatpush1.bf16.msra.mxu0 0
      %5543 = vmatprep.subr.bf16.mxu0 0
      %5544 = vmatpush1.bf16.msra.mxu0 0
      %5545 = vmatprep.subr.bf16.mxu0 0
      %5546 = vmatpush1.bf16.msra.mxu0 0
      %5547 = vmatprep.subr.bf16.mxu0 0
      %5548 = vmatpush1.bf16.msra.mxu0 0
      %5549 = vmatprep.subr.bf16.mxu0 0
      %5550 = vmatpush1.bf16.msra.mxu0 0
      %5551 = vmatprep.subr.bf16.mxu0 0
      %5552 = vmatpush1.bf16.msra.mxu0 0
      %5553 = vmatprep.subr.bf16.mxu0 0
      %5554 = vmatpush1.bf16.msra.mxu0 0
      %5555 = vmatprep.mubr.bf16.mxu0 0
      %5556 = vmatmul.mubr.bf16.gmra.mrb[0].mxu0 %v5216
      %v5557 = vpop.f32.mrb[0].mxu0
      %v5558 = vadd.f32 0.0, %v5557
      %v5559 = vpop.f32.mrb[0].mxu0
      %v5560 = vpop.f32.mrb[0].mxu0
      %v5561 = vadd.f32 0.0, %v5560
      %v5562 = vpop.f32.mrb[0].mxu0
      %5563 = vmatprep.mubr.bf16.mxu0 0
      %5564 = vmatmul.mubr.bf16.gmra.mrb[0].mxu0 %v5219
      %v5565 = vpop.f32.mrb[0].mxu0
      %v5566 = vadd.f32 0.0, %v5565
      %v5567 = vpop.f32.mrb[0].mxu0
      %v5568 = vpop.f32.mrb[0].mxu0
      %v5569 = vadd.f32 0.0, %v5568
      %v5570 = vpop.f32.mrb[0].mxu0
      %5571 = vmatprep.mubr.bf16.mxu0 0
      %5572 = vmatmul.mubr.bf16.gmra.mrb[0].mxu0 %v5222
      %v5573 = vpop.f32.mrb[0].mxu0
      %v5574 = vadd.f32 0.0, %v5573
      %v5575 = vpop.f32.mrb[0].mxu0
      %v5576 = vpop.f32.mrb[0].mxu0
      %v5577 = vadd.f32 0.0, %v5576
      %v5578 = vpop.f32.mrb[0].mxu0
      %5579 = vmatprep.mubr.bf16.mxu0 0
      %5580 = vmatmul.mubr.bf16.gmra.mrb[0].mxu0 %v5225
      %v5581 = vpop.f32.mrb[0].mxu0
      %v5582 = vadd.f32 0.0, %v5581
      %v5583 = vpop.f32.mrb[0].mxu0
      %v5584 = vpop.f32.mrb[0].mxu0
      %v5585 = vadd.f32 0.0, %v5584
      %v5586 = vpop.f32.mrb[0].mxu0
      %5587 = vdwg.mxu0
      %s5588 = scalar_lea.vmem %s11, 40
      %v5589 = vld [vmem:[%s5588] sm:$0xf]
      %v5590 = vld [vmem:[%s5588 + $0x4] sm:$0xf]
      %v5593 = vunpack.c.l.b16 %v5589
      %v5594 = vunpack.c.l.b16 %v5590
      %v5595 = vpack.c.b16 %v5594, %v5593
      %5597 = vmatprep.subr.bf16.mxu0 0
      %5598 = vmatpush1.bf16.msra.mxu0 %v5595
      %5599 = vmatprep.subr.bf16.mxu0 0
      %5600 = vmatpush1.bf16.msra.mxu0 0
      %5601 = vmatprep.subr.bf16.mxu0 0
      %5602 = vmatpush1.bf16.msra.mxu0 0
      %5603 = vmatprep.subr.bf16.mxu0 0
      %5604 = vmatpush1.bf16.msra.mxu0 0
      %5605 = vmatprep.subr.bf16.mxu0 0
      %5606 = vmatpush1.bf16.msra.mxu0 0
      %5607 = vmatprep.subr.bf16.mxu0 0
      %5608 = vmatpush1.bf16.msra.mxu0 0
      %5609 = vmatprep.subr.bf16.mxu0 0
      %5610 = vmatpush1.bf16.msra.mxu0 0
      %5611 = vmatprep.subr.bf16.mxu0 0
      %5612 = vmatpush1.bf16.msra.mxu0 0
      %5613 = vmatprep.subr.bf16.mxu0 0
      %5614 = vmatpush1.bf16.msra.mxu0 0
      %5615 = vmatprep.subr.bf16.mxu0 0
      %5616 = vmatpush1.bf16.msra.mxu0 0
      %5617 = vmatprep.subr.bf16.mxu0 0
      %5618 = vmatpush1.bf16.msra.mxu0 0
      %5619 = vmatprep.subr.bf16.mxu0 0
      %5620 = vmatpush1.bf16.msra.mxu0 0
      %5621 = vmatprep.subr.bf16.mxu0 0
      %5622 = vmatpush1.bf16.msra.mxu0 0
      %5623 = vmatprep.subr.bf16.mxu0 0
      %5624 = vmatpush1.bf16.msra.mxu0 0
      %5625 = vmatprep.subr.bf16.mxu0 0
      %5626 = vmatpush1.bf16.msra.mxu0 0
      %5627 = vmatprep.subr.bf16.mxu0 0
      %5628 = vmatpush1.bf16.msra.mxu0 0
      %5629 = vmatprep.mubr.bf16.mxu0 0
      %5630 = vmatmul.mubr.bf16.gmra.mrb[0].mxu0 %v5216
      %v5631 = vpop.f32.mrb[0].mxu0
      %v5632 = vadd.f32 0.0, %v5631
      %v5633 = vpop.f32.mrb[0].mxu0
      %v5634 = vpop.f32.mrb[0].mxu0
      %v5635 = vadd.f32 0.0, %v5634
      %v5636 = vpop.f32.mrb[0].mxu0
      %5637 = vmatprep.mubr.bf16.mxu0 0
      %5638 = vmatmul.mubr.bf16.gmra.mrb[0].mxu0 %v5219
      %v5639 = vpop.f32.mrb[0].mxu0
      %v5640 = vadd.f32 0.0, %v5639
      %v5641 = vpop.f32.mrb[0].mxu0
      %v5642 = vpop.f32.mrb[0].mxu0
      %v5643 = vadd.f32 0.0, %v5642
      %v5644 = vpop.f32.mrb[0].mxu0
      %5645 = vmatprep.mubr.bf16.mxu0 0
      %5646 = vmatmul.mubr.bf16.gmra.mrb[0].mxu0 %v5222
      %v5647 = vpop.f32.mrb[0].mxu0
      %v5648 = vadd.f32 0.0, %v5647
      %v5649 = vpop.f32.mrb[0].mxu0
      %v5650 = vpop.f32.mrb[0].mxu0
      %v5651 = vadd.f32 0.0, %v5650
      %v5652 = vpop.f32.mrb[0].mxu0
      %5653 = vmatprep.mubr.bf16.mxu0 0
      %5654 = vmatmul.mubr.bf16.gmra.mrb[0].mxu0 %v5225
      %v5655 = vpop.f32.mrb[0].mxu0
      %v5656 = vadd.f32 0.0, %v5655
      %v5657 = vpop.f32.mrb[0].mxu0
      %v5658 = vpop.f32.mrb[0].mxu0
      %v5659 = vadd.f32 0.0, %v5658
      %v5660 = vpop.f32.mrb[0].mxu0
      %5661 = vdwg.mxu0
      %s5662 = scalar_lea.vmem %s11, 48
      %v5663 = vld [vmem:[%s5662] sm:$0xf]
      %v5664 = vld [vmem:[%s5662 + $0x4] sm:$0xf]
      %v5667 = vunpack.c.l.b16 %v5663
      %v5668 = vunpack.c.l.b16 %v5664
      %v5669 = vpack.c.b16 %v5668, %v5667
      %5671 = vmatprep.subr.bf16.mxu0 0
      %5672 = vmatpush1.bf16.msra.mxu0 %v5669
      %5673 = vmatprep.subr.bf16.mxu0 0
      %5674 = vmatpush1.bf16.msra.mxu0 0
      %5675 = vmatprep.subr.bf16.mxu0 0
      %5676 = vmatpush1.bf16.msra.mxu0 0
      %5677 = vmatprep.subr.bf16.mxu0 0
      %5678 = vmatpush1.bf16.msra.mxu0 0
      %5679 = vmatprep.subr.bf16.mxu0 0
      %5680 = vmatpush1.bf16.msra.mxu0 0
      %5681 = vmatprep.subr.bf16.mxu0 0
      %5682 = vmatpush1.bf16.msra.mxu0 0
      %5683 = vmatprep.subr.bf16.mxu0 0
      %5684 = vmatpush1.bf16.msra.mxu0 0
      %5685 = vmatprep.subr.bf16.mxu0 0
      %5686 = vmatpush1.bf16.msra.mxu0 0
      %5687 = vmatprep.subr.bf16.mxu0 0
      %5688 = vmatpush1.bf16.msra.mxu0 0
      %5689 = vmatprep.subr.bf16.mxu0 0
      %5690 = vmatpush1.bf16.msra.mxu0 0
      %5691 = vmatprep.subr.bf16.mxu0 0
      %5692 = vmatpush1.bf16.msra.mxu0 0
      %5693 = vmatprep.subr.bf16.mxu0 0
      %5694 = vmatpush1.bf16.msra.mxu0 0
      %5695 = vmatprep.subr.bf16.mxu0 0
      %5696 = vmatpush1.bf16.msra.mxu0 0
      %5697 = vmatprep.subr.bf16.mxu0 0
      %5698 = vmatpush1.bf16.msra.mxu0 0
      %5699 = vmatprep.subr.bf16.mxu0 0
      %5700 = vmatpush1.bf16.msra.mxu0 0
      %5701 = vmatprep.subr.bf16.mxu0 0
      %5702 = vmatpush1.bf16.msra.mxu0 0
      %5703 = vmatprep.mubr.bf16.mxu0 0
      %5704 = vmatmul.mubr.bf16.gmra.mrb[0].mxu0 %v5216
      %v5705 = vpop.f32.mrb[0].mxu0
      %v5706 = vadd.f32 0.0, %v5705
      %v5707 = vpop.f32.mrb[0].mxu0
      %v5708 = vpop.f32.mrb[0].mxu0
      %v5709 = vadd.f32 0.0, %v5708
      %v5710 = vpop.f32.mrb[0].mxu0
      %5711 = vmatprep.mubr.bf16.mxu0 0
      %5712 = vmatmul.mubr.bf16.gmra.mrb[0].mxu0 %v5219
      %v5713 = vpop.f32.mrb[0].mxu0
      %v5714 = vadd.f32 0.0, %v5713
      %v5715 = vpop.f32.mrb[0].mxu0
      %v5716 = vpop.f32.mrb[0].mxu0
      %v5717 = vadd.f32 0.0, %v5716
      %v5718 = vpop.f32.mrb[0].mxu0
      %5719 = vmatprep.mubr.bf16.mxu0 0
      %5720 = vmatmul.mubr.bf16.gmra.mrb[0].mxu0 %v5222
      %v5721 = vpop.f32.mrb[0].mxu0
      %v5722 = vadd.f32 0.0, %v5721
      %v5723 = vpop.f32.mrb[0].mxu0
      %v5724 = vpop.f32.mrb[0].mxu0
      %v5725 = vadd.f32 0.0, %v5724
      %v5726 = vpop.f32.mrb[0].mxu0
      %5727 = vmatprep.mubr.bf16.mxu0 0
      %5728 = vmatmul.mubr.bf16.gmra.mrb[0].mxu0 %v5225
      %v5729 = vpop.f32.mrb[0].mxu0
      %v5730 = vadd.f32 0.0, %v5729
      %v5731 = vpop.f32.mrb[0].mxu0
      %v5732 = vpop.f32.mrb[0].mxu0
      %v5733 = vadd.f32 0.0, %v5732
      %v5734 = vpop.f32.mrb[0].mxu0
      %5735 = vdwg.mxu0
      %s5736 = scalar_lea.vmem %s11, 56
      %v5737 = vld [vmem:[%s5736] sm:$0xf]
      %v5738 = vld [vmem:[%s5736 + $0x4] sm:$0xf]
      %v5741 = vunpack.c.l.b16 %v5737
      %v5742 = vunpack.c.l.b16 %v5738
      %v5743 = vpack.c.b16 %v5742, %v5741
      %5745 = vmatprep.subr.bf16.mxu0 0
      %5746 = vmatpush1.bf16.msra.mxu0 %v5743
      %5747 = vmatprep.subr.bf16.mxu0 0
      %5748 = vmatpush1.bf16.msra.mxu0 0
      %5749 = vmatprep.subr.bf16.mxu0 0
      %5750 = vmatpush1.bf16.msra.mxu0 0
      %5751 = vmatprep.subr.bf16.mxu0 0
      %5752 = vmatpush1.bf16.msra.mxu0 0
      %5753 = vmatprep.subr.bf16.mxu0 0
      %5754 = vmatpush1.bf16.msra.mxu0 0
      %5755 = vmatprep.subr.bf16.mxu0 0
      %5756 = vmatpush1.bf16.msra.mxu0 0
      %5757 = vmatprep.subr.bf16.mxu0 0
      %5758 = vmatpush1.bf16.msra.mxu0 0
      %5759 = vmatprep.subr.bf16.mxu0 0
      %5760 = vmatpush1.bf16.msra.mxu0 0
      %5761 = vmatprep.subr.bf16.mxu0 0
      %5762 = vmatpush1.bf16.msra.mxu0 0
      %5763 = vmatprep.subr.bf16.mxu0 0
      %5764 = vmatpush1.bf16.msra.mxu0 0
      %5765 = vmatprep.subr.bf16.mxu0 0
      %5766 = vmatpush1.bf16.msra.mxu0 0
      %5767 = vmatprep.subr.bf16.mxu0 0
      %5768 = vmatpush1.bf16.msra.mxu0 0
      %5769 = vmatprep.subr.bf16.mxu0 0
      %5770 = vmatpush1.bf16.msra.mxu0 0
      %5771 = vmatprep.subr.bf16.mxu0 0
      %5772 = vmatpush1.bf16.msra.mxu0 0
      %5773 = vmatprep.subr.bf16.mxu0 0
      %5774 = vmatpush1.bf16.msra.mxu0 0
      %5775 = vmatprep.subr.bf16.mxu0 0
      %5776 = vmatpush1.bf16.msra.mxu0 0
      %5777 = vmatprep.mubr.bf16.mxu0 0
      %5778 = vmatmul.mubr.bf16.gmra.mrb[0].mxu0 %v5216
      %v5779 = vpop.f32.mrb[0].mxu0
      %v5780 = vadd.f32 0.0, %v5779
      %v5781 = vpop.f32.mrb[0].mxu0
      %v5782 = vpop.f32.mrb[0].mxu0
      %v5783 = vadd.f32 0.0, %v5782
      %v5784 = vpop.f32.mrb[0].mxu0
      %5785 = vmatprep.mubr.bf16.mxu0 0
      %5786 = vmatmul.mubr.bf16.gmra.mrb[0].mxu0 %v5219
      %v5787 = vpop.f32.mrb[0].mxu0
      %v5788 = vadd.f32 0.0, %v5787
      %v5789 = vpop.f32.mrb[0].mxu0
      %v5790 = vpop.f32.mrb[0].mxu0
      %v5791 = vadd.f32 0.0, %v5790
      %v5792 = vpop.f32.mrb[0].mxu0
      %5793 = vmatprep.mubr.bf16.mxu0 0
      %5794 = vmatmul.mubr.bf16.gmra.mrb[0].mxu0 %v5222
      %v5795 = vpop.f32.mrb[0].mxu0
      %v5796 = vadd.f32 0.0, %v5795
      %v5797 = vpop.f32.mrb[0].mxu0
      %v5798 = vpop.f32.mrb[0].mxu0
      %v5799 = vadd.f32 0.0, %v5798
      %v5800 = vpop.f32.mrb[0].mxu0
      %5801 = vmatprep.mubr.bf16.mxu0 0
      %5802 = vmatmul.mubr.bf16.gmra.mrb[0].mxu0 %v5225
      %v5803 = vpop.f32.mrb[0].mxu0
      %v5804 = vadd.f32 0.0, %v5803
      %v5805 = vpop.f32.mrb[0].mxu0
      %v5806 = vpop.f32.mrb[0].mxu0
      %v5807 = vadd.f32 0.0, %v5806
      %v5808 = vpop.f32.mrb[0].mxu0
      %5809 = vdwg.mxu0
      %s5810 = scalar_lea.vmem %s11, 64
      %v5811 = vld [vmem:[%s5810] sm:$0xf]
      %v5812 = vld [vmem:[%s5810 + $0x4] sm:$0xf]
      %v5815 = vunpack.c.l.b16 %v5811
      %v5816 = vunpack.c.l.b16 %v5812
      %v5817 = vpack.c.b16 %v5816, %v5815
      %5819 = vmatprep.subr.bf16.mxu0 0
      %5820 = vmatpush1.bf16.msra.mxu0 %v5817
      %5821 = vmatprep.subr.bf16.mxu0 0
      %5822 = vmatpush1.bf16.msra.mxu0 0
      %5823 = vmatprep.subr.bf16.mxu0 0
      %5824 = vmatpush1.bf16.msra.mxu0 0
      %5825 = vmatprep.subr.bf16.mxu0 0
      %5826 = vmatpush1.bf16.msra.mxu0 0
      %5827 = vmatprep.subr.bf16.mxu0 0
      %5828 = vmatpush1.bf16.msra.mxu0 0
      %5829 = vmatprep.subr.bf16.mxu0 0
      %5830 = vmatpush1.bf16.msra.mxu0 0
      %5831 = vmatprep.subr.bf16.mxu0 0
      %5832 = vmatpush1.bf16.msra.mxu0 0
      %5833 = vmatprep.subr.bf16.mxu0 0
      %5834 = vmatpush1.bf16.msra.mxu0 0
      %5835 = vmatprep.subr.bf16.mxu0 0
      %5836 = vmatpush1.bf16.msra.mxu0 0
      %5837 = vmatprep.subr.bf16.mxu0 0
      %5838 = vmatpush1.bf16.msra.mxu0 0
      %5839 = vmatprep.subr.bf16.mxu0 0
      %5840 = vmatpush1.bf16.msra.mxu0 0
      %5841 = vmatprep.subr.bf16.mxu0 0
      %5842 = vmatpush1.bf16.msra.mxu0 0
      %5843 = vmatprep.subr.bf16.mxu0 0
      %5844 = vmatpush1.bf16.msra.mxu0 0
      %5845 = vmatprep.subr.bf16.mxu0 0
      %5846 = vmatpush1.bf16.msra.mxu0 0
      %5847 = vmatprep.subr.bf16.mxu0 0
      %5848 = vmatpush1.bf16.msra.mxu0 0
      %5849 = vmatprep.subr.bf16.mxu0 0
      %5850 = vmatpush1.bf16.msra.mxu0 0
      %5851 = vmatprep.mubr.bf16.mxu0 0
      %5852 = vmatmul.mubr.bf16.gmra.mrb[0].mxu0 %v5216
      %v5853 = vpop.f32.mrb[0].mxu0
      %v5854 = vadd.f32 0.0, %v5853
      %v5855 = vpop.f32.mrb[0].mxu0
      %v5856 = vpop.f32.mrb[0].mxu0
      %v5857 = vadd.f32 0.0, %v5856
      %v5858 = vpop.f32.mrb[0].mxu0
      %5859 = vmatprep.mubr.bf16.mxu0 0
      %5860 = vmatmul.mubr.bf16.gmra.mrb[0].mxu0 %v5219
      %v5861 = vpop.f32.mrb[0].mxu0
      %v5862 = vadd.f32 0.0, %v5861
      %v5863 = vpop.f32.mrb[0].mxu0
      %v5864 = vpop.f32.mrb[0].mxu0
      %v5865 = vadd.f32 0.0, %v5864
      %v5866 = vpop.f32.mrb[0].mxu0
      %5867 = vmatprep.mubr.bf16.mxu0 0
      %5868 = vmatmul.mubr.bf16.gmra.mrb[0].mxu0 %v5222
      %v5869 = vpop.f32.mrb[0].mxu0
      %v5870 = vadd.f32 0.0, %v5869
      %v5871 = vpop.f32.mrb[0].mxu0
      %v5872 = vpop.f32.mrb[0].mxu0
      %v5873 = vadd.f32 0.0, %v5872
      %v5874 = vpop.f32.mrb[0].mxu0
      %5875 = vmatprep.mubr.bf16.mxu0 0
      %5876 = vmatmul.mubr.bf16.gmra.mrb[0].mxu0 %v5225
      %v5877 = vpop.f32.mrb[0].mxu0
      %v5878 = vadd.f32 0.0, %v5877
      %v5879 = vpop.f32.mrb[0].mxu0
      %v5880 = vpop.f32.mrb[0].mxu0
      %v5881 = vadd.f32 0.0, %v5880
      %v5882 = vpop.f32.mrb[0].mxu0
      %5883 = vdwg.mxu0
      %s5884 = scalar_lea.vmem %s11, 72
      %v5885 = vld [vmem:[%s5884] sm:$0xf]
      %v5886 = vld [vmem:[%s5884 + $0x4] sm:$0xf]
      %v5889 = vunpack.c.l.b16 %v5885
      %v5890 = vunpack.c.l.b16 %v5886
      %v5891 = vpack.c.b16 %v5890, %v5889
      %5893 = vmatprep.subr.bf16.mxu0 0
      %5894 = vmatpush1.bf16.msra.mxu0 %v5891
      %5895 = vmatprep.subr.bf16.mxu0 0
      %5896 = vmatpush1.bf16.msra.mxu0 0
      %5897 = vmatprep.subr.bf16.mxu0 0
      %5898 = vmatpush1.bf16.msra.mxu0 0
      %5899 = vmatprep.subr.bf16.mxu0 0
      %5900 = vmatpush1.bf16.msra.mxu0 0
      %5901 = vmatprep.subr.bf16.mxu0 0
      %5902 = vmatpush1.bf16.msra.mxu0 0
      %5903 = vmatprep.subr.bf16.mxu0 0
      %5904 = vmatpush1.bf16.msra.mxu0 0
      %5905 = vmatprep.subr.bf16.mxu0 0
      %5906 = vmatpush1.bf16.msra.mxu0 0
      %5907 = vmatprep.subr.bf16.mxu0 0
      %5908 = vmatpush1.bf16.msra.mxu0 0
      %5909 = vmatprep.subr.bf16.mxu0 0
      %5910 = vmatpush1.bf16.msra.mxu0 0
      %5911 = vmatprep.subr.bf16.mxu0 0
      %5912 = vmatpush1.bf16.msra.mxu0 0
      %5913 = vmatprep.subr.bf16.mxu0 0
      %5914 = vmatpush1.bf16.msra.mxu0 0
      %5915 = vmatprep.subr.bf16.mxu0 0
      %5916 = vmatpush1.bf16.msra.mxu0 0
      %5917 = vmatprep.subr.bf16.mxu0 0
      %5918 = vmatpush1.bf16.msra.mxu0 0
      %5919 = vmatprep.subr.bf16.mxu0 0
      %5920 = vmatpush1.bf16.msra.mxu0 0
      %5921 = vmatprep.subr.bf16.mxu0 0
      %5922 = vmatpush1.bf16.msra.mxu0 0
      %5923 = vmatprep.subr.bf16.mxu0 0
      %5924 = vmatpush1.bf16.msra.mxu0 0
      %5925 = vmatprep.mubr.bf16.mxu0 0
      %5926 = vmatmul.mubr.bf16.gmra.mrb[0].mxu0 %v5216
      %v5927 = vpop.f32.mrb[0].mxu0
      %v5928 = vadd.f32 0.0, %v5927
      %v5929 = vpop.f32.mrb[0].mxu0
      %v5930 = vpop.f32.mrb[0].mxu0
      %v5931 = vadd.f32 0.0, %v5930
      %v5932 = vpop.f32.mrb[0].mxu0
      %5933 = vmatprep.mubr.bf16.mxu0 0
      %5934 = vmatmul.mubr.bf16.gmra.mrb[0].mxu0 %v5219
      %v5935 = vpop.f32.mrb[0].mxu0
      %v5936 = vadd.f32 0.0, %v5935
      %v5937 = vpop.f32.mrb[0].mxu0
      %v5938 = vpop.f32.mrb[0].mxu0
      %v5939 = vadd.f32 0.0, %v5938
      %v5940 = vpop.f32.mrb[0].mxu0
      %5941 = vmatprep.mubr.bf16.mxu0 0
      %5942 = vmatmul.mubr.bf16.gmra.mrb[0].mxu0 %v5222
      %v5943 = vpop.f32.mrb[0].mxu0
      %v5944 = vadd.f32 0.0, %v5943
      %v5945 = vpop.f32.mrb[0].mxu0
      %v5946 = vpop.f32.mrb[0].mxu0
      %v5947 = vadd.f32 0.0, %v5946
      %v5948 = vpop.f32.mrb[0].mxu0
      %5949 = vmatprep.mubr.bf16.mxu0 0
      %5950 = vmatmul.mubr.bf16.gmra.mrb[0].mxu0 %v5225
      %v5951 = vpop.f32.mrb[0].mxu0
      %v5952 = vadd.f32 0.0, %v5951
      %v5953 = vpop.f32.mrb[0].mxu0
      %v5954 = vpop.f32.mrb[0].mxu0
      %v5955 = vadd.f32 0.0, %v5954
      %v5956 = vpop.f32.mrb[0].mxu0
      %5957 = vdwg.mxu0
      %s5958 = scalar_lea.vmem %s11, 80
      %v5959 = vld [vmem:[%s5958] sm:$0xf]
      %v5960 = vld [vmem:[%s5958 + $0x4] sm:$0xf]
      %v5963 = vunpack.c.l.b16 %v5959
      %v5964 = vunpack.c.l.b16 %v5960
      %v5965 = vpack.c.b16 %v5964, %v5963
      %5967 = vmatprep.subr.bf16.mxu0 0
      %5968 = vmatpush1.bf16.msra.mxu0 %v5965
      %5969 = vmatprep.subr.bf16.mxu0 0
      %5970 = vmatpush1.bf16.msra.mxu0 0
      %5971 = vmatprep.subr.bf16.mxu0 0
      %5972 = vmatpush1.bf16.msra.mxu0 0
      %5973 = vmatprep.subr.bf16.mxu0 0
      %5974 = vmatpush1.bf16.msra.mxu0 0
      %5975 = vmatprep.subr.bf16.mxu0 0
      %5976 = vmatpush1.bf16.msra.mxu0 0
      %5977 = vmatprep.subr.bf16.mxu0 0
      %5978 = vmatpush1.bf16.msra.mxu0 0
      %5979 = vmatprep.subr.bf16.mxu0 0
      %5980 = vmatpush1.bf16.msra.mxu0 0
      %5981 = vmatprep.subr.bf16.mxu0 0
      %5982 = vmatpush1.bf16.msra.mxu0 0
      %5983 = vmatprep.subr.bf16.mxu0 0
      %5984 = vmatpush1.bf16.msra.mxu0 0
      %5985 = vmatprep.subr.bf16.mxu0 0
      %5986 = vmatpush1.bf16.msra.mxu0 0
      %5987 = vmatprep.subr.bf16.mxu0 0
      %5988 = vmatpush1.bf16.msra.mxu0 0
      %5989 = vmatprep.subr.bf16.mxu0 0
      %5990 = vmatpush1.bf16.msra.mxu0 0
      %5991 = vmatprep.subr.bf16.mxu0 0
      %5992 = vmatpush1.bf16.msra.mxu0 0
      %5993 = vmatprep.subr.bf16.mxu0 0
      %5994 = vmatpush1.bf16.msra.mxu0 0
      %5995 = vmatprep.subr.bf16.mxu0 0
      %5996 = vmatpush1.bf16.msra.mxu0 0
      %5997 = vmatprep.subr.bf16.mxu0 0
      %5998 = vmatpush1.bf16.msra.mxu0 0
      %5999 = vmatprep.mubr.bf16.mxu0 0
      %6000 = vmatmul.mubr.bf16.gmra.mrb[0].mxu0 %v5216
      %v6001 = vpop.f32.mrb[0].mxu0
      %v6002 = vadd.f32 0.0, %v6001
      %v6003 = vpop.f32.mrb[0].mxu0
      %v6004 = vpop.f32.mrb[0].mxu0
      %v6005 = vadd.f32 0.0, %v6004
      %v6006 = vpop.f32.mrb[0].mxu0
      %6007 = vmatprep.mubr.bf16.mxu0 0
      %6008 = vmatmul.mubr.bf16.gmra.mrb[0].mxu0 %v5219
      %v6009 = vpop.f32.mrb[0].mxu0
      %v6010 = vadd.f32 0.0, %v6009
      %v6011 = vpop.f32.mrb[0].mxu0
      %v6012 = vpop.f32.mrb[0].mxu0
      %v6013 = vadd.f32 0.0, %v6012
      %v6014 = vpop.f32.mrb[0].mxu0
      %6015 = vmatprep.mubr.bf16.mxu0 0
      %6016 = vmatmul.mubr.bf16.gmra.mrb[0].mxu0 %v5222
      %v6017 = vpop.f32.mrb[0].mxu0
      %v6018 = vadd.f32 0.0, %v6017
      %v6019 = vpop.f32.mrb[0].mxu0
      %v6020 = vpop.f32.mrb[0].mxu0
      %v6021 = vadd.f32 0.0, %v6020
      %v6022 = vpop.f32.mrb[0].mxu0
      %6023 = vmatprep.mubr.bf16.mxu0 0
      %6024 = vmatmul.mubr.bf16.gmra.mrb[0].mxu0 %v5225
      %v6025 = vpop.f32.mrb[0].mxu0
      %v6026 = vadd.f32 0.0, %v6025
      %v6027 = vpop.f32.mrb[0].mxu0
      %v6028 = vpop.f32.mrb[0].mxu0
      %v6029 = vadd.f32 0.0, %v6028
      %v6030 = vpop.f32.mrb[0].mxu0
      %6031 = vdwg.mxu0
      %s6032 = scalar_lea.vmem %s11, 88
      %v6033 = vld [vmem:[%s6032] sm:$0xf]
      %v6034 = vld [vmem:[%s6032 + $0x4] sm:$0xf]
      %v6037 = vunpack.c.l.b16 %v6033
      %v6038 = vunpack.c.l.b16 %v6034
      %v6039 = vpack.c.b16 %v6038, %v6037
      %6041 = vmatprep.subr.bf16.mxu0 0
      %6042 = vmatpush1.bf16.msra.mxu0 %v6039
      %6043 = vmatprep.subr.bf16.mxu0 0
      %6044 = vmatpush1.bf16.msra.mxu0 0
      %6045 = vmatprep.subr.bf16.mxu0 0
      %6046 = vmatpush1.bf16.msra.mxu0 0
      %6047 = vmatprep.subr.bf16.mxu0 0
      %6048 = vmatpush1.bf16.msra.mxu0 0
      %6049 = vmatprep.subr.bf16.mxu0 0
      %6050 = vmatpush1.bf16.msra.mxu0 0
      %6051 = vmatprep.subr.bf16.mxu0 0
      %6052 = vmatpush1.bf16.msra.mxu0 0
      %6053 = vmatprep.subr.bf16.mxu0 0
      %6054 = vmatpush1.bf16.msra.mxu0 0
      %6055 = vmatprep.subr.bf16.mxu0 0
      %6056 = vmatpush1.bf16.msra.mxu0 0
      %6057 = vmatprep.subr.bf16.mxu0 0
      %6058 = vmatpush1.bf16.msra.mxu0 0
      %6059 = vmatprep.subr.bf16.mxu0 0
      %6060 = vmatpush1.bf16.msra.mxu0 0
      %6061 = vmatprep.subr.bf16.mxu0 0
      %6062 = vmatpush1.bf16.msra.mxu0 0
      %6063 = vmatprep.subr.bf16.mxu0 0
      %6064 = vmatpush1.bf16.msra.mxu0 0
      %6065 = vmatprep.subr.bf16.mxu0 0
      %6066 = vmatpush1.bf16.msra.mxu0 0
      %6067 = vmatprep.subr.bf16.mxu0 0
      %6068 = vmatpush1.bf16.msra.mxu0 0
      %6069 = vmatprep.subr.bf16.mxu0 0
      %6070 = vmatpush1.bf16.msra.mxu0 0
      %6071 = vmatprep.subr.bf16.mxu0 0
      %6072 = vmatpush1.bf16.msra.mxu0 0
      %6073 = vmatprep.mubr.bf16.mxu0 0
      %6074 = vmatmul.mubr.bf16.gmra.mrb[0].mxu0 %v5216
      %v6075 = vpop.f32.mrb[0].mxu0
      %v6076 = vadd.f32 0.0, %v6075
      %v6077 = vpop.f32.mrb[0].mxu0
      %v6078 = vpop.f32.mrb[0].mxu0
      %v6079 = vadd.f32 0.0, %v6078
      %v6080 = vpop.f32.mrb[0].mxu0
      %6081 = vmatprep.mubr.bf16.mxu0 0
      %6082 = vmatmul.mubr.bf16.gmra.mrb[0].mxu0 %v5219
      %v6083 = vpop.f32.mrb[0].mxu0
      %v6084 = vadd.f32 0.0, %v6083
      %v6085 = vpop.f32.mrb[0].mxu0
      %v6086 = vpop.f32.mrb[0].mxu0
      %v6087 = vadd.f32 0.0, %v6086
      %v6088 = vpop.f32.mrb[0].mxu0
      %6089 = vmatprep.mubr.bf16.mxu0 0
      %6090 = vmatmul.mubr.bf16.gmra.mrb[0].mxu0 %v5222
      %v6091 = vpop.f32.mrb[0].mxu0
      %v6092 = vadd.f32 0.0, %v6091
      %v6093 = vpop.f32.mrb[0].mxu0
      %v6094 = vpop.f32.mrb[0].mxu0
      %v6095 = vadd.f32 0.0, %v6094
      %v6096 = vpop.f32.mrb[0].mxu0
      %6097 = vmatprep.mubr.bf16.mxu0 0
      %6098 = vmatmul.mubr.bf16.gmra.mrb[0].mxu0 %v5225
      %v6099 = vpop.f32.mrb[0].mxu0
      %v6100 = vadd.f32 0.0, %v6099
      %v6101 = vpop.f32.mrb[0].mxu0
      %v6102 = vpop.f32.mrb[0].mxu0
      %v6103 = vadd.f32 0.0, %v6102
      %v6104 = vpop.f32.mrb[0].mxu0
      %6105 = vdwg.mxu0
      %s6106 = scalar_lea.vmem %s11, 96
      %v6107 = vld [vmem:[%s6106] sm:$0xf]
      %v6108 = vld [vmem:[%s6106 + $0x4] sm:$0xf]
      %v6111 = vunpack.c.l.b16 %v6107
      %v6112 = vunpack.c.l.b16 %v6108
      %v6113 = vpack.c.b16 %v6112, %v6111
      %6115 = vmatprep.subr.bf16.mxu0 0
      %6116 = vmatpush1.bf16.msra.mxu0 %v6113
      %6117 = vmatprep.subr.bf16.mxu0 0
      %6118 = vmatpush1.bf16.msra.mxu0 0
      %6119 = vmatprep.subr.bf16.mxu0 0
      %6120 = vmatpush1.bf16.msra.mxu0 0
      %6121 = vmatprep.subr.bf16.mxu0 0
      %6122 = vmatpush1.bf16.msra.mxu0 0
      %6123 = vmatprep.subr.bf16.mxu0 0
      %6124 = vmatpush1.bf16.msra.mxu0 0
      %6125 = vmatprep.subr.bf16.mxu0 0
      %6126 = vmatpush1.bf16.msra.mxu0 0
      %6127 = vmatprep.subr.bf16.mxu0 0
      %6128 = vmatpush1.bf16.msra.mxu0 0
      %6129 = vmatprep.subr.bf16.mxu0 0
      %6130 = vmatpush1.bf16.msra.mxu0 0
      %6131 = vmatprep.subr.bf16.mxu0 0
      %6132 = vmatpush1.bf16.msra.mxu0 0
      %6133 = vmatprep.subr.bf16.mxu0 0
      %6134 = vmatpush1.bf16.msra.mxu0 0
      %6135 = vmatprep.subr.bf16.mxu0 0
      %6136 = vmatpush1.bf16.msra.mxu0 0
      %6137 = vmatprep.subr.bf16.mxu0 0
      %6138 = vmatpush1.bf16.msra.mxu0 0
      %6139 = vmatprep.subr.bf16.mxu0 0
      %6140 = vmatpush1.bf16.msra.mxu0 0
      %6141 = vmatprep.subr.bf16.mxu0 0
      %6142 = vmatpush1.bf16.msra.mxu0 0
      %6143 = vmatprep.subr.bf16.mxu0 0
      %6144 = vmatpush1.bf16.msra.mxu0 0
      %6145 = vmatprep.subr.bf16.mxu0 0
      %6146 = vmatpush1.bf16.msra.mxu0 0
      %6147 = vmatprep.mubr.bf16.mxu0 0
      %6148 = vmatmul.mubr.bf16.gmra.mrb[0].mxu0 %v5216
      %v6149 = vpop.f32.mrb[0].mxu0
      %v6150 = vadd.f32 0.0, %v6149
      %v6151 = vpop.f32.mrb[0].mxu0
      %v6152 = vpop.f32.mrb[0].mxu0
      %v6153 = vadd.f32 0.0, %v6152
      %v6154 = vpop.f32.mrb[0].mxu0
      %6155 = vmatprep.mubr.bf16.mxu0 0
      %6156 = vmatmul.mubr.bf16.gmra.mrb[0].mxu0 %v5219
      %v6157 = vpop.f32.mrb[0].mxu0
      %v6158 = vadd.f32 0.0, %v6157
      %v6159 = vpop.f32.mrb[0].mxu0
      %v6160 = vpop.f32.mrb[0].mxu0
      %v6161 = vadd.f32 0.0, %v6160
      %v6162 = vpop.f32.mrb[0].mxu0
      %6163 = vmatprep.mubr.bf16.mxu0 0
      %6164 = vmatmul.mubr.bf16.gmra.mrb[0].mxu0 %v5222
      %v6165 = vpop.f32.mrb[0].mxu0
      %v6166 = vadd.f32 0.0, %v6165
      %v6167 = vpop.f32.mrb[0].mxu0
      %v6168 = vpop.f32.mrb[0].mxu0
      %v6169 = vadd.f32 0.0, %v6168
      %v6170 = vpop.f32.mrb[0].mxu0
      %6171 = vmatprep.mubr.bf16.mxu0 0
      %6172 = vmatmul.mubr.bf16.gmra.mrb[0].mxu0 %v5225
      %v6173 = vpop.f32.mrb[0].mxu0
      %v6174 = vadd.f32 0.0, %v6173
      %v6175 = vpop.f32.mrb[0].mxu0
      %v6176 = vpop.f32.mrb[0].mxu0
      %v6177 = vadd.f32 0.0, %v6176
      %v6178 = vpop.f32.mrb[0].mxu0
      %6179 = vdwg.mxu0
      %s6180 = scalar_lea.vmem %s11, 104
      %v6181 = vld [vmem:[%s6180] sm:$0xf]
      %v6182 = vld [vmem:[%s6180 + $0x4] sm:$0xf]
      %v6185 = vunpack.c.l.b16 %v6181
      %v6186 = vunpack.c.l.b16 %v6182
      %v6187 = vpack.c.b16 %v6186, %v6185
      %6189 = vmatprep.subr.bf16.mxu0 0
      %6190 = vmatpush1.bf16.msra.mxu0 %v6187
      %6191 = vmatprep.subr.bf16.mxu0 0
      %6192 = vmatpush1.bf16.msra.mxu0 0
      %6193 = vmatprep.subr.bf16.mxu0 0
      %6194 = vmatpush1.bf16.msra.mxu0 0
      %6195 = vmatprep.subr.bf16.mxu0 0
      %6196 = vmatpush1.bf16.msra.mxu0 0
      %6197 = vmatprep.subr.bf16.mxu0 0
      %6198 = vmatpush1.bf16.msra.mxu0 0
      %6199 = vmatprep.subr.bf16.mxu0 0
      %6200 = vmatpush1.bf16.msra.mxu0 0
      %6201 = vmatprep.subr.bf16.mxu0 0
      %6202 = vmatpush1.bf16.msra.mxu0 0
      %6203 = vmatprep.subr.bf16.mxu0 0
      %6204 = vmatpush1.bf16.msra.mxu0 0
      %6205 = vmatprep.subr.bf16.mxu0 0
      %6206 = vmatpush1.bf16.msra.mxu0 0
      %6207 = vmatprep.subr.bf16.mxu0 0
      %6208 = vmatpush1.bf16.msra.mxu0 0
      %6209 = vmatprep.subr.bf16.mxu0 0
      %6210 = vmatpush1.bf16.msra.mxu0 0
      %6211 = vmatprep.subr.bf16.mxu0 0
      %6212 = vmatpush1.bf16.msra.mxu0 0
      %6213 = vmatprep.subr.bf16.mxu0 0
      %6214 = vmatpush1.bf16.msra.mxu0 0
      %6215 = vmatprep.subr.bf16.mxu0 0
      %6216 = vmatpush1.bf16.msra.mxu0 0
      %6217 = vmatprep.subr.bf16.mxu0 0
      %6218 = vmatpush1.bf16.msra.mxu0 0
      %6219 = vmatprep.subr.bf16.mxu0 0
      %6220 = vmatpush1.bf16.msra.mxu0 0
      %6221 = vmatprep.mubr.bf16.mxu0 0
      %6222 = vmatmul.mubr.bf16.gmra.mrb[0].mxu0 %v5216
      %v6223 = vpop.f32.mrb[0].mxu0
      %v6224 = vadd.f32 0.0, %v6223
      %v6225 = vpop.f32.mrb[0].mxu0
      %v6226 = vpop.f32.mrb[0].mxu0
      %v6227 = vadd.f32 0.0, %v6226
      %v6228 = vpop.f32.mrb[0].mxu0
      %6229 = vmatprep.mubr.bf16.mxu0 0
      %6230 = vmatmul.mubr.bf16.gmra.mrb[0].mxu0 %v5219
      %v6231 = vpop.f32.mrb[0].mxu0
      %v6232 = vadd.f32 0.0, %v6231
      %v6233 = vpop.f32.mrb[0].mxu0
      %v6234 = vpop.f32.mrb[0].mxu0
      %v6235 = vadd.f32 0.0, %v6234
      %v6236 = vpop.f32.mrb[0].mxu0
      %6237 = vmatprep.mubr.bf16.mxu0 0
      %6238 = vmatmul.mubr.bf16.gmra.mrb[0].mxu0 %v5222
      %v6239 = vpop.f32.mrb[0].mxu0
      %v6240 = vadd.f32 0.0, %v6239
      %v6241 = vpop.f32.mrb[0].mxu0
      %v6242 = vpop.f32.mrb[0].mxu0
      %v6243 = vadd.f32 0.0, %v6242
      %v6244 = vpop.f32.mrb[0].mxu0
      %6245 = vmatprep.mubr.bf16.mxu0 0
      %6246 = vmatmul.mubr.bf16.gmra.mrb[0].mxu0 %v5225
      %v6247 = vpop.f32.mrb[0].mxu0
      %v6248 = vadd.f32 0.0, %v6247
      %v6249 = vpop.f32.mrb[0].mxu0
      %v6250 = vpop.f32.mrb[0].mxu0
      %v6251 = vadd.f32 0.0, %v6250
      %v6252 = vpop.f32.mrb[0].mxu0
      %6253 = vdwg.mxu0
      %s6254 = scalar_lea.vmem %s11, 112
      %v6255 = vld [vmem:[%s6254] sm:$0xf]
      %v6256 = vld [vmem:[%s6254 + $0x4] sm:$0xf]
      %v6259 = vunpack.c.l.b16 %v6255
      %v6260 = vunpack.c.l.b16 %v6256
      %v6261 = vpack.c.b16 %v6260, %v6259
      %6263 = vmatprep.subr.bf16.mxu0 0
      %6264 = vmatpush1.bf16.msra.mxu0 %v6261
      %6265 = vmatprep.subr.bf16.mxu0 0
      %6266 = vmatpush1.bf16.msra.mxu0 0
      %6267 = vmatprep.subr.bf16.mxu0 0
      %6268 = vmatpush1.bf16.msra.mxu0 0
      %6269 = vmatprep.subr.bf16.mxu0 0
      %6270 = vmatpush1.bf16.msra.mxu0 0
      %6271 = vmatprep.subr.bf16.mxu0 0
      %6272 = vmatpush1.bf16.msra.mxu0 0
      %6273 = vmatprep.subr.bf16.mxu0 0
      %6274 = vmatpush1.bf16.msra.mxu0 0
      %6275 = vmatprep.subr.bf16.mxu0 0
      %6276 = vmatpush1.bf16.msra.mxu0 0
      %6277 = vmatprep.subr.bf16.mxu0 0
      %6278 = vmatpush1.bf16.msra.mxu0 0
      %6279 = vmatprep.subr.bf16.mxu0 0
      %6280 = vmatpush1.bf16.msra.mxu0 0
      %6281 = vmatprep.subr.bf16.mxu0 0
      %6282 = vmatpush1.bf16.msra.mxu0 0
      %6283 = vmatprep.subr.bf16.mxu0 0
      %6284 = vmatpush1.bf16.msra.mxu0 0
      %6285 = vmatprep.subr.bf16.mxu0 0
      %6286 = vmatpush1.bf16.msra.mxu0 0
      %6287 = vmatprep.subr.bf16.mxu0 0
      %6288 = vmatpush1.bf16.msra.mxu0 0
      %6289 = vmatprep.subr.bf16.mxu0 0
      %6290 = vmatpush1.bf16.msra.mxu0 0
      %6291 = vmatprep.subr.bf16.mxu0 0
      %6292 = vmatpush1.bf16.msra.mxu0 0
      %6293 = vmatprep.subr.bf16.mxu0 0
      %6294 = vmatpush1.bf16.msra.mxu0 0
      %6295 = vmatprep.mubr.bf16.mxu0 0
      %6296 = vmatmul.mubr.bf16.gmra.mrb[0].mxu0 %v5216
      %v6297 = vpop.f32.mrb[0].mxu0
      %v6298 = vadd.f32 0.0, %v6297
      %v6299 = vpop.f32.mrb[0].mxu0
      %v6300 = vpop.f32.mrb[0].mxu0
      %v6301 = vadd.f32 0.0, %v6300
      %v6302 = vpop.f32.mrb[0].mxu0
      %6303 = vmatprep.mubr.bf16.mxu0 0
      %6304 = vmatmul.mubr.bf16.gmra.mrb[0].mxu0 %v5219
      %v6305 = vpop.f32.mrb[0].mxu0
      %v6306 = vadd.f32 0.0, %v6305
      %v6307 = vpop.f32.mrb[0].mxu0
      %v6308 = vpop.f32.mrb[0].mxu0
      %v6309 = vadd.f32 0.0, %v6308
      %v6310 = vpop.f32.mrb[0].mxu0
      %6311 = vmatprep.mubr.bf16.mxu0 0
      %6312 = vmatmul.mubr.bf16.gmra.mrb[0].mxu0 %v5222
      %v6313 = vpop.f32.mrb[0].mxu0
      %v6314 = vadd.f32 0.0, %v6313
      %v6315 = vpop.f32.mrb[0].mxu0
      %v6316 = vpop.f32.mrb[0].mxu0
      %v6317 = vadd.f32 0.0, %v6316
      %v6318 = vpop.f32.mrb[0].mxu0
      %6319 = vmatprep.mubr.bf16.mxu0 0
      %6320 = vmatmul.mubr.bf16.gmra.mrb[0].mxu0 %v5225
      %v6321 = vpop.f32.mrb[0].mxu0
      %v6322 = vadd.f32 0.0, %v6321
      %v6323 = vpop.f32.mrb[0].mxu0
      %v6324 = vpop.f32.mrb[0].mxu0
      %v6325 = vadd.f32 0.0, %v6324
      %v6326 = vpop.f32.mrb[0].mxu0
      %6327 = vdwg.mxu0
      %s6328 = scalar_lea.vmem %s11, 120
      %v6329 = vld [vmem:[%s6328] sm:$0xf]
      %v6330 = vld [vmem:[%s6328 + $0x4] sm:$0xf]
      %v6333 = vunpack.c.l.b16 %v6329
      %v6334 = vunpack.c.l.b16 %v6330
      %v6335 = vpack.c.b16 %v6334, %v6333
      %6337 = vmatprep.subr.bf16.mxu0 0
      %6338 = vmatpush1.bf16.msra.mxu0 %v6335
      %6339 = vmatprep.subr.bf16.mxu0 0
      %6340 = vmatpush1.bf16.msra.mxu0 0
      %6341 = vmatprep.subr.bf16.mxu0 0
      %6342 = vmatpush1.bf16.msra.mxu0 0
      %6343 = vmatprep.subr.bf16.mxu0 0
      %6344 = vmatpush1.bf16.msra.mxu0 0
      %6345 = vmatprep.subr.bf16.mxu0 0
      %6346 = vmatpush1.bf16.msra.mxu0 0
      %6347 = vmatprep.subr.bf16.mxu0 0
      %6348 = vmatpush1.bf16.msra.mxu0 0
      %6349 = vmatprep.subr.bf16.mxu0 0
      %6350 = vmatpush1.bf16.msra.mxu0 0
      %6351 = vmatprep.subr.bf16.mxu0 0
      %6352 = vmatpush1.bf16.msra.mxu0 0
      %6353 = vmatprep.subr.bf16.mxu0 0
      %6354 = vmatpush1.bf16.msra.mxu0 0
      %6355 = vmatprep.subr.bf16.mxu0 0
      %6356 = vmatpush1.bf16.msra.mxu0 0
      %6357 = vmatprep.subr.bf16.mxu0 0
      %6358 = vmatpush1.bf16.msra.mxu0 0
      %6359 = vmatprep.subr.bf16.mxu0 0
      %6360 = vmatpush1.bf16.msra.mxu0 0
      %6361 = vmatprep.subr.bf16.mxu0 0
      %6362 = vmatpush1.bf16.msra.mxu0 0
      %6363 = vmatprep.subr.bf16.mxu0 0
      %6364 = vmatpush1.bf16.msra.mxu0 0
      %6365 = vmatprep.subr.bf16.mxu0 0
      %6366 = vmatpush1.bf16.msra.mxu0 0
      %6367 = vmatprep.subr.bf16.mxu0 0
      %6368 = vmatpush1.bf16.msra.mxu0 0
      %6369 = vmatprep.mubr.bf16.mxu0 0
      %6370 = vmatmul.mubr.bf16.gmra.mrb[0].mxu0 %v5216
      %v6371 = vpop.f32.mrb[0].mxu0
      %v6372 = vadd.f32 0.0, %v6371
      %v6373 = vpop.f32.mrb[0].mxu0
      %v6374 = vpop.f32.mrb[0].mxu0
      %v6375 = vadd.f32 0.0, %v6374
      %v6376 = vpop.f32.mrb[0].mxu0
      %6377 = vmatprep.mubr.bf16.mxu0 0
      %6378 = vmatmul.mubr.bf16.gmra.mrb[0].mxu0 %v5219
      %v6379 = vpop.f32.mrb[0].mxu0
      %v6380 = vadd.f32 0.0, %v6379
      %v6381 = vpop.f32.mrb[0].mxu0
      %v6382 = vpop.f32.mrb[0].mxu0
      %v6383 = vadd.f32 0.0, %v6382
      %v6384 = vpop.f32.mrb[0].mxu0
      %6385 = vmatprep.mubr.bf16.mxu0 0
      %6386 = vmatmul.mubr.bf16.gmra.mrb[0].mxu0 %v5222
      %v6387 = vpop.f32.mrb[0].mxu0
      %v6388 = vadd.f32 0.0, %v6387
      %v6389 = vpop.f32.mrb[0].mxu0
      %v6390 = vpop.f32.mrb[0].mxu0
      %v6391 = vadd.f32 0.0, %v6390
      %v6392 = vpop.f32.mrb[0].mxu0
      %6393 = vmatprep.mubr.bf16.mxu0 0
      %6394 = vmatmul.mubr.bf16.gmra.mrb[0].mxu0 %v5225
      %v6395 = vpop.f32.mrb[0].mxu0
      %v6396 = vadd.f32 0.0, %v6395
      %v6397 = vpop.f32.mrb[0].mxu0
      %v6398 = vpop.f32.mrb[0].mxu0
      %v6399 = vadd.f32 0.0, %v6398
      %v6400 = vpop.f32.mrb[0].mxu0
      %6401 = vdwg.mxu0
      %v6402 = vld [vmem:[%s9] sm:$0xff]
      %v6403 = vld [vmem:[%s9 + $0x8] sm:$0xff]
      %v6404 = vld [vmem:[%s9 + $0x10] sm:$0xff]
      %v6405 = vld [vmem:[%s9 + $0x18] sm:$0xff]
      %v6406 = vld [vmem:[%s9 + $0x20] sm:$0xff]
      %v6407 = vld [vmem:[%s9 + $0x28] sm:$0xff]
      %v6408 = vld [vmem:[%s9 + $0x30] sm:$0xff]
      %v6409 = vld [vmem:[%s9 + $0x38] sm:$0xff]
      %v6410 = vld [vmem:[%s9 + $0x40] sm:$0xff]
      %v6411 = vld [vmem:[%s9 + $0x48] sm:$0xff]
      %v6412 = vld [vmem:[%s9 + $0x50] sm:$0xff]
      %v6413 = vld [vmem:[%s9 + $0x58] sm:$0xff]
      %v6414 = vld [vmem:[%s9 + $0x60] sm:$0xff]
      %v6415 = vld [vmem:[%s9 + $0x68] sm:$0xff]
      %v6416 = vld [vmem:[%s9 + $0x70] sm:$0xff]
      %v6417 = vld [vmem:[%s9 + $0x78] sm:$0xff]
      %v6418 = vld [vmem:[%s10] sm:$0xff]
      %v6419 = vld [vmem:[%s10 + $0x8] sm:$0xff]
      %v6420 = vld [vmem:[%s10 + $0x10] sm:$0xff]
      %v6421 = vld [vmem:[%s10 + $0x18] sm:$0xff]
      %v6422 = vld [vmem:[%s10 + $0x20] sm:$0xff]
      %v6423 = vld [vmem:[%s10 + $0x28] sm:$0xff]
      %v6424 = vld [vmem:[%s10 + $0x30] sm:$0xff]
      %v6425 = vld [vmem:[%s10 + $0x38] sm:$0xff]
      %v6426 = vpack.c.bf16 %v5265, %v5262
      %v6427 = vpack.c.bf16 %v5273, %v5270
      %v6428 = vpack.c.bf16 %v5339, %v5336
      %v6429 = vpack.c.bf16 %v5347, %v5344
      %v6430 = vpack.c.bf16 %v5413, %v5410
      %v6431 = vpack.c.bf16 %v5421, %v5418
      %v6432 = vpack.c.bf16 %v5487, %v5484
      %v6433 = vpack.c.bf16 %v5495, %v5492
      %v6434 = vpack.c.bf16 %v5561, %v5558
      %v6435 = vpack.c.bf16 %v5569, %v5566
      %v6436 = vpack.c.bf16 %v5635, %v5632
      %v6437 = vpack.c.bf16 %v5643, %v5640
      %v6438 = vpack.c.bf16 %v5709, %v5706
      %v6439 = vpack.c.bf16 %v5717, %v5714
      %v6440 = vpack.c.bf16 %v5783, %v5780
      %v6441 = vpack.c.bf16 %v5791, %v5788
      %v6442 = vpack.c.bf16 %v5857, %v5854
      %v6443 = vpack.c.bf16 %v5865, %v5862
      %v6444 = vpack.c.bf16 %v5931, %v5928
      %v6445 = vpack.c.bf16 %v5939, %v5936
      %v6446 = vpack.c.bf16 %v6005, %v6002
      %v6447 = vpack.c.bf16 %v6013, %v6010
      %v6448 = vpack.c.bf16 %v6079, %v6076
      %v6449 = vpack.c.bf16 %v6087, %v6084
      %v6450 = vpack.c.bf16 %v6153, %v6150
      %v6451 = vpack.c.bf16 %v6161, %v6158
      %v6452 = vpack.c.bf16 %v6227, %v6224
      %v6453 = vpack.c.bf16 %v6235, %v6232
      %v6454 = vpack.c.bf16 %v6301, %v6298
      %v6455 = vpack.c.bf16 %v6309, %v6306
      %v6456 = vpack.c.bf16 %v6375, %v6372
      %v6457 = vpack.c.bf16 %v6383, %v6380
      %6459 = vset.pattern.permute.xlu0 0
      %6460 = vperm.xlu0 %6459, %v6418
      %v6461 = vpop.permute.xlu0 %6460
      %6464 = vset.pattern.permute.xlu0 0
      %6465 = vperm.xlu0 %6464, %v6419
      %v6466 = vpop.permute.xlu0 %6465
      %6469 = vset.pattern.permute.xlu0 0
      %6470 = vperm.xlu0 %6469, %v6420
      %v6471 = vpop.permute.xlu0 %6470
      %6474 = vset.pattern.permute.xlu0 0
      %6475 = vperm.xlu0 %6474, %v6421
      %v6476 = vpop.permute.xlu0 %6475
      %6479 = vset.pattern.permute.xlu0 0
      %6480 = vperm.xlu0 %6479, %v6422
      %v6481 = vpop.permute.xlu0 %6480
      %6484 = vset.pattern.permute.xlu0 0
      %6485 = vperm.xlu0 %6484, %v6423
      %v6486 = vpop.permute.xlu0 %6485
      %6489 = vset.pattern.permute.xlu0 0
      %6490 = vperm.xlu0 %6489, %v6424
      %v6491 = vpop.permute.xlu0 %6490
      %6494 = vset.pattern.permute.xlu0 0
      %6495 = vperm.xlu0 %6494, %v6425
      %v6496 = vpop.permute.xlu0 %6495
      %v6514 = vunpack.c.l.b16 %v6402
      %v6515 = vunpack.c.h.b16 %v6402
      %v6516 = vunpack.c.l.b16 %v6403
      %v6517 = vunpack.c.h.b16 %v6403
      %v6518 = vunpack.c.l.b16 %v6404
      %v6519 = vunpack.c.h.b16 %v6404
      %v6520 = vunpack.c.l.b16 %v6405
      %v6521 = vunpack.c.h.b16 %v6405
      %v6522 = vunpack.c.l.b16 %v6406
      %v6523 = vunpack.c.h.b16 %v6406
      %v6524 = vunpack.c.l.b16 %v6407
      %v6525 = vunpack.c.h.b16 %v6407
      %v6526 = vunpack.c.l.b16 %v6408
      %v6527 = vunpack.c.h.b16 %v6408
      %v6528 = vunpack.c.l.b16 %v6409
      %v6529 = vunpack.c.h.b16 %v6409
      %v6530 = vunpack.c.l.b16 %v6410
      %v6531 = vunpack.c.h.b16 %v6410
      %v6532 = vunpack.c.l.b16 %v6411
      %v6533 = vunpack.c.h.b16 %v6411
      %v6534 = vunpack.c.l.b16 %v6412
      %v6535 = vunpack.c.h.b16 %v6412
      %v6536 = vunpack.c.l.b16 %v6413
      %v6537 = vunpack.c.h.b16 %v6413
      %v6538 = vunpack.c.l.b16 %v6414
      %v6539 = vunpack.c.h.b16 %v6414
      %v6540 = vunpack.c.l.b16 %v6415
      %v6541 = vunpack.c.h.b16 %v6415
      %v6542 = vunpack.c.l.b16 %v6416
      %v6543 = vunpack.c.h.b16 %v6416
      %v6544 = vunpack.c.l.b16 %v6417
      %v6545 = vunpack.c.h.b16 %v6417
      %v6546 = vpack.c.b16 %v6518, %v6514
      %v6547 = vpack.c.b16 %v6519, %v6515
      %v6548 = vpack.c.b16 %v6520, %v6516
      %v6549 = vpack.c.b16 %v6521, %v6517
      %v6550 = vpack.c.b16 %v6526, %v6522
      %v6551 = vpack.c.b16 %v6527, %v6523
      %v6552 = vpack.c.b16 %v6528, %v6524
      %v6553 = vpack.c.b16 %v6529, %v6525
      %v6554 = vpack.c.b16 %v6534, %v6530
      %v6555 = vpack.c.b16 %v6535, %v6531
      %v6556 = vpack.c.b16 %v6536, %v6532
      %v6557 = vpack.c.b16 %v6537, %v6533
      %v6558 = vpack.c.b16 %v6542, %v6538
      %v6559 = vpack.c.b16 %v6543, %v6539
      %v6560 = vpack.c.b16 %v6544, %v6540
      %v6561 = vpack.c.b16 %v6545, %v6541
      %6578 = vmatprep.subr.bf16.mxu0 0
      %6579 = vmatpush1.bf16.msra.mxu0 %v6426
      %6580 = vmatprep.subr.bf16.mxu0 0
      %6581 = vmatpush1.bf16.msra.mxu0 %v6427
      %6582 = vmatprep.subr.bf16.mxu0 0
      %6583 = vmatpush1.bf16.msra.mxu0 %v6428
      %6584 = vmatprep.subr.bf16.mxu0 0
      %6585 = vmatpush1.bf16.msra.mxu0 %v6429
      %6586 = vmatprep.subr.bf16.mxu0 0
      %6587 = vmatpush1.bf16.msra.mxu0 %v6430
      %6588 = vmatprep.subr.bf16.mxu0 0
      %6589 = vmatpush1.bf16.msra.mxu0 %v6431
      %6590 = vmatprep.subr.bf16.mxu0 0
      %6591 = vmatpush1.bf16.msra.mxu0 %v6432
      %6592 = vmatprep.subr.bf16.mxu0 0
      %6593 = vmatpush1.bf16.msra.mxu0 %v6433
      %6594 = vmatprep.subr.bf16.mxu0 0
      %6595 = vmatpush1.bf16.msra.mxu0 %v6434
      %6596 = vmatprep.subr.bf16.mxu0 0
      %6597 = vmatpush1.bf16.msra.mxu0 %v6435
      %6598 = vmatprep.subr.bf16.mxu0 0
      %6599 = vmatpush1.bf16.msra.mxu0 %v6436
      %6600 = vmatprep.subr.bf16.mxu0 0
      %6601 = vmatpush1.bf16.msra.mxu0 %v6437
      %6602 = vmatprep.subr.bf16.mxu0 0
      %6603 = vmatpush1.bf16.msra.mxu0 %v6438
      %6604 = vmatprep.subr.bf16.mxu0 0
      %6605 = vmatpush1.bf16.msra.mxu0 %v6439
      %6606 = vmatprep.subr.bf16.mxu0 0
      %6607 = vmatpush1.bf16.msra.mxu0 %v6440
      %6608 = vmatprep.subr.bf16.mxu0 0
      %6609 = vmatpush1.bf16.msra.mxu0 %v6441
      %6610 = vmatprep.mubr.bf16.mxu0 %v6547
      %6611 = vmatmul.mubr.bf16.gmra.mrb[0].mxu0 %v6546
      %v6612 = vpop.f32.mrb[0].mxu0
      %v6613 = vadd.f32 %v6461, %v6612
      %v6614 = vpop.f32.mrb[0].mxu0
      %v6615 = vpop.f32.mrb[0].mxu0
      %v6616 = vadd.f32 %v6466, %v6615
      %v6617 = vpop.f32.mrb[0].mxu0
      %6618 = vmatprep.mubr.bf16.mxu0 %v6551
      %6619 = vmatmul.mubr.bf16.gmra.mrb[0].mxu0 %v6550
      %v6620 = vpop.f32.mrb[0].mxu0
      %v6621 = vadd.f32 %v6471, %v6620
      %v6622 = vpop.f32.mrb[0].mxu0
      %v6623 = vpop.f32.mrb[0].mxu0
      %v6624 = vadd.f32 %v6476, %v6623
      %v6625 = vpop.f32.mrb[0].mxu0
      %6626 = vmatprep.mubr.bf16.mxu0 %v6555
      %6627 = vmatmul.mubr.bf16.gmra.mrb[0].mxu0 %v6554
      %v6628 = vpop.f32.mrb[0].mxu0
      %v6629 = vadd.f32 %v6481, %v6628
      %v6630 = vpop.f32.mrb[0].mxu0
      %v6631 = vpop.f32.mrb[0].mxu0
      %v6632 = vadd.f32 %v6486, %v6631
      %v6633 = vpop.f32.mrb[0].mxu0
      %6634 = vmatprep.mubr.bf16.mxu0 %v6559
      %6635 = vmatmul.mubr.bf16.gmra.mrb[0].mxu0 %v6558
      %v6636 = vpop.f32.mrb[0].mxu0
      %v6637 = vadd.f32 %v6491, %v6636
      %v6638 = vpop.f32.mrb[0].mxu0
      %v6639 = vpop.f32.mrb[0].mxu0
      %v6640 = vadd.f32 %v6496, %v6639
      %v6641 = vpop.f32.mrb[0].mxu0
      %6642 = vdwg.mxu0
      %6643 = vmatprep.subr.bf16.mxu0 0
      %6644 = vmatpush1.bf16.msra.mxu0 %v6442
      %6645 = vmatprep.subr.bf16.mxu0 0
      %6646 = vmatpush1.bf16.msra.mxu0 %v6443
      %6647 = vmatprep.subr.bf16.mxu0 0
      %6648 = vmatpush1.bf16.msra.mxu0 %v6444
      %6649 = vmatprep.subr.bf16.mxu0 0
      %6650 = vmatpush1.bf16.msra.mxu0 %v6445
      %6651 = vmatprep.subr.bf16.mxu0 0
      %6652 = vmatpush1.bf16.msra.mxu0 %v6446
      %6653 = vmatprep.subr.bf16.mxu0 0
      %6654 = vmatpush1.bf16.msra.mxu0 %v6447
      %6655 = vmatprep.subr.bf16.mxu0 0
      %6656 = vmatpush1.bf16.msra.mxu0 %v6448
      %6657 = vmatprep.subr.bf16.mxu0 0
      %6658 = vmatpush1.bf16.msra.mxu0 %v6449
      %6659 = vmatprep.subr.bf16.mxu0 0
      %6660 = vmatpush1.bf16.msra.mxu0 %v6450
      %6661 = vmatprep.subr.bf16.mxu0 0
      %6662 = vmatpush1.bf16.msra.mxu0 %v6451
      %6663 = vmatprep.subr.bf16.mxu0 0
      %6664 = vmatpush1.bf16.msra.mxu0 %v6452
      %6665 = vmatprep.subr.bf16.mxu0 0
      %6666 = vmatpush1.bf16.msra.mxu0 %v6453
      %6667 = vmatprep.subr.bf16.mxu0 0
      %6668 = vmatpush1.bf16.msra.mxu0 %v6454
      %6669 = vmatprep.subr.bf16.mxu0 0
      %6670 = vmatpush1.bf16.msra.mxu0 %v6455
      %6671 = vmatprep.subr.bf16.mxu0 0
      %6672 = vmatpush1.bf16.msra.mxu0 %v6456
      %6673 = vmatprep.subr.bf16.mxu0 0
      %6674 = vmatpush1.bf16.msra.mxu0 %v6457
      %6675 = vmatprep.mubr.bf16.mxu0 %v6549
      %6676 = vmatmul.mubr.bf16.gmra.mrb[0].mxu0 %v6548
      %v6677 = vpop.f32.mrb[0].mxu0
      %v6678 = vadd.f32 %v6613, %v6677
      %v6679 = vpop.f32.mrb[0].mxu0
      %v6680 = vpop.f32.mrb[0].mxu0
      %v6681 = vadd.f32 %v6616, %v6680
      %v6682 = vpop.f32.mrb[0].mxu0
      %6683 = vmatprep.mubr.bf16.mxu0 %v6553
      %6684 = vmatmul.mubr.bf16.gmra.mrb[0].mxu0 %v6552
      %v6685 = vpop.f32.mrb[0].mxu0
      %v6686 = vadd.f32 %v6621, %v6685
      %v6687 = vpop.f32.mrb[0].mxu0
      %v6688 = vpop.f32.mrb[0].mxu0
      %v6689 = vadd.f32 %v6624, %v6688
      %v6690 = vpop.f32.mrb[0].mxu0
      %6691 = vmatprep.mubr.bf16.mxu0 %v6557
      %6692 = vmatmul.mubr.bf16.gmra.mrb[0].mxu0 %v6556
      %v6693 = vpop.f32.mrb[0].mxu0
      %v6694 = vadd.f32 %v6629, %v6693
      %v6695 = vpop.f32.mrb[0].mxu0
      %v6696 = vpop.f32.mrb[0].mxu0
      %v6697 = vadd.f32 %v6632, %v6696
      %v6698 = vpop.f32.mrb[0].mxu0
      %6699 = vmatprep.mubr.bf16.mxu0 %v6561
      %6700 = vmatmul.mubr.bf16.gmra.mrb[0].mxu0 %v6560
      %v6701 = vpop.f32.mrb[0].mxu0
      %v6702 = vadd.f32 %v6637, %v6701
      %v6703 = vpop.f32.mrb[0].mxu0
      %v6704 = vpop.f32.mrb[0].mxu0
      %v6705 = vadd.f32 %v6640, %v6704
      %v6706 = vpop.f32.mrb[0].mxu0
      %6707 = vdwg.mxu0
      %v6708 = vpack.c.bf16 %v5281, %v5278
      %v6709 = vpack.c.bf16 %v5289, %v5286
      %v6710 = vpack.c.bf16 %v5355, %v5352
      %v6711 = vpack.c.bf16 %v5363, %v5360
      %v6712 = vpack.c.bf16 %v5429, %v5426
      %v6713 = vpack.c.bf16 %v5437, %v5434
      %v6714 = vpack.c.bf16 %v5503, %v5500
      %v6715 = vpack.c.bf16 %v5511, %v5508
      %v6716 = vpack.c.bf16 %v5577, %v5574
      %v6717 = vpack.c.bf16 %v5585, %v5582
      %v6718 = vpack.c.bf16 %v5651, %v5648
      %v6719 = vpack.c.bf16 %v5659, %v5656
      %v6720 = vpack.c.bf16 %v5725, %v5722
      %v6721 = vpack.c.bf16 %v5733, %v5730
      %v6722 = vpack.c.bf16 %v5799, %v5796
      %v6723 = vpack.c.bf16 %v5807, %v5804
      %v6724 = vpack.c.bf16 %v5873, %v5870
      %v6725 = vpack.c.bf16 %v5881, %v5878
      %v6726 = vpack.c.bf16 %v5947, %v5944
      %v6727 = vpack.c.bf16 %v5955, %v5952
      %v6728 = vpack.c.bf16 %v6021, %v6018
      %v6729 = vpack.c.bf16 %v6029, %v6026
      %v6730 = vpack.c.bf16 %v6095, %v6092
      %v6731 = vpack.c.bf16 %v6103, %v6100
      %v6732 = vpack.c.bf16 %v6169, %v6166
      %v6733 = vpack.c.bf16 %v6177, %v6174
      %v6734 = vpack.c.bf16 %v6243, %v6240
      %v6735 = vpack.c.bf16 %v6251, %v6248
      %v6736 = vpack.c.bf16 %v6317, %v6314
      %v6737 = vpack.c.bf16 %v6325, %v6322
      %v6738 = vpack.c.bf16 %v6391, %v6388
      %v6739 = vpack.c.bf16 %v6399, %v6396
      %6740 = vmatprep.subr.bf16.mxu0 0
      %6741 = vmatpush1.bf16.msra.mxu0 %v6708
      %6742 = vmatprep.subr.bf16.mxu0 0
      %6743 = vmatpush1.bf16.msra.mxu0 %v6709
      %6744 = vmatprep.subr.bf16.mxu0 0
      %6745 = vmatpush1.bf16.msra.mxu0 %v6710
      %6746 = vmatprep.subr.bf16.mxu0 0
      %6747 = vmatpush1.bf16.msra.mxu0 %v6711
      %6748 = vmatprep.subr.bf16.mxu0 0
      %6749 = vmatpush1.bf16.msra.mxu0 %v6712
      %6750 = vmatprep.subr.bf16.mxu0 0
      %6751 = vmatpush1.bf16.msra.mxu0 %v6713
      %6752 = vmatprep.subr.bf16.mxu0 0
      %6753 = vmatpush1.bf16.msra.mxu0 %v6714
      %6754 = vmatprep.subr.bf16.mxu0 0
      %6755 = vmatpush1.bf16.msra.mxu0 %v6715
      %6756 = vmatprep.subr.bf16.mxu0 0
      %6757 = vmatpush1.bf16.msra.mxu0 %v6716
      %6758 = vmatprep.subr.bf16.mxu0 0
      %6759 = vmatpush1.bf16.msra.mxu0 %v6717
      %6760 = vmatprep.subr.bf16.mxu0 0
      %6761 = vmatpush1.bf16.msra.mxu0 %v6718
      %6762 = vmatprep.subr.bf16.mxu0 0
      %6763 = vmatpush1.bf16.msra.mxu0 %v6719
      %6764 = vmatprep.subr.bf16.mxu0 0
      %6765 = vmatpush1.bf16.msra.mxu0 %v6720
      %6766 = vmatprep.subr.bf16.mxu0 0
      %6767 = vmatpush1.bf16.msra.mxu0 %v6721
      %6768 = vmatprep.subr.bf16.mxu0 0
      %6769 = vmatpush1.bf16.msra.mxu0 %v6722
      %6770 = vmatprep.subr.bf16.mxu0 0
      %6771 = vmatpush1.bf16.msra.mxu0 %v6723
      %6772 = vmatprep.mubr.bf16.mxu0 %v6547
      %6773 = vmatmul.mubr.bf16.gmra.mrb[0].mxu0 %v6546
      %v6774 = vpop.f32.mrb[0].mxu0
      %v6775 = vadd.f32 %v6461, %v6774
      %v6776 = vpop.f32.mrb[0].mxu0
      %v6777 = vpop.f32.mrb[0].mxu0
      %v6778 = vadd.f32 %v6466, %v6777
      %v6779 = vpop.f32.mrb[0].mxu0
      %6780 = vmatprep.mubr.bf16.mxu0 %v6551
      %6781 = vmatmul.mubr.bf16.gmra.mrb[0].mxu0 %v6550
      %v6782 = vpop.f32.mrb[0].mxu0
      %v6783 = vadd.f32 %v6471, %v6782
      %v6784 = vpop.f32.mrb[0].mxu0
      %v6785 = vpop.f32.mrb[0].mxu0
      %v6786 = vadd.f32 %v6476, %v6785
      %v6787 = vpop.f32.mrb[0].mxu0
      %6788 = vmatprep.mubr.bf16.mxu0 %v6555
      %6789 = vmatmul.mubr.bf16.gmra.mrb[0].mxu0 %v6554
      %v6790 = vpop.f32.mrb[0].mxu0
      %v6791 = vadd.f32 %v6481, %v6790
      %v6792 = vpop.f32.mrb[0].mxu0
      %v6793 = vpop.f32.mrb[0].mxu0
      %v6794 = vadd.f32 %v6486, %v6793
      %v6795 = vpop.f32.mrb[0].mxu0
      %6796 = vmatprep.mubr.bf16.mxu0 %v6559
      %6797 = vmatmul.mubr.bf16.gmra.mrb[0].mxu0 %v6558
      %v6798 = vpop.f32.mrb[0].mxu0
      %v6799 = vadd.f32 %v6491, %v6798
      %v6800 = vpop.f32.mrb[0].mxu0
      %v6801 = vpop.f32.mrb[0].mxu0
      %v6802 = vadd.f32 %v6496, %v6801
      %v6803 = vpop.f32.mrb[0].mxu0
      %6804 = vdwg.mxu0
      %6805 = vmatprep.subr.bf16.mxu0 0
      %6806 = vmatpush1.bf16.msra.mxu0 %v6724
      %6807 = vmatprep.subr.bf16.mxu0 0
      %6808 = vmatpush1.bf16.msra.mxu0 %v6725
      %6809 = vmatprep.subr.bf16.mxu0 0
      %6810 = vmatpush1.bf16.msra.mxu0 %v6726
      %6811 = vmatprep.subr.bf16.mxu0 0
      %6812 = vmatpush1.bf16.msra.mxu0 %v6727
      %6813 = vmatprep.subr.bf16.mxu0 0
      %6814 = vmatpush1.bf16.msra.mxu0 %v6728
      %6815 = vmatprep.subr.bf16.mxu0 0
      %6816 = vmatpush1.bf16.msra.mxu0 %v6729
      %6817 = vmatprep.subr.bf16.mxu0 0
      %6818 = vmatpush1.bf16.msra.mxu0 %v6730
      %6819 = vmatprep.subr.bf16.mxu0 0
      %6820 = vmatpush1.bf16.msra.mxu0 %v6731
      %6821 = vmatprep.subr.bf16.mxu0 0
      %6822 = vmatpush1.bf16.msra.mxu0 %v6732
      %6823 = vmatprep.subr.bf16.mxu0 0
      %6824 = vmatpush1.bf16.msra.mxu0 %v6733
      %6825 = vmatprep.subr.bf16.mxu0 0
      %6826 = vmatpush1.bf16.msra.mxu0 %v6734
      %6827 = vmatprep.subr.bf16.mxu0 0
      %6828 = vmatpush1.bf16.msra.mxu0 %v6735
      %6829 = vmatprep.subr.bf16.mxu0 0
      %6830 = vmatpush1.bf16.msra.mxu0 %v6736
      %6831 = vmatprep.subr.bf16.mxu0 0
      %6832 = vmatpush1.bf16.msra.mxu0 %v6737
      %6833 = vmatprep.subr.bf16.mxu0 0
      %6834 = vmatpush1.bf16.msra.mxu0 %v6738
      %6835 = vmatprep.subr.bf16.mxu0 0
      %6836 = vmatpush1.bf16.msra.mxu0 %v6739
      %6837 = vmatprep.mubr.bf16.mxu0 %v6549
      %6838 = vmatmul.mubr.bf16.gmra.mrb[0].mxu0 %v6548
      %v6839 = vpop.f32.mrb[0].mxu0
      %v6840 = vadd.f32 %v6775, %v6839
      %v6841 = vpop.f32.mrb[0].mxu0
      %v6842 = vpop.f32.mrb[0].mxu0
      %v6843 = vadd.f32 %v6778, %v6842
      %v6844 = vpop.f32.mrb[0].mxu0
      %6845 = vmatprep.mubr.bf16.mxu0 %v6553
      %6846 = vmatmul.mubr.bf16.gmra.mrb[0].mxu0 %v6552
      %v6847 = vpop.f32.mrb[0].mxu0
      %v6848 = vadd.f32 %v6783, %v6847
      %v6849 = vpop.f32.mrb[0].mxu0
      %v6850 = vpop.f32.mrb[0].mxu0
      %v6851 = vadd.f32 %v6786, %v6850
      %v6852 = vpop.f32.mrb[0].mxu0
      %6853 = vmatprep.mubr.bf16.mxu0 %v6557
      %6854 = vmatmul.mubr.bf16.gmra.mrb[0].mxu0 %v6556
      %v6855 = vpop.f32.mrb[0].mxu0
      %v6856 = vadd.f32 %v6791, %v6855
      %v6857 = vpop.f32.mrb[0].mxu0
      %v6858 = vpop.f32.mrb[0].mxu0
      %v6859 = vadd.f32 %v6794, %v6858
      %v6860 = vpop.f32.mrb[0].mxu0
      %6861 = vmatprep.mubr.bf16.mxu0 %v6561
      %6862 = vmatmul.mubr.bf16.gmra.mrb[0].mxu0 %v6560
      %v6863 = vpop.f32.mrb[0].mxu0
      %v6864 = vadd.f32 %v6799, %v6863
      %v6865 = vpop.f32.mrb[0].mxu0
      %v6866 = vpop.f32.mrb[0].mxu0
      %v6867 = vadd.f32 %v6802, %v6866
      %v6868 = vpop.f32.mrb[0].mxu0
      %6869 = vdwg.mxu0
      %vm6870 = vcmask 72704
      %v6871 = vsel %vm6870, %v6678, 0.0
      %6872 = vadd.xlane.f32.xlu0 %v6871
      %v6873 = vpop.xlane.xlu0 %6872
      %v6874 = vsel %vm6870, %v6681, 0.0
      %6875 = vadd.xlane.f32.xlu0 %v6874
      %v6876 = vpop.xlane.xlu0 %6875
      %v6877 = vsel %vm6870, %v6686, 0.0
      %6878 = vadd.xlane.f32.xlu0 %v6877
      %v6879 = vpop.xlane.xlu0 %6878
      %v6880 = vsel %vm6870, %v6689, 0.0
      %6881 = vadd.xlane.f32.xlu0 %v6880
      %v6882 = vpop.xlane.xlu0 %6881
      %v6883 = vsel %vm6870, %v6694, 0.0
      %6884 = vadd.xlane.f32.xlu0 %v6883
      %v6885 = vpop.xlane.xlu0 %6884
      %v6886 = vsel %vm6870, %v6697, 0.0
      %6887 = vadd.xlane.f32.xlu0 %v6886
      %v6888 = vpop.xlane.xlu0 %6887
      %v6889 = vsel %vm6870, %v6702, 0.0
      %6890 = vadd.xlane.f32.xlu0 %v6889
      %v6891 = vpop.xlane.xlu0 %6890
      %v6892 = vsel %vm6870, %v6705, 0.0
      %6893 = vadd.xlane.f32.xlu0 %v6892
      %v6894 = vpop.xlane.xlu0 %6893
      %v6895 = vrcp.pop 9.0
      %v6896 = vmul.f32 %v6873, %v6895
      %v6897 = vmul.f32 %v6876, %v6895
      %v6898 = vmul.f32 %v6879, %v6895
      %v6899 = vmul.f32 %v6882, %v6895
      %v6900 = vmul.f32 %v6885, %v6895
      %v6901 = vmul.f32 %v6888, %v6895
      %v6902 = vmul.f32 %v6891, %v6895
      %v6903 = vmul.f32 %v6894, %v6895
      %v6904 = vsub.f32 %v6678, %v6896
      %v6905 = vsub.f32 %v6681, %v6897
      %v6906 = vsub.f32 %v6686, %v6898
      %v6907 = vsub.f32 %v6689, %v6899
      %v6908 = vsub.f32 %v6694, %v6900
      %v6909 = vsub.f32 %v6697, %v6901
      %v6910 = vsub.f32 %v6702, %v6902
      %v6911 = vsub.f32 %v6705, %v6903
      %v6912 = vmul.f32 %v6904, %v6904
      %v6913 = vmul.f32 %v6905, %v6905
      %v6914 = vmul.f32 %v6906, %v6906
      %v6915 = vmul.f32 %v6907, %v6907
      %v6916 = vmul.f32 %v6908, %v6908
      %v6917 = vmul.f32 %v6909, %v6909
      %v6918 = vmul.f32 %v6910, %v6910
      %v6919 = vmul.f32 %v6911, %v6911
      %v6920 = vsel %vm6870, %v6912, 0.0
      %6921 = vadd.xlane.f32.xlu0 %v6920
      %v6922 = vpop.xlane.xlu0 %6921
      %v6923 = vsel %vm6870, %v6913, 0.0
      %6924 = vadd.xlane.f32.xlu0 %v6923
      %v6925 = vpop.xlane.xlu0 %6924
      %v6926 = vsel %vm6870, %v6914, 0.0
      %6927 = vadd.xlane.f32.xlu0 %v6926
      %v6928 = vpop.xlane.xlu0 %6927
      %v6929 = vsel %vm6870, %v6915, 0.0
      %6930 = vadd.xlane.f32.xlu0 %v6929
      %v6931 = vpop.xlane.xlu0 %6930
      %v6932 = vsel %vm6870, %v6916, 0.0
      %6933 = vadd.xlane.f32.xlu0 %v6932
      %v6934 = vpop.xlane.xlu0 %6933
      %v6935 = vsel %vm6870, %v6917, 0.0
      %6936 = vadd.xlane.f32.xlu0 %v6935
      %v6937 = vpop.xlane.xlu0 %6936
      %v6938 = vsel %vm6870, %v6918, 0.0
      %6939 = vadd.xlane.f32.xlu0 %v6938
      %v6940 = vpop.xlane.xlu0 %6939
      %v6941 = vsel %vm6870, %v6919, 0.0
      %6942 = vadd.xlane.f32.xlu0 %v6941
      %v6943 = vpop.xlane.xlu0 %6942
      %v6944 = vmul.f32 %v6922, %v6895
      %v6945 = vmul.f32 %v6925, %v6895
      %v6946 = vmul.f32 %v6928, %v6895
      %v6947 = vmul.f32 %v6931, %v6895
      %v6948 = vmul.f32 %v6934, %v6895
      %v6949 = vmul.f32 %v6937, %v6895
      %v6950 = vmul.f32 %v6940, %v6895
      %v6951 = vmul.f32 %v6943, %v6895
      %v6952 = vadd.f32 %v6944, 1e-05
      %v6953 = vadd.f32 %v6945, 1e-05
      %v6954 = vadd.f32 %v6946, 1e-05
      %v6955 = vadd.f32 %v6947, 1e-05
      %v6956 = vadd.f32 %v6948, 1e-05
      %v6957 = vadd.f32 %v6949, 1e-05
      %v6958 = vadd.f32 %v6950, 1e-05
      %v6959 = vadd.f32 %v6951, 1e-05
      %v6960 = vrsqrt.pop %v6952
      %v6961 = vrsqrt.pop %v6953
      %v6962 = vrsqrt.pop %v6954
      %v6963 = vrsqrt.pop %v6955
      %v6964 = vrsqrt.pop %v6956
      %v6965 = vrsqrt.pop %v6957
      %v6966 = vrsqrt.pop %v6958
      %v6967 = vrsqrt.pop %v6959
      %v6968 = vmul.f32 %v6904, %v6960
      %v6969 = vmul.f32 %v6905, %v6961
      %v6970 = vmul.f32 %v6906, %v6962
      %v6971 = vmul.f32 %v6907, %v6963
      %v6972 = vmul.f32 %v6908, %v6964
      %v6973 = vmul.f32 %v6909, %v6965
      %v6974 = vmul.f32 %v6910, %v6966
      %v6975 = vmul.f32 %v6911, %v6967
      %vm6976 = vcmp.ge.f32.partialorder %v6968, 0.0
      %vm6977 = vcmp.ge.f32.partialorder %v6969, 0.0
      %vm6978 = vcmp.ge.f32.partialorder %v6970, 0.0
      %vm6979 = vcmp.ge.f32.partialorder %v6971, 0.0
      %vm6980 = vcmp.ge.f32.partialorder %v6972, 0.0
      %vm6981 = vcmp.ge.f32.partialorder %v6973, 0.0
      %vm6982 = vcmp.ge.f32.partialorder %v6974, 0.0
      %vm6983 = vcmp.ge.f32.partialorder %v6975, 0.0
      %v6984 = vmul.f32 %v6968, 0.2
      %v6985 = vmul.f32 %v6969, 0.2
      %v6986 = vmul.f32 %v6970, 0.2
      %v6987 = vmul.f32 %v6971, 0.2
      %v6988 = vmul.f32 %v6972, 0.2
      %v6989 = vmul.f32 %v6973, 0.2
      %v6990 = vmul.f32 %v6974, 0.2
      %v6991 = vmul.f32 %v6975, 0.2
      %v6992 = vsel %vm6976, %v6968, %v6984
      %v6993 = vsel %vm6977, %v6969, %v6985
      %v6994 = vsel %vm6978, %v6970, %v6986
      %v6995 = vsel %vm6979, %v6971, %v6987
      %v6996 = vsel %vm6980, %v6972, %v6988
      %v6997 = vsel %vm6981, %v6973, %v6989
      %v6998 = vsel %vm6982, %v6974, %v6990
      %v6999 = vsel %vm6983, %v6975, %v6991
      %v7000 = vsel %vm6870, %v6840, 0.0
      %7001 = vadd.xlane.f32.xlu0 %v7000
      %v7002 = vpop.xlane.xlu0 %7001
      %v7003 = vsel %vm6870, %v6843, 0.0
      %7004 = vadd.xlane.f32.xlu0 %v7003
      %v7005 = vpop.xlane.xlu0 %7004
      %v7006 = vsel %vm6870, %v6848, 0.0
      %7007 = vadd.xlane.f32.xlu0 %v7006
      %v7008 = vpop.xlane.xlu0 %7007
      %v7009 = vsel %vm6870, %v6851, 0.0
      %7010 = vadd.xlane.f32.xlu0 %v7009
      %v7011 = vpop.xlane.xlu0 %7010
      %v7012 = vsel %vm6870, %v6856, 0.0
      %7013 = vadd.xlane.f32.xlu0 %v7012
      %v7014 = vpop.xlane.xlu0 %7013
      %v7015 = vsel %vm6870, %v6859, 0.0
      %7016 = vadd.xlane.f32.xlu0 %v7015
      %v7017 = vpop.xlane.xlu0 %7016
      %v7018 = vsel %vm6870, %v6864, 0.0
      %7019 = vadd.xlane.f32.xlu0 %v7018
      %v7020 = vpop.xlane.xlu0 %7019
      %v7021 = vsel %vm6870, %v6867, 0.0
      %7022 = vadd.xlane.f32.xlu0 %v7021
      %v7023 = vpop.xlane.xlu0 %7022
      %v7024 = vmul.f32 %v7002, %v6895
      %v7025 = vmul.f32 %v7005, %v6895
      %v7026 = vmul.f32 %v7008, %v6895
      %v7027 = vmul.f32 %v7011, %v6895
      %v7028 = vmul.f32 %v7014, %v6895
      %v7029 = vmul.f32 %v7017, %v6895
      %v7030 = vmul.f32 %v7020, %v6895
      %v7031 = vmul.f32 %v7023, %v6895
      %v7032 = vsub.f32 %v6840, %v7024
      %v7033 = vsub.f32 %v6843, %v7025
      %v7034 = vsub.f32 %v6848, %v7026
      %v7035 = vsub.f32 %v6851, %v7027
      %v7036 = vsub.f32 %v6856, %v7028
      %v7037 = vsub.f32 %v6859, %v7029
      %v7038 = vsub.f32 %v6864, %v7030
      %v7039 = vsub.f32 %v6867, %v7031
      %v7040 = vmul.f32 %v7032, %v7032
      %v7041 = vmul.f32 %v7033, %v7033
      %v7042 = vmul.f32 %v7034, %v7034
      %v7043 = vmul.f32 %v7035, %v7035
      %v7044 = vmul.f32 %v7036, %v7036
      %v7045 = vmul.f32 %v7037, %v7037
      %v7046 = vmul.f32 %v7038, %v7038
      %v7047 = vmul.f32 %v7039, %v7039
      %v7048 = vsel %vm6870, %v7040, 0.0
      %7049 = vadd.xlane.f32.xlu0 %v7048
      %v7050 = vpop.xlane.xlu0 %7049
      %v7051 = vsel %vm6870, %v7041, 0.0
      %7052 = vadd.xlane.f32.xlu0 %v7051
      %v7053 = vpop.xlane.xlu0 %7052
      %v7054 = vsel %vm6870, %v7042, 0.0
      %7055 = vadd.xlane.f32.xlu0 %v7054
      %v7056 = vpop.xlane.xlu0 %7055
      %v7057 = vsel %vm6870, %v7043, 0.0
      %7058 = vadd.xlane.f32.xlu0 %v7057
      %v7059 = vpop.xlane.xlu0 %7058
      %v7060 = vsel %vm6870, %v7044, 0.0
      %7061 = vadd.xlane.f32.xlu0 %v7060
      %v7062 = vpop.xlane.xlu0 %7061
      %v7063 = vsel %vm6870, %v7045, 0.0
      %7064 = vadd.xlane.f32.xlu0 %v7063
      %v7065 = vpop.xlane.xlu0 %7064
      %v7066 = vsel %vm6870, %v7046, 0.0
      %7067 = vadd.xlane.f32.xlu0 %v7066
      %v7068 = vpop.xlane.xlu0 %7067
      %v7069 = vsel %vm6870, %v7047, 0.0
      %7070 = vadd.xlane.f32.xlu0 %v7069
      %v7071 = vpop.xlane.xlu0 %7070
      %v7072 = vmul.f32 %v7050, %v6895
      %v7073 = vmul.f32 %v7053, %v6895
      %v7074 = vmul.f32 %v7056, %v6895
      %v7075 = vmul.f32 %v7059, %v6895
      %v7076 = vmul.f32 %v7062, %v6895
      %v7077 = vmul.f32 %v7065, %v6895
      %v7078 = vmul.f32 %v7068, %v6895
      %v7079 = vmul.f32 %v7071, %v6895
      %v7080 = vadd.f32 %v7072, 1e-05
      %v7081 = vadd.f32 %v7073, 1e-05
      %v7082 = vadd.f32 %v7074, 1e-05
      %v7083 = vadd.f32 %v7075, 1e-05
      %v7084 = vadd.f32 %v7076, 1e-05
      %v7085 = vadd.f32 %v7077, 1e-05
      %v7086 = vadd.f32 %v7078, 1e-05
      %v7087 = vadd.f32 %v7079, 1e-05
      %v7088 = vrsqrt.pop %v7080
      %v7089 = vrsqrt.pop %v7081
      %v7090 = vrsqrt.pop %v7082
      %v7091 = vrsqrt.pop %v7083
      %v7092 = vrsqrt.pop %v7084
      %v7093 = vrsqrt.pop %v7085
      %v7094 = vrsqrt.pop %v7086
      %v7095 = vrsqrt.pop %v7087
      %v7096 = vmul.f32 %v7032, %v7088
      %v7097 = vmul.f32 %v7033, %v7089
      %v7098 = vmul.f32 %v7034, %v7090
      %v7099 = vmul.f32 %v7035, %v7091
      %v7100 = vmul.f32 %v7036, %v7092
      %v7101 = vmul.f32 %v7037, %v7093
      %v7102 = vmul.f32 %v7038, %v7094
      %v7103 = vmul.f32 %v7039, %v7095
      %vm7104 = vcmp.ge.f32.partialorder %v7096, 0.0
      %vm7105 = vcmp.ge.f32.partialorder %v7097, 0.0
      %vm7106 = vcmp.ge.f32.partialorder %v7098, 0.0
      %vm7107 = vcmp.ge.f32.partialorder %v7099, 0.0
      %vm7108 = vcmp.ge.f32.partialorder %v7100, 0.0
      %vm7109 = vcmp.ge.f32.partialorder %v7101, 0.0
      %vm7110 = vcmp.ge.f32.partialorder %v7102, 0.0
      %vm7111 = vcmp.ge.f32.partialorder %v7103, 0.0
      %v7112 = vmul.f32 %v7096, 0.2
      %v7113 = vmul.f32 %v7097, 0.2
      %v7114 = vmul.f32 %v7098, 0.2
      %v7115 = vmul.f32 %v7099, 0.2
      %v7116 = vmul.f32 %v7100, 0.2
      %v7117 = vmul.f32 %v7101, 0.2
      %v7118 = vmul.f32 %v7102, 0.2
      %v7119 = vmul.f32 %v7103, 0.2
      %v7120 = vsel %vm7104, %v7096, %v7112
      %v7121 = vsel %vm7105, %v7097, %v7113
      %v7122 = vsel %vm7106, %v7098, %v7114
      %v7123 = vsel %vm7107, %v7099, %v7115
      %v7124 = vsel %vm7108, %v7100, %v7116
      %v7125 = vsel %vm7109, %v7101, %v7117
      %v7126 = vsel %vm7110, %v7102, %v7118
      %v7127 = vsel %vm7111, %v7103, %v7119
      %v7128 = vpack.c.bf16 %v6993, %v6992
      %v7129 = vpack.c.bf16 %v6995, %v6994
      %v7130 = vpack.c.bf16 %v6997, %v6996
      %v7131 = vpack.c.bf16 %v6999, %v6998
      %v7132 = vpack.c.bf16 %v7121, %v7120
      %v7133 = vpack.c.bf16 %v7123, %v7122
      %v7134 = vpack.c.bf16 %v7125, %v7124
      %v7135 = vpack.c.bf16 %v7127, %v7126
      %v7136 = vld [vmem:[%s14] sm:$0xf]
      %v7137 = vld [vmem:[%s14 + $0x4] sm:$0x1]
      %v7140 = vunpack.c.l.b16 %v7136
      %v7141 = vunpack.c.l.b16 %v7137
      %v7142 = vpack.c.b16 %v7141, %v7140
      %v7144 = vsel %vm6870, %v7128, 0
      %v7147 = vsel %vm6870, %v7129, 0
      %v7150 = vsel %vm6870, %v7130, 0
      %v7153 = vsel %vm6870, %v7131, 0
      %v7156 = vsel %vm6870, %v7132, 0
      %v7159 = vsel %vm6870, %v7133, 0
      %v7162 = vsel %vm6870, %v7134, 0
      %v7165 = vsel %vm6870, %v7135, 0
      %vm7167 = vcmask 1043456
      %vm7168 = vcmask 1044480
      %v7169 = vsel %vm7167, 4294967295, 65535
      %v7170 = vsel %vm7168, %v7169, 0
      %v7172 = vand.u32 %v7142, %v7170
      %7174 = vmatprep.subr.bf16.mxu0 0
      %7175 = vmatpush1.bf16.msra.mxu0 %v7172
      %7176 = vmatprep.subr.bf16.mxu0 0
      %7177 = vmatpush1.bf16.msra.mxu0 0
      %7178 = vmatprep.subr.bf16.mxu0 0
      %7179 = vmatpush1.bf16.msra.mxu0 0
      %7180 = vmatprep.subr.bf16.mxu0 0
      %7181 = vmatpush1.bf16.msra.mxu0 0
      %7182 = vmatprep.subr.bf16.mxu0 0
      %7183 = vmatpush1.bf16.msra.mxu0 0
      %7184 = vmatprep.subr.bf16.mxu0 0
      %7185 = vmatpush1.bf16.msra.mxu0 0
      %7186 = vmatprep.subr.bf16.mxu0 0
      %7187 = vmatpush1.bf16.msra.mxu0 0
      %7188 = vmatprep.subr.bf16.mxu0 0
      %7189 = vmatpush1.bf16.msra.mxu0 0
      %7190 = vmatprep.subr.bf16.mxu0 0
      %7191 = vmatpush1.bf16.msra.mxu0 0
      %7192 = vmatprep.subr.bf16.mxu0 0
      %7193 = vmatpush1.bf16.msra.mxu0 0
      %7194 = vmatprep.subr.bf16.mxu0 0
      %7195 = vmatpush1.bf16.msra.mxu0 0
      %7196 = vmatprep.subr.bf16.mxu0 0
      %7197 = vmatpush1.bf16.msra.mxu0 0
      %7198 = vmatprep.subr.bf16.mxu0 0
      %7199 = vmatpush1.bf16.msra.mxu0 0
      %7200 = vmatprep.subr.bf16.mxu0 0
      %7201 = vmatpush1.bf16.msra.mxu0 0
      %7202 = vmatprep.subr.bf16.mxu0 0
      %7203 = vmatpush1.bf16.msra.mxu0 0
      %7204 = vmatprep.subr.bf16.mxu0 0
      %7205 = vmatpush1.bf16.msra.mxu0 0
      %7206 = vmatprep.mubr.bf16.mxu0 0
      %7207 = vmatmul.mubr.bf16.gmra.mrb[0].mxu0 %v7144
      %v7208 = vpop.f32.mrb[0].mxu0
      %v7209 = vadd.f32 0.0, %v7208
      %v7210 = vpop.f32.mrb[0].mxu0
      %v7211 = vpop.f32.mrb[0].mxu0
      %v7212 = vadd.f32 0.0, %v7211
      %v7213 = vpop.f32.mrb[0].mxu0
      %7214 = vmatprep.mubr.bf16.mxu0 0
      %7215 = vmatmul.mubr.bf16.gmra.mrb[0].mxu0 %v7147
      %v7216 = vpop.f32.mrb[0].mxu0
      %v7217 = vadd.f32 0.0, %v7216
      %v7218 = vpop.f32.mrb[0].mxu0
      %v7219 = vpop.f32.mrb[0].mxu0
      %v7220 = vadd.f32 0.0, %v7219
      %v7221 = vpop.f32.mrb[0].mxu0
      %7222 = vmatprep.mubr.bf16.mxu0 0
      %7223 = vmatmul.mubr.bf16.gmra.mrb[0].mxu0 %v7150
      %v7224 = vpop.f32.mrb[0].mxu0
      %v7225 = vadd.f32 0.0, %v7224
      %v7226 = vpop.f32.mrb[0].mxu0
      %v7227 = vpop.f32.mrb[0].mxu0
      %v7228 = vadd.f32 0.0, %v7227
      %v7229 = vpop.f32.mrb[0].mxu0
      %7230 = vmatprep.mubr.bf16.mxu0 0
      %7231 = vmatmul.mubr.bf16.gmra.mrb[0].mxu0 %v7153
      %v7232 = vpop.f32.mrb[0].mxu0
      %v7233 = vadd.f32 0.0, %v7232
      %v7234 = vpop.f32.mrb[0].mxu0
      %v7235 = vpop.f32.mrb[0].mxu0
      %v7236 = vadd.f32 0.0, %v7235
      %v7237 = vpop.f32.mrb[0].mxu0
      %7238 = vmatprep.mubr.bf16.mxu0 0
      %7239 = vmatmul.mubr.bf16.gmra.mrb[0].mxu0 %v7156
      %v7240 = vpop.f32.mrb[0].mxu0
      %v7241 = vadd.f32 0.0, %v7240
      %v7242 = vpop.f32.mrb[0].mxu0
      %v7243 = vpop.f32.mrb[0].mxu0
      %v7244 = vadd.f32 0.0, %v7243
      %v7245 = vpop.f32.mrb[0].mxu0
      %7246 = vmatprep.mubr.bf16.mxu0 0
      %7247 = vmatmul.mubr.bf16.gmra.mrb[0].mxu0 %v7159
      %v7248 = vpop.f32.mrb[0].mxu0
      %v7249 = vadd.f32 0.0, %v7248
      %v7250 = vpop.f32.mrb[0].mxu0
      %v7251 = vpop.f32.mrb[0].mxu0
      %v7252 = vadd.f32 0.0, %v7251
      %v7253 = vpop.f32.mrb[0].mxu0
      %7254 = vmatprep.mubr.bf16.mxu0 0
      %7255 = vmatmul.mubr.bf16.gmra.mrb[0].mxu0 %v7162
      %v7256 = vpop.f32.mrb[0].mxu0
      %v7257 = vadd.f32 0.0, %v7256
      %v7258 = vpop.f32.mrb[0].mxu0
      %v7259 = vpop.f32.mrb[0].mxu0
      %v7260 = vadd.f32 0.0, %v7259
      %v7261 = vpop.f32.mrb[0].mxu0
      %7262 = vmatprep.mubr.bf16.mxu0 0
      %7263 = vmatmul.mubr.bf16.gmra.mrb[0].mxu0 %v7165
      %v7264 = vpop.f32.mrb[0].mxu0
      %v7265 = vadd.f32 0.0, %v7264
      %v7266 = vpop.f32.mrb[0].mxu0
      %v7267 = vpop.f32.mrb[0].mxu0
      %v7268 = vadd.f32 0.0, %v7267
      %v7269 = vpop.f32.mrb[0].mxu0
      %7270 = vdwg.mxu0
      %s7271 = scalar_lea.vmem %s14, 8
      %v7272 = vld [vmem:[%s7271] sm:$0xf]
      %v7273 = vld [vmem:[%s7271 + $0x4] sm:$0x1]
      %v7276 = vunpack.c.l.b16 %v7272
      %v7277 = vunpack.c.l.b16 %v7273
      %v7278 = vpack.c.b16 %v7277, %v7276
      %v7280 = vand.u32 %v7278, %v7170
      %7282 = vmatprep.subr.bf16.mxu0 0
      %7283 = vmatpush1.bf16.msra.mxu0 %v7280
      %7284 = vmatprep.subr.bf16.mxu0 0
      %7285 = vmatpush1.bf16.msra.mxu0 0
      %7286 = vmatprep.subr.bf16.mxu0 0
      %7287 = vmatpush1.bf16.msra.mxu0 0
      %7288 = vmatprep.subr.bf16.mxu0 0
      %7289 = vmatpush1.bf16.msra.mxu0 0
      %7290 = vmatprep.subr.bf16.mxu0 0
      %7291 = vmatpush1.bf16.msra.mxu0 0
      %7292 = vmatprep.subr.bf16.mxu0 0
      %7293 = vmatpush1.bf16.msra.mxu0 0
      %7294 = vmatprep.subr.bf16.mxu0 0
      %7295 = vmatpush1.bf16.msra.mxu0 0
      %7296 = vmatprep.subr.bf16.mxu0 0
      %7297 = vmatpush1.bf16.msra.mxu0 0
      %7298 = vmatprep.subr.bf16.mxu0 0
      %7299 = vmatpush1.bf16.msra.mxu0 0
      %7300 = vmatprep.subr.bf16.mxu0 0
      %7301 = vmatpush1.bf16.msra.mxu0 0
      %7302 = vmatprep.subr.bf16.mxu0 0
      %7303 = vmatpush1.bf16.msra.mxu0 0
      %7304 = vmatprep.subr.bf16.mxu0 0
      %7305 = vmatpush1.bf16.msra.mxu0 0
      %7306 = vmatprep.subr.bf16.mxu0 0
      %7307 = vmatpush1.bf16.msra.mxu0 0
      %7308 = vmatprep.subr.bf16.mxu0 0
      %7309 = vmatpush1.bf16.msra.mxu0 0
      %7310 = vmatprep.subr.bf16.mxu0 0
      %7311 = vmatpush1.bf16.msra.mxu0 0
      %7312 = vmatprep.subr.bf16.mxu0 0
      %7313 = vmatpush1.bf16.msra.mxu0 0
      %7314 = vmatprep.mubr.bf16.mxu0 0
      %7315 = vmatmul.mubr.bf16.gmra.mrb[0].mxu0 %v7144
      %v7316 = vpop.f32.mrb[0].mxu0
      %v7317 = vadd.f32 0.0, %v7316
      %v7318 = vpop.f32.mrb[0].mxu0
      %v7319 = vpop.f32.mrb[0].mxu0
      %v7320 = vadd.f32 0.0, %v7319
      %v7321 = vpop.f32.mrb[0].mxu0
      %7322 = vmatprep.mubr.bf16.mxu0 0
      %7323 = vmatmul.mubr.bf16.gmra.mrb[0].mxu0 %v7147
      %v7324 = vpop.f32.mrb[0].mxu0
      %v7325 = vadd.f32 0.0, %v7324
      %v7326 = vpop.f32.mrb[0].mxu0
      %v7327 = vpop.f32.mrb[0].mxu0
      %v7328 = vadd.f32 0.0, %v7327
      %v7329 = vpop.f32.mrb[0].mxu0
      %7330 = vmatprep.mubr.bf16.mxu0 0
      %7331 = vmatmul.mubr.bf16.gmra.mrb[0].mxu0 %v7150
      %v7332 = vpop.f32.mrb[0].mxu0
      %v7333 = vadd.f32 0.0, %v7332
      %v7334 = vpop.f32.mrb[0].mxu0
      %v7335 = vpop.f32.mrb[0].mxu0
      %v7336 = vadd.f32 0.0, %v7335
      %v7337 = vpop.f32.mrb[0].mxu0
      %7338 = vmatprep.mubr.bf16.mxu0 0
      %7339 = vmatmul.mubr.bf16.gmra.mrb[0].mxu0 %v7153
      %v7340 = vpop.f32.mrb[0].mxu0
      %v7341 = vadd.f32 0.0, %v7340
      %v7342 = vpop.f32.mrb[0].mxu0
      %v7343 = vpop.f32.mrb[0].mxu0
      %v7344 = vadd.f32 0.0, %v7343
      %v7345 = vpop.f32.mrb[0].mxu0
      %7346 = vmatprep.mubr.bf16.mxu0 0
      %7347 = vmatmul.mubr.bf16.gmra.mrb[0].mxu0 %v7156
      %v7348 = vpop.f32.mrb[0].mxu0
      %v7349 = vadd.f32 0.0, %v7348
      %v7350 = vpop.f32.mrb[0].mxu0
      %v7351 = vpop.f32.mrb[0].mxu0
      %v7352 = vadd.f32 0.0, %v7351
      %v7353 = vpop.f32.mrb[0].mxu0
      %7354 = vmatprep.mubr.bf16.mxu0 0
      %7355 = vmatmul.mubr.bf16.gmra.mrb[0].mxu0 %v7159
      %v7356 = vpop.f32.mrb[0].mxu0
      %v7357 = vadd.f32 0.0, %v7356
      %v7358 = vpop.f32.mrb[0].mxu0
      %v7359 = vpop.f32.mrb[0].mxu0
      %v7360 = vadd.f32 0.0, %v7359
      %v7361 = vpop.f32.mrb[0].mxu0
      %7362 = vmatprep.mubr.bf16.mxu0 0
      %7363 = vmatmul.mubr.bf16.gmra.mrb[0].mxu0 %v7162
      %v7364 = vpop.f32.mrb[0].mxu0
      %v7365 = vadd.f32 0.0, %v7364
      %v7366 = vpop.f32.mrb[0].mxu0
      %v7367 = vpop.f32.mrb[0].mxu0
      %v7368 = vadd.f32 0.0, %v7367
      %v7369 = vpop.f32.mrb[0].mxu0
      %7370 = vmatprep.mubr.bf16.mxu0 0
      %7371 = vmatmul.mubr.bf16.gmra.mrb[0].mxu0 %v7165
      %v7372 = vpop.f32.mrb[0].mxu0
      %v7373 = vadd.f32 0.0, %v7372
      %v7374 = vpop.f32.mrb[0].mxu0
      %v7375 = vpop.f32.mrb[0].mxu0
      %v7376 = vadd.f32 0.0, %v7375
      %v7377 = vpop.f32.mrb[0].mxu0
      %7378 = vdwg.mxu0
      %s7379 = scalar_lea.vmem %s14, 16
      %v7380 = vld [vmem:[%s7379] sm:$0xf]
      %v7381 = vld [vmem:[%s7379 + $0x4] sm:$0x1]
      %v7384 = vunpack.c.l.b16 %v7380
      %v7385 = vunpack.c.l.b16 %v7381
      %v7386 = vpack.c.b16 %v7385, %v7384
      %v7388 = vand.u32 %v7386, %v7170
      %7390 = vmatprep.subr.bf16.mxu0 0
      %7391 = vmatpush1.bf16.msra.mxu0 %v7388
      %7392 = vmatprep.subr.bf16.mxu0 0
      %7393 = vmatpush1.bf16.msra.mxu0 0
      %7394 = vmatprep.subr.bf16.mxu0 0
      %7395 = vmatpush1.bf16.msra.mxu0 0
      %7396 = vmatprep.subr.bf16.mxu0 0
      %7397 = vmatpush1.bf16.msra.mxu0 0
      %7398 = vmatprep.subr.bf16.mxu0 0
      %7399 = vmatpush1.bf16.msra.mxu0 0
      %7400 = vmatprep.subr.bf16.mxu0 0
      %7401 = vmatpush1.bf16.msra.mxu0 0
      %7402 = vmatprep.subr.bf16.mxu0 0
      %7403 = vmatpush1.bf16.msra.mxu0 0
      %7404 = vmatprep.subr.bf16.mxu0 0
      %7405 = vmatpush1.bf16.msra.mxu0 0
      %7406 = vmatprep.subr.bf16.mxu0 0
      %7407 = vmatpush1.bf16.msra.mxu0 0
      %7408 = vmatprep.subr.bf16.mxu0 0
      %7409 = vmatpush1.bf16.msra.mxu0 0
      %7410 = vmatprep.subr.bf16.mxu0 0
      %7411 = vmatpush1.bf16.msra.mxu0 0
      %7412 = vmatprep.subr.bf16.mxu0 0
      %7413 = vmatpush1.bf16.msra.mxu0 0
      %7414 = vmatprep.subr.bf16.mxu0 0
      %7415 = vmatpush1.bf16.msra.mxu0 0
      %7416 = vmatprep.subr.bf16.mxu0 0
      %7417 = vmatpush1.bf16.msra.mxu0 0
      %7418 = vmatprep.subr.bf16.mxu0 0
      %7419 = vmatpush1.bf16.msra.mxu0 0
      %7420 = vmatprep.subr.bf16.mxu0 0
      %7421 = vmatpush1.bf16.msra.mxu0 0
      %7422 = vmatprep.mubr.bf16.mxu0 0
      %7423 = vmatmul.mubr.bf16.gmra.mrb[0].mxu0 %v7144
      %v7424 = vpop.f32.mrb[0].mxu0
      %v7425 = vadd.f32 0.0, %v7424
      %v7426 = vpop.f32.mrb[0].mxu0
      %v7427 = vpop.f32.mrb[0].mxu0
      %v7428 = vadd.f32 0.0, %v7427
      %v7429 = vpop.f32.mrb[0].mxu0
      %7430 = vmatprep.mubr.bf16.mxu0 0
      %7431 = vmatmul.mubr.bf16.gmra.mrb[0].mxu0 %v7147
      %v7432 = vpop.f32.mrb[0].mxu0
      %v7433 = vadd.f32 0.0, %v7432
      %v7434 = vpop.f32.mrb[0].mxu0
      %v7435 = vpop.f32.mrb[0].mxu0
      %v7436 = vadd.f32 0.0, %v7435
      %v7437 = vpop.f32.mrb[0].mxu0
      %7438 = vmatprep.mubr.bf16.mxu0 0
      %7439 = vmatmul.mubr.bf16.gmra.mrb[0].mxu0 %v7150
      %v7440 = vpop.f32.mrb[0].mxu0
      %v7441 = vadd.f32 0.0, %v7440
      %v7442 = vpop.f32.mrb[0].mxu0
      %v7443 = vpop.f32.mrb[0].mxu0
      %v7444 = vadd.f32 0.0, %v7443
      %v7445 = vpop.f32.mrb[0].mxu0
      %7446 = vmatprep.mubr.bf16.mxu0 0
      %7447 = vmatmul.mubr.bf16.gmra.mrb[0].mxu0 %v7153
      %v7448 = vpop.f32.mrb[0].mxu0
      %v7449 = vadd.f32 0.0, %v7448
      %v7450 = vpop.f32.mrb[0].mxu0
      %v7451 = vpop.f32.mrb[0].mxu0
      %v7452 = vadd.f32 0.0, %v7451
      %v7453 = vpop.f32.mrb[0].mxu0
      %7454 = vmatprep.mubr.bf16.mxu0 0
      %7455 = vmatmul.mubr.bf16.gmra.mrb[0].mxu0 %v7156
      %v7456 = vpop.f32.mrb[0].mxu0
      %v7457 = vadd.f32 0.0, %v7456
      %v7458 = vpop.f32.mrb[0].mxu0
      %v7459 = vpop.f32.mrb[0].mxu0
      %v7460 = vadd.f32 0.0, %v7459
      %v7461 = vpop.f32.mrb[0].mxu0
      %7462 = vmatprep.mubr.bf16.mxu0 0
      %7463 = vmatmul.mubr.bf16.gmra.mrb[0].mxu0 %v7159
      %v7464 = vpop.f32.mrb[0].mxu0
      %v7465 = vadd.f32 0.0, %v7464
      %v7466 = vpop.f32.mrb[0].mxu0
      %v7467 = vpop.f32.mrb[0].mxu0
      %v7468 = vadd.f32 0.0, %v7467
      %v7469 = vpop.f32.mrb[0].mxu0
      %7470 = vmatprep.mubr.bf16.mxu0 0
      %7471 = vmatmul.mubr.bf16.gmra.mrb[0].mxu0 %v7162
      %v7472 = vpop.f32.mrb[0].mxu0
      %v7473 = vadd.f32 0.0, %v7472
      %v7474 = vpop.f32.mrb[0].mxu0
      %v7475 = vpop.f32.mrb[0].mxu0
      %v7476 = vadd.f32 0.0, %v7475
      %v7477 = vpop.f32.mrb[0].mxu0
      %7478 = vmatprep.mubr.bf16.mxu0 0
      %7479 = vmatmul.mubr.bf16.gmra.mrb[0].mxu0 %v7165
      %v7480 = vpop.f32.mrb[0].mxu0
      %v7481 = vadd.f32 0.0, %v7480
      %v7482 = vpop.f32.mrb[0].mxu0
      %v7483 = vpop.f32.mrb[0].mxu0
      %v7484 = vadd.f32 0.0, %v7483
      %v7485 = vpop.f32.mrb[0].mxu0
      %7486 = vdwg.mxu0
      %s7487 = scalar_lea.vmem %s14, 24
      %v7488 = vld [vmem:[%s7487] sm:$0xf]
      %v7489 = vld [vmem:[%s7487 + $0x4] sm:$0x1]
      %v7492 = vunpack.c.l.b16 %v7488
      %v7493 = vunpack.c.l.b16 %v7489
      %v7494 = vpack.c.b16 %v7493, %v7492
      %v7496 = vand.u32 %v7494, %v7170
      %7498 = vmatprep.subr.bf16.mxu0 0
      %7499 = vmatpush1.bf16.msra.mxu0 %v7496
      %7500 = vmatprep.subr.bf16.mxu0 0
      %7501 = vmatpush1.bf16.msra.mxu0 0
      %7502 = vmatprep.subr.bf16.mxu0 0
      %7503 = vmatpush1.bf16.msra.mxu0 0
      %7504 = vmatprep.subr.bf16.mxu0 0
      %7505 = vmatpush1.bf16.msra.mxu0 0
      %7506 = vmatprep.subr.bf16.mxu0 0
      %7507 = vmatpush1.bf16.msra.mxu0 0
      %7508 = vmatprep.subr.bf16.mxu0 0
      %7509 = vmatpush1.bf16.msra.mxu0 0
      %7510 = vmatprep.subr.bf16.mxu0 0
      %7511 = vmatpush1.bf16.msra.mxu0 0
      %7512 = vmatprep.subr.bf16.mxu0 0
      %7513 = vmatpush1.bf16.msra.mxu0 0
      %7514 = vmatprep.subr.bf16.mxu0 0
      %7515 = vmatpush1.bf16.msra.mxu0 0
      %7516 = vmatprep.subr.bf16.mxu0 0
      %7517 = vmatpush1.bf16.msra.mxu0 0
      %7518 = vmatprep.subr.bf16.mxu0 0
      %7519 = vmatpush1.bf16.msra.mxu0 0
      %7520 = vmatprep.subr.bf16.mxu0 0
      %7521 = vmatpush1.bf16.msra.mxu0 0
      %7522 = vmatprep.subr.bf16.mxu0 0
      %7523 = vmatpush1.bf16.msra.mxu0 0
      %7524 = vmatprep.subr.bf16.mxu0 0
      %7525 = vmatpush1.bf16.msra.mxu0 0
      %7526 = vmatprep.subr.bf16.mxu0 0
      %7527 = vmatpush1.bf16.msra.mxu0 0
      %7528 = vmatprep.subr.bf16.mxu0 0
      %7529 = vmatpush1.bf16.msra.mxu0 0
      %7530 = vmatprep.mubr.bf16.mxu0 0
      %7531 = vmatmul.mubr.bf16.gmra.mrb[0].mxu0 %v7144
      %v7532 = vpop.f32.mrb[0].mxu0
      %v7533 = vadd.f32 0.0, %v7532
      %v7534 = vpop.f32.mrb[0].mxu0
      %v7535 = vpop.f32.mrb[0].mxu0
      %v7536 = vadd.f32 0.0, %v7535
      %v7537 = vpop.f32.mrb[0].mxu0
      %7538 = vmatprep.mubr.bf16.mxu0 0
      %7539 = vmatmul.mubr.bf16.gmra.mrb[0].mxu0 %v7147
      %v7540 = vpop.f32.mrb[0].mxu0
      %v7541 = vadd.f32 0.0, %v7540
      %v7542 = vpop.f32.mrb[0].mxu0
      %v7543 = vpop.f32.mrb[0].mxu0
      %v7544 = vadd.f32 0.0, %v7543
      %v7545 = vpop.f32.mrb[0].mxu0
      %7546 = vmatprep.mubr.bf16.mxu0 0
      %7547 = vmatmul.mubr.bf16.gmra.mrb[0].mxu0 %v7150
      %v7548 = vpop.f32.mrb[0].mxu0
      %v7549 = vadd.f32 0.0, %v7548
      %v7550 = vpop.f32.mrb[0].mxu0
      %v7551 = vpop.f32.mrb[0].mxu0
      %v7552 = vadd.f32 0.0, %v7551
      %v7553 = vpop.f32.mrb[0].mxu0
      %7554 = vmatprep.mubr.bf16.mxu0 0
      %7555 = vmatmul.mubr.bf16.gmra.mrb[0].mxu0 %v7153
      %v7556 = vpop.f32.mrb[0].mxu0
      %v7557 = vadd.f32 0.0, %v7556
      %v7558 = vpop.f32.mrb[0].mxu0
      %v7559 = vpop.f32.mrb[0].mxu0
      %v7560 = vadd.f32 0.0, %v7559
      %v7561 = vpop.f32.mrb[0].mxu0
      %7562 = vmatprep.mubr.bf16.mxu0 0
      %7563 = vmatmul.mubr.bf16.gmra.mrb[0].mxu0 %v7156
      %v7564 = vpop.f32.mrb[0].mxu0
      %v7565 = vadd.f32 0.0, %v7564
      %v7566 = vpop.f32.mrb[0].mxu0
      %v7567 = vpop.f32.mrb[0].mxu0
      %v7568 = vadd.f32 0.0, %v7567
      %v7569 = vpop.f32.mrb[0].mxu0
      %7570 = vmatprep.mubr.bf16.mxu0 0
      %7571 = vmatmul.mubr.bf16.gmra.mrb[0].mxu0 %v7159
      %v7572 = vpop.f32.mrb[0].mxu0
      %v7573 = vadd.f32 0.0, %v7572
      %v7574 = vpop.f32.mrb[0].mxu0
      %v7575 = vpop.f32.mrb[0].mxu0
      %v7576 = vadd.f32 0.0, %v7575
      %v7577 = vpop.f32.mrb[0].mxu0
      %7578 = vmatprep.mubr.bf16.mxu0 0
      %7579 = vmatmul.mubr.bf16.gmra.mrb[0].mxu0 %v7162
      %v7580 = vpop.f32.mrb[0].mxu0
      %v7581 = vadd.f32 0.0, %v7580
      %v7582 = vpop.f32.mrb[0].mxu0
      %v7583 = vpop.f32.mrb[0].mxu0
      %v7584 = vadd.f32 0.0, %v7583
      %v7585 = vpop.f32.mrb[0].mxu0
      %7586 = vmatprep.mubr.bf16.mxu0 0
      %7587 = vmatmul.mubr.bf16.gmra.mrb[0].mxu0 %v7165
      %v7588 = vpop.f32.mrb[0].mxu0
      %v7589 = vadd.f32 0.0, %v7588
      %v7590 = vpop.f32.mrb[0].mxu0
      %v7591 = vpop.f32.mrb[0].mxu0
      %v7592 = vadd.f32 0.0, %v7591
      %v7593 = vpop.f32.mrb[0].mxu0
      %7594 = vdwg.mxu0
      %s7595 = scalar_lea.vmem %s14, 32
      %v7596 = vld [vmem:[%s7595] sm:$0xf]
      %v7597 = vld [vmem:[%s7595 + $0x4] sm:$0x1]
      %v7600 = vunpack.c.l.b16 %v7596
      %v7601 = vunpack.c.l.b16 %v7597
      %v7602 = vpack.c.b16 %v7601, %v7600
      %v7604 = vand.u32 %v7602, %v7170
      %7606 = vmatprep.subr.bf16.mxu0 0
      %7607 = vmatpush1.bf16.msra.mxu0 %v7604
      %7608 = vmatprep.subr.bf16.mxu0 0
      %7609 = vmatpush1.bf16.msra.mxu0 0
      %7610 = vmatprep.subr.bf16.mxu0 0
      %7611 = vmatpush1.bf16.msra.mxu0 0
      %7612 = vmatprep.subr.bf16.mxu0 0
      %7613 = vmatpush1.bf16.msra.mxu0 0
      %7614 = vmatprep.subr.bf16.mxu0 0
      %7615 = vmatpush1.bf16.msra.mxu0 0
      %7616 = vmatprep.subr.bf16.mxu0 0
      %7617 = vmatpush1.bf16.msra.mxu0 0
      %7618 = vmatprep.subr.bf16.mxu0 0
      %7619 = vmatpush1.bf16.msra.mxu0 0
      %7620 = vmatprep.subr.bf16.mxu0 0
      %7621 = vmatpush1.bf16.msra.mxu0 0
      %7622 = vmatprep.subr.bf16.mxu0 0
      %7623 = vmatpush1.bf16.msra.mxu0 0
      %7624 = vmatprep.subr.bf16.mxu0 0
      %7625 = vmatpush1.bf16.msra.mxu0 0
      %7626 = vmatprep.subr.bf16.mxu0 0
      %7627 = vmatpush1.bf16.msra.mxu0 0
      %7628 = vmatprep.subr.bf16.mxu0 0
      %7629 = vmatpush1.bf16.msra.mxu0 0
      %7630 = vmatprep.subr.bf16.mxu0 0
      %7631 = vmatpush1.bf16.msra.mxu0 0
      %7632 = vmatprep.subr.bf16.mxu0 0
      %7633 = vmatpush1.bf16.msra.mxu0 0
      %7634 = vmatprep.subr.bf16.mxu0 0
      %7635 = vmatpush1.bf16.msra.mxu0 0
      %7636 = vmatprep.subr.bf16.mxu0 0
      %7637 = vmatpush1.bf16.msra.mxu0 0
      %7638 = vmatprep.mubr.bf16.mxu0 0
      %7639 = vmatmul.mubr.bf16.gmra.mrb[0].mxu0 %v7144
      %v7640 = vpop.f32.mrb[0].mxu0
      %v7641 = vadd.f32 0.0, %v7640
      %v7642 = vpop.f32.mrb[0].mxu0
      %v7643 = vpop.f32.mrb[0].mxu0
      %v7644 = vadd.f32 0.0, %v7643
      %v7645 = vpop.f32.mrb[0].mxu0
      %7646 = vmatprep.mubr.bf16.mxu0 0
      %7647 = vmatmul.mubr.bf16.gmra.mrb[0].mxu0 %v7147
      %v7648 = vpop.f32.mrb[0].mxu0
      %v7649 = vadd.f32 0.0, %v7648
      %v7650 = vpop.f32.mrb[0].mxu0
      %v7651 = vpop.f32.mrb[0].mxu0
      %v7652 = vadd.f32 0.0, %v7651
      %v7653 = vpop.f32.mrb[0].mxu0
      %7654 = vmatprep.mubr.bf16.mxu0 0
      %7655 = vmatmul.mubr.bf16.gmra.mrb[0].mxu0 %v7150
      %v7656 = vpop.f32.mrb[0].mxu0
      %v7657 = vadd.f32 0.0, %v7656
      %v7658 = vpop.f32.mrb[0].mxu0
      %v7659 = vpop.f32.mrb[0].mxu0
      %v7660 = vadd.f32 0.0, %v7659
      %v7661 = vpop.f32.mrb[0].mxu0
      %7662 = vmatprep.mubr.bf16.mxu0 0
      %7663 = vmatmul.mubr.bf16.gmra.mrb[0].mxu0 %v7153
      %v7664 = vpop.f32.mrb[0].mxu0
      %v7665 = vadd.f32 0.0, %v7664
      %v7666 = vpop.f32.mrb[0].mxu0
      %v7667 = vpop.f32.mrb[0].mxu0
      %v7668 = vadd.f32 0.0, %v7667
      %v7669 = vpop.f32.mrb[0].mxu0
      %7670 = vmatprep.mubr.bf16.mxu0 0
      %7671 = vmatmul.mubr.bf16.gmra.mrb[0].mxu0 %v7156
      %v7672 = vpop.f32.mrb[0].mxu0
      %v7673 = vadd.f32 0.0, %v7672
      %v7674 = vpop.f32.mrb[0].mxu0
      %v7675 = vpop.f32.mrb[0].mxu0
      %v7676 = vadd.f32 0.0, %v7675
      %v7677 = vpop.f32.mrb[0].mxu0
      %7678 = vmatprep.mubr.bf16.mxu0 0
      %7679 = vmatmul.mubr.bf16.gmra.mrb[0].mxu0 %v7159
      %v7680 = vpop.f32.mrb[0].mxu0
      %v7681 = vadd.f32 0.0, %v7680
      %v7682 = vpop.f32.mrb[0].mxu0
      %v7683 = vpop.f32.mrb[0].mxu0
      %v7684 = vadd.f32 0.0, %v7683
      %v7685 = vpop.f32.mrb[0].mxu0
      %7686 = vmatprep.mubr.bf16.mxu0 0
      %7687 = vmatmul.mubr.bf16.gmra.mrb[0].mxu0 %v7162
      %v7688 = vpop.f32.mrb[0].mxu0
      %v7689 = vadd.f32 0.0, %v7688
      %v7690 = vpop.f32.mrb[0].mxu0
      %v7691 = vpop.f32.mrb[0].mxu0
      %v7692 = vadd.f32 0.0, %v7691
      %v7693 = vpop.f32.mrb[0].mxu0
      %7694 = vmatprep.mubr.bf16.mxu0 0
      %7695 = vmatmul.mubr.bf16.gmra.mrb[0].mxu0 %v7165
      %v7696 = vpop.f32.mrb[0].mxu0
      %v7697 = vadd.f32 0.0, %v7696
      %v7698 = vpop.f32.mrb[0].mxu0
      %v7699 = vpop.f32.mrb[0].mxu0
      %v7700 = vadd.f32 0.0, %v7699
      %v7701 = vpop.f32.mrb[0].mxu0
      %7702 = vdwg.mxu0
      %s7703 = scalar_lea.vmem %s14, 40
      %v7704 = vld [vmem:[%s7703] sm:$0xf]
      %v7705 = vld [vmem:[%s7703 + $0x4] sm:$0x1]
      %v7708 = vunpack.c.l.b16 %v7704
      %v7709 = vunpack.c.l.b16 %v7705
      %v7710 = vpack.c.b16 %v7709, %v7708
      %v7712 = vand.u32 %v7710, %v7170
      %7714 = vmatprep.subr.bf16.mxu0 0
      %7715 = vmatpush1.bf16.msra.mxu0 %v7712
      %7716 = vmatprep.subr.bf16.mxu0 0
      %7717 = vmatpush1.bf16.msra.mxu0 0
      %7718 = vmatprep.subr.bf16.mxu0 0
      %7719 = vmatpush1.bf16.msra.mxu0 0
      %7720 = vmatprep.subr.bf16.mxu0 0
      %7721 = vmatpush1.bf16.msra.mxu0 0
      %7722 = vmatprep.subr.bf16.mxu0 0
      %7723 = vmatpush1.bf16.msra.mxu0 0
      %7724 = vmatprep.subr.bf16.mxu0 0
      %7725 = vmatpush1.bf16.msra.mxu0 0
      %7726 = vmatprep.subr.bf16.mxu0 0
      %7727 = vmatpush1.bf16.msra.mxu0 0
      %7728 = vmatprep.subr.bf16.mxu0 0
      %7729 = vmatpush1.bf16.msra.mxu0 0
      %7730 = vmatprep.subr.bf16.mxu0 0
      %7731 = vmatpush1.bf16.msra.mxu0 0
      %7732 = vmatprep.subr.bf16.mxu0 0
      %7733 = vmatpush1.bf16.msra.mxu0 0
      %7734 = vmatprep.subr.bf16.mxu0 0
      %7735 = vmatpush1.bf16.msra.mxu0 0
      %7736 = vmatprep.subr.bf16.mxu0 0
      %7737 = vmatpush1.bf16.msra.mxu0 0
      %7738 = vmatprep.subr.bf16.mxu0 0
      %7739 = vmatpush1.bf16.msra.mxu0 0
      %7740 = vmatprep.subr.bf16.mxu0 0
      %7741 = vmatpush1.bf16.msra.mxu0 0
      %7742 = vmatprep.subr.bf16.mxu0 0
      %7743 = vmatpush1.bf16.msra.mxu0 0
      %7744 = vmatprep.subr.bf16.mxu0 0
      %7745 = vmatpush1.bf16.msra.mxu0 0
      %7746 = vmatprep.mubr.bf16.mxu0 0
      %7747 = vmatmul.mubr.bf16.gmra.mrb[0].mxu0 %v7144
      %v7748 = vpop.f32.mrb[0].mxu0
      %v7749 = vadd.f32 0.0, %v7748
      %v7750 = vpop.f32.mrb[0].mxu0
      %v7751 = vpop.f32.mrb[0].mxu0
      %v7752 = vadd.f32 0.0, %v7751
      %v7753 = vpop.f32.mrb[0].mxu0
      %7754 = vmatprep.mubr.bf16.mxu0 0
      %7755 = vmatmul.mubr.bf16.gmra.mrb[0].mxu0 %v7147
      %v7756 = vpop.f32.mrb[0].mxu0
      %v7757 = vadd.f32 0.0, %v7756
      %v7758 = vpop.f32.mrb[0].mxu0
      %v7759 = vpop.f32.mrb[0].mxu0
      %v7760 = vadd.f32 0.0, %v7759
      %v7761 = vpop.f32.mrb[0].mxu0
      %7762 = vmatprep.mubr.bf16.mxu0 0
      %7763 = vmatmul.mubr.bf16.gmra.mrb[0].mxu0 %v7150
      %v7764 = vpop.f32.mrb[0].mxu0
      %v7765 = vadd.f32 0.0, %v7764
      %v7766 = vpop.f32.mrb[0].mxu0
      %v7767 = vpop.f32.mrb[0].mxu0
      %v7768 = vadd.f32 0.0, %v7767
      %v7769 = vpop.f32.mrb[0].mxu0
      %7770 = vmatprep.mubr.bf16.mxu0 0
      %7771 = vmatmul.mubr.bf16.gmra.mrb[0].mxu0 %v7153
      %v7772 = vpop.f32.mrb[0].mxu0
      %v7773 = vadd.f32 0.0, %v7772
      %v7774 = vpop.f32.mrb[0].mxu0
      %v7775 = vpop.f32.mrb[0].mxu0
      %v7776 = vadd.f32 0.0, %v7775
      %v7777 = vpop.f32.mrb[0].mxu0
      %7778 = vmatprep.mubr.bf16.mxu0 0
      %7779 = vmatmul.mubr.bf16.gmra.mrb[0].mxu0 %v7156
      %v7780 = vpop.f32.mrb[0].mxu0
      %v7781 = vadd.f32 0.0, %v7780
      %v7782 = vpop.f32.mrb[0].mxu0
      %v7783 = vpop.f32.mrb[0].mxu0
      %v7784 = vadd.f32 0.0, %v7783
      %v7785 = vpop.f32.mrb[0].mxu0
      %7786 = vmatprep.mubr.bf16.mxu0 0
      %7787 = vmatmul.mubr.bf16.gmra.mrb[0].mxu0 %v7159
      %v7788 = vpop.f32.mrb[0].mxu0
      %v7789 = vadd.f32 0.0, %v7788
      %v7790 = vpop.f32.mrb[0].mxu0
      %v7791 = vpop.f32.mrb[0].mxu0
      %v7792 = vadd.f32 0.0, %v7791
      %v7793 = vpop.f32.mrb[0].mxu0
      %7794 = vmatprep.mubr.bf16.mxu0 0
      %7795 = vmatmul.mubr.bf16.gmra.mrb[0].mxu0 %v7162
      %v7796 = vpop.f32.mrb[0].mxu0
      %v7797 = vadd.f32 0.0, %v7796
      %v7798 = vpop.f32.mrb[0].mxu0
      %v7799 = vpop.f32.mrb[0].mxu0
      %v7800 = vadd.f32 0.0, %v7799
      %v7801 = vpop.f32.mrb[0].mxu0
      %7802 = vmatprep.mubr.bf16.mxu0 0
      %7803 = vmatmul.mubr.bf16.gmra.mrb[0].mxu0 %v7165
      %v7804 = vpop.f32.mrb[0].mxu0
      %v7805 = vadd.f32 0.0, %v7804
      %v7806 = vpop.f32.mrb[0].mxu0
      %v7807 = vpop.f32.mrb[0].mxu0
      %v7808 = vadd.f32 0.0, %v7807
      %v7809 = vpop.f32.mrb[0].mxu0
      %7810 = vdwg.mxu0
      %s7811 = scalar_lea.vmem %s14, 48
      %v7812 = vld [vmem:[%s7811] sm:$0xf]
      %v7813 = vld [vmem:[%s7811 + $0x4] sm:$0x1]
      %v7816 = vunpack.c.l.b16 %v7812
      %v7817 = vunpack.c.l.b16 %v7813
      %v7818 = vpack.c.b16 %v7817, %v7816
      %v7820 = vand.u32 %v7818, %v7170
      %7822 = vmatprep.subr.bf16.mxu0 0
      %7823 = vmatpush1.bf16.msra.mxu0 %v7820
      %7824 = vmatprep.subr.bf16.mxu0 0
      %7825 = vmatpush1.bf16.msra.mxu0 0
      %7826 = vmatprep.subr.bf16.mxu0 0
      %7827 = vmatpush1.bf16.msra.mxu0 0
      %7828 = vmatprep.subr.bf16.mxu0 0
      %7829 = vmatpush1.bf16.msra.mxu0 0
      %7830 = vmatprep.subr.bf16.mxu0 0
      %7831 = vmatpush1.bf16.msra.mxu0 0
      %7832 = vmatprep.subr.bf16.mxu0 0
      %7833 = vmatpush1.bf16.msra.mxu0 0
      %7834 = vmatprep.subr.bf16.mxu0 0
      %7835 = vmatpush1.bf16.msra.mxu0 0
      %7836 = vmatprep.subr.bf16.mxu0 0
      %7837 = vmatpush1.bf16.msra.mxu0 0
      %7838 = vmatprep.subr.bf16.mxu0 0
      %7839 = vmatpush1.bf16.msra.mxu0 0
      %7840 = vmatprep.subr.bf16.mxu0 0
      %7841 = vmatpush1.bf16.msra.mxu0 0
      %7842 = vmatprep.subr.bf16.mxu0 0
      %7843 = vmatpush1.bf16.msra.mxu0 0
      %7844 = vmatprep.subr.bf16.mxu0 0
      %7845 = vmatpush1.bf16.msra.mxu0 0
      %7846 = vmatprep.subr.bf16.mxu0 0
      %7847 = vmatpush1.bf16.msra.mxu0 0
      %7848 = vmatprep.subr.bf16.mxu0 0
      %7849 = vmatpush1.bf16.msra.mxu0 0
      %7850 = vmatprep.subr.bf16.mxu0 0
      %7851 = vmatpush1.bf16.msra.mxu0 0
      %7852 = vmatprep.subr.bf16.mxu0 0
      %7853 = vmatpush1.bf16.msra.mxu0 0
      %7854 = vmatprep.mubr.bf16.mxu0 0
      %7855 = vmatmul.mubr.bf16.gmra.mrb[0].mxu0 %v7144
      %v7856 = vpop.f32.mrb[0].mxu0
      %v7857 = vadd.f32 0.0, %v7856
      %v7858 = vpop.f32.mrb[0].mxu0
      %v7859 = vpop.f32.mrb[0].mxu0
      %v7860 = vadd.f32 0.0, %v7859
      %v7861 = vpop.f32.mrb[0].mxu0
      %7862 = vmatprep.mubr.bf16.mxu0 0
      %7863 = vmatmul.mubr.bf16.gmra.mrb[0].mxu0 %v7147
      %v7864 = vpop.f32.mrb[0].mxu0
      %v7865 = vadd.f32 0.0, %v7864
      %v7866 = vpop.f32.mrb[0].mxu0
      %v7867 = vpop.f32.mrb[0].mxu0
      %v7868 = vadd.f32 0.0, %v7867
      %v7869 = vpop.f32.mrb[0].mxu0
      %7870 = vmatprep.mubr.bf16.mxu0 0
      %7871 = vmatmul.mubr.bf16.gmra.mrb[0].mxu0 %v7150
      %v7872 = vpop.f32.mrb[0].mxu0
      %v7873 = vadd.f32 0.0, %v7872
      %v7874 = vpop.f32.mrb[0].mxu0
      %v7875 = vpop.f32.mrb[0].mxu0
      %v7876 = vadd.f32 0.0, %v7875
      %v7877 = vpop.f32.mrb[0].mxu0
      %7878 = vmatprep.mubr.bf16.mxu0 0
      %7879 = vmatmul.mubr.bf16.gmra.mrb[0].mxu0 %v7153
      %v7880 = vpop.f32.mrb[0].mxu0
      %v7881 = vadd.f32 0.0, %v7880
      %v7882 = vpop.f32.mrb[0].mxu0
      %v7883 = vpop.f32.mrb[0].mxu0
      %v7884 = vadd.f32 0.0, %v7883
      %v7885 = vpop.f32.mrb[0].mxu0
      %7886 = vmatprep.mubr.bf16.mxu0 0
      %7887 = vmatmul.mubr.bf16.gmra.mrb[0].mxu0 %v7156
      %v7888 = vpop.f32.mrb[0].mxu0
      %v7889 = vadd.f32 0.0, %v7888
      %v7890 = vpop.f32.mrb[0].mxu0
      %v7891 = vpop.f32.mrb[0].mxu0
      %v7892 = vadd.f32 0.0, %v7891
      %v7893 = vpop.f32.mrb[0].mxu0
      %7894 = vmatprep.mubr.bf16.mxu0 0
      %7895 = vmatmul.mubr.bf16.gmra.mrb[0].mxu0 %v7159
      %v7896 = vpop.f32.mrb[0].mxu0
      %v7897 = vadd.f32 0.0, %v7896
      %v7898 = vpop.f32.mrb[0].mxu0
      %v7899 = vpop.f32.mrb[0].mxu0
      %v7900 = vadd.f32 0.0, %v7899
      %v7901 = vpop.f32.mrb[0].mxu0
      %7902 = vmatprep.mubr.bf16.mxu0 0
      %7903 = vmatmul.mubr.bf16.gmra.mrb[0].mxu0 %v7162
      %v7904 = vpop.f32.mrb[0].mxu0
      %v7905 = vadd.f32 0.0, %v7904
      %v7906 = vpop.f32.mrb[0].mxu0
      %v7907 = vpop.f32.mrb[0].mxu0
      %v7908 = vadd.f32 0.0, %v7907
      %v7909 = vpop.f32.mrb[0].mxu0
      %7910 = vmatprep.mubr.bf16.mxu0 0
      %7911 = vmatmul.mubr.bf16.gmra.mrb[0].mxu0 %v7165
      %v7912 = vpop.f32.mrb[0].mxu0
      %v7913 = vadd.f32 0.0, %v7912
      %v7914 = vpop.f32.mrb[0].mxu0
      %v7915 = vpop.f32.mrb[0].mxu0
      %v7916 = vadd.f32 0.0, %v7915
      %v7917 = vpop.f32.mrb[0].mxu0
      %7918 = vdwg.mxu0
      %s7919 = scalar_lea.vmem %s14, 56
      %v7920 = vld [vmem:[%s7919] sm:$0xf]
      %v7921 = vld [vmem:[%s7919 + $0x4] sm:$0x1]
      %v7924 = vunpack.c.l.b16 %v7920
      %v7925 = vunpack.c.l.b16 %v7921
      %v7926 = vpack.c.b16 %v7925, %v7924
      %v7928 = vand.u32 %v7926, %v7170
      %7930 = vmatprep.subr.bf16.mxu0 0
      %7931 = vmatpush1.bf16.msra.mxu0 %v7928
      %7932 = vmatprep.subr.bf16.mxu0 0
      %7933 = vmatpush1.bf16.msra.mxu0 0
      %7934 = vmatprep.subr.bf16.mxu0 0
      %7935 = vmatpush1.bf16.msra.mxu0 0
      %7936 = vmatprep.subr.bf16.mxu0 0
      %7937 = vmatpush1.bf16.msra.mxu0 0
      %7938 = vmatprep.subr.bf16.mxu0 0
      %7939 = vmatpush1.bf16.msra.mxu0 0
      %7940 = vmatprep.subr.bf16.mxu0 0
      %7941 = vmatpush1.bf16.msra.mxu0 0
      %7942 = vmatprep.subr.bf16.mxu0 0
      %7943 = vmatpush1.bf16.msra.mxu0 0
      %7944 = vmatprep.subr.bf16.mxu0 0
      %7945 = vmatpush1.bf16.msra.mxu0 0
      %7946 = vmatprep.subr.bf16.mxu0 0
      %7947 = vmatpush1.bf16.msra.mxu0 0
      %7948 = vmatprep.subr.bf16.mxu0 0
      %7949 = vmatpush1.bf16.msra.mxu0 0
      %7950 = vmatprep.subr.bf16.mxu0 0
      %7951 = vmatpush1.bf16.msra.mxu0 0
      %7952 = vmatprep.subr.bf16.mxu0 0
      %7953 = vmatpush1.bf16.msra.mxu0 0
      %7954 = vmatprep.subr.bf16.mxu0 0
      %7955 = vmatpush1.bf16.msra.mxu0 0
      %7956 = vmatprep.subr.bf16.mxu0 0
      %7957 = vmatpush1.bf16.msra.mxu0 0
      %7958 = vmatprep.subr.bf16.mxu0 0
      %7959 = vmatpush1.bf16.msra.mxu0 0
      %7960 = vmatprep.subr.bf16.mxu0 0
      %7961 = vmatpush1.bf16.msra.mxu0 0
      %7962 = vmatprep.mubr.bf16.mxu0 0
      %7963 = vmatmul.mubr.bf16.gmra.mrb[0].mxu0 %v7144
      %v7964 = vpop.f32.mrb[0].mxu0
      %v7965 = vadd.f32 0.0, %v7964
      %v7966 = vpop.f32.mrb[0].mxu0
      %v7967 = vpop.f32.mrb[0].mxu0
      %v7968 = vadd.f32 0.0, %v7967
      %v7969 = vpop.f32.mrb[0].mxu0
      %7970 = vmatprep.mubr.bf16.mxu0 0
      %7971 = vmatmul.mubr.bf16.gmra.mrb[0].mxu0 %v7147
      %v7972 = vpop.f32.mrb[0].mxu0
      %v7973 = vadd.f32 0.0, %v7972
      %v7974 = vpop.f32.mrb[0].mxu0
      %v7975 = vpop.f32.mrb[0].mxu0
      %v7976 = vadd.f32 0.0, %v7975
      %v7977 = vpop.f32.mrb[0].mxu0
      %7978 = vmatprep.mubr.bf16.mxu0 0
      %7979 = vmatmul.mubr.bf16.gmra.mrb[0].mxu0 %v7150
      %v7980 = vpop.f32.mrb[0].mxu0
      %v7981 = vadd.f32 0.0, %v7980
      %v7982 = vpop.f32.mrb[0].mxu0
      %v7983 = vpop.f32.mrb[0].mxu0
      %v7984 = vadd.f32 0.0, %v7983
      %v7985 = vpop.f32.mrb[0].mxu0
      %7986 = vmatprep.mubr.bf16.mxu0 0
      %7987 = vmatmul.mubr.bf16.gmra.mrb[0].mxu0 %v7153
      %v7988 = vpop.f32.mrb[0].mxu0
      %v7989 = vadd.f32 0.0, %v7988
      %v7990 = vpop.f32.mrb[0].mxu0
      %v7991 = vpop.f32.mrb[0].mxu0
      %v7992 = vadd.f32 0.0, %v7991
      %v7993 = vpop.f32.mrb[0].mxu0
      %7994 = vmatprep.mubr.bf16.mxu0 0
      %7995 = vmatmul.mubr.bf16.gmra.mrb[0].mxu0 %v7156
      %v7996 = vpop.f32.mrb[0].mxu0
      %v7997 = vadd.f32 0.0, %v7996
      %v7998 = vpop.f32.mrb[0].mxu0
      %v7999 = vpop.f32.mrb[0].mxu0
      %v8000 = vadd.f32 0.0, %v7999
      %v8001 = vpop.f32.mrb[0].mxu0
      %8002 = vmatprep.mubr.bf16.mxu0 0
      %8003 = vmatmul.mubr.bf16.gmra.mrb[0].mxu0 %v7159
      %v8004 = vpop.f32.mrb[0].mxu0
      %v8005 = vadd.f32 0.0, %v8004
      %v8006 = vpop.f32.mrb[0].mxu0
      %v8007 = vpop.f32.mrb[0].mxu0
      %v8008 = vadd.f32 0.0, %v8007
      %v8009 = vpop.f32.mrb[0].mxu0
      %8010 = vmatprep.mubr.bf16.mxu0 0
      %8011 = vmatmul.mubr.bf16.gmra.mrb[0].mxu0 %v7162
      %v8012 = vpop.f32.mrb[0].mxu0
      %v8013 = vadd.f32 0.0, %v8012
      %v8014 = vpop.f32.mrb[0].mxu0
      %v8015 = vpop.f32.mrb[0].mxu0
      %v8016 = vadd.f32 0.0, %v8015
      %v8017 = vpop.f32.mrb[0].mxu0
      %8018 = vmatprep.mubr.bf16.mxu0 0
      %8019 = vmatmul.mubr.bf16.gmra.mrb[0].mxu0 %v7165
      %v8020 = vpop.f32.mrb[0].mxu0
      %v8021 = vadd.f32 0.0, %v8020
      %v8022 = vpop.f32.mrb[0].mxu0
      %v8023 = vpop.f32.mrb[0].mxu0
      %v8024 = vadd.f32 0.0, %v8023
      %v8025 = vpop.f32.mrb[0].mxu0
      %8026 = vdwg.mxu0
      %s8027 = scalar_lea.vmem %s14, 64
      %v8028 = vld [vmem:[%s8027] sm:$0xf]
      %v8029 = vld [vmem:[%s8027 + $0x4] sm:$0x1]
      %v8032 = vunpack.c.l.b16 %v8028
      %v8033 = vunpack.c.l.b16 %v8029
      %v8034 = vpack.c.b16 %v8033, %v8032
      %v8036 = vand.u32 %v8034, %v7170
      %8038 = vmatprep.subr.bf16.mxu0 0
      %8039 = vmatpush1.bf16.msra.mxu0 %v8036
      %8040 = vmatprep.subr.bf16.mxu0 0
      %8041 = vmatpush1.bf16.msra.mxu0 0
      %8042 = vmatprep.subr.bf16.mxu0 0
      %8043 = vmatpush1.bf16.msra.mxu0 0
      %8044 = vmatprep.subr.bf16.mxu0 0
      %8045 = vmatpush1.bf16.msra.mxu0 0
      %8046 = vmatprep.subr.bf16.mxu0 0
      %8047 = vmatpush1.bf16.msra.mxu0 0
      %8048 = vmatprep.subr.bf16.mxu0 0
      %8049 = vmatpush1.bf16.msra.mxu0 0
      %8050 = vmatprep.subr.bf16.mxu0 0
      %8051 = vmatpush1.bf16.msra.mxu0 0
      %8052 = vmatprep.subr.bf16.mxu0 0
      %8053 = vmatpush1.bf16.msra.mxu0 0
      %8054 = vmatprep.subr.bf16.mxu0 0
      %8055 = vmatpush1.bf16.msra.mxu0 0
      %8056 = vmatprep.subr.bf16.mxu0 0
      %8057 = vmatpush1.bf16.msra.mxu0 0
      %8058 = vmatprep.subr.bf16.mxu0 0
      %8059 = vmatpush1.bf16.msra.mxu0 0
      %8060 = vmatprep.subr.bf16.mxu0 0
      %8061 = vmatpush1.bf16.msra.mxu0 0
      %8062 = vmatprep.subr.bf16.mxu0 0
      %8063 = vmatpush1.bf16.msra.mxu0 0
      %8064 = vmatprep.subr.bf16.mxu0 0
      %8065 = vmatpush1.bf16.msra.mxu0 0
      %8066 = vmatprep.subr.bf16.mxu0 0
      %8067 = vmatpush1.bf16.msra.mxu0 0
      %8068 = vmatprep.subr.bf16.mxu0 0
      %8069 = vmatpush1.bf16.msra.mxu0 0
      %8070 = vmatprep.mubr.bf16.mxu0 0
      %8071 = vmatmul.mubr.bf16.gmra.mrb[0].mxu0 %v7144
      %v8072 = vpop.f32.mrb[0].mxu0
      %v8073 = vadd.f32 0.0, %v8072
      %v8074 = vpop.f32.mrb[0].mxu0
      %v8075 = vpop.f32.mrb[0].mxu0
      %v8076 = vadd.f32 0.0, %v8075
      %v8077 = vpop.f32.mrb[0].mxu0
      %8078 = vmatprep.mubr.bf16.mxu0 0
      %8079 = vmatmul.mubr.bf16.gmra.mrb[0].mxu0 %v7147
      %v8080 = vpop.f32.mrb[0].mxu0
      %v8081 = vadd.f32 0.0, %v8080
      %v8082 = vpop.f32.mrb[0].mxu0
      %v8083 = vpop.f32.mrb[0].mxu0
      %v8084 = vadd.f32 0.0, %v8083
      %v8085 = vpop.f32.mrb[0].mxu0
      %8086 = vmatprep.mubr.bf16.mxu0 0
      %8087 = vmatmul.mubr.bf16.gmra.mrb[0].mxu0 %v7150
      %v8088 = vpop.f32.mrb[0].mxu0
      %v8089 = vadd.f32 0.0, %v8088
      %v8090 = vpop.f32.mrb[0].mxu0
      %v8091 = vpop.f32.mrb[0].mxu0
      %v8092 = vadd.f32 0.0, %v8091
      %v8093 = vpop.f32.mrb[0].mxu0
      %8094 = vmatprep.mubr.bf16.mxu0 0
      %8095 = vmatmul.mubr.bf16.gmra.mrb[0].mxu0 %v7153
      %v8096 = vpop.f32.mrb[0].mxu0
      %v8097 = vadd.f32 0.0, %v8096
      %v8098 = vpop.f32.mrb[0].mxu0
      %v8099 = vpop.f32.mrb[0].mxu0
      %v8100 = vadd.f32 0.0, %v8099
      %v8101 = vpop.f32.mrb[0].mxu0
      %8102 = vmatprep.mubr.bf16.mxu0 0
      %8103 = vmatmul.mubr.bf16.gmra.mrb[0].mxu0 %v7156
      %v8104 = vpop.f32.mrb[0].mxu0
      %v8105 = vadd.f32 0.0, %v8104
      %v8106 = vpop.f32.mrb[0].mxu0
      %v8107 = vpop.f32.mrb[0].mxu0
      %v8108 = vadd.f32 0.0, %v8107
      %v8109 = vpop.f32.mrb[0].mxu0
      %8110 = vmatprep.mubr.bf16.mxu0 0
      %8111 = vmatmul.mubr.bf16.gmra.mrb[0].mxu0 %v7159
      %v8112 = vpop.f32.mrb[0].mxu0
      %v8113 = vadd.f32 0.0, %v8112
      %v8114 = vpop.f32.mrb[0].mxu0
      %v8115 = vpop.f32.mrb[0].mxu0
      %v8116 = vadd.f32 0.0, %v8115
      %v8117 = vpop.f32.mrb[0].mxu0
      %8118 = vmatprep.mubr.bf16.mxu0 0
      %8119 = vmatmul.mubr.bf16.gmra.mrb[0].mxu0 %v7162
      %v8120 = vpop.f32.mrb[0].mxu0
      %v8121 = vadd.f32 0.0, %v8120
      %v8122 = vpop.f32.mrb[0].mxu0
      %v8123 = vpop.f32.mrb[0].mxu0
      %v8124 = vadd.f32 0.0, %v8123
      %v8125 = vpop.f32.mrb[0].mxu0
      %8126 = vmatprep.mubr.bf16.mxu0 0
      %8127 = vmatmul.mubr.bf16.gmra.mrb[0].mxu0 %v7165
      %v8128 = vpop.f32.mrb[0].mxu0
      %v8129 = vadd.f32 0.0, %v8128
      %v8130 = vpop.f32.mrb[0].mxu0
      %v8131 = vpop.f32.mrb[0].mxu0
      %v8132 = vadd.f32 0.0, %v8131
      %v8133 = vpop.f32.mrb[0].mxu0
      %8134 = vdwg.mxu0
      %s8135 = scalar_lea.vmem %s14, 72
      %v8136 = vld [vmem:[%s8135] sm:$0xf]
      %v8137 = vld [vmem:[%s8135 + $0x4] sm:$0x1]
      %v8140 = vunpack.c.l.b16 %v8136
      %v8141 = vunpack.c.l.b16 %v8137
      %v8142 = vpack.c.b16 %v8141, %v8140
      %v8144 = vand.u32 %v8142, %v7170
      %8146 = vmatprep.subr.bf16.mxu0 0
      %8147 = vmatpush1.bf16.msra.mxu0 %v8144
      %8148 = vmatprep.subr.bf16.mxu0 0
      %8149 = vmatpush1.bf16.msra.mxu0 0
      %8150 = vmatprep.subr.bf16.mxu0 0
      %8151 = vmatpush1.bf16.msra.mxu0 0
      %8152 = vmatprep.subr.bf16.mxu0 0
      %8153 = vmatpush1.bf16.msra.mxu0 0
      %8154 = vmatprep.subr.bf16.mxu0 0
      %8155 = vmatpush1.bf16.msra.mxu0 0
      %8156 = vmatprep.subr.bf16.mxu0 0
      %8157 = vmatpush1.bf16.msra.mxu0 0
      %8158 = vmatprep.subr.bf16.mxu0 0
      %8159 = vmatpush1.bf16.msra.mxu0 0
      %8160 = vmatprep.subr.bf16.mxu0 0
      %8161 = vmatpush1.bf16.msra.mxu0 0
      %8162 = vmatprep.subr.bf16.mxu0 0
      %8163 = vmatpush1.bf16.msra.mxu0 0
      %8164 = vmatprep.subr.bf16.mxu0 0
      %8165 = vmatpush1.bf16.msra.mxu0 0
      %8166 = vmatprep.subr.bf16.mxu0 0
      %8167 = vmatpush1.bf16.msra.mxu0 0
      %8168 = vmatprep.subr.bf16.mxu0 0
      %8169 = vmatpush1.bf16.msra.mxu0 0
      %8170 = vmatprep.subr.bf16.mxu0 0
      %8171 = vmatpush1.bf16.msra.mxu0 0
      %8172 = vmatprep.subr.bf16.mxu0 0
      %8173 = vmatpush1.bf16.msra.mxu0 0
      %8174 = vmatprep.subr.bf16.mxu0 0
      %8175 = vmatpush1.bf16.msra.mxu0 0
      %8176 = vmatprep.subr.bf16.mxu0 0
      %8177 = vmatpush1.bf16.msra.mxu0 0
      %8178 = vmatprep.mubr.bf16.mxu0 0
      %8179 = vmatmul.mubr.bf16.gmra.mrb[0].mxu0 %v7144
      %v8180 = vpop.f32.mrb[0].mxu0
      %v8181 = vadd.f32 0.0, %v8180
      %v8182 = vpop.f32.mrb[0].mxu0
      %v8183 = vpop.f32.mrb[0].mxu0
      %v8184 = vadd.f32 0.0, %v8183
      %v8185 = vpop.f32.mrb[0].mxu0
      %8186 = vmatprep.mubr.bf16.mxu0 0
      %8187 = vmatmul.mubr.bf16.gmra.mrb[0].mxu0 %v7147
      %v8188 = vpop.f32.mrb[0].mxu0
      %v8189 = vadd.f32 0.0, %v8188
      %v8190 = vpop.f32.mrb[0].mxu0
      %v8191 = vpop.f32.mrb[0].mxu0
      %v8192 = vadd.f32 0.0, %v8191
      %v8193 = vpop.f32.mrb[0].mxu0
      %8194 = vmatprep.mubr.bf16.mxu0 0
      %8195 = vmatmul.mubr.bf16.gmra.mrb[0].mxu0 %v7150
      %v8196 = vpop.f32.mrb[0].mxu0
      %v8197 = vadd.f32 0.0, %v8196
      %v8198 = vpop.f32.mrb[0].mxu0
      %v8199 = vpop.f32.mrb[0].mxu0
      %v8200 = vadd.f32 0.0, %v8199
      %v8201 = vpop.f32.mrb[0].mxu0
      %8202 = vmatprep.mubr.bf16.mxu0 0
      %8203 = vmatmul.mubr.bf16.gmra.mrb[0].mxu0 %v7153
      %v8204 = vpop.f32.mrb[0].mxu0
      %v8205 = vadd.f32 0.0, %v8204
      %v8206 = vpop.f32.mrb[0].mxu0
      %v8207 = vpop.f32.mrb[0].mxu0
      %v8208 = vadd.f32 0.0, %v8207
      %v8209 = vpop.f32.mrb[0].mxu0
      %8210 = vmatprep.mubr.bf16.mxu0 0
      %8211 = vmatmul.mubr.bf16.gmra.mrb[0].mxu0 %v7156
      %v8212 = vpop.f32.mrb[0].mxu0
      %v8213 = vadd.f32 0.0, %v8212
      %v8214 = vpop.f32.mrb[0].mxu0
      %v8215 = vpop.f32.mrb[0].mxu0
      %v8216 = vadd.f32 0.0, %v8215
      %v8217 = vpop.f32.mrb[0].mxu0
      %8218 = vmatprep.mubr.bf16.mxu0 0
      %8219 = vmatmul.mubr.bf16.gmra.mrb[0].mxu0 %v7159
      %v8220 = vpop.f32.mrb[0].mxu0
      %v8221 = vadd.f32 0.0, %v8220
      %v8222 = vpop.f32.mrb[0].mxu0
      %v8223 = vpop.f32.mrb[0].mxu0
      %v8224 = vadd.f32 0.0, %v8223
      %v8225 = vpop.f32.mrb[0].mxu0
      %8226 = vmatprep.mubr.bf16.mxu0 0
      %8227 = vmatmul.mubr.bf16.gmra.mrb[0].mxu0 %v7162
      %v8228 = vpop.f32.mrb[0].mxu0
      %v8229 = vadd.f32 0.0, %v8228
      %v8230 = vpop.f32.mrb[0].mxu0
      %v8231 = vpop.f32.mrb[0].mxu0
      %v8232 = vadd.f32 0.0, %v8231
      %v8233 = vpop.f32.mrb[0].mxu0
      %8234 = vmatprep.mubr.bf16.mxu0 0
      %8235 = vmatmul.mubr.bf16.gmra.mrb[0].mxu0 %v7165
      %v8236 = vpop.f32.mrb[0].mxu0
      %v8237 = vadd.f32 0.0, %v8236
      %v8238 = vpop.f32.mrb[0].mxu0
      %v8239 = vpop.f32.mrb[0].mxu0
      %v8240 = vadd.f32 0.0, %v8239
      %v8241 = vpop.f32.mrb[0].mxu0
      %8242 = vdwg.mxu0
      %s8243 = scalar_lea.vmem %s14, 80
      %v8244 = vld [vmem:[%s8243] sm:$0xf]
      %v8245 = vld [vmem:[%s8243 + $0x4] sm:$0x1]
      %v8248 = vunpack.c.l.b16 %v8244
      %v8249 = vunpack.c.l.b16 %v8245
      %v8250 = vpack.c.b16 %v8249, %v8248
      %v8252 = vand.u32 %v8250, %v7170
      %8254 = vmatprep.subr.bf16.mxu0 0
      %8255 = vmatpush1.bf16.msra.mxu0 %v8252
      %8256 = vmatprep.subr.bf16.mxu0 0
      %8257 = vmatpush1.bf16.msra.mxu0 0
      %8258 = vmatprep.subr.bf16.mxu0 0
      %8259 = vmatpush1.bf16.msra.mxu0 0
      %8260 = vmatprep.subr.bf16.mxu0 0
      %8261 = vmatpush1.bf16.msra.mxu0 0
      %8262 = vmatprep.subr.bf16.mxu0 0
      %8263 = vmatpush1.bf16.msra.mxu0 0
      %8264 = vmatprep.subr.bf16.mxu0 0
      %8265 = vmatpush1.bf16.msra.mxu0 0
      %8266 = vmatprep.subr.bf16.mxu0 0
      %8267 = vmatpush1.bf16.msra.mxu0 0
      %8268 = vmatprep.subr.bf16.mxu0 0
      %8269 = vmatpush1.bf16.msra.mxu0 0
      %8270 = vmatprep.subr.bf16.mxu0 0
      %8271 = vmatpush1.bf16.msra.mxu0 0
      %8272 = vmatprep.subr.bf16.mxu0 0
      %8273 = vmatpush1.bf16.msra.mxu0 0
      %8274 = vmatprep.subr.bf16.mxu0 0
      %8275 = vmatpush1.bf16.msra.mxu0 0
      %8276 = vmatprep.subr.bf16.mxu0 0
      %8277 = vmatpush1.bf16.msra.mxu0 0
      %8278 = vmatprep.subr.bf16.mxu0 0
      %8279 = vmatpush1.bf16.msra.mxu0 0
      %8280 = vmatprep.subr.bf16.mxu0 0
      %8281 = vmatpush1.bf16.msra.mxu0 0
      %8282 = vmatprep.subr.bf16.mxu0 0
      %8283 = vmatpush1.bf16.msra.mxu0 0
      %8284 = vmatprep.subr.bf16.mxu0 0
      %8285 = vmatpush1.bf16.msra.mxu0 0
      %8286 = vmatprep.mubr.bf16.mxu0 0
      %8287 = vmatmul.mubr.bf16.gmra.mrb[0].mxu0 %v7144
      %v8288 = vpop.f32.mrb[0].mxu0
      %v8289 = vadd.f32 0.0, %v8288
      %v8290 = vpop.f32.mrb[0].mxu0
      %v8291 = vpop.f32.mrb[0].mxu0
      %v8292 = vadd.f32 0.0, %v8291
      %v8293 = vpop.f32.mrb[0].mxu0
      %8294 = vmatprep.mubr.bf16.mxu0 0
      %8295 = vmatmul.mubr.bf16.gmra.mrb[0].mxu0 %v7147
      %v8296 = vpop.f32.mrb[0].mxu0
      %v8297 = vadd.f32 0.0, %v8296
      %v8298 = vpop.f32.mrb[0].mxu0
      %v8299 = vpop.f32.mrb[0].mxu0
      %v8300 = vadd.f32 0.0, %v8299
      %v8301 = vpop.f32.mrb[0].mxu0
      %8302 = vmatprep.mubr.bf16.mxu0 0
      %8303 = vmatmul.mubr.bf16.gmra.mrb[0].mxu0 %v7150
      %v8304 = vpop.f32.mrb[0].mxu0
      %v8305 = vadd.f32 0.0, %v8304
      %v8306 = vpop.f32.mrb[0].mxu0
      %v8307 = vpop.f32.mrb[0].mxu0
      %v8308 = vadd.f32 0.0, %v8307
      %v8309 = vpop.f32.mrb[0].mxu0
      %8310 = vmatprep.mubr.bf16.mxu0 0
      %8311 = vmatmul.mubr.bf16.gmra.mrb[0].mxu0 %v7153
      %v8312 = vpop.f32.mrb[0].mxu0
      %v8313 = vadd.f32 0.0, %v8312
      %v8314 = vpop.f32.mrb[0].mxu0
      %v8315 = vpop.f32.mrb[0].mxu0
      %v8316 = vadd.f32 0.0, %v8315
      %v8317 = vpop.f32.mrb[0].mxu0
      %8318 = vmatprep.mubr.bf16.mxu0 0
      %8319 = vmatmul.mubr.bf16.gmra.mrb[0].mxu0 %v7156
      %v8320 = vpop.f32.mrb[0].mxu0
      %v8321 = vadd.f32 0.0, %v8320
      %v8322 = vpop.f32.mrb[0].mxu0
      %v8323 = vpop.f32.mrb[0].mxu0
      %v8324 = vadd.f32 0.0, %v8323
      %v8325 = vpop.f32.mrb[0].mxu0
      %8326 = vmatprep.mubr.bf16.mxu0 0
      %8327 = vmatmul.mubr.bf16.gmra.mrb[0].mxu0 %v7159
      %v8328 = vpop.f32.mrb[0].mxu0
      %v8329 = vadd.f32 0.0, %v8328
      %v8330 = vpop.f32.mrb[0].mxu0
      %v8331 = vpop.f32.mrb[0].mxu0
      %v8332 = vadd.f32 0.0, %v8331
      %v8333 = vpop.f32.mrb[0].mxu0
      %8334 = vmatprep.mubr.bf16.mxu0 0
      %8335 = vmatmul.mubr.bf16.gmra.mrb[0].mxu0 %v7162
      %v8336 = vpop.f32.mrb[0].mxu0
      %v8337 = vadd.f32 0.0, %v8336
      %v8338 = vpop.f32.mrb[0].mxu0
      %v8339 = vpop.f32.mrb[0].mxu0
      %v8340 = vadd.f32 0.0, %v8339
      %v8341 = vpop.f32.mrb[0].mxu0
      %8342 = vmatprep.mubr.bf16.mxu0 0
      %8343 = vmatmul.mubr.bf16.gmra.mrb[0].mxu0 %v7165
      %v8344 = vpop.f32.mrb[0].mxu0
      %v8345 = vadd.f32 0.0, %v8344
      %v8346 = vpop.f32.mrb[0].mxu0
      %v8347 = vpop.f32.mrb[0].mxu0
      %v8348 = vadd.f32 0.0, %v8347
      %v8349 = vpop.f32.mrb[0].mxu0
      %8350 = vdwg.mxu0
      %s8351 = scalar_lea.vmem %s14, 88
      %v8352 = vld [vmem:[%s8351] sm:$0xf]
      %v8353 = vld [vmem:[%s8351 + $0x4] sm:$0x1]
      %v8356 = vunpack.c.l.b16 %v8352
      %v8357 = vunpack.c.l.b16 %v8353
      %v8358 = vpack.c.b16 %v8357, %v8356
      %v8360 = vand.u32 %v8358, %v7170
      %8362 = vmatprep.subr.bf16.mxu0 0
      %8363 = vmatpush1.bf16.msra.mxu0 %v8360
      %8364 = vmatprep.subr.bf16.mxu0 0
      %8365 = vmatpush1.bf16.msra.mxu0 0
      %8366 = vmatprep.subr.bf16.mxu0 0
      %8367 = vmatpush1.bf16.msra.mxu0 0
      %8368 = vmatprep.subr.bf16.mxu0 0
      %8369 = vmatpush1.bf16.msra.mxu0 0
      %8370 = vmatprep.subr.bf16.mxu0 0
      %8371 = vmatpush1.bf16.msra.mxu0 0
      %8372 = vmatprep.subr.bf16.mxu0 0
      %8373 = vmatpush1.bf16.msra.mxu0 0
      %8374 = vmatprep.subr.bf16.mxu0 0
      %8375 = vmatpush1.bf16.msra.mxu0 0
      %8376 = vmatprep.subr.bf16.mxu0 0
      %8377 = vmatpush1.bf16.msra.mxu0 0
      %8378 = vmatprep.subr.bf16.mxu0 0
      %8379 = vmatpush1.bf16.msra.mxu0 0
      %8380 = vmatprep.subr.bf16.mxu0 0
      %8381 = vmatpush1.bf16.msra.mxu0 0
      %8382 = vmatprep.subr.bf16.mxu0 0
      %8383 = vmatpush1.bf16.msra.mxu0 0
      %8384 = vmatprep.subr.bf16.mxu0 0
      %8385 = vmatpush1.bf16.msra.mxu0 0
      %8386 = vmatprep.subr.bf16.mxu0 0
      %8387 = vmatpush1.bf16.msra.mxu0 0
      %8388 = vmatprep.subr.bf16.mxu0 0
      %8389 = vmatpush1.bf16.msra.mxu0 0
      %8390 = vmatprep.subr.bf16.mxu0 0
      %8391 = vmatpush1.bf16.msra.mxu0 0
      %8392 = vmatprep.subr.bf16.mxu0 0
      %8393 = vmatpush1.bf16.msra.mxu0 0
      %8394 = vmatprep.mubr.bf16.mxu0 0
      %8395 = vmatmul.mubr.bf16.gmra.mrb[0].mxu0 %v7144
      %v8396 = vpop.f32.mrb[0].mxu0
      %v8397 = vadd.f32 0.0, %v8396
      %v8398 = vpop.f32.mrb[0].mxu0
      %v8399 = vpop.f32.mrb[0].mxu0
      %v8400 = vadd.f32 0.0, %v8399
      %v8401 = vpop.f32.mrb[0].mxu0
      %8402 = vmatprep.mubr.bf16.mxu0 0
      %8403 = vmatmul.mubr.bf16.gmra.mrb[0].mxu0 %v7147
      %v8404 = vpop.f32.mrb[0].mxu0
      %v8405 = vadd.f32 0.0, %v8404
      %v8406 = vpop.f32.mrb[0].mxu0
      %v8407 = vpop.f32.mrb[0].mxu0
      %v8408 = vadd.f32 0.0, %v8407
      %v8409 = vpop.f32.mrb[0].mxu0
      %8410 = vmatprep.mubr.bf16.mxu0 0
      %8411 = vmatmul.mubr.bf16.gmra.mrb[0].mxu0 %v7150
      %v8412 = vpop.f32.mrb[0].mxu0
      %v8413 = vadd.f32 0.0, %v8412
      %v8414 = vpop.f32.mrb[0].mxu0
      %v8415 = vpop.f32.mrb[0].mxu0
      %v8416 = vadd.f32 0.0, %v8415
      %v8417 = vpop.f32.mrb[0].mxu0
      %8418 = vmatprep.mubr.bf16.mxu0 0
      %8419 = vmatmul.mubr.bf16.gmra.mrb[0].mxu0 %v7153
      %v8420 = vpop.f32.mrb[0].mxu0
      %v8421 = vadd.f32 0.0, %v8420
      %v8422 = vpop.f32.mrb[0].mxu0
      %v8423 = vpop.f32.mrb[0].mxu0
      %v8424 = vadd.f32 0.0, %v8423
      %v8425 = vpop.f32.mrb[0].mxu0
      %8426 = vmatprep.mubr.bf16.mxu0 0
      %8427 = vmatmul.mubr.bf16.gmra.mrb[0].mxu0 %v7156
      %v8428 = vpop.f32.mrb[0].mxu0
      %v8429 = vadd.f32 0.0, %v8428
      %v8430 = vpop.f32.mrb[0].mxu0
      %v8431 = vpop.f32.mrb[0].mxu0
      %v8432 = vadd.f32 0.0, %v8431
      %v8433 = vpop.f32.mrb[0].mxu0
      %8434 = vmatprep.mubr.bf16.mxu0 0
      %8435 = vmatmul.mubr.bf16.gmra.mrb[0].mxu0 %v7159
      %v8436 = vpop.f32.mrb[0].mxu0
      %v8437 = vadd.f32 0.0, %v8436
      %v8438 = vpop.f32.mrb[0].mxu0
      %v8439 = vpop.f32.mrb[0].mxu0
      %v8440 = vadd.f32 0.0, %v8439
      %v8441 = vpop.f32.mrb[0].mxu0
      %8442 = vmatprep.mubr.bf16.mxu0 0
      %8443 = vmatmul.mubr.bf16.gmra.mrb[0].mxu0 %v7162
      %v8444 = vpop.f32.mrb[0].mxu0
      %v8445 = vadd.f32 0.0, %v8444
      %v8446 = vpop.f32.mrb[0].mxu0
      %v8447 = vpop.f32.mrb[0].mxu0
      %v8448 = vadd.f32 0.0, %v8447
      %v8449 = vpop.f32.mrb[0].mxu0
      %8450 = vmatprep.mubr.bf16.mxu0 0
      %8451 = vmatmul.mubr.bf16.gmra.mrb[0].mxu0 %v7165
      %v8452 = vpop.f32.mrb[0].mxu0
      %v8453 = vadd.f32 0.0, %v8452
      %v8454 = vpop.f32.mrb[0].mxu0
      %v8455 = vpop.f32.mrb[0].mxu0
      %v8456 = vadd.f32 0.0, %v8455
      %v8457 = vpop.f32.mrb[0].mxu0
      %8458 = vdwg.mxu0
      %s8459 = scalar_lea.vmem %s14, 96
      %v8460 = vld [vmem:[%s8459] sm:$0xf]
      %v8461 = vld [vmem:[%s8459 + $0x4] sm:$0x1]
      %v8464 = vunpack.c.l.b16 %v8460
      %v8465 = vunpack.c.l.b16 %v8461
      %v8466 = vpack.c.b16 %v8465, %v8464
      %v8468 = vand.u32 %v8466, %v7170
      %8470 = vmatprep.subr.bf16.mxu0 0
      %8471 = vmatpush1.bf16.msra.mxu0 %v8468
      %8472 = vmatprep.subr.bf16.mxu0 0
      %8473 = vmatpush1.bf16.msra.mxu0 0
      %8474 = vmatprep.subr.bf16.mxu0 0
      %8475 = vmatpush1.bf16.msra.mxu0 0
      %8476 = vmatprep.subr.bf16.mxu0 0
      %8477 = vmatpush1.bf16.msra.mxu0 0
      %8478 = vmatprep.subr.bf16.mxu0 0
      %8479 = vmatpush1.bf16.msra.mxu0 0
      %8480 = vmatprep.subr.bf16.mxu0 0
      %8481 = vmatpush1.bf16.msra.mxu0 0
      %8482 = vmatprep.subr.bf16.mxu0 0
      %8483 = vmatpush1.bf16.msra.mxu0 0
      %8484 = vmatprep.subr.bf16.mxu0 0
      %8485 = vmatpush1.bf16.msra.mxu0 0
      %8486 = vmatprep.subr.bf16.mxu0 0
      %8487 = vmatpush1.bf16.msra.mxu0 0
      %8488 = vmatprep.subr.bf16.mxu0 0
      %8489 = vmatpush1.bf16.msra.mxu0 0
      %8490 = vmatprep.subr.bf16.mxu0 0
      %8491 = vmatpush1.bf16.msra.mxu0 0
      %8492 = vmatprep.subr.bf16.mxu0 0
      %8493 = vmatpush1.bf16.msra.mxu0 0
      %8494 = vmatprep.subr.bf16.mxu0 0
      %8495 = vmatpush1.bf16.msra.mxu0 0
      %8496 = vmatprep.subr.bf16.mxu0 0
      %8497 = vmatpush1.bf16.msra.mxu0 0
      %8498 = vmatprep.subr.bf16.mxu0 0
      %8499 = vmatpush1.bf16.msra.mxu0 0
      %8500 = vmatprep.subr.bf16.mxu0 0
      %8501 = vmatpush1.bf16.msra.mxu0 0
      %8502 = vmatprep.mubr.bf16.mxu0 0
      %8503 = vmatmul.mubr.bf16.gmra.mrb[0].mxu0 %v7144
      %v8504 = vpop.f32.mrb[0].mxu0
      %v8505 = vadd.f32 0.0, %v8504
      %v8506 = vpop.f32.mrb[0].mxu0
      %v8507 = vpop.f32.mrb[0].mxu0
      %v8508 = vadd.f32 0.0, %v8507
      %v8509 = vpop.f32.mrb[0].mxu0
      %8510 = vmatprep.mubr.bf16.mxu0 0
      %8511 = vmatmul.mubr.bf16.gmra.mrb[0].mxu0 %v7147
      %v8512 = vpop.f32.mrb[0].mxu0
      %v8513 = vadd.f32 0.0, %v8512
      %v8514 = vpop.f32.mrb[0].mxu0
      %v8515 = vpop.f32.mrb[0].mxu0
      %v8516 = vadd.f32 0.0, %v8515
      %v8517 = vpop.f32.mrb[0].mxu0
      %8518 = vmatprep.mubr.bf16.mxu0 0
      %8519 = vmatmul.mubr.bf16.gmra.mrb[0].mxu0 %v7150
      %v8520 = vpop.f32.mrb[0].mxu0
      %v8521 = vadd.f32 0.0, %v8520
      %v8522 = vpop.f32.mrb[0].mxu0
      %v8523 = vpop.f32.mrb[0].mxu0
      %v8524 = vadd.f32 0.0, %v8523
      %v8525 = vpop.f32.mrb[0].mxu0
      %8526 = vmatprep.mubr.bf16.mxu0 0
      %8527 = vmatmul.mubr.bf16.gmra.mrb[0].mxu0 %v7153
      %v8528 = vpop.f32.mrb[0].mxu0
      %v8529 = vadd.f32 0.0, %v8528
      %v8530 = vpop.f32.mrb[0].mxu0
      %v8531 = vpop.f32.mrb[0].mxu0
      %v8532 = vadd.f32 0.0, %v8531
      %v8533 = vpop.f32.mrb[0].mxu0
      %8534 = vmatprep.mubr.bf16.mxu0 0
      %8535 = vmatmul.mubr.bf16.gmra.mrb[0].mxu0 %v7156
      %v8536 = vpop.f32.mrb[0].mxu0
      %v8537 = vadd.f32 0.0, %v8536
      %v8538 = vpop.f32.mrb[0].mxu0
      %v8539 = vpop.f32.mrb[0].mxu0
      %v8540 = vadd.f32 0.0, %v8539
      %v8541 = vpop.f32.mrb[0].mxu0
      %8542 = vmatprep.mubr.bf16.mxu0 0
      %8543 = vmatmul.mubr.bf16.gmra.mrb[0].mxu0 %v7159
      %v8544 = vpop.f32.mrb[0].mxu0
      %v8545 = vadd.f32 0.0, %v8544
      %v8546 = vpop.f32.mrb[0].mxu0
      %v8547 = vpop.f32.mrb[0].mxu0
      %v8548 = vadd.f32 0.0, %v8547
      %v8549 = vpop.f32.mrb[0].mxu0
      %8550 = vmatprep.mubr.bf16.mxu0 0
      %8551 = vmatmul.mubr.bf16.gmra.mrb[0].mxu0 %v7162
      %v8552 = vpop.f32.mrb[0].mxu0
      %v8553 = vadd.f32 0.0, %v8552
      %v8554 = vpop.f32.mrb[0].mxu0
      %v8555 = vpop.f32.mrb[0].mxu0
      %v8556 = vadd.f32 0.0, %v8555
      %v8557 = vpop.f32.mrb[0].mxu0
      %8558 = vmatprep.mubr.bf16.mxu0 0
      %8559 = vmatmul.mubr.bf16.gmra.mrb[0].mxu0 %v7165
      %v8560 = vpop.f32.mrb[0].mxu0
      %v8561 = vadd.f32 0.0, %v8560
      %v8562 = vpop.f32.mrb[0].mxu0
      %v8563 = vpop.f32.mrb[0].mxu0
      %v8564 = vadd.f32 0.0, %v8563
      %v8565 = vpop.f32.mrb[0].mxu0
      %8566 = vdwg.mxu0
      %s8567 = scalar_lea.vmem %s14, 104
      %v8568 = vld [vmem:[%s8567] sm:$0xf]
      %v8569 = vld [vmem:[%s8567 + $0x4] sm:$0x1]
      %v8572 = vunpack.c.l.b16 %v8568
      %v8573 = vunpack.c.l.b16 %v8569
      %v8574 = vpack.c.b16 %v8573, %v8572
      %v8576 = vand.u32 %v8574, %v7170
      %8578 = vmatprep.subr.bf16.mxu0 0
      %8579 = vmatpush1.bf16.msra.mxu0 %v8576
      %8580 = vmatprep.subr.bf16.mxu0 0
      %8581 = vmatpush1.bf16.msra.mxu0 0
      %8582 = vmatprep.subr.bf16.mxu0 0
      %8583 = vmatpush1.bf16.msra.mxu0 0
      %8584 = vmatprep.subr.bf16.mxu0 0
      %8585 = vmatpush1.bf16.msra.mxu0 0
      %8586 = vmatprep.subr.bf16.mxu0 0
      %8587 = vmatpush1.bf16.msra.mxu0 0
      %8588 = vmatprep.subr.bf16.mxu0 0
      %8589 = vmatpush1.bf16.msra.mxu0 0
      %8590 = vmatprep.subr.bf16.mxu0 0
      %8591 = vmatpush1.bf16.msra.mxu0 0
      %8592 = vmatprep.subr.bf16.mxu0 0
      %8593 = vmatpush1.bf16.msra.mxu0 0
      %8594 = vmatprep.subr.bf16.mxu0 0
      %8595 = vmatpush1.bf16.msra.mxu0 0
      %8596 = vmatprep.subr.bf16.mxu0 0
      %8597 = vmatpush1.bf16.msra.mxu0 0
      %8598 = vmatprep.subr.bf16.mxu0 0
      %8599 = vmatpush1.bf16.msra.mxu0 0
      %8600 = vmatprep.subr.bf16.mxu0 0
      %8601 = vmatpush1.bf16.msra.mxu0 0
      %8602 = vmatprep.subr.bf16.mxu0 0
      %8603 = vmatpush1.bf16.msra.mxu0 0
      %8604 = vmatprep.subr.bf16.mxu0 0
      %8605 = vmatpush1.bf16.msra.mxu0 0
      %8606 = vmatprep.subr.bf16.mxu0 0
      %8607 = vmatpush1.bf16.msra.mxu0 0
      %8608 = vmatprep.subr.bf16.mxu0 0
      %8609 = vmatpush1.bf16.msra.mxu0 0
      %8610 = vmatprep.mubr.bf16.mxu0 0
      %8611 = vmatmul.mubr.bf16.gmra.mrb[0].mxu0 %v7144
      %v8612 = vpop.f32.mrb[0].mxu0
      %v8613 = vadd.f32 0.0, %v8612
      %v8614 = vpop.f32.mrb[0].mxu0
      %v8615 = vpop.f32.mrb[0].mxu0
      %v8616 = vadd.f32 0.0, %v8615
      %v8617 = vpop.f32.mrb[0].mxu0
      %8618 = vmatprep.mubr.bf16.mxu0 0
      %8619 = vmatmul.mubr.bf16.gmra.mrb[0].mxu0 %v7147
      %v8620 = vpop.f32.mrb[0].mxu0
      %v8621 = vadd.f32 0.0, %v8620
      %v8622 = vpop.f32.mrb[0].mxu0
      %v8623 = vpop.f32.mrb[0].mxu0
      %v8624 = vadd.f32 0.0, %v8623
      %v8625 = vpop.f32.mrb[0].mxu0
      %8626 = vmatprep.mubr.bf16.mxu0 0
      %8627 = vmatmul.mubr.bf16.gmra.mrb[0].mxu0 %v7150
      %v8628 = vpop.f32.mrb[0].mxu0
      %v8629 = vadd.f32 0.0, %v8628
      %v8630 = vpop.f32.mrb[0].mxu0
      %v8631 = vpop.f32.mrb[0].mxu0
      %v8632 = vadd.f32 0.0, %v8631
      %v8633 = vpop.f32.mrb[0].mxu0
      %8634 = vmatprep.mubr.bf16.mxu0 0
      %8635 = vmatmul.mubr.bf16.gmra.mrb[0].mxu0 %v7153
      %v8636 = vpop.f32.mrb[0].mxu0
      %v8637 = vadd.f32 0.0, %v8636
      %v8638 = vpop.f32.mrb[0].mxu0
      %v8639 = vpop.f32.mrb[0].mxu0
      %v8640 = vadd.f32 0.0, %v8639
      %v8641 = vpop.f32.mrb[0].mxu0
      %8642 = vmatprep.mubr.bf16.mxu0 0
      %8643 = vmatmul.mubr.bf16.gmra.mrb[0].mxu0 %v7156
      %v8644 = vpop.f32.mrb[0].mxu0
      %v8645 = vadd.f32 0.0, %v8644
      %v8646 = vpop.f32.mrb[0].mxu0
      %v8647 = vpop.f32.mrb[0].mxu0
      %v8648 = vadd.f32 0.0, %v8647
      %v8649 = vpop.f32.mrb[0].mxu0
      %8650 = vmatprep.mubr.bf16.mxu0 0
      %8651 = vmatmul.mubr.bf16.gmra.mrb[0].mxu0 %v7159
      %v8652 = vpop.f32.mrb[0].mxu0
      %v8653 = vadd.f32 0.0, %v8652
      %v8654 = vpop.f32.mrb[0].mxu0
      %v8655 = vpop.f32.mrb[0].mxu0
      %v8656 = vadd.f32 0.0, %v8655
      %v8657 = vpop.f32.mrb[0].mxu0
      %8658 = vmatprep.mubr.bf16.mxu0 0
      %8659 = vmatmul.mubr.bf16.gmra.mrb[0].mxu0 %v7162
      %v8660 = vpop.f32.mrb[0].mxu0
      %v8661 = vadd.f32 0.0, %v8660
      %v8662 = vpop.f32.mrb[0].mxu0
      %v8663 = vpop.f32.mrb[0].mxu0
      %v8664 = vadd.f32 0.0, %v8663
      %v8665 = vpop.f32.mrb[0].mxu0
      %8666 = vmatprep.mubr.bf16.mxu0 0
      %8667 = vmatmul.mubr.bf16.gmra.mrb[0].mxu0 %v7165
      %v8668 = vpop.f32.mrb[0].mxu0
      %v8669 = vadd.f32 0.0, %v8668
      %v8670 = vpop.f32.mrb[0].mxu0
      %v8671 = vpop.f32.mrb[0].mxu0
      %v8672 = vadd.f32 0.0, %v8671
      %v8673 = vpop.f32.mrb[0].mxu0
      %8674 = vdwg.mxu0
      %s8675 = scalar_lea.vmem %s14, 112
      %v8676 = vld [vmem:[%s8675] sm:$0xf]
      %v8677 = vld [vmem:[%s8675 + $0x4] sm:$0x1]
      %v8680 = vunpack.c.l.b16 %v8676
      %v8681 = vunpack.c.l.b16 %v8677
      %v8682 = vpack.c.b16 %v8681, %v8680
      %v8684 = vand.u32 %v8682, %v7170
      %8686 = vmatprep.subr.bf16.mxu0 0
      %8687 = vmatpush1.bf16.msra.mxu0 %v8684
      %8688 = vmatprep.subr.bf16.mxu0 0
      %8689 = vmatpush1.bf16.msra.mxu0 0
      %8690 = vmatprep.subr.bf16.mxu0 0
      %8691 = vmatpush1.bf16.msra.mxu0 0
      %8692 = vmatprep.subr.bf16.mxu0 0
      %8693 = vmatpush1.bf16.msra.mxu0 0
      %8694 = vmatprep.subr.bf16.mxu0 0
      %8695 = vmatpush1.bf16.msra.mxu0 0
      %8696 = vmatprep.subr.bf16.mxu0 0
      %8697 = vmatpush1.bf16.msra.mxu0 0
      %8698 = vmatprep.subr.bf16.mxu0 0
      %8699 = vmatpush1.bf16.msra.mxu0 0
      %8700 = vmatprep.subr.bf16.mxu0 0
      %8701 = vmatpush1.bf16.msra.mxu0 0
      %8702 = vmatprep.subr.bf16.mxu0 0
      %8703 = vmatpush1.bf16.msra.mxu0 0
      %8704 = vmatprep.subr.bf16.mxu0 0
      %8705 = vmatpush1.bf16.msra.mxu0 0
      %8706 = vmatprep.subr.bf16.mxu0 0
      %8707 = vmatpush1.bf16.msra.mxu0 0
      %8708 = vmatprep.subr.bf16.mxu0 0
      %8709 = vmatpush1.bf16.msra.mxu0 0
      %8710 = vmatprep.subr.bf16.mxu0 0
      %8711 = vmatpush1.bf16.msra.mxu0 0
      %8712 = vmatprep.subr.bf16.mxu0 0
      %8713 = vmatpush1.bf16.msra.mxu0 0
      %8714 = vmatprep.subr.bf16.mxu0 0
      %8715 = vmatpush1.bf16.msra.mxu0 0
      %8716 = vmatprep.subr.bf16.mxu0 0
      %8717 = vmatpush1.bf16.msra.mxu0 0
      %8718 = vmatprep.mubr.bf16.mxu0 0
      %8719 = vmatmul.mubr.bf16.gmra.mrb[0].mxu0 %v7144
      %v8720 = vpop.f32.mrb[0].mxu0
      %v8721 = vadd.f32 0.0, %v8720
      %v8722 = vpop.f32.mrb[0].mxu0
      %v8723 = vpop.f32.mrb[0].mxu0
      %v8724 = vadd.f32 0.0, %v8723
      %v8725 = vpop.f32.mrb[0].mxu0
      %8726 = vmatprep.mubr.bf16.mxu0 0
      %8727 = vmatmul.mubr.bf16.gmra.mrb[0].mxu0 %v7147
      %v8728 = vpop.f32.mrb[0].mxu0
      %v8729 = vadd.f32 0.0, %v8728
      %v8730 = vpop.f32.mrb[0].mxu0
      %v8731 = vpop.f32.mrb[0].mxu0
      %v8732 = vadd.f32 0.0, %v8731
      %v8733 = vpop.f32.mrb[0].mxu0
      %8734 = vmatprep.mubr.bf16.mxu0 0
      %8735 = vmatmul.mubr.bf16.gmra.mrb[0].mxu0 %v7150
      %v8736 = vpop.f32.mrb[0].mxu0
      %v8737 = vadd.f32 0.0, %v8736
      %v8738 = vpop.f32.mrb[0].mxu0
      %v8739 = vpop.f32.mrb[0].mxu0
      %v8740 = vadd.f32 0.0, %v8739
      %v8741 = vpop.f32.mrb[0].mxu0
      %8742 = vmatprep.mubr.bf16.mxu0 0
      %8743 = vmatmul.mubr.bf16.gmra.mrb[0].mxu0 %v7153
      %v8744 = vpop.f32.mrb[0].mxu0
      %v8745 = vadd.f32 0.0, %v8744
      %v8746 = vpop.f32.mrb[0].mxu0
      %v8747 = vpop.f32.mrb[0].mxu0
      %v8748 = vadd.f32 0.0, %v8747
      %v8749 = vpop.f32.mrb[0].mxu0
      %8750 = vmatprep.mubr.bf16.mxu0 0
      %8751 = vmatmul.mubr.bf16.gmra.mrb[0].mxu0 %v7156
      %v8752 = vpop.f32.mrb[0].mxu0
      %v8753 = vadd.f32 0.0, %v8752
      %v8754 = vpop.f32.mrb[0].mxu0
      %v8755 = vpop.f32.mrb[0].mxu0
      %v8756 = vadd.f32 0.0, %v8755
      %v8757 = vpop.f32.mrb[0].mxu0
      %8758 = vmatprep.mubr.bf16.mxu0 0
      %8759 = vmatmul.mubr.bf16.gmra.mrb[0].mxu0 %v7159
      %v8760 = vpop.f32.mrb[0].mxu0
      %v8761 = vadd.f32 0.0, %v8760
      %v8762 = vpop.f32.mrb[0].mxu0
      %v8763 = vpop.f32.mrb[0].mxu0
      %v8764 = vadd.f32 0.0, %v8763
      %v8765 = vpop.f32.mrb[0].mxu0
      %8766 = vmatprep.mubr.bf16.mxu0 0
      %8767 = vmatmul.mubr.bf16.gmra.mrb[0].mxu0 %v7162
      %v8768 = vpop.f32.mrb[0].mxu0
      %v8769 = vadd.f32 0.0, %v8768
      %v8770 = vpop.f32.mrb[0].mxu0
      %v8771 = vpop.f32.mrb[0].mxu0
      %v8772 = vadd.f32 0.0, %v8771
      %v8773 = vpop.f32.mrb[0].mxu0
      %8774 = vmatprep.mubr.bf16.mxu0 0
      %8775 = vmatmul.mubr.bf16.gmra.mrb[0].mxu0 %v7165
      %v8776 = vpop.f32.mrb[0].mxu0
      %v8777 = vadd.f32 0.0, %v8776
      %v8778 = vpop.f32.mrb[0].mxu0
      %v8779 = vpop.f32.mrb[0].mxu0
      %v8780 = vadd.f32 0.0, %v8779
      %v8781 = vpop.f32.mrb[0].mxu0
      %8782 = vdwg.mxu0
      %s8783 = scalar_lea.vmem %s14, 120
      %v8784 = vld [vmem:[%s8783] sm:$0xf]
      %v8785 = vld [vmem:[%s8783 + $0x4] sm:$0x1]
      %v8788 = vunpack.c.l.b16 %v8784
      %v8789 = vunpack.c.l.b16 %v8785
      %v8790 = vpack.c.b16 %v8789, %v8788
      %v8792 = vand.u32 %v8790, %v7170
      %8794 = vmatprep.subr.bf16.mxu0 0
      %8795 = vmatpush1.bf16.msra.mxu0 %v8792
      %8796 = vmatprep.subr.bf16.mxu0 0
      %8797 = vmatpush1.bf16.msra.mxu0 0
      %8798 = vmatprep.subr.bf16.mxu0 0
      %8799 = vmatpush1.bf16.msra.mxu0 0
      %8800 = vmatprep.subr.bf16.mxu0 0
      %8801 = vmatpush1.bf16.msra.mxu0 0
      %8802 = vmatprep.subr.bf16.mxu0 0
      %8803 = vmatpush1.bf16.msra.mxu0 0
      %8804 = vmatprep.subr.bf16.mxu0 0
      %8805 = vmatpush1.bf16.msra.mxu0 0
      %8806 = vmatprep.subr.bf16.mxu0 0
      %8807 = vmatpush1.bf16.msra.mxu0 0
      %8808 = vmatprep.subr.bf16.mxu0 0
      %8809 = vmatpush1.bf16.msra.mxu0 0
      %8810 = vmatprep.subr.bf16.mxu0 0
      %8811 = vmatpush1.bf16.msra.mxu0 0
      %8812 = vmatprep.subr.bf16.mxu0 0
      %8813 = vmatpush1.bf16.msra.mxu0 0
      %8814 = vmatprep.subr.bf16.mxu0 0
      %8815 = vmatpush1.bf16.msra.mxu0 0
      %8816 = vmatprep.subr.bf16.mxu0 0
      %8817 = vmatpush1.bf16.msra.mxu0 0
      %8818 = vmatprep.subr.bf16.mxu0 0
      %8819 = vmatpush1.bf16.msra.mxu0 0
      %8820 = vmatprep.subr.bf16.mxu0 0
      %8821 = vmatpush1.bf16.msra.mxu0 0
      %8822 = vmatprep.subr.bf16.mxu0 0
      %8823 = vmatpush1.bf16.msra.mxu0 0
      %8824 = vmatprep.subr.bf16.mxu0 0
      %8825 = vmatpush1.bf16.msra.mxu0 0
      %8826 = vmatprep.mubr.bf16.mxu0 0
      %8827 = vmatmul.mubr.bf16.gmra.mrb[0].mxu0 %v7144
      %v8828 = vpop.f32.mrb[0].mxu0
      %v8829 = vadd.f32 0.0, %v8828
      %v8830 = vpop.f32.mrb[0].mxu0
      %v8831 = vpop.f32.mrb[0].mxu0
      %v8832 = vadd.f32 0.0, %v8831
      %v8833 = vpop.f32.mrb[0].mxu0
      %8834 = vmatprep.mubr.bf16.mxu0 0
      %8835 = vmatmul.mubr.bf16.gmra.mrb[0].mxu0 %v7147
      %v8836 = vpop.f32.mrb[0].mxu0
      %v8837 = vadd.f32 0.0, %v8836
      %v8838 = vpop.f32.mrb[0].mxu0
      %v8839 = vpop.f32.mrb[0].mxu0
      %v8840 = vadd.f32 0.0, %v8839
      %v8841 = vpop.f32.mrb[0].mxu0
      %8842 = vmatprep.mubr.bf16.mxu0 0
      %8843 = vmatmul.mubr.bf16.gmra.mrb[0].mxu0 %v7150
      %v8844 = vpop.f32.mrb[0].mxu0
      %v8845 = vadd.f32 0.0, %v8844
      %v8846 = vpop.f32.mrb[0].mxu0
      %v8847 = vpop.f32.mrb[0].mxu0
      %v8848 = vadd.f32 0.0, %v8847
      %v8849 = vpop.f32.mrb[0].mxu0
      %8850 = vmatprep.mubr.bf16.mxu0 0
      %8851 = vmatmul.mubr.bf16.gmra.mrb[0].mxu0 %v7153
      %v8852 = vpop.f32.mrb[0].mxu0
      %v8853 = vadd.f32 0.0, %v8852
      %v8854 = vpop.f32.mrb[0].mxu0
      %v8855 = vpop.f32.mrb[0].mxu0
      %v8856 = vadd.f32 0.0, %v8855
      %v8857 = vpop.f32.mrb[0].mxu0
      %8858 = vmatprep.mubr.bf16.mxu0 0
      %8859 = vmatmul.mubr.bf16.gmra.mrb[0].mxu0 %v7156
      %v8860 = vpop.f32.mrb[0].mxu0
      %v8861 = vadd.f32 0.0, %v8860
      %v8862 = vpop.f32.mrb[0].mxu0
      %v8863 = vpop.f32.mrb[0].mxu0
      %v8864 = vadd.f32 0.0, %v8863
      %v8865 = vpop.f32.mrb[0].mxu0
      %8866 = vmatprep.mubr.bf16.mxu0 0
      %8867 = vmatmul.mubr.bf16.gmra.mrb[0].mxu0 %v7159
      %v8868 = vpop.f32.mrb[0].mxu0
      %v8869 = vadd.f32 0.0, %v8868
      %v8870 = vpop.f32.mrb[0].mxu0
      %v8871 = vpop.f32.mrb[0].mxu0
      %v8872 = vadd.f32 0.0, %v8871
      %v8873 = vpop.f32.mrb[0].mxu0
      %8874 = vmatprep.mubr.bf16.mxu0 0
      %8875 = vmatmul.mubr.bf16.gmra.mrb[0].mxu0 %v7162
      %v8876 = vpop.f32.mrb[0].mxu0
      %v8877 = vadd.f32 0.0, %v8876
      %v8878 = vpop.f32.mrb[0].mxu0
      %v8879 = vpop.f32.mrb[0].mxu0
      %v8880 = vadd.f32 0.0, %v8879
      %v8881 = vpop.f32.mrb[0].mxu0
      %8882 = vmatprep.mubr.bf16.mxu0 0
      %8883 = vmatmul.mubr.bf16.gmra.mrb[0].mxu0 %v7165
      %v8884 = vpop.f32.mrb[0].mxu0
      %v8885 = vadd.f32 0.0, %v8884
      %v8886 = vpop.f32.mrb[0].mxu0
      %v8887 = vpop.f32.mrb[0].mxu0
      %v8888 = vadd.f32 0.0, %v8887
      %v8889 = vpop.f32.mrb[0].mxu0
      %8890 = vdwg.mxu0
      %v8891 = vld [vmem:[%s12] sm:$0xff]
      %v8892 = vld [vmem:[#allocation2] sm:$0x1]
      %v8893 = vpack.c.bf16 %v7212, %v7209
      %v8894 = vpack.c.bf16 %v7220, %v7217
      %v8895 = vpack.c.bf16 %v7228, %v7225
      %v8896 = vpack.c.bf16 %v7236, %v7233
      %v8897 = vpack.c.bf16 %v7320, %v7317
      %v8898 = vpack.c.bf16 %v7328, %v7325
      %v8899 = vpack.c.bf16 %v7336, %v7333
      %v8900 = vpack.c.bf16 %v7344, %v7341
      %v8901 = vpack.c.bf16 %v7428, %v7425
      %v8902 = vpack.c.bf16 %v7436, %v7433
      %v8903 = vpack.c.bf16 %v7444, %v7441
      %v8904 = vpack.c.bf16 %v7452, %v7449
      %v8905 = vpack.c.bf16 %v7536, %v7533
      %v8906 = vpack.c.bf16 %v7544, %v7541
      %v8907 = vpack.c.bf16 %v7552, %v7549
      %v8908 = vpack.c.bf16 %v7560, %v7557
      %v8909 = vpack.c.bf16 %v7644, %v7641
      %v8910 = vpack.c.bf16 %v7652, %v7649
      %v8911 = vpack.c.bf16 %v7660, %v7657
      %v8912 = vpack.c.bf16 %v7668, %v7665
      %v8913 = vpack.c.bf16 %v7752, %v7749
      %v8914 = vpack.c.bf16 %v7760, %v7757
      %v8915 = vpack.c.bf16 %v7768, %v7765
      %v8916 = vpack.c.bf16 %v7776, %v7773
      %v8917 = vpack.c.bf16 %v7860, %v7857
      %v8918 = vpack.c.bf16 %v7868, %v7865
      %v8919 = vpack.c.bf16 %v7876, %v7873
      %v8920 = vpack.c.bf16 %v7884, %v7881
      %v8921 = vpack.c.bf16 %v7968, %v7965
      %v8922 = vpack.c.bf16 %v7976, %v7973
      %v8923 = vpack.c.bf16 %v7984, %v7981
      %v8924 = vpack.c.bf16 %v7992, %v7989
      %v8925 = vpack.c.bf16 %v8076, %v8073
      %v8926 = vpack.c.bf16 %v8084, %v8081
      %v8927 = vpack.c.bf16 %v8092, %v8089
      %v8928 = vpack.c.bf16 %v8100, %v8097
      %v8929 = vpack.c.bf16 %v8184, %v8181
      %v8930 = vpack.c.bf16 %v8192, %v8189
      %v8931 = vpack.c.bf16 %v8200, %v8197
      %v8932 = vpack.c.bf16 %v8208, %v8205
      %v8933 = vpack.c.bf16 %v8292, %v8289
      %v8934 = vpack.c.bf16 %v8300, %v8297
      %v8935 = vpack.c.bf16 %v8308, %v8305
      %v8936 = vpack.c.bf16 %v8316, %v8313
      %v8937 = vpack.c.bf16 %v8400, %v8397
      %v8938 = vpack.c.bf16 %v8408, %v8405
      %v8939 = vpack.c.bf16 %v8416, %v8413
      %v8940 = vpack.c.bf16 %v8424, %v8421
      %v8941 = vpack.c.bf16 %v8508, %v8505
      %v8942 = vpack.c.bf16 %v8516, %v8513
      %v8943 = vpack.c.bf16 %v8524, %v8521
      %v8944 = vpack.c.bf16 %v8532, %v8529
      %v8945 = vpack.c.bf16 %v8616, %v8613
      %v8946 = vpack.c.bf16 %v8624, %v8621
      %v8947 = vpack.c.bf16 %v8632, %v8629
      %v8948 = vpack.c.bf16 %v8640, %v8637
      %v8949 = vpack.c.bf16 %v8724, %v8721
      %v8950 = vpack.c.bf16 %v8732, %v8729
      %v8951 = vpack.c.bf16 %v8740, %v8737
      %v8952 = vpack.c.bf16 %v8748, %v8745
      %v8953 = vpack.c.bf16 %v8832, %v8829
      %v8954 = vpack.c.bf16 %v8840, %v8837
      %v8955 = vpack.c.bf16 %v8848, %v8845
      %v8956 = vpack.c.bf16 %v8856, %v8853
      %8958 = vset.pattern.permute.xlu0 0
      %8959 = vperm.xlu0 %8958, %v8892
      %v8960 = vpop.permute.xlu0 %8959
      %v8962 = vlaneseq
      %v8963 = vshrl.u32 %v8962, 7
      %v8964 = vsub.s32 0, %v8963
      %v8965 = vrot.slane %v8960, %v8964
      %v8967 = vcombine.high %v8891, %v8891
      %v8969 = vunpack.c.l.s4 1966171168
      %v8970 = vunpack.c.0.s8 %v8969
      %v8971 = vlaneseq
      %v8972 = vshrl.u32 %v8971, 7
      %v8973 = vsub.s32 %v8970, %v8972
      %v8974 = vrot.slane %v8891, %v8973
      %v8976 = vunpack.c.l.s4 1966171168
      %v8977 = vunpack.c.0.s8 %v8976
      %v8978 = vlaneseq
      %v8979 = vshrl.u32 %v8978, 7
      %v8980 = vsub.s32 %v8977, %v8979
      %v8981 = vrot.slane %v8967, %v8980
      %v8982 = vcombine.high %v8974, %v8974
      %v8983 = vcombine.high %v8981, %v8981
      %v8985 = vunpack.c.l.s4 1966171168
      %v8986 = vunpack.c.0.s8 %v8985
      %v8987 = vlaneseq
      %v8988 = vshrl.u32 %v8987, 7
      %v8989 = vsub.s32 %v8986, %v8988
      %v8990 = vrot.slane %v8974, %v8989
      %v8992 = vunpack.c.l.s4 1966171168
      %v8993 = vunpack.c.0.s8 %v8992
      %v8994 = vlaneseq
      %v8995 = vshrl.u32 %v8994, 7
      %v8996 = vsub.s32 %v8993, %v8995
      %v8997 = vrot.slane %v8981, %v8996
      %v8999 = vunpack.c.l.s4 1966171168
      %v9000 = vunpack.c.0.s8 %v8999
      %v9001 = vlaneseq
      %v9002 = vshrl.u32 %v9001, 7
      %v9003 = vsub.s32 %v9000, %v9002
      %v9004 = vrot.slane %v8982, %v9003
      %v9006 = vunpack.c.l.s4 1966171168
      %v9007 = vunpack.c.0.s8 %v9006
      %v9008 = vlaneseq
      %v9009 = vshrl.u32 %v9008, 7
      %v9010 = vsub.s32 %v9007, %v9009
      %v9011 = vrot.slane %v8983, %v9010
      %v9012 = vcombine.high %v8990, %v8990
      %v9013 = vcombine.high %v8997, %v8997
      %v9014 = vcombine.high %v9004, %v9004
      %v9015 = vcombine.high %v9011, %v9011
      %9024 = vmatprep.subr.bf16.mxu0 0
      %9025 = vmatpush1.bf16.msra.mxu0 %v8893
      %9026 = vmatprep.subr.bf16.mxu0 0
      %9027 = vmatpush1.bf16.msra.mxu0 %v8894
      %9028 = vmatprep.subr.bf16.mxu0 0
      %9029 = vmatpush1.bf16.msra.mxu0 %v8895
      %9030 = vmatprep.subr.bf16.mxu0 0
      %9031 = vmatpush1.bf16.msra.mxu0 %v8896
      %9032 = vmatprep.subr.bf16.mxu0 0
      %9033 = vmatpush1.bf16.msra.mxu0 %v8897
      %9034 = vmatprep.subr.bf16.mxu0 0
      %9035 = vmatpush1.bf16.msra.mxu0 %v8898
      %9036 = vmatprep.subr.bf16.mxu0 0
      %9037 = vmatpush1.bf16.msra.mxu0 %v8899
      %9038 = vmatprep.subr.bf16.mxu0 0
      %9039 = vmatpush1.bf16.msra.mxu0 %v8900
      %9040 = vmatprep.subr.bf16.mxu0 0
      %9041 = vmatpush1.bf16.msra.mxu0 %v8901
      %9042 = vmatprep.subr.bf16.mxu0 0
      %9043 = vmatpush1.bf16.msra.mxu0 %v8902
      %9044 = vmatprep.subr.bf16.mxu0 0
      %9045 = vmatpush1.bf16.msra.mxu0 %v8903
      %9046 = vmatprep.subr.bf16.mxu0 0
      %9047 = vmatpush1.bf16.msra.mxu0 %v8904
      %9048 = vmatprep.subr.bf16.mxu0 0
      %9049 = vmatpush1.bf16.msra.mxu0 %v8905
      %9050 = vmatprep.subr.bf16.mxu0 0
      %9051 = vmatpush1.bf16.msra.mxu0 %v8906
      %9052 = vmatprep.subr.bf16.mxu0 0
      %9053 = vmatpush1.bf16.msra.mxu0 %v8907
      %9054 = vmatprep.subr.bf16.mxu0 0
      %9055 = vmatpush1.bf16.msra.mxu0 %v8908
      %9056 = vmatprep.mubr.bf16.mxu0 %v9004
      %9057 = vmatmul.mubr.bf16.gmra.mrb[0].mxu0 %v8990
      %v9058 = vpop.f32.mrb[0].mxu0
      %v9059 = vadd.f32 %v8965, %v9058
      %v9060 = vpop.f32.mrb[0].mxu0
      %v9061 = vpop.f32.mrb[0].mxu0
      %v9062 = vpop.f32.mrb[0].mxu0
      %9063 = vdwg.mxu0
      %9064 = vmatprep.subr.bf16.mxu0 0
      %9065 = vmatpush1.bf16.msra.mxu0 %v8909
      %9066 = vmatprep.subr.bf16.mxu0 0
      %9067 = vmatpush1.bf16.msra.mxu0 %v8910
      %9068 = vmatprep.subr.bf16.mxu0 0
      %9069 = vmatpush1.bf16.msra.mxu0 %v8911
      %9070 = vmatprep.subr.bf16.mxu0 0
      %9071 = vmatpush1.bf16.msra.mxu0 %v8912
      %9072 = vmatprep.subr.bf16.mxu0 0
      %9073 = vmatpush1.bf16.msra.mxu0 %v8913
      %9074 = vmatprep.subr.bf16.mxu0 0
      %9075 = vmatpush1.bf16.msra.mxu0 %v8914
      %9076 = vmatprep.subr.bf16.mxu0 0
      %9077 = vmatpush1.bf16.msra.mxu0 %v8915
      %9078 = vmatprep.subr.bf16.mxu0 0
      %9079 = vmatpush1.bf16.msra.mxu0 %v8916
      %9080 = vmatprep.subr.bf16.mxu0 0
      %9081 = vmatpush1.bf16.msra.mxu0 %v8917
      %9082 = vmatprep.subr.bf16.mxu0 0
      %9083 = vmatpush1.bf16.msra.mxu0 %v8918
      %9084 = vmatprep.subr.bf16.mxu0 0
      %9085 = vmatpush1.bf16.msra.mxu0 %v8919
      %9086 = vmatprep.subr.bf16.mxu0 0
      %9087 = vmatpush1.bf16.msra.mxu0 %v8920
      %9088 = vmatprep.subr.bf16.mxu0 0
      %9089 = vmatpush1.bf16.msra.mxu0 %v8921
      %9090 = vmatprep.subr.bf16.mxu0 0
      %9091 = vmatpush1.bf16.msra.mxu0 %v8922
      %9092 = vmatprep.subr.bf16.mxu0 0
      %9093 = vmatpush1.bf16.msra.mxu0 %v8923
      %9094 = vmatprep.subr.bf16.mxu0 0
      %9095 = vmatpush1.bf16.msra.mxu0 %v8924
      %9096 = vmatprep.mubr.bf16.mxu0 %v9014
      %9097 = vmatmul.mubr.bf16.gmra.mrb[0].mxu0 %v9012
      %v9098 = vpop.f32.mrb[0].mxu0
      %v9099 = vadd.f32 %v9059, %v9098
      %v9100 = vpop.f32.mrb[0].mxu0
      %v9101 = vpop.f32.mrb[0].mxu0
      %v9102 = vpop.f32.mrb[0].mxu0
      %9103 = vdwg.mxu0
      %9104 = vmatprep.subr.bf16.mxu0 0
      %9105 = vmatpush1.bf16.msra.mxu0 %v8925
      %9106 = vmatprep.subr.bf16.mxu0 0
      %9107 = vmatpush1.bf16.msra.mxu0 %v8926
      %9108 = vmatprep.subr.bf16.mxu0 0
      %9109 = vmatpush1.bf16.msra.mxu0 %v8927
      %9110 = vmatprep.subr.bf16.mxu0 0
      %9111 = vmatpush1.bf16.msra.mxu0 %v8928
      %9112 = vmatprep.subr.bf16.mxu0 0
      %9113 = vmatpush1.bf16.msra.mxu0 %v8929
      %9114 = vmatprep.subr.bf16.mxu0 0
      %9115 = vmatpush1.bf16.msra.mxu0 %v8930
      %9116 = vmatprep.subr.bf16.mxu0 0
      %9117 = vmatpush1.bf16.msra.mxu0 %v8931
      %9118 = vmatprep.subr.bf16.mxu0 0
      %9119 = vmatpush1.bf16.msra.mxu0 %v8932
      %9120 = vmatprep.subr.bf16.mxu0 0
      %9121 = vmatpush1.bf16.msra.mxu0 %v8933
      %9122 = vmatprep.subr.bf16.mxu0 0
      %9123 = vmatpush1.bf16.msra.mxu0 %v8934
      %9124 = vmatprep.subr.bf16.mxu0 0
      %9125 = vmatpush1.bf16.msra.mxu0 %v8935
      %9126 = vmatprep.subr.bf16.mxu0 0
      %9127 = vmatpush1.bf16.msra.mxu0 %v8936
      %9128 = vmatprep.subr.bf16.mxu0 0
      %9129 = vmatpush1.bf16.msra.mxu0 %v8937
      %9130 = vmatprep.subr.bf16.mxu0 0
      %9131 = vmatpush1.bf16.msra.mxu0 %v8938
      %9132 = vmatprep.subr.bf16.mxu0 0
      %9133 = vmatpush1.bf16.msra.mxu0 %v8939
      %9134 = vmatprep.subr.bf16.mxu0 0
      %9135 = vmatpush1.bf16.msra.mxu0 %v8940
      %9136 = vmatprep.mubr.bf16.mxu0 %v9011
      %9137 = vmatmul.mubr.bf16.gmra.mrb[0].mxu0 %v8997
      %v9138 = vpop.f32.mrb[0].mxu0
      %v9139 = vadd.f32 %v9099, %v9138
      %v9140 = vpop.f32.mrb[0].mxu0
      %v9141 = vpop.f32.mrb[0].mxu0
      %v9142 = vpop.f32.mrb[0].mxu0
      %9143 = vdwg.mxu0
      %9144 = vmatprep.subr.bf16.mxu0 0
      %9145 = vmatpush1.bf16.msra.mxu0 %v8941
      %9146 = vmatprep.subr.bf16.mxu0 0
      %9147 = vmatpush1.bf16.msra.mxu0 %v8942
      %9148 = vmatprep.subr.bf16.mxu0 0
      %9149 = vmatpush1.bf16.msra.mxu0 %v8943
      %9150 = vmatprep.subr.bf16.mxu0 0
      %9151 = vmatpush1.bf16.msra.mxu0 %v8944
      %9152 = vmatprep.subr.bf16.mxu0 0
      %9153 = vmatpush1.bf16.msra.mxu0 %v8945
      %9154 = vmatprep.subr.bf16.mxu0 0
      %9155 = vmatpush1.bf16.msra.mxu0 %v8946
      %9156 = vmatprep.subr.bf16.mxu0 0
      %9157 = vmatpush1.bf16.msra.mxu0 %v8947
      %9158 = vmatprep.subr.bf16.mxu0 0
      %9159 = vmatpush1.bf16.msra.mxu0 %v8948
      %9160 = vmatprep.subr.bf16.mxu0 0
      %9161 = vmatpush1.bf16.msra.mxu0 %v8949
      %9162 = vmatprep.subr.bf16.mxu0 0
      %9163 = vmatpush1.bf16.msra.mxu0 %v8950
      %9164 = vmatprep.subr.bf16.mxu0 0
      %9165 = vmatpush1.bf16.msra.mxu0 %v8951
      %9166 = vmatprep.subr.bf16.mxu0 0
      %9167 = vmatpush1.bf16.msra.mxu0 %v8952
      %9168 = vmatprep.subr.bf16.mxu0 0
      %9169 = vmatpush1.bf16.msra.mxu0 %v8953
      %9170 = vmatprep.subr.bf16.mxu0 0
      %9171 = vmatpush1.bf16.msra.mxu0 %v8954
      %9172 = vmatprep.subr.bf16.mxu0 0
      %9173 = vmatpush1.bf16.msra.mxu0 %v8955
      %9174 = vmatprep.subr.bf16.mxu0 0
      %9175 = vmatpush1.bf16.msra.mxu0 %v8956
      %9176 = vmatprep.mubr.bf16.mxu0 %v9015
      %9177 = vmatmul.mubr.bf16.gmra.mrb[0].mxu0 %v9013
      %v9178 = vpop.f32.mrb[0].mxu0
      %v9179 = vadd.f32 %v9139, %v9178
      %v9180 = vpop.f32.mrb[0].mxu0
      %v9181 = vpop.f32.mrb[0].mxu0
      %v9182 = vpop.f32.mrb[0].mxu0
      %9183 = vdwg.mxu0
      %v9184 = vpack.c.bf16 %v7244, %v7241
      %v9185 = vpack.c.bf16 %v7252, %v7249
      %v9186 = vpack.c.bf16 %v7260, %v7257
      %v9187 = vpack.c.bf16 %v7268, %v7265
      %v9188 = vpack.c.bf16 %v7352, %v7349
      %v9189 = vpack.c.bf16 %v7360, %v7357
      %v9190 = vpack.c.bf16 %v7368, %v7365
      %v9191 = vpack.c.bf16 %v7376, %v7373
      %v9192 = vpack.c.bf16 %v7460, %v7457
      %v9193 = vpack.c.bf16 %v7468, %v7465
      %v9194 = vpack.c.bf16 %v7476, %v7473
      %v9195 = vpack.c.bf16 %v7484, %v7481
      %v9196 = vpack.c.bf16 %v7568, %v7565
      %v9197 = vpack.c.bf16 %v7576, %v7573
      %v9198 = vpack.c.bf16 %v7584, %v7581
      %v9199 = vpack.c.bf16 %v7592, %v7589
      %v9200 = vpack.c.bf16 %v7676, %v7673
      %v9201 = vpack.c.bf16 %v7684, %v7681
      %v9202 = vpack.c.bf16 %v7692, %v7689
      %v9203 = vpack.c.bf16 %v7700, %v7697
      %v9204 = vpack.c.bf16 %v7784, %v7781
      %v9205 = vpack.c.bf16 %v7792, %v7789
      %v9206 = vpack.c.bf16 %v7800, %v7797
      %v9207 = vpack.c.bf16 %v7808, %v7805
      %v9208 = vpack.c.bf16 %v7892, %v7889
      %v9209 = vpack.c.bf16 %v7900, %v7897
      %v9210 = vpack.c.bf16 %v7908, %v7905
      %v9211 = vpack.c.bf16 %v7916, %v7913
      %v9212 = vpack.c.bf16 %v8000, %v7997
      %v9213 = vpack.c.bf16 %v8008, %v8005
      %v9214 = vpack.c.bf16 %v8016, %v8013
      %v9215 = vpack.c.bf16 %v8024, %v8021
      %v9216 = vpack.c.bf16 %v8108, %v8105
      %v9217 = vpack.c.bf16 %v8116, %v8113
      %v9218 = vpack.c.bf16 %v8124, %v8121
      %v9219 = vpack.c.bf16 %v8132, %v8129
      %v9220 = vpack.c.bf16 %v8216, %v8213
      %v9221 = vpack.c.bf16 %v8224, %v8221
      %v9222 = vpack.c.bf16 %v8232, %v8229
      %v9223 = vpack.c.bf16 %v8240, %v8237
      %v9224 = vpack.c.bf16 %v8324, %v8321
      %v9225 = vpack.c.bf16 %v8332, %v8329
      %v9226 = vpack.c.bf16 %v8340, %v8337
      %v9227 = vpack.c.bf16 %v8348, %v8345
      %v9228 = vpack.c.bf16 %v8432, %v8429
      %v9229 = vpack.c.bf16 %v8440, %v8437
      %v9230 = vpack.c.bf16 %v8448, %v8445
      %v9231 = vpack.c.bf16 %v8456, %v8453
      %v9232 = vpack.c.bf16 %v8540, %v8537
      %v9233 = vpack.c.bf16 %v8548, %v8545
      %v9234 = vpack.c.bf16 %v8556, %v8553
      %v9235 = vpack.c.bf16 %v8564, %v8561
      %v9236 = vpack.c.bf16 %v8648, %v8645
      %v9237 = vpack.c.bf16 %v8656, %v8653
      %v9238 = vpack.c.bf16 %v8664, %v8661
      %v9239 = vpack.c.bf16 %v8672, %v8669
      %v9240 = vpack.c.bf16 %v8756, %v8753
      %v9241 = vpack.c.bf16 %v8764, %v8761
      %v9242 = vpack.c.bf16 %v8772, %v8769
      %v9243 = vpack.c.bf16 %v8780, %v8777
      %v9244 = vpack.c.bf16 %v8864, %v8861
      %v9245 = vpack.c.bf16 %v8872, %v8869
      %v9246 = vpack.c.bf16 %v8880, %v8877
      %v9247 = vpack.c.bf16 %v8888, %v8885
      %9248 = vmatprep.subr.bf16.mxu0 0
      %9249 = vmatpush1.bf16.msra.mxu0 %v9184
      %9250 = vmatprep.subr.bf16.mxu0 0
      %9251 = vmatpush1.bf16.msra.mxu0 %v9185
      %9252 = vmatprep.subr.bf16.mxu0 0
      %9253 = vmatpush1.bf16.msra.mxu0 %v9186
      %9254 = vmatprep.subr.bf16.mxu0 0
      %9255 = vmatpush1.bf16.msra.mxu0 %v9187
      %9256 = vmatprep.subr.bf16.mxu0 0
      %9257 = vmatpush1.bf16.msra.mxu0 %v9188
      %9258 = vmatprep.subr.bf16.mxu0 0
      %9259 = vmatpush1.bf16.msra.mxu0 %v9189
      %9260 = vmatprep.subr.bf16.mxu0 0
      %9261 = vmatpush1.bf16.msra.mxu0 %v9190
      %9262 = vmatprep.subr.bf16.mxu0 0
      %9263 = vmatpush1.bf16.msra.mxu0 %v9191
      %9264 = vmatprep.subr.bf16.mxu0 0
      %9265 = vmatpush1.bf16.msra.mxu0 %v9192
      %9266 = vmatprep.subr.bf16.mxu0 0
      %9267 = vmatpush1.bf16.msra.mxu0 %v9193
      %9268 = vmatprep.subr.bf16.mxu0 0
      %9269 = vmatpush1.bf16.msra.mxu0 %v9194
      %9270 = vmatprep.subr.bf16.mxu0 0
      %9271 = vmatpush1.bf16.msra.mxu0 %v9195
      %9272 = vmatprep.subr.bf16.mxu0 0
      %9273 = vmatpush1.bf16.msra.mxu0 %v9196
      %9274 = vmatprep.subr.bf16.mxu0 0
      %9275 = vmatpush1.bf16.msra.mxu0 %v9197
      %9276 = vmatprep.subr.bf16.mxu0 0
      %9277 = vmatpush1.bf16.msra.mxu0 %v9198
      %9278 = vmatprep.subr.bf16.mxu0 0
      %9279 = vmatpush1.bf16.msra.mxu0 %v9199
      %9280 = vmatprep.mubr.bf16.mxu0 %v9004
      %9281 = vmatmul.mubr.bf16.gmra.mrb[0].mxu0 %v8990
      %v9282 = vpop.f32.mrb[0].mxu0
      %v9283 = vadd.f32 %v8965, %v9282
      %v9284 = vpop.f32.mrb[0].mxu0
      %v9285 = vpop.f32.mrb[0].mxu0
      %v9286 = vpop.f32.mrb[0].mxu0
      %9287 = vdwg.mxu0
      %9288 = vmatprep.subr.bf16.mxu0 0
      %9289 = vmatpush1.bf16.msra.mxu0 %v9200
      %9290 = vmatprep.subr.bf16.mxu0 0
      %9291 = vmatpush1.bf16.msra.mxu0 %v9201
      %9292 = vmatprep.subr.bf16.mxu0 0
      %9293 = vmatpush1.bf16.msra.mxu0 %v9202
      %9294 = vmatprep.subr.bf16.mxu0 0
      %9295 = vmatpush1.bf16.msra.mxu0 %v9203
      %9296 = vmatprep.subr.bf16.mxu0 0
      %9297 = vmatpush1.bf16.msra.mxu0 %v9204
      %9298 = vmatprep.subr.bf16.mxu0 0
      %9299 = vmatpush1.bf16.msra.mxu0 %v9205
      %9300 = vmatprep.subr.bf16.mxu0 0
      %9301 = vmatpush1.bf16.msra.mxu0 %v9206
      %9302 = vmatprep.subr.bf16.mxu0 0
      %9303 = vmatpush1.bf16.msra.mxu0 %v9207
      %9304 = vmatprep.subr.bf16.mxu0 0
      %9305 = vmatpush1.bf16.msra.mxu0 %v9208
      %9306 = vmatprep.subr.bf16.mxu0 0
      %9307 = vmatpush1.bf16.msra.mxu0 %v9209
      %9308 = vmatprep.subr.bf16.mxu0 0
      %9309 = vmatpush1.bf16.msra.mxu0 %v9210
      %9310 = vmatprep.subr.bf16.mxu0 0
      %9311 = vmatpush1.bf16.msra.mxu0 %v9211
      %9312 = vmatprep.subr.bf16.mxu0 0
      %9313 = vmatpush1.bf16.msra.mxu0 %v9212
      %9314 = vmatprep.subr.bf16.mxu0 0
      %9315 = vmatpush1.bf16.msra.mxu0 %v9213
      %9316 = vmatprep.subr.bf16.mxu0 0
      %9317 = vmatpush1.bf16.msra.mxu0 %v9214
      %9318 = vmatprep.subr.bf16.mxu0 0
      %9319 = vmatpush1.bf16.msra.mxu0 %v9215
      %9320 = vmatprep.mubr.bf16.mxu0 %v9014
      %9321 = vmatmul.mubr.bf16.gmra.mrb[0].mxu0 %v9012
      %v9322 = vpop.f32.mrb[0].mxu0
      %v9323 = vadd.f32 %v9283, %v9322
      %v9324 = vpop.f32.mrb[0].mxu0
      %v9325 = vpop.f32.mrb[0].mxu0
      %v9326 = vpop.f32.mrb[0].mxu0
      %9327 = vdwg.mxu0
      %9328 = vmatprep.subr.bf16.mxu0 0
      %9329 = vmatpush1.bf16.msra.mxu0 %v9216
      %9330 = vmatprep.subr.bf16.mxu0 0
      %9331 = vmatpush1.bf16.msra.mxu0 %v9217
      %9332 = vmatprep.subr.bf16.mxu0 0
      %9333 = vmatpush1.bf16.msra.mxu0 %v9218
      %9334 = vmatprep.subr.bf16.mxu0 0
      %9335 = vmatpush1.bf16.msra.mxu0 %v9219
      %9336 = vmatprep.subr.bf16.mxu0 0
      %9337 = vmatpush1.bf16.msra.mxu0 %v9220
      %9338 = vmatprep.subr.bf16.mxu0 0
      %9339 = vmatpush1.bf16.msra.mxu0 %v9221
      %9340 = vmatprep.subr.bf16.mxu0 0
      %9341 = vmatpush1.bf16.msra.mxu0 %v9222
      %9342 = vmatprep.subr.bf16.mxu0 0
      %9343 = vmatpush1.bf16.msra.mxu0 %v9223
      %9344 = vmatprep.subr.bf16.mxu0 0
      %9345 = vmatpush1.bf16.msra.mxu0 %v9224
      %9346 = vmatprep.subr.bf16.mxu0 0
      %9347 = vmatpush1.bf16.msra.mxu0 %v9225
      %9348 = vmatprep.subr.bf16.mxu0 0
      %9349 = vmatpush1.bf16.msra.mxu0 %v9226
      %9350 = vmatprep.subr.bf16.mxu0 0
      %9351 = vmatpush1.bf16.msra.mxu0 %v9227
      %9352 = vmatprep.subr.bf16.mxu0 0
      %9353 = vmatpush1.bf16.msra.mxu0 %v9228
      %9354 = vmatprep.subr.bf16.mxu0 0
      %9355 = vmatpush1.bf16.msra.mxu0 %v9229
      %9356 = vmatprep.subr.bf16.mxu0 0
      %9357 = vmatpush1.bf16.msra.mxu0 %v9230
      %9358 = vmatprep.subr.bf16.mxu0 0
      %9359 = vmatpush1.bf16.msra.mxu0 %v9231
      %9360 = vmatprep.mubr.bf16.mxu0 %v9011
      %9361 = vmatmul.mubr.bf16.gmra.mrb[0].mxu0 %v8997
      %v9362 = vpop.f32.mrb[0].mxu0
      %v9363 = vadd.f32 %v9323, %v9362
      %v9364 = vpop.f32.mrb[0].mxu0
      %v9365 = vpop.f32.mrb[0].mxu0
      %v9366 = vpop.f32.mrb[0].mxu0
      %9367 = vdwg.mxu0
      %9368 = vmatprep.subr.bf16.mxu0 0
      %9369 = vmatpush1.bf16.msra.mxu0 %v9232
      %9370 = vmatprep.subr.bf16.mxu0 0
      %9371 = vmatpush1.bf16.msra.mxu0 %v9233
      %9372 = vmatprep.subr.bf16.mxu0 0
      %9373 = vmatpush1.bf16.msra.mxu0 %v9234
      %9374 = vmatprep.subr.bf16.mxu0 0
      %9375 = vmatpush1.bf16.msra.mxu0 %v9235
      %9376 = vmatprep.subr.bf16.mxu0 0
      %9377 = vmatpush1.bf16.msra.mxu0 %v9236
      %9378 = vmatprep.subr.bf16.mxu0 0
      %9379 = vmatpush1.bf16.msra.mxu0 %v9237
      %9380 = vmatprep.subr.bf16.mxu0 0
      %9381 = vmatpush1.bf16.msra.mxu0 %v9238
      %9382 = vmatprep.subr.bf16.mxu0 0
      %9383 = vmatpush1.bf16.msra.mxu0 %v9239
      %9384 = vmatprep.subr.bf16.mxu0 0
      %9385 = vmatpush1.bf16.msra.mxu0 %v9240
      %9386 = vmatprep.subr.bf16.mxu0 0
      %9387 = vmatpush1.bf16.msra.mxu0 %v9241
      %9388 = vmatprep.subr.bf16.mxu0 0
      %9389 = vmatpush1.bf16.msra.mxu0 %v9242
      %9390 = vmatprep.subr.bf16.mxu0 0
      %9391 = vmatpush1.bf16.msra.mxu0 %v9243
      %9392 = vmatprep.subr.bf16.mxu0 0
      %9393 = vmatpush1.bf16.msra.mxu0 %v9244
      %9394 = vmatprep.subr.bf16.mxu0 0
      %9395 = vmatpush1.bf16.msra.mxu0 %v9245
      %9396 = vmatprep.subr.bf16.mxu0 0
      %9397 = vmatpush1.bf16.msra.mxu0 %v9246
      %9398 = vmatprep.subr.bf16.mxu0 0
      %9399 = vmatpush1.bf16.msra.mxu0 %v9247
      %9400 = vmatprep.mubr.bf16.mxu0 %v9015
      %9401 = vmatmul.mubr.bf16.gmra.mrb[0].mxu0 %v9013
      %v9402 = vpop.f32.mrb[0].mxu0
      %v9403 = vadd.f32 %v9363, %v9402
      %v9404 = vpop.f32.mrb[0].mxu0
      %v9405 = vpop.f32.mrb[0].mxu0
      %v9406 = vpop.f32.mrb[0].mxu0
      %9407 = vdwg.mxu0
      %v9408 = vxor.u32 %v9179, 2147483648
      %v9409 = vmul.f32 %v9408, 1.442695
      %v9410 = vpow.pop %v9409
      %v9411 = vadd.f32 %v9410, 1.0
      %v9412 = vrcp.pop %v9411
      %v9413 = vmul.f32 1.0, %v9412
      %v9414 = vxor.u32 %v9403, 2147483648
      %v9415 = vmul.f32 %v9414, 1.442695
      %v9416 = vpow.pop %v9415
      %v9417 = vadd.f32 %v9416, 1.0
      %v9418 = vrcp.pop %v9417
      %v9419 = vmul.f32 1.0, %v9418
      %9421 = vrot.lane.b32.xlu0 %v9419, 4
      %v9422 = vpop.permute.xlu0 %9421
      %vm9424 = vcmask 31744
      %v9425 = vsel %vm9424, %v9413, %v9422
      %vm9426 = vcmask 57344
      %9427 = vst.msk [vmem:[%s492] sm:$0x1] %vm9426, %v9425
      %p9428 = scmp.lt.s32.totalorder %s28, 1
      %s9429 = scalar_select %p9428, %s28, 1
      %s9430 = scalar_lea.vmem %s15, %s9429
      // Predicated region
      $region81: #{discriminator_forward.1} parent=79 // pred_check
        %p9431 = pneg %p366
      $region82: #{discriminator_forward.1} parent=79 // pred_check_branch
        %9433 = sbr.rel (%p9431) target = $region84
      $region83: #{discriminator_forward.1} parent=79 // pred_region
        _
      $region84: #{discriminator_forward.1} parent=79 // pred_fallthru
        _
    $region80: #{discriminator_forward.1} parent=5 // pred_fallthru
      _
    %p9434 = scmp.le.s32.totalorder 2, %s23
    // Predicated region
    $region85: #{discriminator_forward.1} parent=5 // pred_check
      %p9435 = pneg %p9434
    $region86: #{discriminator_forward.1} parent=5 // pred_check_branch
      %9437 = sbr.rel (%p9435) target = $region88
    $region87: #{discriminator_forward.1} parent=5 // pred_region
      %s9438 = ssub.s32 %s23, 2
      // Predicated region
      $region89: #{discriminator_forward.1} parent=87 // pred_check
        %p9439 = pneg %p372
      $region90: #{discriminator_forward.1} parent=87 // pred_check_branch
        %9441 = sbr.rel (%p9439) target = $region92
      $region91: #{discriminator_forward.1} parent=87 // pred_region
        %p9442 = scmp.lt.s32.totalorder %s29, 1
        %s9443 = scalar_select %p9442, %s29, 1
        %s9444 = scalar_lea.vmem %s15, %s9443
      $region92: #{discriminator_forward.1} parent=87 // pred_fallthru
        _
    $region88: #{discriminator_forward.1} parent=5 // pred_fallthru
      _
  $region6: #{discriminator_forward.1} parent=0 // loop_footer
    %s27 = sadd.s32 1, %s23
  $region7: #{discriminator_forward.1} parent=0 // loop_footer_branch
    %22 = sbr.rel target = $region3
  $region8: #{discriminator_forward.1} parent=0 // loop_exit
    _

</llo_original>
